<compile_context>
chip_gen: v7x
topology: tpu7x:2x2x1
jax: 0.10.0
libtpu: 0.0.40
codegen_flags: <defaults>
</compile_context>

<pallas_src>
import math
import functools

import jax
import jax.numpy as jnp
from jax.experimental import pallas as pl
from jax.experimental.pallas import tpu as pltpu

EPS = 1e-5  # PyTorch nn.LayerNorm default eps

# einshape is the lane-layout-aware reshape+transpose; fall back to
# jnp.transpose on older jax versions.
_EINSHAPE = getattr(pltpu, "einshape", None)


# ----------------------------- in-kernel helpers -----------------------------

def _gelu(x):
    # tanh-approx GELU (PyTorch nn.GELU(approximate='tanh')) — tanh runs on the
    # EUP slot, unlike the previous 10-multiply erf polynomial on the VALU.
    c = math.sqrt(2.0 / math.pi)
    return 0.5 * x * (1.0 + jnp.tanh(c * (x + 0.044715 * x * x * x)))


def _layernorm(x, w, b):
    mu = jnp.mean(x, axis=-1, keepdims=True)
    var = jnp.mean((x - mu) ** 2, axis=-1, keepdims=True)
    return (x - mu) * jax.lax.rsqrt(var + EPS) * w + b


def _split_heads(x, num_heads):
    # (S, D) -> (H, S, dh): heads become a leading batch dim (no per-head slices).
    s, d = x.shape
    x3 = x.reshape(s, num_heads, d // num_heads)
    if _EINSHAPE is not None:
        return _EINSHAPE("shd->hsd", x3)
    return jnp.transpose(x3, (1, 0, 2))


def _merge_heads(x):
    # (H, S, dh) -> (S, D)
    h, s, dh = x.shape
    if _EINSHAPE is not None:
        x3 = _EINSHAPE("hsd->shd", x)
    else:
        x3 = jnp.transpose(x, (1, 0, 2))
    return x3.reshape(s, h * dh)


# ------------------------------- Pallas kernels -------------------------------

def _patch_embed_kernel(p_ref, w_ref, b_ref, o_ref):
    # Tubelet encoding: Conv3d(kernel == stride) == matmul over flattened tubelets.
    o_ref[...] = (jnp.dot(p_ref[...], w_ref[...], preferred_element_type=jnp.float32)
                  + b_ref[...])


def patch_embed(patches, w, b):
    m, k = patches.shape
    d = w.shape[1]
    # Tile the patch (M) dimension; K and D ride along whole (they are small once bf16).
    tm = 512 if (m > 512 and m % 512 == 0) else m
    grid = (pl.cdiv(m, tm),)
    return pl.pallas_call(
        _patch_embed_kernel,
        out_shape=jax.ShapeDtypeStruct((m, d), jnp.float32),
        grid=grid,
        in_specs=[pl.BlockSpec((tm, k), lambda i: (i, 0)),
                  pl.BlockSpec((k, d), lambda i: (0, 0)),
                  pl.BlockSpec((1, d), lambda i: (0, 0))],
        out_specs=pl.BlockSpec((tm, d), lambda i: (i, 0)),
        compiler_params=pltpu.CompilerParams(dimension_semantics=("parallel",)),
    )(patches.astype(jnp.bfloat16), w, b)


_STACKED = ("ln1_w", "ln1_b", "wq", "bq", "wk", "bk", "wv", "bv", "wo", "bo",
            "ln2_w", "ln2_b", "w1", "b1", "w2", "b2")


def _transformer_kernel(x_ref, ln1w, ln1b, wq, bq, wk, bk, wv, bv, wo, bo,
                        ln2w, ln2b, w1, b1, w2, b2, encw, encb, o_ref,
                        *, num_heads):
    l = pl.program_id(1)
    nl = pl.num_programs(1)

    # Bring the sequence into the resident output block once per sequence.
    @pl.when(l == 0)
    def _():
        o_ref[...] = x_ref[...]

    x = o_ref[0]                                  # (S, D) f32, resident across layers
    s, d = x.shape
    dh = d // num_heads
    scale = 1.0 / math.sqrt(dh)

    # --- pre-LN multi-head self-attention (nn.MultiheadAttention semantics) ---
    y = _layernorm(x, ln1w[0], ln1b[0]).astype(jnp.bfloat16)
    q = jnp.dot(y, wq[0], preferred_element_type=jnp.float32) + bq[0]
    k = jnp.dot(y, wk[0], preferred_element_type=jnp.float32) + bk[0]
    v = jnp.dot(y, wv[0], preferred_element_type=jnp.float32) + bv[0]

    qh = _split_heads(q, num_heads).astype(jnp.bfloat16)   # (H, S, dh)
    kh = _split_heads(k, num_heads).astype(jnp.bfloat16)
    vh = _split_heads(v, num_heads).astype(jnp.bfloat16)

    sc = jnp.einsum("hqd,hkd->hqk", qh, kh,
                    preferred_element_type=jnp.float32) * scale
    sc = sc - jnp.max(sc, axis=-1, keepdims=True)
    e = jnp.exp(sc)
    p = e * pl.reciprocal(jnp.sum(e, axis=-1, keepdims=True), approx=True)
    ctx = jnp.einsum("hqk,hkd->hqd", p.astype(jnp.bfloat16), vh,
                     preferred_element_type=jnp.float32)   # (H, S, dh)
    attn = _merge_heads(ctx)                                # (S, D) f32
    attn = jnp.dot(attn.astype(jnp.bfloat16), wo[0],
                   preferred_element_type=jnp.float32) + bo[0]
    x = attn + x                                  # drop-layer multiplier == 1.0 (eval)

    # --- pre-LN MLP (Linear -> GELU -> Linear) ---
    z = _layernorm(x, ln2w[0], ln2b[0]).astype(jnp.bfloat16)
    hdn = jnp.dot(z, w1[0], preferred_element_type=jnp.float32) + b1[0]
    hdn = _gelu(hdn).astype(jnp.bfloat16)
    out = jnp.dot(hdn, w2[0], preferred_element_type=jnp.float32) + b2[0]
    res = out + x

    @pl.when(l < nl - 1)
    def _():
        o_ref[0] = res

    @pl.when(l == nl - 1)
    def _():
        # Transformer.encodernorm fused into the last layer's epilogue.
        o_ref[0] = _layernorm(res, encw[...], encb[...])


def transformer(x, prm, num_heads):
    """Run all L encoder blocks + the final LayerNorm in a single pallas_call."""
    nseq, s, d = x.shape
    L = prm["wq"].shape[0]
    assert d % num_heads == 0 and (d // num_heads) % 8 == 0, \
        "head_dim must be a multiple of 8 (lane/sublane alignment)"

    args = [x] + [prm[name] for name in _STACKED] + [prm["enc_w"], prm["enc_b"]]

    in_specs = [pl.BlockSpec((1, s, d), lambda n, l: (n, 0, 0))]
    for name in _STACKED:
        a = prm[name]
        in_specs.append(
            pl.BlockSpec((1,) + a.shape[1:],
                         lambda n, l, nd=a.ndim: (l,) + (0,) * (nd - 1)))
    in_specs += [pl.BlockSpec(prm["enc_w"].shape, lambda n, l: (0, 0)),
                 pl.BlockSpec(prm["enc_b"].shape, lambda n, l: (0, 0))]

    # Advisory cost estimate so XLA schedules the surrounding glue around us.
    flops = int(nseq * L * (24 * s * d * d + 4 * s * s * d))
    transcendentals = int(nseq * L * (4 * s * d + num_heads * s * s + num_heads * s))
    bytes_accessed = int(2 * nseq * s * d * 4
                         + sum(int(a.size) * a.dtype.itemsize for a in args[1:]))

    return pl.pallas_call(
        functools.partial(_transformer_kernel, num_heads=num_heads),
        out_shape=jax.ShapeDtypeStruct((nseq, s, d), jnp.float32),
        grid=(nseq, L),
        in_specs=in_specs,
        out_specs=pl.BlockSpec((1, s, d), lambda n, l: (n, 0, 0)),
        compiler_params=pltpu.CompilerParams(
            dimension_semantics=("parallel", "arbitrary"),
            vmem_limit_bytes=64 * 1024 * 1024),
        cost_estimate=pl.CostEstimate(flops=flops,
                                      transcendentals=transcendentals,
                                      bytes_accessed=bytes_accessed),
    )(*args)


def _linear_kernel(x_ref, w_ref, b_ref, o_ref):
    o_ref[...] = (jnp.dot(x_ref[...], w_ref[...], preferred_element_type=jnp.float32)
                  + b_ref[...])


def linear_head(x, w, b):
    n = x.shape[0]
    c = w.shape[1]
    return pl.pallas_call(
        _linear_kernel,
        out_shape=jax.ShapeDtypeStruct((n, c), jnp.float32),
    )(x.astype(jnp.bfloat16), w, b)


# ------------------------------ parameter setup ------------------------------

def init_params(key, *, c, t, h, w, hidden, num_patches, num_classes, Ls, Lt):
    f32, bf16 = jnp.float32, jnp.bfloat16
    keys = jax.random.split(key, 8)

    def rnd(k, shape, dtype=f32):
        return (jax.random.normal(k, shape, f32) * 0.02).astype(dtype)

    def transformer_params(k, d, L):
        ks = jax.random.split(k, 6)
        h4 = 4 * d
        return dict(
            ln1_w=jnp.ones((L, 1, d), f32), ln1_b=jnp.zeros((L, 1, d), f32),
            wq=rnd(ks[0], (L, d, d), bf16), bq=jnp.zeros((L, 1, d), f32),
            wk=rnd(ks[1], (L, d, d), bf16), bk=jnp.zeros((L, 1, d), f32),
            wv=rnd(ks[2], (L, d, d), bf16), bv=jnp.zeros((L, 1, d), f32),
            wo=rnd(ks[3], (L, d, d), bf16), bo=jnp.zeros((L, 1, d), f32),
            ln2_w=jnp.ones((L, 1, d), f32), ln2_b=jnp.zeros((L, 1, d), f32),
            w1=rnd(ks[4], (L, d, h4), bf16), b1=jnp.zeros((L, 1, h4), f32),
            w2=rnd(ks[5], (L, h4, d), bf16), b2=jnp.zeros((L, 1, d), f32),
            enc_w=jnp.ones((1, d), f32), enc_b=jnp.zeros((1, d), f32),
        )

    patch_dim = c * t * h * w
    return dict(
        # Conv3d weight [hid, c, t, h, w] flattened & transposed, stored bf16.
        pe_w=rnd(keys[0], (patch_dim, hidden), bf16),
        pe_b=jnp.zeros((1, hidden), f32),
        pos_emb=rnd(keys[1], (1, num_patches + 1, hidden)),
        spatial_cls=rnd(keys[2], (1, 1, hidden)),
        temporal_cls=rnd(keys[3], (1, 1, hidden)),
        head_w=rnd(keys[4], (hidden, num_classes), bf16),
        head_b=jnp.zeros((1, num_classes), f32),
        spatial=transformer_params(keys[5], hidden, Ls),
        temporal=transformer_params(keys[6], hidden, Lt),
    )


# --------------------------------- forward -----------------------------------

def factorized_encoder_forward(x, params, *, t, h, w, hidden, num_heads):
    b, c, frames, H, W = x.shape
    nt, nh, nw = frames // t, H // h, W // w
    d = hidden

    # Tubelet encoding: Conv3d(kernel=stride) == extract tubelets + matmul.
    xp = x.reshape(b, c, nt, t, nh, h, nw, w)
    xp = xp.transpose(0, 2, 4, 6, 1, 3, 5, 7)           # b, nt, nh, nw, c, t, h, w
    patches = xp.reshape(b * nt * nh * nw, c * t * h * w)
    tok = patch_embed(patches, params["pe_w"], params["pe_b"])
    tok = tok.reshape(b, nt, nh * nw, d)

    # spatial cls token + positional embedding
    seq = 1 + nh * nw
    s_cls = jnp.broadcast_to(params["spatial_cls"], (b, nt, 1, d))
    xs = jnp.concatenate([s_cls, tok], axis=2)          # (b, nt, seq, d)
    xs = xs + params["pos_emb"].reshape(1, 1, seq, d)   # explicit broadcast shape
    xs = xs.reshape(b * nt, seq, d)

    # Spatial transformer (Ls blocks + encoder norm in one pallas_call)
    xs = transformer(xs, params["spatial"], num_heads)
    xs = xs.reshape(b, nt, seq, d)[:, :, 0, :]          # spatial CLS per time step

    # Temporal transformer (Lt blocks + encoder norm in one pallas_call)
    t_cls = jnp.broadcast_to(params["temporal_cls"], (b, 1, d))
    xt = jnp.concatenate([t_cls, xs], axis=1)           # (b, nt + 1, d)
    xt = transformer(xt, params["temporal"], num_heads)

    cls = xt[:, 0, :]                                   # (b, d)
    return linear_head(cls, params["head_w"], params["head_b"])


# ----------------------------------- main -------------------------------------

if __name__ == "__main__":
    # Small config consistent with FactorizedEncoder(__init__) shapes.
    # hidden=128 / num_heads=4 gives head_dim=32 (lane/sublane-friendly).
    frame_size, t, h, w = 16, 2, 4, 4
    hidden, c, frames = 128, 3, 4
    num_classes, Ls, Lt, num_heads = 10, 2, 2, 4
    batch = 2
    nh, nw, nt = frame_size // h, frame_size // w, frames // t

    key = jax.random.PRNGKey(0)
    kx, kp = jax.random.split(key)
    x = jax.random.normal(kx, (batch, c, frames, frame_size, frame_size), jnp.float32)
    params = init_params(kp, c=c, t=t, h=h, w=w, hidden=hidden,
                         num_patches=nh * nw, num_classes=num_classes, Ls=Ls, Lt=Lt)

    fwd = jax.jit(functools.partial(factorized_encoder_forward, t=t, h=h, w=w,
                                    hidden=hidden, num_heads=num_heads))
    logits = fwd(x, params)
    jax.block_until_ready(logits)
    assert logits.shape == (batch, num_classes), logits.shape
    # TODO(synk): training-mode stochastic drop-layer (Bernoulli) not modeled; eval path only.
    print("KERNEL_OK")
</pallas_src>

<mosaic_0001>
module attributes {stable_mosaic.version = 11 : i64} {
  func.func @_patch_embed_kernel(%arg0: i32, %arg1: memref<64x96xbf16, #tpu.memory_space<vmem>>, %arg2: memref<96x128xbf16, #tpu.memory_space<vmem>>, %arg3: memref<1x128xf32, #tpu.memory_space<vmem>>, %arg4: memref<64x128xf32, #tpu.memory_space<vmem>>) attributes {dimension_semantics = [#tpu.dimension_semantics<parallel>], iteration_bounds = array<i64: 1>, scalar_prefetch = 0 : i64, scratch_operands = 0 : i64, tpu.core_type = #tpu.core_type<tc>, window_params = [{transform_indices = @transform_0, window_bounds = array<i64: 64, 96>}, {pipeline_mode = #tpu.pipeline_mode<synchronous>, transform_indices = @transform_1, window_bounds = array<i64: 96, 128>}, {pipeline_mode = #tpu.pipeline_mode<synchronous>, transform_indices = @transform_2, window_bounds = array<i64: 1, 128>}, {transform_indices = @transform_3, window_bounds = array<i64: 64, 128>}]} {
    %c0 = arith.constant 0 : index
    %c0_0 = arith.constant 0 : index
    %0 = vector.load %arg1[%c0, %c0_0] : memref<64x96xbf16, #tpu.memory_space<vmem>>, vector<64x96xbf16>
    %c0_1 = arith.constant 0 : index
    %c0_2 = arith.constant 0 : index
    %1 = vector.load %arg2[%c0_1, %c0_2] : memref<96x128xbf16, #tpu.memory_space<vmem>>, vector<96x128xbf16>
    %cst = arith.constant dense<0.000000e+00> : vector<64x128xf32>
    %2 = tpu.matmul %0, %1, %cst {dimension_numbers = #tpu.dot_dimension_numbers<[1], [0], [0], [1], [0, 0, 1, 1], [], []>} : vector<64x96xbf16>, vector<96x128xbf16>, vector<64x128xf32> -> vector<64x128xf32>
    %c0_3 = arith.constant 0 : index
    %c0_4 = arith.constant 0 : index
    %3 = vector.load %arg3[%c0_3, %c0_4] : memref<1x128xf32, #tpu.memory_space<vmem>>, vector<1x128xf32>
    %4 = vector.broadcast %3 : vector<1x128xf32> to vector<64x128xf32>
    %5 = arith.addf %2, %4 : vector<64x128xf32>
    %c0_5 = arith.constant 0 : index
    %c0_6 = arith.constant 0 : index
    %6 = vector.load %arg4[%c0_5, %c0_6] : memref<64x128xf32, #tpu.memory_space<vmem>>, vector<64x128xf32>
    tpu.vector_store %arg4[%c0_5, %c0_6], %5 {strides = array<i32>} : memref<64x128xf32, #tpu.memory_space<vmem>>, vector<64x128xf32>,
    return
  }
  func.func @transform_0(%arg0: i32) -> (i32, i32) {
    %c0_i32 = arith.constant 0 : i32
    %c0_i32_0 = arith.constant 0 : i32
    return %arg0, %c0_i32 : i32, i32
  }
  func.func @transform_1(%arg0: i32) -> (i32, i32) {
    %c0_i32 = arith.constant 0 : i32
    %c0_i32_0 = arith.constant 0 : i32
    %c0_i32_1 = arith.constant 0 : i32
    return %c0_i32, %c0_i32_0 : i32, i32
  }
  func.func @transform_2(%arg0: i32) -> (i32, i32) {
    %c0_i32 = arith.constant 0 : i32
    %c0_i32_0 = arith.constant 0 : i32
    %c0_i32_1 = arith.constant 0 : i32
    return %c0_i32, %c0_i32_0 : i32, i32
  }
  func.func @transform_3(%arg0: i32) -> (i32, i32) {
    %c0_i32 = arith.constant 0 : i32
    %c0_i32_0 = arith.constant 0 : i32
    return %arg0, %c0_i32 : i32, i32
  }
}

module attributes {stable_mosaic.version = 11 : i64} {
  func.func @_transformer_kernel(%arg0: i32, %arg1: i32, %arg2: memref<1x17x128xf32, #tpu.memory_space<vmem>>, %arg3: memref<1x1x128xf32, #tpu.memory_space<vmem>>, %arg4: memref<1x1x128xf32, #tpu.memory_space<vmem>>, %arg5: memref<1x128x128xbf16, #tpu.memory_space<vmem>>, %arg6: memref<1x1x128xf32, #tpu.memory_space<vmem>>, %arg7: memref<1x128x128xbf16, #tpu.memory_space<vmem>>, %arg8: memref<1x1x128xf32, #tpu.memory_space<vmem>>, %arg9: memref<1x128x128xbf16, #tpu.memory_space<vmem>>, %arg10: memref<1x1x128xf32, #tpu.memory_space<vmem>>, %arg11: memref<1x128x128xbf16, #tpu.memory_space<vmem>>, %arg12: memref<1x1x128xf32, #tpu.memory_space<vmem>>, %arg13: memref<1x1x128xf32, #tpu.memory_space<vmem>>, %arg14: memref<1x1x128xf32, #tpu.memory_space<vmem>>, %arg15: memref<1x128x512xbf16, #tpu.memory_space<vmem>>, %arg16: memref<1x1x512xf32, #tpu.memory_space<vmem>>, %arg17: memref<1x512x128xbf16, #tpu.memory_space<vmem>>, %arg18: memref<1x1x128xf32, #tpu.memory_space<vmem>>, %arg19: memref<1x128xf32, #tpu.memory_space<vmem>>, %arg20: memref<1x128xf32, #tpu.memory_space<vmem>>, %arg21: memref<1x17x128xf32, #tpu.memory_space<vmem>>) attributes {dimension_semantics = [#tpu.dimension_semantics<parallel>, #tpu.dimension_semantics<arbitrary>], iteration_bounds = array<i64: 4, 2>, scalar_prefetch = 0 : i64, scratch_operands = 0 : i64, tpu.core_type = #tpu.core_type<tc>, window_params = [{transform_indices = @transform_0, window_bounds = array<i64: 1, 17, 128>}, {transform_indices = @transform_1, window_bounds = array<i64: 1, 1, 128>}, {transform_indices = @transform_2, window_bounds = array<i64: 1, 1, 128>}, {transform_indices = @transform_3, window_bounds = array<i64: 1, 128, 128>}, {transform_indices = @transform_4, window_bounds = array<i64: 1, 1, 128>}, {transform_indices = @transform_5, window_bounds = array<i64: 1, 128, 128>}, {transform_indices = @transform_6, window_bounds = array<i64: 1, 1, 128>}, {transform_indices = @transform_7, window_bounds = array<i64: 1, 128, 128>}, {transform_indices = @transform_8, window_bounds = array<i64: 1, 1, 128>}, {transform_indices = @transform_9, window_bounds = array<i64: 1, 128, 128>}, {transform_indices = @transform_10, window_bounds = array<i64: 1, 1, 128>}, {transform_indices = @transform_11, window_bounds = array<i64: 1, 1, 128>}, {transform_indices = @transform_12, window_bounds = array<i64: 1, 1, 128>}, {transform_indices = @transform_13, window_bounds = array<i64: 1, 128, 512>}, {transform_indices = @transform_14, window_bounds = array<i64: 1, 1, 512>}, {transform_indices = @transform_15, window_bounds = array<i64: 1, 512, 128>}, {transform_indices = @transform_16, window_bounds = array<i64: 1, 1, 128>}, {pipeline_mode = #tpu.pipeline_mode<synchronous>, transform_indices = @transform_17, window_bounds = array<i64: 1, 128>}, {pipeline_mode = #tpu.pipeline_mode<synchronous>, transform_indices = @transform_18, window_bounds = array<i64: 1, 128>}, {transform_indices = @transform_19, window_bounds = array<i64: 1, 17, 128>}]} {
    %c0_i32 = arith.constant 0 : i32
    %0 = arith.cmpi eq, %arg1, %c0_i32 : i32
    %1 = arith.extui %0 : i1 to i32
    %c0_i32_0 = arith.constant 0 : i32
    %2 = arith.cmpi ne, %1, %c0_i32_0 : i32
    scf.if %2 {
      %c0_78 = arith.constant 0 : index
      %c0_79 = arith.constant 0 : index
      %c0_80 = arith.constant 0 : index
      %150 = vector.load %arg2[%c0_78, %c0_79, %c0_80] : memref<1x17x128xf32, #tpu.memory_space<vmem>>, vector<1x17x128xf32>
      %c0_81 = arith.constant 0 : index
      %c0_82 = arith.constant 0 : index
      %c0_83 = arith.constant 0 : index
      %151 = vector.load %arg21[%c0_81, %c0_82, %c0_83] : memref<1x17x128xf32, #tpu.memory_space<vmem>>, vector<1x17x128xf32>
      tpu.vector_store %arg21[%c0_81, %c0_82, %c0_83], %150 {strides = array<i32>} : memref<1x17x128xf32, #tpu.memory_space<vmem>>, vector<1x17x128xf32>,
    } else {
    }
    %c0 = arith.constant 0 : index
    %c0_1 = arith.constant 0 : index
    %c0_2 = arith.constant 0 : index
    %3 = vector.load %arg21[%c0, %c0_1, %c0_2] : memref<1x17x128xf32, #tpu.memory_space<vmem>>, vector<1x17x128xf32>
    %4 = vector.shape_cast %3 : vector<1x17x128xf32> to vector<17x128xf32>
    %c0_3 = arith.constant 0 : index
    %c0_4 = arith.constant 0 : index
    %c0_5 = arith.constant 0 : index
    %5 = vector.load %arg3[%c0_3, %c0_4, %c0_5] : memref<1x1x128xf32, #tpu.memory_space<vmem>>, vector<1x1x128xf32>
    %6 = vector.shape_cast %5 : vector<1x1x128xf32> to vector<1x128xf32>
    %c0_6 = arith.constant 0 : index
    %c0_7 = arith.constant 0 : index
    %c0_8 = arith.constant 0 : index
    %7 = vector.load %arg4[%c0_6, %c0_7, %c0_8] : memref<1x1x128xf32, #tpu.memory_space<vmem>>, vector<1x1x128xf32>
    %8 = vector.shape_cast %7 : vector<1x1x128xf32> to vector<1x128xf32>
    %cst = arith.constant dense<0.000000e+00> : vector<17xf32>
    %9 = vector.multi_reduction <add>, %4, %cst [1] : vector<17x128xf32> to vector<17xf32>
    %10 = vector.shape_cast %9 : vector<17xf32> to vector<17x1xf32>
    %cst_9 = arith.constant 1.280000e+02 : f32
    %11 = vector.broadcast %cst_9 : f32 to vector<17x1xf32>
    %12 = arith.divf %10, %11 : vector<17x1xf32>
    %13 = vector.broadcast %12 : vector<17x1xf32> to vector<17x128xf32>
    %14 = arith.subf %4, %13 : vector<17x128xf32>
    %15 = arith.mulf %14, %14 : vector<17x128xf32>
    %cst_10 = arith.constant dense<0.000000e+00> : vector<17xf32>
    %16 = vector.multi_reduction <add>, %15, %cst_10 [1] : vector<17x128xf32> to vector<17xf32>
    %17 = vector.shape_cast %16 : vector<17xf32> to vector<17x1xf32>
    %cst_11 = arith.constant 1.280000e+02 : f32
    %18 = vector.broadcast %cst_11 : f32 to vector<17x1xf32>
    %19 = arith.divf %17, %18 : vector<17x1xf32>
    %20 = vector.broadcast %12 : vector<17x1xf32> to vector<17x128xf32>
    %21 = arith.subf %4, %20 : vector<17x128xf32>
    %cst_12 = arith.constant 9.99999974E-6 : f32
    %22 = vector.broadcast %cst_12 : f32 to vector<17x1xf32>
    %23 = arith.addf %19, %22 : vector<17x1xf32>
    %24 = math.rsqrt %23 : vector<17x1xf32>
    %25 = vector.broadcast %24 : vector<17x1xf32> to vector<17x128xf32>
    %26 = arith.mulf %21, %25 : vector<17x128xf32>
    %27 = vector.broadcast %6 : vector<1x128xf32> to vector<17x128xf32>
    %28 = arith.mulf %26, %27 : vector<17x128xf32>
    %29 = vector.broadcast %8 : vector<1x128xf32> to vector<17x128xf32>
    %30 = arith.addf %28, %29 : vector<17x128xf32>
    %31 = arith.truncf %30 : vector<17x128xf32> to vector<17x128xbf16>
    %c0_13 = arith.constant 0 : index
    %c0_14 = arith.constant 0 : index
    %c0_15 = arith.constant 0 : index
    %32 = vector.load %arg5[%c0_13, %c0_14, %c0_15] : memref<1x128x128xbf16, #tpu.memory_space<vmem>>, vector<1x128x128xbf16>
    %33 = vector.shape_cast %32 : vector<1x128x128xbf16> to vector<128x128xbf16>
    %cst_16 = arith.constant dense<0.000000e+00> : vector<17x128xf32>
    %34 = tpu.matmul %31, %33, %cst_16 {dimension_numbers = #tpu.dot_dimension_numbers<[1], [0], [0], [1], [0, 0, 1, 1], [], []>} : vector<17x128xbf16>, vector<128x128xbf16>, vector<17x128xf32> -> vector<17x128xf32>
    %c0_17 = arith.constant 0 : index
    %c0_18 = arith.constant 0 : index
    %c0_19 = arith.constant 0 : index
    %35 = vector.load %arg6[%c0_17, %c0_18, %c0_19] : memref<1x1x128xf32, #tpu.memory_space<vmem>>, vector<1x1x128xf32>
    %36 = vector.shape_cast %35 : vector<1x1x128xf32> to vector<1x128xf32>
    %37 = vector.broadcast %36 : vector<1x128xf32> to vector<17x128xf32>
    %38 = arith.addf %34, %37 : vector<17x128xf32>
    %c0_20 = arith.constant 0 : index
    %c0_21 = arith.constant 0 : index
    %c0_22 = arith.constant 0 : index
    %39 = vector.load %arg7[%c0_20, %c0_21, %c0_22] : memref<1x128x128xbf16, #tpu.memory_space<vmem>>, vector<1x128x128xbf16>
    %40 = vector.shape_cast %39 : vector<1x128x128xbf16> to vector<128x128xbf16>
    %cst_23 = arith.constant dense<0.000000e+00> : vector<17x128xf32>
    %41 = tpu.matmul %31, %40, %cst_23 {dimension_numbers = #tpu.dot_dimension_numbers<[1], [0], [0], [1], [0, 0, 1, 1], [], []>} : vector<17x128xbf16>, vector<128x128xbf16>, vector<17x128xf32> -> vector<17x128xf32>
    %c0_24 = arith.constant 0 : index
    %c0_25 = arith.constant 0 : index
    %c0_26 = arith.constant 0 : index
    %42 = vector.load %arg8[%c0_24, %c0_25, %c0_26] : memref<1x1x128xf32, #tpu.memory_space<vmem>>, vector<1x1x128xf32>
    %43 = vector.shape_cast %42 : vector<1x1x128xf32> to vector<1x128xf32>
    %44 = vector.broadcast %43 : vector<1x128xf32> to vector<17x128xf32>
    %45 = arith.addf %41, %44 : vector<17x128xf32>
    %c0_27 = arith.constant 0 : index
    %c0_28 = arith.constant 0 : index
    %c0_29 = arith.constant 0 : index
    %46 = vector.load %arg9[%c0_27, %c0_28, %c0_29] : memref<1x128x128xbf16, #tpu.memory_space<vmem>>, vector<1x128x128xbf16>
    %47 = vector.shape_cast %46 : vector<1x128x128xbf16> to vector<128x128xbf16>
    %cst_30 = arith.constant dense<0.000000e+00> : vector<17x128xf32>
    %48 = tpu.matmul %31, %47, %cst_30 {dimension_numbers = #tpu.dot_dimension_numbers<[1], [0], [0], [1], [0, 0, 1, 1], [], []>} : vector<17x128xbf16>, vector<128x128xbf16>, vector<17x128xf32> -> vector<17x128xf32>
    %c0_31 = arith.constant 0 : index
    %c0_32 = arith.constant 0 : index
    %c0_33 = arith.constant 0 : index
    %49 = vector.load %arg10[%c0_31, %c0_32, %c0_33] : memref<1x1x128xf32, #tpu.memory_space<vmem>>, vector<1x1x128xf32>
    %50 = vector.shape_cast %49 : vector<1x1x128xf32> to vector<1x128xf32>
    %51 = vector.broadcast %50 : vector<1x128xf32> to vector<17x128xf32>
    %52 = arith.addf %48, %51 : vector<17x128xf32>
    %53 = vector.shape_cast %38 : vector<17x128xf32> to vector<17x4x32xf32>
    %54 = tpu.transpose %53, [1, 0, 2] : vector<17x4x32xf32> -> vector<4x17x32xf32>
    %55 = arith.truncf %54 : vector<4x17x32xf32> to vector<4x17x32xbf16>
    %56 = vector.shape_cast %45 : vector<17x128xf32> to vector<17x4x32xf32>
    %57 = tpu.transpose %56, [1, 0, 2] : vector<17x4x32xf32> -> vector<4x17x32xf32>
    %58 = arith.truncf %57 : vector<4x17x32xf32> to vector<4x17x32xbf16>
    %59 = vector.shape_cast %52 : vector<17x128xf32> to vector<17x4x32xf32>
    %60 = tpu.transpose %59, [1, 0, 2] : vector<17x4x32xf32> -> vector<4x17x32xf32>
    %61 = arith.truncf %60 : vector<4x17x32xf32> to vector<4x17x32xbf16>
    "tpu.trace_start"() <{level = 10 : i32, message = "hqd,hkd->hqk"}> : () -> ()
    %cst_34 = arith.constant dense<0.000000e+00> : vector<4x17x17xf32>
    %62 = tpu.matmul %55, %58, %cst_34 {dimension_numbers = #tpu.dot_dimension_numbers<[2], [2], [1], [1], [0, 0, 0, 1, 1, 1], [0], [0]>} : vector<4x17x32xbf16>, vector<4x17x32xbf16>, vector<4x17x17xf32> -> vector<4x17x17xf32>
    "tpu.trace_stop"() : () -> ()
    %cst_35 = arith.constant 0.176776692 : f32
    %63 = vector.broadcast %cst_35 : f32 to vector<4x17x17xf32>
    %64 = arith.mulf %62, %63 : vector<4x17x17xf32>
    %cst_36 = arith.constant dense<0xFF800000> : vector<4x17xf32>
    %65 = vector.multi_reduction <maximumf>, %64, %cst_36 [2] : vector<4x17x17xf32> to vector<4x17xf32>
    %66 = vector.shape_cast %65 : vector<4x17xf32> to vector<4x17x1xf32>
    %67 = vector.broadcast %66 : vector<4x17x1xf32> to vector<4x17x17xf32>
    %68 = arith.subf %64, %67 : vector<4x17x17xf32>
    %69 = math.exp %68 : vector<4x17x17xf32>
    %cst_37 = arith.constant dense<0.000000e+00> : vector<4x17xf32>
    %70 = vector.multi_reduction <add>, %69, %cst_37 [2] : vector<4x17x17xf32> to vector<4x17xf32>
    %71 = vector.shape_cast %70 : vector<4x17xf32> to vector<4x17x1xf32>
    %72 = tpu.reciprocal %71 {approx = true} : vector<4x17x1xf32> -> vector<4x17x1xf32>
    %73 = vector.broadcast %72 : vector<4x17x1xf32> to vector<4x17x17xf32>
    %74 = arith.mulf %69, %73 : vector<4x17x17xf32>
    %75 = arith.truncf %74 : vector<4x17x17xf32> to vector<4x17x17xbf16>
    "tpu.trace_start"() <{level = 10 : i32, message = "hqk,hkd->hqd"}> : () -> ()
    %cst_38 = arith.constant dense<0.000000e+00> : vector<4x17x32xf32>
    %76 = tpu.matmul %75, %61, %cst_38 {dimension_numbers = #tpu.dot_dimension_numbers<[2], [1], [1], [2], [0, 0, 0, 1, 1, 2], [0], [0]>} : vector<4x17x17xbf16>, vector<4x17x32xbf16>, vector<4x17x32xf32> -> vector<4x17x32xf32>
    "tpu.trace_stop"() : () -> ()
    %77 = tpu.transpose %76, [1, 0, 2] : vector<4x17x32xf32> -> vector<17x4x32xf32>
    %78 = vector.shape_cast %77 : vector<17x4x32xf32> to vector<17x128xf32>
    %79 = arith.truncf %78 : vector<17x128xf32> to vector<17x128xbf16>
    %c0_39 = arith.constant 0 : index
    %c0_40 = arith.constant 0 : index
    %c0_41 = arith.constant 0 : index
    %80 = vector.load %arg11[%c0_39, %c0_40, %c0_41] : memref<1x128x128xbf16, #tpu.memory_space<vmem>>, vector<1x128x128xbf16>
    %81 = vector.shape_cast %80 : vector<1x128x128xbf16> to vector<128x128xbf16>
    %cst_42 = arith.constant dense<0.000000e+00> : vector<17x128xf32>
    %82 = tpu.matmul %79, %81, %cst_42 {dimension_numbers = #tpu.dot_dimension_numbers<[1], [0], [0], [1], [0, 0, 1, 1], [], []>} : vector<17x128xbf16>, vector<128x128xbf16>, vector<17x128xf32> -> vector<17x128xf32>
    %c0_43 = arith.constant 0 : index
    %c0_44 = arith.constant 0 : index
    %c0_45 = arith.constant 0 : index
    %83 = vector.load %arg12[%c0_43, %c0_44, %c0_45] : memref<1x1x128xf32, #tpu.memory_space<vmem>>, vector<1x1x128xf32>
    %84 = vector.shape_cast %83 : vector<1x1x128xf32> to vector<1x128xf32>
    %85 = vector.broadcast %84 : vector<1x128xf32> to vector<17x128xf32>
    %86 = arith.addf %82, %85 : vector<17x128xf32>
    %87 = arith.addf %86, %4 : vector<17x128xf32>
    %c0_46 = arith.constant 0 : index
    %c0_47 = arith.constant 0 : index
    %c0_48 = arith.constant 0 : index
    %88 = vector.load %arg13[%c0_46, %c0_47, %c0_48] : memref<1x1x128xf32, #tpu.memory_space<vmem>>, vector<1x1x128xf32>
    %89 = vector.shape_cast %88 : vector<1x1x128xf32> to vector<1x128xf32>
    %c0_49 = arith.constant 0 : index
    %c0_50 = arith.constant 0 : index
    %c0_51 = arith.constant 0 : index
    %90 = vector.load %arg14[%c0_49, %c0_50, %c0_51] : memref<1x1x128xf32, #tpu.memory_space<vmem>>, vector<1x1x128xf32>
    %91 = vector.shape_cast %90 : vector<1x1x128xf32> to vector<1x128xf32>
    %cst_52 = arith.constant dense<0.000000e+00> : vector<17xf32>
    %92 = vector.multi_reduction <add>, %87, %cst_52 [1] : vector<17x128xf32> to vector<17xf32>
    %93 = vector.shape_cast %92 : vector<17xf32> to vector<17x1xf32>
    %cst_53 = arith.constant 1.280000e+02 : f32
    %94 = vector.broadcast %cst_53 : f32 to vector<17x1xf32>
    %95 = arith.divf %93, %94 : vector<17x1xf32>
    %96 = vector.broadcast %95 : vector<17x1xf32> to vector<17x128xf32>
    %97 = arith.subf %87, %96 : vector<17x128xf32>
    %98 = arith.mulf %97, %97 : vector<17x128xf32>
    %cst_54 = arith.constant dense<0.000000e+00> : vector<17xf32>
    %99 = vector.multi_reduction <add>, %98, %cst_54 [1] : vector<17x128xf32> to vector<17xf32>
    %100 = vector.shape_cast %99 : vector<17xf32> to vector<17x1xf32>
    %cst_55 = arith.constant 1.280000e+02 : f32
    %101 = vector.broadcast %cst_55 : f32 to vector<17x1xf32>
    %102 = arith.divf %100, %101 : vector<17x1xf32>
    %103 = vector.broadcast %95 : vector<17x1xf32> to vector<17x128xf32>
    %104 = arith.subf %87, %103 : vector<17x128xf32>
    %cst_56 = arith.constant 9.99999974E-6 : f32
    %105 = vector.broadcast %cst_56 : f32 to vector<17x1xf32>
    %106 = arith.addf %102, %105 : vector<17x1xf32>
    %107 = math.rsqrt %106 : vector<17x1xf32>
    %108 = vector.broadcast %107 : vector<17x1xf32> to vector<17x128xf32>
    %109 = arith.mulf %104, %108 : vector<17x128xf32>
    %110 = vector.broadcast %89 : vector<1x128xf32> to vector<17x128xf32>
    %111 = arith.mulf %109, %110 : vector<17x128xf32>
    %112 = vector.broadcast %91 : vector<1x128xf32> to vector<17x128xf32>
    %113 = arith.addf %111, %112 : vector<17x128xf32>
    %114 = arith.truncf %113 : vector<17x128xf32> to vector<17x128xbf16>
    %c0_57 = arith.constant 0 : index
    %c0_58 = arith.constant 0 : index
    %c0_59 = arith.constant 0 : index
    %115 = vector.load %arg15[%c0_57, %c0_58, %c0_59] : memref<1x128x512xbf16, #tpu.memory_space<vmem>>, vector<1x128x512xbf16>
    %116 = vector.shape_cast %115 : vector<1x128x512xbf16> to vector<128x512xbf16>
    %cst_60 = arith.constant dense<0.000000e+00> : vector<17x512xf32>
    %117 = tpu.matmul %114, %116, %cst_60 {dimension_numbers = #tpu.dot_dimension_numbers<[1], [0], [0], [1], [0, 0, 1, 1], [], []>} : vector<17x128xbf16>, vector<128x512xbf16>, vector<17x512xf32> -> vector<17x512xf32>
    %c0_61 = arith.constant 0 : index
    %c0_62 = arith.constant 0 : index
    %c0_63 = arith.constant 0 : index
    %118 = vector.load %arg16[%c0_61, %c0_62, %c0_63] : memref<1x1x512xf32, #tpu.memory_space<vmem>>, vector<1x1x512xf32>
    %119 = vector.shape_cast %118 : vector<1x1x512xf32> to vector<1x512xf32>
    %120 = vector.broadcast %119 : vector<1x512xf32> to vector<17x512xf32>
    %121 = arith.addf %117, %120 : vector<17x512xf32>
    %cst_64 = arith.constant 5.000000e-01 : f32
    %122 = vector.broadcast %cst_64 : f32 to vector<17x512xf32>
    %123 = arith.mulf %122, %121 : vector<17x512xf32>
    %cst_65 = arith.constant 4.471500e-02 : f32
    %124 = vector.broadcast %cst_65 : f32 to vector<17x512xf32>
    %125 = arith.mulf %124, %121 : vector<17x512xf32>
    %126 = arith.mulf %125, %121 : vector<17x512xf32>
    %127 = arith.mulf %126, %121 : vector<17x512xf32>
    %128 = arith.addf %121, %127 : vector<17x512xf32>
    %cst_66 = arith.constant 0.797884583 : f32
    %129 = vector.broadcast %cst_66 : f32 to vector<17x512xf32>
    %130 = arith.mulf %129, %128 : vector<17x512xf32>
    %131 = math.tanh %130 : vector<17x512xf32>
    %cst_67 = arith.constant 1.000000e+00 : f32
    %132 = vector.broadcast %cst_67 : f32 to vector<17x512xf32>
    %133 = arith.addf %132, %131 : vector<17x512xf32>
    %134 = arith.mulf %123, %133 : vector<17x512xf32>
    %135 = arith.truncf %134 : vector<17x512xf32> to vector<17x512xbf16>
    %c0_68 = arith.constant 0 : index
    %c0_69 = arith.constant 0 : index
    %c0_70 = arith.constant 0 : index
    %136 = vector.load %arg17[%c0_68, %c0_69, %c0_70] : memref<1x512x128xbf16, #tpu.memory_space<vmem>>, vector<1x512x128xbf16>
    %137 = vector.shape_cast %136 : vector<1x512x128xbf16> to vector<512x128xbf16>
    %cst_71 = arith.constant dense<0.000000e+00> : vector<17x128xf32>
    %138 = tpu.matmul %135, %137, %cst_71 {dimension_numbers = #tpu.dot_dimension_numbers<[1], [0], [0], [1], [0, 0, 1, 1], [], []>} : vector<17x512xbf16>, vector<512x128xbf16>, vector<17x128xf32> -> vector<17x128xf32>
    %c0_72 = arith.constant 0 : index
    %c0_73 = arith.constant 0 : index
    %c0_74 = arith.constant 0 : index
    %139 = vector.load %arg18[%c0_72, %c0_73, %c0_74] : memref<1x1x128xf32, #tpu.memory_space<vmem>>, vector<1x1x128xf32>
    %140 = vector.shape_cast %139 : vector<1x1x128xf32> to vector<1x128xf32>
    %141 = vector.broadcast %140 : vector<1x128xf32> to vector<17x128xf32>
    %142 = arith.addf %138, %141 : vector<17x128xf32>
    %143 = arith.addf %142, %87 : vector<17x128xf32>
    %c1_i32 = arith.constant 1 : i32
    %144 = arith.cmpi slt, %arg1, %c1_i32 : i32
    %145 = arith.extui %144 : i1 to i32
    %c0_i32_75 = arith.constant 0 : i32
    %146 = arith.cmpi ne, %145, %c0_i32_75 : i32
    scf.if %146 {
      %c0_78 = arith.constant 0 : index
      %c0_79 = arith.constant 0 : index
      %c0_80 = arith.constant 0 : index
      %150 = vector.load %arg21[%c0_78, %c0_79, %c0_80] : memref<1x17x128xf32, #tpu.memory_space<vmem>>, vector<1x17x128xf32>
      %151 = vector.shape_cast %150 : vector<1x17x128xf32> to vector<17x128xf32>
      %152 = vector.shape_cast %143 : vector<17x128xf32> to vector<1x17x128xf32>
      tpu.vector_store %arg21[%c0_78, %c0_79, %c0_80], %152 {strides = array<i32>} : memref<1x17x128xf32, #tpu.memory_space<vmem>>, vector<1x17x128xf32>,
    } else {
    }
    %c1_i32_76 = arith.constant 1 : i32
    %147 = arith.cmpi eq, %arg1, %c1_i32_76 : i32
    %148 = arith.extui %147 : i1 to i32
    %c0_i32_77 = arith.constant 0 : i32
    %149 = arith.cmpi ne, %148, %c0_i32_77 : i32
    scf.if %149 {
      %c0_78 = arith.constant 0 : index
      %c0_79 = arith.constant 0 : index
      %150 = vector.load %arg19[%c0_78, %c0_79] : memref<1x128xf32, #tpu.memory_space<vmem>>, vector<1x128xf32>
      %c0_80 = arith.constant 0 : index
      %c0_81 = arith.constant 0 : index
      %151 = vector.load %arg20[%c0_80, %c0_81] : memref<1x128xf32, #tpu.memory_space<vmem>>, vector<1x128xf32>
      %cst_82 = arith.constant dense<0.000000e+00> : vector<17xf32>
      %152 = vector.multi_reduction <add>, %143, %cst_82 [1] : vector<17x128xf32> to vector<17xf32>
      %153 = vector.shape_cast %152 : vector<17xf32> to vector<17x1xf32>
      %cst_83 = arith.constant 1.280000e+02 : f32
      %154 = vector.broadcast %cst_83 : f32 to vector<17x1xf32>
      %155 = arith.divf %153, %154 : vector<17x1xf32>
      %156 = vector.broadcast %155 : vector<17x1xf32> to vector<17x128xf32>
      %157 = arith.subf %143, %156 : vector<17x128xf32>
      %158 = arith.mulf %157, %157 : vector<17x128xf32>
      %cst_84 = arith.constant dense<0.000000e+00> : vector<17xf32>
      %159 = vector.multi_reduction <add>, %158, %cst_84 [1] : vector<17x128xf32> to vector<17xf32>
      %160 = vector.shape_cast %159 : vector<17xf32> to vector<17x1xf32>
      %cst_85 = arith.constant 1.280000e+02 : f32
      %161 = vector.broadcast %cst_85 : f32 to vector<17x1xf32>
      %162 = arith.divf %160, %161 : vector<17x1xf32>
      %163 = vector.broadcast %155 : vector<17x1xf32> to vector<17x128xf32>
      %164 = arith.subf %143, %163 : vector<17x128xf32>
      %cst_86 = arith.constant 9.99999974E-6 : f32
      %165 = vector.broadcast %cst_86 : f32 to vector<17x1xf32>
      %166 = arith.addf %162, %165 : vector<17x1xf32>
      %167 = math.rsqrt %166 : vector<17x1xf32>
      %168 = vector.broadcast %167 : vector<17x1xf32> to vector<17x128xf32>
      %169 = arith.mulf %164, %168 : vector<17x128xf32>
      %170 = vector.broadcast %150 : vector<1x128xf32> to vector<17x128xf32>
      %171 = arith.mulf %169, %170 : vector<17x128xf32>
      %172 = vector.broadcast %151 : vector<1x128xf32> to vector<17x128xf32>
      %173 = arith.addf %171, %172 : vector<17x128xf32>
      %c0_87 = arith.constant 0 : index
      %c0_88 = arith.constant 0 : index
      %c0_89 = arith.constant 0 : index
      %174 = vector.load %arg21[%c0_87, %c0_88, %c0_89] : memref<1x17x128xf32, #tpu.memory_space<vmem>>, vector<1x17x128xf32>
      %175 = vector.shape_cast %174 : vector<1x17x128xf32> to vector<17x128xf32>
      %176 = vector.shape_cast %173 : vector<17x128xf32> to vector<1x17x128xf32>
      tpu.vector_store %arg21[%c0_87, %c0_88, %c0_89], %176 {strides = array<i32>} : memref<1x17x128xf32, #tpu.memory_space<vmem>>, vector<1x17x128xf32>,
    } else {
    }
    return
  }
  func.func @transform_0(%arg0: i32, %arg1: i32) -> (i32, i32, i32) {
    %c0_i32 = arith.constant 0 : i32
    %c0_i32_0 = arith.constant 0 : i32
    %c0_i32_1 = arith.constant 0 : i32
    return %arg0, %c0_i32, %c0_i32_0 : i32, i32, i32
  }
  func.func @transform_1(%arg0: i32, %arg1: i32) -> (i32, i32, i32) {
    %c0_i32 = arith.constant 0 : i32
    %c0_i32_0 = arith.constant 0 : i32
    %c0_i32_1 = arith.constant 0 : i32
    return %arg1, %c0_i32, %c0_i32_0 : i32, i32, i32
  }
  func.func @transform_2(%arg0: i32, %arg1: i32) -> (i32, i32, i32) {
    %c0_i32 = arith.constant 0 : i32
    %c0_i32_0 = arith.constant 0 : i32
    %c0_i32_1 = arith.constant 0 : i32
    return %arg1, %c0_i32, %c0_i32_0 : i32, i32, i32
  }
  func.func @transform_3(%arg0: i32, %arg1: i32) -> (i32, i32, i32) {
    %c0_i32 = arith.constant 0 : i32
    %c0_i32_0 = arith.constant 0 : i32
    %c0_i32_1 = arith.constant 0 : i32
    return %arg1, %c0_i32, %c0_i32_0 : i32, i32, i32
  }
  func.func @transform_4(%arg0: i32, %arg1: i32) -> (i32, i32, i32) {
    %c0_i32 = arith.constant 0 : i32
    %c0_i32_0 = arith.constant 0 : i32
    %c0_i32_1 = arith.constant 0 : i32
    return %arg1, %c0_i32, %c0_i32_0 : i32, i32, i32
  }
  func.func @transform_5(%arg0: i32, %arg1: i32) -> (i32, i32, i32) {
    %c0_i32 = arith.constant 0 : i32
    %c0_i32_0 = arith.constant 0 : i32
    %c0_i32_1 = arith.constant 0 : i32
    return %arg1, %c0_i32, %c0_i32_0 : i32, i32, i32
  }
  func.func @transform_6(%arg0: i32, %arg1: i32) -> (i32, i32, i32) {
    %c0_i32 = arith.constant 0 : i32
    %c0_i32_0 = arith.constant 0 : i32
    %c0_i32_1 = arith.constant 0 : i32
    return %arg1, %c0_i32, %c0_i32_0 : i32, i32, i32
  }
  func.func @transform_7(%arg0: i32, %arg1: i32) -> (i32, i32, i32) {
    %c0_i32 = arith.constant 0 : i32
    %c0_i32_0 = arith.constant 0 : i32
    %c0_i32_1 = arith.constant 0 : i32
    return %arg1, %c0_i32, %c0_i32_0 : i32, i32, i32
  }
  func.func @transform_8(%arg0: i32, %arg1: i32) -> (i32, i32, i32) {
    %c0_i32 = arith.constant 0 : i32
    %c0_i32_0 = arith.constant 0 : i32
    %c0_i32_1 = arith.constant 0 : i32
    return %arg1, %c0_i32, %c0_i32_0 : i32, i32, i32
  }
  func.func @transform_9(%arg0: i32, %arg1: i32) -> (i32, i32, i32) {
    %c0_i32 = arith.constant 0 : i32
    %c0_i32_0 = arith.constant 0 : i32
    %c0_i32_1 = arith.constant 0 : i32
    return %arg1, %c0_i32, %c0_i32_0 : i32, i32, i32
  }
  func.func @transform_10(%arg0: i32, %arg1: i32) -> (i32, i32, i32) {
    %c0_i32 = arith.constant 0 : i32
    %c0_i32_0 = arith.constant 0 : i32
    %c0_i32_1 = arith.constant 0 : i32
    return %arg1, %c0_i32, %c0_i32_0 : i32, i32, i32
  }
  func.func @transform_11(%arg0: i32, %arg1: i32) -> (i32, i32, i32) {
    %c0_i32 = arith.constant 0 : i32
    %c0_i32_0 = arith.constant 0 : i32
    %c0_i32_1 = arith.constant 0 : i32
    return %arg1, %c0_i32, %c0_i32_0 : i32, i32, i32
  }
  func.func @transform_12(%arg0: i32, %arg1: i32) -> (i32, i32, i32) {
    %c0_i32 = arith.constant 0 : i32
    %c0_i32_0 = arith.constant 0 : i32
    %c0_i32_1 = arith.constant 0 : i32
    return %arg1, %c0_i32, %c0_i32_0 : i32, i32, i32
  }
  func.func @transform_13(%arg0: i32, %arg1: i32) -> (i32, i32, i32) {
    %c0_i32 = arith.constant 0 : i32
    %c0_i32_0 = arith.constant 0 : i32
    %c0_i32_1 = arith.constant 0 : i32
    return %arg1, %c0_i32, %c0_i32_0 : i32, i32, i32
  }
  func.func @transform_14(%arg0: i32, %arg1: i32) -> (i32, i32, i32) {
    %c0_i32 = arith.constant 0 : i32
    %c0_i32_0 = arith.constant 0 : i32
    %c0_i32_1 = arith.constant 0 : i32
    return %arg1, %c0_i32, %c0_i32_0 : i32, i32, i32
  }
  func.func @transform_15(%arg0: i32, %arg1: i32) -> (i32, i32, i32) {
    %c0_i32 = arith.constant 0 : i32
    %c0_i32_0 = arith.constant 0 : i32
    %c0_i32_1 = arith.constant 0 : i32
    return %arg1, %c0_i32, %c0_i32_0 : i32, i32, i32
  }
  func.func @transform_16(%arg0: i32, %arg1: i32) -> (i32, i32, i32) {
    %c0_i32 = arith.constant 0 : i32
    %c0_i32_0 = arith.constant 0 : i32
    %c0_i32_1 = arith.constant 0 : i32
    return %arg1, %c0_i32, %c0_i32_0 : i32, i32, i32
  }
  func.func @transform_17(%arg0: i32, %arg1: i32) -> (i32, i32) {
    %c0_i32 = arith.constant 0 : i32
    %c0_i32_0 = arith.constant 0 : i32
    %c0_i32_1 = arith.constant 0 : i32
    return %c0_i32, %c0_i32_0 : i32, i32
  }
  func.func @transform_18(%arg0: i32, %arg1: i32) -> (i32, i32) {
    %c0_i32 = arith.constant 0 : i32
    %c0_i32_0 = arith.constant 0 : i32
    %c0_i32_1 = arith.constant 0 : i32
    return %c0_i32, %c0_i32_0 : i32, i32
  }
  func.func @transform_19(%arg0: i32, %arg1: i32) -> (i32, i32, i32) {
    %c0_i32 = arith.constant 0 : i32
    %c0_i32_0 = arith.constant 0 : i32
    %c0_i32_1 = arith.constant 0 : i32
    return %arg0, %c0_i32, %c0_i32_0 : i32, i32, i32
  }
}

module attributes {stable_mosaic.version = 11 : i64} {
  func.func @_transformer_kernel(%arg0: i32, %arg1: i32, %arg2: memref<1x3x128xf32, #tpu.memory_space<vmem>>, %arg3: memref<1x1x128xf32, #tpu.memory_space<vmem>>, %arg4: memref<1x1x128xf32, #tpu.memory_space<vmem>>, %arg5: memref<1x128x128xbf16, #tpu.memory_space<vmem>>, %arg6: memref<1x1x128xf32, #tpu.memory_space<vmem>>, %arg7: memref<1x128x128xbf16, #tpu.memory_space<vmem>>, %arg8: memref<1x1x128xf32, #tpu.memory_space<vmem>>, %arg9: memref<1x128x128xbf16, #tpu.memory_space<vmem>>, %arg10: memref<1x1x128xf32, #tpu.memory_space<vmem>>, %arg11: memref<1x128x128xbf16, #tpu.memory_space<vmem>>, %arg12: memref<1x1x128xf32, #tpu.memory_space<vmem>>, %arg13: memref<1x1x128xf32, #tpu.memory_space<vmem>>, %arg14: memref<1x1x128xf32, #tpu.memory_space<vmem>>, %arg15: memref<1x128x512xbf16, #tpu.memory_space<vmem>>, %arg16: memref<1x1x512xf32, #tpu.memory_space<vmem>>, %arg17: memref<1x512x128xbf16, #tpu.memory_space<vmem>>, %arg18: memref<1x1x128xf32, #tpu.memory_space<vmem>>, %arg19: memref<1x128xf32, #tpu.memory_space<vmem>>, %arg20: memref<1x128xf32, #tpu.memory_space<vmem>>, %arg21: memref<1x3x128xf32, #tpu.memory_space<vmem>>) attributes {dimension_semantics = [#tpu.dimension_semantics<parallel>, #tpu.dimension_semantics<arbitrary>], iteration_bounds = array<i64: 2, 2>, scalar_prefetch = 0 : i64, scratch_operands = 0 : i64, tpu.core_type = #tpu.core_type<tc>, window_params = [{transform_indices = @transform_0, window_bounds = array<i64: 1, 3, 128>}, {transform_indices = @transform_1, window_bounds = array<i64: 1, 1, 128>}, {transform_indices = @transform_2, window_bounds = array<i64: 1, 1, 128>}, {transform_indices = @transform_3, window_bounds = array<i64: 1, 128, 128>}, {transform_indices = @transform_4, window_bounds = array<i64: 1, 1, 128>}, {transform_indices = @transform_5, window_bounds = array<i64: 1, 128, 128>}, {transform_indices = @transform_6, window_bounds = array<i64: 1, 1, 128>}, {transform_indices = @transform_7, window_bounds = array<i64: 1, 128, 128>}, {transform_indices = @transform_8, window_bounds = array<i64: 1, 1, 128>}, {transform_indices = @transform_9, window_bounds = array<i64: 1, 128, 128>}, {transform_indices = @transform_10, window_bounds = array<i64: 1, 1, 128>}, {transform_indices = @transform_11, window_bounds = array<i64: 1, 1, 128>}, {transform_indices = @transform_12, window_bounds = array<i64: 1, 1, 128>}, {transform_indices = @transform_13, window_bounds = array<i64: 1, 128, 512>}, {transform_indices = @transform_14, window_bounds = array<i64: 1, 1, 512>}, {transform_indices = @transform_15, window_bounds = array<i64: 1, 512, 128>}, {transform_indices = @transform_16, window_bounds = array<i64: 1, 1, 128>}, {pipeline_mode = #tpu.pipeline_mode<synchronous>, transform_indices = @transform_17, window_bounds = array<i64: 1, 128>}, {pipeline_mode = #tpu.pipeline_mode<synchronous>, transform_indices = @transform_18, window_bounds = array<i64: 1, 128>}, {transform_indices = @transform_19, window_bounds = array<i64: 1, 3, 128>}]} {
    %c0_i32 = arith.constant 0 : i32
    %0 = arith.cmpi eq, %arg1, %c0_i32 : i32
    %1 = arith.extui %0 : i1 to i32
    %c0_i32_0 = arith.constant 0 : i32
    %2 = arith.cmpi ne, %1, %c0_i32_0 : i32
    scf.if %2 {
      %c0_78 = arith.constant 0 : index
      %c0_79 = arith.constant 0 : index
      %c0_80 = arith.constant 0 : index
      %150 = vector.load %arg2[%c0_78, %c0_79, %c0_80] : memref<1x3x128xf32, #tpu.memory_space<vmem>>, vector<1x3x128xf32>
      %c0_81 = arith.constant 0 : index
      %c0_82 = arith.constant 0 : index
      %c0_83 = arith.constant 0 : index
      %151 = vector.load %arg21[%c0_81, %c0_82, %c0_83] : memref<1x3x128xf32, #tpu.memory_space<vmem>>, vector<1x3x128xf32>
      tpu.vector_store %arg21[%c0_81, %c0_82, %c0_83], %150 {strides = array<i32>} : memref<1x3x128xf32, #tpu.memory_space<vmem>>, vector<1x3x128xf32>,
    } else {
    }
    %c0 = arith.constant 0 : index
    %c0_1 = arith.constant 0 : index
    %c0_2 = arith.constant 0 : index
    %3 = vector.load %arg21[%c0, %c0_1, %c0_2] : memref<1x3x128xf32, #tpu.memory_space<vmem>>, vector<1x3x128xf32>
    %4 = vector.shape_cast %3 : vector<1x3x128xf32> to vector<3x128xf32>
    %c0_3 = arith.constant 0 : index
    %c0_4 = arith.constant 0 : index
    %c0_5 = arith.constant 0 : index
    %5 = vector.load %arg3[%c0_3, %c0_4, %c0_5] : memref<1x1x128xf32, #tpu.memory_space<vmem>>, vector<1x1x128xf32>
    %6 = vector.shape_cast %5 : vector<1x1x128xf32> to vector<1x128xf32>
    %c0_6 = arith.constant 0 : index
    %c0_7 = arith.constant 0 : index
    %c0_8 = arith.constant 0 : index
    %7 = vector.load %arg4[%c0_6, %c0_7, %c0_8] : memref<1x1x128xf32, #tpu.memory_space<vmem>>, vector<1x1x128xf32>
    %8 = vector.shape_cast %7 : vector<1x1x128xf32> to vector<1x128xf32>
    %cst = arith.constant dense<0.000000e+00> : vector<3xf32>
    %9 = vector.multi_reduction <add>, %4, %cst [1] : vector<3x128xf32> to vector<3xf32>
    %10 = vector.shape_cast %9 : vector<3xf32> to vector<3x1xf32>
    %cst_9 = arith.constant 1.280000e+02 : f32
    %11 = vector.broadcast %cst_9 : f32 to vector<3x1xf32>
    %12 = arith.divf %10, %11 : vector<3x1xf32>
    %13 = vector.broadcast %12 : vector<3x1xf32> to vector<3x128xf32>
    %14 = arith.subf %4, %13 : vector<3x128xf32>
    %15 = arith.mulf %14, %14 : vector<3x128xf32>
    %cst_10 = arith.constant dense<0.000000e+00> : vector<3xf32>
    %16 = vector.multi_reduction <add>, %15, %cst_10 [1] : vector<3x128xf32> to vector<3xf32>
    %17 = vector.shape_cast %16 : vector<3xf32> to vector<3x1xf32>
    %cst_11 = arith.constant 1.280000e+02 : f32
    %18 = vector.broadcast %cst_11 : f32 to vector<3x1xf32>
    %19 = arith.divf %17, %18 : vector<3x1xf32>
    %20 = vector.broadcast %12 : vector<3x1xf32> to vector<3x128xf32>
    %21 = arith.subf %4, %20 : vector<3x128xf32>
    %cst_12 = arith.constant 9.99999974E-6 : f32
    %22 = vector.broadcast %cst_12 : f32 to vector<3x1xf32>
    %23 = arith.addf %19, %22 : vector<3x1xf32>
    %24 = math.rsqrt %23 : vector<3x1xf32>
    %25 = vector.broadcast %24 : vector<3x1xf32> to vector<3x128xf32>
    %26 = arith.mulf %21, %25 : vector<3x128xf32>
    %27 = vector.broadcast %6 : vector<1x128xf32> to vector<3x128xf32>
    %28 = arith.mulf %26, %27 : vector<3x128xf32>
    %29 = vector.broadcast %8 : vector<1x128xf32> to vector<3x128xf32>
    %30 = arith.addf %28, %29 : vector<3x128xf32>
    %31 = arith.truncf %30 : vector<3x128xf32> to vector<3x128xbf16>
    %c0_13 = arith.constant 0 : index
    %c0_14 = arith.constant 0 : index
    %c0_15 = arith.constant 0 : index
    %32 = vector.load %arg5[%c0_13, %c0_14, %c0_15] : memref<1x128x128xbf16, #tpu.memory_space<vmem>>, vector<1x128x128xbf16>
    %33 = vector.shape_cast %32 : vector<1x128x128xbf16> to vector<128x128xbf16>
    %cst_16 = arith.constant dense<0.000000e+00> : vector<3x128xf32>
    %34 = tpu.matmul %31, %33, %cst_16 {dimension_numbers = #tpu.dot_dimension_numbers<[1], [0], [0], [1], [0, 0, 1, 1], [], []>} : vector<3x128xbf16>, vector<128x128xbf16>, vector<3x128xf32> -> vector<3x128xf32>
    %c0_17 = arith.constant 0 : index
    %c0_18 = arith.constant 0 : index
    %c0_19 = arith.constant 0 : index
    %35 = vector.load %arg6[%c0_17, %c0_18, %c0_19] : memref<1x1x128xf32, #tpu.memory_space<vmem>>, vector<1x1x128xf32>
    %36 = vector.shape_cast %35 : vector<1x1x128xf32> to vector<1x128xf32>
    %37 = vector.broadcast %36 : vector<1x128xf32> to vector<3x128xf32>
    %38 = arith.addf %34, %37 : vector<3x128xf32>
    %c0_20 = arith.constant 0 : index
    %c0_21 = arith.constant 0 : index
    %c0_22 = arith.constant 0 : index
    %39 = vector.load %arg7[%c0_20, %c0_21, %c0_22] : memref<1x128x128xbf16, #tpu.memory_space<vmem>>, vector<1x128x128xbf16>
    %40 = vector.shape_cast %39 : vector<1x128x128xbf16> to vector<128x128xbf16>
    %cst_23 = arith.constant dense<0.000000e+00> : vector<3x128xf32>
    %41 = tpu.matmul %31, %40, %cst_23 {dimension_numbers = #tpu.dot_dimension_numbers<[1], [0], [0], [1], [0, 0, 1, 1], [], []>} : vector<3x128xbf16>, vector<128x128xbf16>, vector<3x128xf32> -> vector<3x128xf32>
    %c0_24 = arith.constant 0 : index
    %c0_25 = arith.constant 0 : index
    %c0_26 = arith.constant 0 : index
    %42 = vector.load %arg8[%c0_24, %c0_25, %c0_26] : memref<1x1x128xf32, #tpu.memory_space<vmem>>, vector<1x1x128xf32>
    %43 = vector.shape_cast %42 : vector<1x1x128xf32> to vector<1x128xf32>
    %44 = vector.broadcast %43 : vector<1x128xf32> to vector<3x128xf32>
    %45 = arith.addf %41, %44 : vector<3x128xf32>
    %c0_27 = arith.constant 0 : index
    %c0_28 = arith.constant 0 : index
    %c0_29 = arith.constant 0 : index
    %46 = vector.load %arg9[%c0_27, %c0_28, %c0_29] : memref<1x128x128xbf16, #tpu.memory_space<vmem>>, vector<1x128x128xbf16>
    %47 = vector.shape_cast %46 : vector<1x128x128xbf16> to vector<128x128xbf16>
    %cst_30 = arith.constant dense<0.000000e+00> : vector<3x128xf32>
    %48 = tpu.matmul %31, %47, %cst_30 {dimension_numbers = #tpu.dot_dimension_numbers<[1], [0], [0], [1], [0, 0, 1, 1], [], []>} : vector<3x128xbf16>, vector<128x128xbf16>, vector<3x128xf32> -> vector<3x128xf32>
    %c0_31 = arith.constant 0 : index
    %c0_32 = arith.constant 0 : index
    %c0_33 = arith.constant 0 : index
    %49 = vector.load %arg10[%c0_31, %c0_32, %c0_33] : memref<1x1x128xf32, #tpu.memory_space<vmem>>, vector<1x1x128xf32>
    %50 = vector.shape_cast %49 : vector<1x1x128xf32> to vector<1x128xf32>
    %51 = vector.broadcast %50 : vector<1x128xf32> to vector<3x128xf32>
    %52 = arith.addf %48, %51 : vector<3x128xf32>
    %53 = vector.shape_cast %38 : vector<3x128xf32> to vector<3x4x32xf32>
    %54 = tpu.transpose %53, [1, 0, 2] : vector<3x4x32xf32> -> vector<4x3x32xf32>
    %55 = arith.truncf %54 : vector<4x3x32xf32> to vector<4x3x32xbf16>
    %56 = vector.shape_cast %45 : vector<3x128xf32> to vector<3x4x32xf32>
    %57 = tpu.transpose %56, [1, 0, 2] : vector<3x4x32xf32> -> vector<4x3x32xf32>
    %58 = arith.truncf %57 : vector<4x3x32xf32> to vector<4x3x32xbf16>
    %59 = vector.shape_cast %52 : vector<3x128xf32> to vector<3x4x32xf32>
    %60 = tpu.transpose %59, [1, 0, 2] : vector<3x4x32xf32> -> vector<4x3x32xf32>
    %61 = arith.truncf %60 : vector<4x3x32xf32> to vector<4x3x32xbf16>
    "tpu.trace_start"() <{level = 10 : i32, message = "hqd,hkd->hqk"}> : () -> ()
    %cst_34 = arith.constant dense<0.000000e+00> : vector<4x3x3xf32>
    %62 = tpu.matmul %55, %58, %cst_34 {dimension_numbers = #tpu.dot_dimension_numbers<[2], [2], [1], [1], [0, 0, 0, 1, 1, 1], [0], [0]>} : vector<4x3x32xbf16>, vector<4x3x32xbf16>, vector<4x3x3xf32> -> vector<4x3x3xf32>
    "tpu.trace_stop"() : () -> ()
    %cst_35 = arith.constant 0.176776692 : f32
    %63 = vector.broadcast %cst_35 : f32 to vector<4x3x3xf32>
    %64 = arith.mulf %62, %63 : vector<4x3x3xf32>
    %cst_36 = arith.constant dense<0xFF800000> : vector<4x3xf32>
    %65 = vector.multi_reduction <maximumf>, %64, %cst_36 [2] : vector<4x3x3xf32> to vector<4x3xf32>
    %66 = vector.shape_cast %65 : vector<4x3xf32> to vector<4x3x1xf32>
    %67 = vector.broadcast %66 : vector<4x3x1xf32> to vector<4x3x3xf32>
    %68 = arith.subf %64, %67 : vector<4x3x3xf32>
    %69 = math.exp %68 : vector<4x3x3xf32>
    %cst_37 = arith.constant dense<0.000000e+00> : vector<4x3xf32>
    %70 = vector.multi_reduction <add>, %69, %cst_37 [2] : vector<4x3x3xf32> to vector<4x3xf32>
    %71 = vector.shape_cast %70 : vector<4x3xf32> to vector<4x3x1xf32>
    %72 = tpu.reciprocal %71 {approx = true} : vector<4x3x1xf32> -> vector<4x3x1xf32>
    %73 = vector.broadcast %72 : vector<4x3x1xf32> to vector<4x3x3xf32>
    %74 = arith.mulf %69, %73 : vector<4x3x3xf32>
    %75 = arith.truncf %74 : vector<4x3x3xf32> to vector<4x3x3xbf16>
    "tpu.trace_start"() <{level = 10 : i32, message = "hqk,hkd->hqd"}> : () -> ()
    %cst_38 = arith.constant dense<0.000000e+00> : vector<4x3x32xf32>
    %76 = tpu.matmul %75, %61, %cst_38 {dimension_numbers = #tpu.dot_dimension_numbers<[2], [1], [1], [2], [0, 0, 0, 1, 1, 2], [0], [0]>} : vector<4x3x3xbf16>, vector<4x3x32xbf16>, vector<4x3x32xf32> -> vector<4x3x32xf32>
    "tpu.trace_stop"() : () -> ()
    %77 = tpu.transpose %76, [1, 0, 2] : vector<4x3x32xf32> -> vector<3x4x32xf32>
    %78 = vector.shape_cast %77 : vector<3x4x32xf32> to vector<3x128xf32>
    %79 = arith.truncf %78 : vector<3x128xf32> to vector<3x128xbf16>
    %c0_39 = arith.constant 0 : index
    %c0_40 = arith.constant 0 : index
    %c0_41 = arith.constant 0 : index
    %80 = vector.load %arg11[%c0_39, %c0_40, %c0_41] : memref<1x128x128xbf16, #tpu.memory_space<vmem>>, vector<1x128x128xbf16>
    %81 = vector.shape_cast %80 : vector<1x128x128xbf16> to vector<128x128xbf16>
    %cst_42 = arith.constant dense<0.000000e+00> : vector<3x128xf32>
    %82 = tpu.matmul %79, %81, %cst_42 {dimension_numbers = #tpu.dot_dimension_numbers<[1], [0], [0], [1], [0, 0, 1, 1], [], []>} : vector<3x128xbf16>, vector<128x128xbf16>, vector<3x128xf32> -> vector<3x128xf32>
    %c0_43 = arith.constant 0 : index
    %c0_44 = arith.constant 0 : index
    %c0_45 = arith.constant 0 : index
    %83 = vector.load %arg12[%c0_43, %c0_44, %c0_45] : memref<1x1x128xf32, #tpu.memory_space<vmem>>, vector<1x1x128xf32>
    %84 = vector.shape_cast %83 : vector<1x1x128xf32> to vector<1x128xf32>
    %85 = vector.broadcast %84 : vector<1x128xf32> to vector<3x128xf32>
    %86 = arith.addf %82, %85 : vector<3x128xf32>
    %87 = arith.addf %86, %4 : vector<3x128xf32>
    %c0_46 = arith.constant 0 : index
    %c0_47 = arith.constant 0 : index
    %c0_48 = arith.constant 0 : index
    %88 = vector.load %arg13[%c0_46, %c0_47, %c0_48] : memref<1x1x128xf32, #tpu.memory_space<vmem>>, vector<1x1x128xf32>
    %89 = vector.shape_cast %88 : vector<1x1x128xf32> to vector<1x128xf32>
    %c0_49 = arith.constant 0 : index
    %c0_50 = arith.constant 0 : index
    %c0_51 = arith.constant 0 : index
    %90 = vector.load %arg14[%c0_49, %c0_50, %c0_51] : memref<1x1x128xf32, #tpu.memory_space<vmem>>, vector<1x1x128xf32>
    %91 = vector.shape_cast %90 : vector<1x1x128xf32> to vector<1x128xf32>
    %cst_52 = arith.constant dense<0.000000e+00> : vector<3xf32>
    %92 = vector.multi_reduction <add>, %87, %cst_52 [1] : vector<3x128xf32> to vector<3xf32>
    %93 = vector.shape_cast %92 : vector<3xf32> to vector<3x1xf32>
    %cst_53 = arith.constant 1.280000e+02 : f32
    %94 = vector.broadcast %cst_53 : f32 to vector<3x1xf32>
    %95 = arith.divf %93, %94 : vector<3x1xf32>
    %96 = vector.broadcast %95 : vector<3x1xf32> to vector<3x128xf32>
    %97 = arith.subf %87, %96 : vector<3x128xf32>
    %98 = arith.mulf %97, %97 : vector<3x128xf32>
    %cst_54 = arith.constant dense<0.000000e+00> : vector<3xf32>
    %99 = vector.multi_reduction <add>, %98, %cst_54 [1] : vector<3x128xf32> to vector<3xf32>
    %100 = vector.shape_cast %99 : vector<3xf32> to vector<3x1xf32>
    %cst_55 = arith.constant 1.280000e+02 : f32
    %101 = vector.broadcast %cst_55 : f32 to vector<3x1xf32>
    %102 = arith.divf %100, %101 : vector<3x1xf32>
    %103 = vector.broadcast %95 : vector<3x1xf32> to vector<3x128xf32>
    %104 = arith.subf %87, %103 : vector<3x128xf32>
    %cst_56 = arith.constant 9.99999974E-6 : f32
    %105 = vector.broadcast %cst_56 : f32 to vector<3x1xf32>
    %106 = arith.addf %102, %105 : vector<3x1xf32>
    %107 = math.rsqrt %106 : vector<3x1xf32>
    %108 = vector.broadcast %107 : vector<3x1xf32> to vector<3x128xf32>
    %109 = arith.mulf %104, %108 : vector<3x128xf32>
    %110 = vector.broadcast %89 : vector<1x128xf32> to vector<3x128xf32>
    %111 = arith.mulf %109, %110 : vector<3x128xf32>
    %112 = vector.broadcast %91 : vector<1x128xf32> to vector<3x128xf32>
    %113 = arith.addf %111, %112 : vector<3x128xf32>
    %114 = arith.truncf %113 : vector<3x128xf32> to vector<3x128xbf16>
    %c0_57 = arith.constant 0 : index
    %c0_58 = arith.constant 0 : index
    %c0_59 = arith.constant 0 : index
    %115 = vector.load %arg15[%c0_57, %c0_58, %c0_59] : memref<1x128x512xbf16, #tpu.memory_space<vmem>>, vector<1x128x512xbf16>
    %116 = vector.shape_cast %115 : vector<1x128x512xbf16> to vector<128x512xbf16>
    %cst_60 = arith.constant dense<0.000000e+00> : vector<3x512xf32>
    %117 = tpu.matmul %114, %116, %cst_60 {dimension_numbers = #tpu.dot_dimension_numbers<[1], [0], [0], [1], [0, 0, 1, 1], [], []>} : vector<3x128xbf16>, vector<128x512xbf16>, vector<3x512xf32> -> vector<3x512xf32>
    %c0_61 = arith.constant 0 : index
    %c0_62 = arith.constant 0 : index
    %c0_63 = arith.constant 0 : index
    %118 = vector.load %arg16[%c0_61, %c0_62, %c0_63] : memref<1x1x512xf32, #tpu.memory_space<vmem>>, vector<1x1x512xf32>
    %119 = vector.shape_cast %118 : vector<1x1x512xf32> to vector<1x512xf32>
    %120 = vector.broadcast %119 : vector<1x512xf32> to vector<3x512xf32>
    %121 = arith.addf %117, %120 : vector<3x512xf32>
    %cst_64 = arith.constant 5.000000e-01 : f32
    %122 = vector.broadcast %cst_64 : f32 to vector<3x512xf32>
    %123 = arith.mulf %122, %121 : vector<3x512xf32>
    %cst_65 = arith.constant 4.471500e-02 : f32
    %124 = vector.broadcast %cst_65 : f32 to vector<3x512xf32>
    %125 = arith.mulf %124, %121 : vector<3x512xf32>
    %126 = arith.mulf %125, %121 : vector<3x512xf32>
    %127 = arith.mulf %126, %121 : vector<3x512xf32>
    %128 = arith.addf %121, %127 : vector<3x512xf32>
    %cst_66 = arith.constant 0.797884583 : f32
    %129 = vector.broadcast %cst_66 : f32 to vector<3x512xf32>
    %130 = arith.mulf %129, %128 : vector<3x512xf32>
    %131 = math.tanh %130 : vector<3x512xf32>
    %cst_67 = arith.constant 1.000000e+00 : f32
    %132 = vector.broadcast %cst_67 : f32 to vector<3x512xf32>
    %133 = arith.addf %132, %131 : vector<3x512xf32>
    %134 = arith.mulf %123, %133 : vector<3x512xf32>
    %135 = arith.truncf %134 : vector<3x512xf32> to vector<3x512xbf16>
    %c0_68 = arith.constant 0 : index
    %c0_69 = arith.constant 0 : index
    %c0_70 = arith.constant 0 : index
    %136 = vector.load %arg17[%c0_68, %c0_69, %c0_70] : memref<1x512x128xbf16, #tpu.memory_space<vmem>>, vector<1x512x128xbf16>
    %137 = vector.shape_cast %136 : vector<1x512x128xbf16> to vector<512x128xbf16>
    %cst_71 = arith.constant dense<0.000000e+00> : vector<3x128xf32>
    %138 = tpu.matmul %135, %137, %cst_71 {dimension_numbers = #tpu.dot_dimension_numbers<[1], [0], [0], [1], [0, 0, 1, 1], [], []>} : vector<3x512xbf16>, vector<512x128xbf16>, vector<3x128xf32> -> vector<3x128xf32>
    %c0_72 = arith.constant 0 : index
    %c0_73 = arith.constant 0 : index
    %c0_74 = arith.constant 0 : index
    %139 = vector.load %arg18[%c0_72, %c0_73, %c0_74] : memref<1x1x128xf32, #tpu.memory_space<vmem>>, vector<1x1x128xf32>
    %140 = vector.shape_cast %139 : vector<1x1x128xf32> to vector<1x128xf32>
    %141 = vector.broadcast %140 : vector<1x128xf32> to vector<3x128xf32>
    %142 = arith.addf %138, %141 : vector<3x128xf32>
    %143 = arith.addf %142, %87 : vector<3x128xf32>
    %c1_i32 = arith.constant 1 : i32
    %144 = arith.cmpi slt, %arg1, %c1_i32 : i32
    %145 = arith.extui %144 : i1 to i32
    %c0_i32_75 = arith.constant 0 : i32
    %146 = arith.cmpi ne, %145, %c0_i32_75 : i32
    scf.if %146 {
      %c0_78 = arith.constant 0 : index
      %c0_79 = arith.constant 0 : index
      %c0_80 = arith.constant 0 : index
      %150 = vector.load %arg21[%c0_78, %c0_79, %c0_80] : memref<1x3x128xf32, #tpu.memory_space<vmem>>, vector<1x3x128xf32>
      %151 = vector.shape_cast %150 : vector<1x3x128xf32> to vector<3x128xf32>
      %152 = vector.shape_cast %143 : vector<3x128xf32> to vector<1x3x128xf32>
      tpu.vector_store %arg21[%c0_78, %c0_79, %c0_80], %152 {strides = array<i32>} : memref<1x3x128xf32, #tpu.memory_space<vmem>>, vector<1x3x128xf32>,
    } else {
    }
    %c1_i32_76 = arith.constant 1 : i32
    %147 = arith.cmpi eq, %arg1, %c1_i32_76 : i32
    %148 = arith.extui %147 : i1 to i32
    %c0_i32_77 = arith.constant 0 : i32
    %149 = arith.cmpi ne, %148, %c0_i32_77 : i32
    scf.if %149 {
      %c0_78 = arith.constant 0 : index
      %c0_79 = arith.constant 0 : index
      %150 = vector.load %arg19[%c0_78, %c0_79] : memref<1x128xf32, #tpu.memory_space<vmem>>, vector<1x128xf32>
      %c0_80 = arith.constant 0 : index
      %c0_81 = arith.constant 0 : index
      %151 = vector.load %arg20[%c0_80, %c0_81] : memref<1x128xf32, #tpu.memory_space<vmem>>, vector<1x128xf32>
      %cst_82 = arith.constant dense<0.000000e+00> : vector<3xf32>
      %152 = vector.multi_reduction <add>, %143, %cst_82 [1] : vector<3x128xf32> to vector<3xf32>
      %153 = vector.shape_cast %152 : vector<3xf32> to vector<3x1xf32>
      %cst_83 = arith.constant 1.280000e+02 : f32
      %154 = vector.broadcast %cst_83 : f32 to vector<3x1xf32>
      %155 = arith.divf %153, %154 : vector<3x1xf32>
      %156 = vector.broadcast %155 : vector<3x1xf32> to vector<3x128xf32>
      %157 = arith.subf %143, %156 : vector<3x128xf32>
      %158 = arith.mulf %157, %157 : vector<3x128xf32>
      %cst_84 = arith.constant dense<0.000000e+00> : vector<3xf32>
      %159 = vector.multi_reduction <add>, %158, %cst_84 [1] : vector<3x128xf32> to vector<3xf32>
      %160 = vector.shape_cast %159 : vector<3xf32> to vector<3x1xf32>
      %cst_85 = arith.constant 1.280000e+02 : f32
      %161 = vector.broadcast %cst_85 : f32 to vector<3x1xf32>
      %162 = arith.divf %160, %161 : vector<3x1xf32>
      %163 = vector.broadcast %155 : vector<3x1xf32> to vector<3x128xf32>
      %164 = arith.subf %143, %163 : vector<3x128xf32>
      %cst_86 = arith.constant 9.99999974E-6 : f32
      %165 = vector.broadcast %cst_86 : f32 to vector<3x1xf32>
      %166 = arith.addf %162, %165 : vector<3x1xf32>
      %167 = math.rsqrt %166 : vector<3x1xf32>
      %168 = vector.broadcast %167 : vector<3x1xf32> to vector<3x128xf32>
      %169 = arith.mulf %164, %168 : vector<3x128xf32>
      %170 = vector.broadcast %150 : vector<1x128xf32> to vector<3x128xf32>
      %171 = arith.mulf %169, %170 : vector<3x128xf32>
      %172 = vector.broadcast %151 : vector<1x128xf32> to vector<3x128xf32>
      %173 = arith.addf %171, %172 : vector<3x128xf32>
      %c0_87 = arith.constant 0 : index
      %c0_88 = arith.constant 0 : index
      %c0_89 = arith.constant 0 : index
      %174 = vector.load %arg21[%c0_87, %c0_88, %c0_89] : memref<1x3x128xf32, #tpu.memory_space<vmem>>, vector<1x3x128xf32>
      %175 = vector.shape_cast %174 : vector<1x3x128xf32> to vector<3x128xf32>
      %176 = vector.shape_cast %173 : vector<3x128xf32> to vector<1x3x128xf32>
      tpu.vector_store %arg21[%c0_87, %c0_88, %c0_89], %176 {strides = array<i32>} : memref<1x3x128xf32, #tpu.memory_space<vmem>>, vector<1x3x128xf32>,
    } else {
    }
    return
  }
  func.func @transform_0(%arg0: i32, %arg1: i32) -> (i32, i32, i32) {
    %c0_i32 = arith.constant 0 : i32
    %c0_i32_0 = arith.constant 0 : i32
    %c0_i32_1 = arith.constant 0 : i32
    return %arg0, %c0_i32, %c0_i32_0 : i32, i32, i32
  }
  func.func @transform_1(%arg0: i32, %arg1: i32) -> (i32, i32, i32) {
    %c0_i32 = arith.constant 0 : i32
    %c0_i32_0 = arith.constant 0 : i32
    %c0_i32_1 = arith.constant 0 : i32
    return %arg1, %c0_i32, %c0_i32_0 : i32, i32, i32
  }
  func.func @transform_2(%arg0: i32, %arg1: i32) -> (i32, i32, i32) {
    %c0_i32 = arith.constant 0 : i32
    %c0_i32_0 = arith.constant 0 : i32
    %c0_i32_1 = arith.constant 0 : i32
    return %arg1, %c0_i32, %c0_i32_0 : i32, i32, i32
  }
  func.func @transform_3(%arg0: i32, %arg1: i32) -> (i32, i32, i32) {
    %c0_i32 = arith.constant 0 : i32
    %c0_i32_0 = arith.constant 0 : i32
    %c0_i32_1 = arith.constant 0 : i32
    return %arg1, %c0_i32, %c0_i32_0 : i32, i32, i32
  }
  func.func @transform_4(%arg0: i32, %arg1: i32) -> (i32, i32, i32) {
    %c0_i32 = arith.constant 0 : i32
    %c0_i32_0 = arith.constant 0 : i32
    %c0_i32_1 = arith.constant 0 : i32
    return %arg1, %c0_i32, %c0_i32_0 : i32, i32, i32
  }
  func.func @transform_5(%arg0: i32, %arg1: i32) -> (i32, i32, i32) {
    %c0_i32 = arith.constant 0 : i32
    %c0_i32_0 = arith.constant 0 : i32
    %c0_i32_1 = arith.constant 0 : i32
    return %arg1, %c0_i32, %c0_i32_0 : i32, i32, i32
  }
  func.func @transform_6(%arg0: i32, %arg1: i32) -> (i32, i32, i32) {
    %c0_i32 = arith.constant 0 : i32
    %c0_i32_0 = arith.constant 0 : i32
    %c0_i32_1 = arith.constant 0 : i32
    return %arg1, %c0_i32, %c0_i32_0 : i32, i32, i32
  }
  func.func @transform_7(%arg0: i32, %arg1: i32) -> (i32, i32, i32) {
    %c0_i32 = arith.constant 0 : i32
    %c0_i32_0 = arith.constant 0 : i32
    %c0_i32_1 = arith.constant 0 : i32
    return %arg1, %c0_i32, %c0_i32_0 : i32, i32, i32
  }
  func.func @transform_8(%arg0: i32, %arg1: i32) -> (i32, i32, i32) {
    %c0_i32 = arith.constant 0 : i32
    %c0_i32_0 = arith.constant 0 : i32
    %c0_i32_1 = arith.constant 0 : i32
    return %arg1, %c0_i32, %c0_i32_0 : i32, i32, i32
  }
  func.func @transform_9(%arg0: i32, %arg1: i32) -> (i32, i32, i32) {
    %c0_i32 = arith.constant 0 : i32
    %c0_i32_0 = arith.constant 0 : i32
    %c0_i32_1 = arith.constant 0 : i32
    return %arg1, %c0_i32, %c0_i32_0 : i32, i32, i32
  }
  func.func @transform_10(%arg0: i32, %arg1: i32) -> (i32, i32, i32) {
    %c0_i32 = arith.constant 0 : i32
    %c0_i32_0 = arith.constant 0 : i32
    %c0_i32_1 = arith.constant 0 : i32
    return %arg1, %c0_i32, %c0_i32_0 : i32, i32, i32
  }
  func.func @transform_11(%arg0: i32, %arg1: i32) -> (i32, i32, i32) {
    %c0_i32 = arith.constant 0 : i32
    %c0_i32_0 = arith.constant 0 : i32
    %c0_i32_1 = arith.constant 0 : i32
    return %arg1, %c0_i32, %c0_i32_0 : i32, i32, i32
  }
  func.func @transform_12(%arg0: i32, %arg1: i32) -> (i32, i32, i32) {
    %c0_i32 = arith.constant 0 : i32
    %c0_i32_0 = arith.constant 0 : i32
    %c0_i32_1 = arith.constant 0 : i32
    return %arg1, %c0_i32, %c0_i32_0 : i32, i32, i32
  }
  func.func @transform_13(%arg0: i32, %arg1: i32) -> (i32, i32, i32) {
    %c0_i32 = arith.constant 0 : i32
    %c0_i32_0 = arith.constant 0 : i32
    %c0_i32_1 = arith.constant 0 : i32
    return %arg1, %c0_i32, %c0_i32_0 : i32, i32, i32
  }
  func.func @transform_14(%arg0: i32, %arg1: i32) -> (i32, i32, i32) {
    %c0_i32 = arith.constant 0 : i32
    %c0_i32_0 = arith.constant 0 : i32
    %c0_i32_1 = arith.constant 0 : i32
    return %arg1, %c0_i32, %c0_i32_0 : i32, i32, i32
  }
  func.func @transform_15(%arg0: i32, %arg1: i32) -> (i32, i32, i32) {
    %c0_i32 = arith.constant 0 : i32
    %c0_i32_0 = arith.constant 0 : i32
    %c0_i32_1 = arith.constant 0 : i32
    return %arg1, %c0_i32, %c0_i32_0 : i32, i32, i32
  }
  func.func @transform_16(%arg0: i32, %arg1: i32) -> (i32, i32, i32) {
    %c0_i32 = arith.constant 0 : i32
    %c0_i32_0 = arith.constant 0 : i32
    %c0_i32_1 = arith.constant 0 : i32
    return %arg1, %c0_i32, %c0_i32_0 : i32, i32, i32
  }
  func.func @transform_17(%arg0: i32, %arg1: i32) -> (i32, i32) {
    %c0_i32 = arith.constant 0 : i32
    %c0_i32_0 = arith.constant 0 : i32
    %c0_i32_1 = arith.constant 0 : i32
    return %c0_i32, %c0_i32_0 : i32, i32
  }
  func.func @transform_18(%arg0: i32, %arg1: i32) -> (i32, i32) {
    %c0_i32 = arith.constant 0 : i32
    %c0_i32_0 = arith.constant 0 : i32
    %c0_i32_1 = arith.constant 0 : i32
    return %c0_i32, %c0_i32_0 : i32, i32
  }
  func.func @transform_19(%arg0: i32, %arg1: i32) -> (i32, i32, i32) {
    %c0_i32 = arith.constant 0 : i32
    %c0_i32_0 = arith.constant 0 : i32
    %c0_i32_1 = arith.constant 0 : i32
    return %arg0, %c0_i32, %c0_i32_0 : i32, i32, i32
  }
}

module attributes {stable_mosaic.version = 11 : i64} {
  func.func @_linear_kernel(%arg0: memref<2x128xbf16, #tpu.memory_space<vmem>>, %arg1: memref<128x10xbf16, #tpu.memory_space<vmem>>, %arg2: memref<1x10xf32, #tpu.memory_space<vmem>>, %arg3: memref<2x10xf32, #tpu.memory_space<vmem>>) attributes {dimension_semantics = [], scalar_prefetch = 0 : i64, scratch_operands = 0 : i64, tpu.core_type = #tpu.core_type<tc>} {
    %c0 = arith.constant 0 : index
    %c0_0 = arith.constant 0 : index
    %0 = vector.load %arg0[%c0, %c0_0] : memref<2x128xbf16, #tpu.memory_space<vmem>>, vector<2x128xbf16>
    %c0_1 = arith.constant 0 : index
    %c0_2 = arith.constant 0 : index
    %1 = vector.load %arg1[%c0_1, %c0_2] : memref<128x10xbf16, #tpu.memory_space<vmem>>, vector<128x10xbf16>
    %cst = arith.constant dense<0.000000e+00> : vector<2x10xf32>
    %2 = tpu.matmul %0, %1, %cst {dimension_numbers = #tpu.dot_dimension_numbers<[1], [0], [0], [1], [0, 0, 1, 1], [], []>} : vector<2x128xbf16>, vector<128x10xbf16>, vector<2x10xf32> -> vector<2x10xf32>
    %c0_3 = arith.constant 0 : index
    %c0_4 = arith.constant 0 : index
    %3 = vector.load %arg2[%c0_3, %c0_4] : memref<1x10xf32, #tpu.memory_space<vmem>>, vector<1x10xf32>
    %4 = vector.broadcast %3 : vector<1x10xf32> to vector<2x10xf32>
    %5 = arith.addf %2, %4 : vector<2x10xf32>
    %c0_5 = arith.constant 0 : index
    %c0_6 = arith.constant 0 : index
    %6 = vector.load %arg3[%c0_5, %c0_6] : memref<2x10xf32, #tpu.memory_space<vmem>>, vector<2x10xf32>
    tpu.vector_store %arg3[%c0_5, %c0_6], %5 {strides = array<i32>} : memref<2x10xf32, #tpu.memory_space<vmem>>, vector<2x10xf32>,
    return
  }
}

</mosaic_0001>

<llo_original>
// kernel: factorized_encoder_forward.4
$region0: #{factorized_encoder_forward.4}
  #allocation0 [shape = 'u32[]', space=smem, size = 0x4, offset = 0x4, fixed_abs, tag = 'smem constant byte address 0x4 - core index']
  #allocation1 [shape = 'u32[144,128]{1,0:T(1,128)}', space=vmem, size = 0x12000, scoped, tag = 'internal scratch']
  %s0 = inlined_call_operand.vmem [shape: bf16[64,96], index: 0, kind: input, shape index: {}]
  %s1 = inlined_call_operand.vmem [shape: bf16[96,128], index: 1, kind: input, shape index: {}]
  %s2 = inlined_call_operand.vmem [shape: f32[1,128], index: 2, kind: input, shape index: {}]
  %s3 = inlined_call_operand.vmem [shape: f32[64,128], index: 3, kind: output, shape index: {}]
  %s4 = sld [smem:[#allocation0]]
  $region22: #{factorized_encoder_forward.4} parent=0
    _
  %s6 = ssub.s32 1, %s4
  %s7 = scalar_select 0, %s6, %s4
  // Predicated region
  $region2: #{factorized_encoder_forward.4} parent=0 // pred_check
    _
  $region3: #{factorized_encoder_forward.4} parent=0 // pred_check_branch
    %9 = sbr.rel (0) target = $region5
  $region4: #{factorized_encoder_forward.4} parent=0 // pred_region
    _
  $region5: #{factorized_encoder_forward.4} parent=0 // pred_fallthru
    _
  // Predicated region
  $region6: #{factorized_encoder_forward.4} parent=0 // pred_check
    _
  $region7: #{factorized_encoder_forward.4} parent=0 // pred_check_branch
    %11 = sbr.rel (0) target = $region9
  $region8: #{factorized_encoder_forward.4} parent=0 // pred_region
    _
  $region9: #{factorized_encoder_forward.4} parent=0 // pred_fallthru
    _
  // Predicated region
  $region10: #{factorized_encoder_forward.4} parent=0 // pred_check
    _
  $region11: #{factorized_encoder_forward.4} parent=0 // pred_check_branch
    %13 = sbr.rel (0) target = $region13
  $region12: #{factorized_encoder_forward.4} parent=0 // pred_region
    _
  $region13: #{factorized_encoder_forward.4} parent=0 // pred_fallthru
    _
  %v15 = vld [vmem:[%s0] sm:$0xf]
  %v16 = vld [vmem:[%s0 + $0x4] sm:$0xf]
  %v17 = vld [vmem:[%s0 + $0x8] sm:$0xf]
  %v18 = vld [vmem:[%s0 + $0xc] sm:$0xf]
  %v19 = vld [vmem:[%s0 + $0x10] sm:$0xf]
  %v20 = vld [vmem:[%s0 + $0x14] sm:$0xf]
  %v21 = vld [vmem:[%s0 + $0x18] sm:$0xf]
  %v22 = vld [vmem:[%s0 + $0x1c] sm:$0xf]
  %v23 = vld [vmem:[%s1] sm:$0xf]
  %v24 = vld [vmem:[%s1 + $0x4] sm:$0xf]
  %v25 = vld [vmem:[%s1 + $0x8] sm:$0xf]
  %v26 = vld [vmem:[%s1 + $0xc] sm:$0xf]
  %v27 = vld [vmem:[%s1 + $0x10] sm:$0xf]
  %v28 = vld [vmem:[%s1 + $0x14] sm:$0xf]
  %v29 = vld [vmem:[%s1 + $0x18] sm:$0xf]
  %v30 = vld [vmem:[%s1 + $0x1c] sm:$0xf]
  %v31 = vld [vmem:[%s1 + $0x20] sm:$0xf]
  %v32 = vld [vmem:[%s1 + $0x24] sm:$0xf]
  %v33 = vld [vmem:[%s1 + $0x28] sm:$0xf]
  %v34 = vld [vmem:[%s1 + $0x2c] sm:$0xf]
  %v35 = vld [vmem:[%s2] sm:$0x1]
  %v37 = vlaneseq
  %v38 = vshrl.u32 %v37, 7
  %v39 = vsub.s32 0, %v38
  %v40 = vrot.slane %v35, %v39
  %v50 = vunpack.c.l.b16 %v15
  %v51 = vunpack.c.l.b16 %v16
  %v52 = vunpack.c.l.b16 %v17
  %v53 = vunpack.c.l.b16 %v18
  %v54 = vunpack.c.l.b16 %v19
  %v55 = vunpack.c.l.b16 %v20
  %v56 = vunpack.c.l.b16 %v21
  %v57 = vunpack.c.l.b16 %v22
  %v58 = vpack.c.b16 %v51, %v50
  %v59 = vpack.c.b16 %v53, %v52
  %v60 = vpack.c.b16 %v55, %v54
  %v61 = vpack.c.b16 %v57, %v56
  %v74 = vunpack.c.l.b16 %v23
  %v75 = vunpack.c.l.b16 %v24
  %v76 = vunpack.c.l.b16 %v25
  %v77 = vunpack.c.l.b16 %v26
  %v78 = vunpack.c.l.b16 %v27
  %v79 = vunpack.c.l.b16 %v28
  %v80 = vunpack.c.l.b16 %v29
  %v81 = vunpack.c.l.b16 %v30
  %v82 = vunpack.c.l.b16 %v31
  %v83 = vunpack.c.l.b16 %v32
  %v84 = vunpack.c.l.b16 %v33
  %v85 = vunpack.c.l.b16 %v34
  %v86 = vpack.c.b16 %v75, %v74
  %v87 = vpack.c.b16 %v77, %v76
  %v88 = vpack.c.b16 %v79, %v78
  %v89 = vpack.c.b16 %v81, %v80
  %v90 = vpack.c.b16 %v83, %v82
  %v91 = vpack.c.b16 %v85, %v84
  %vm98 = vcmask 785408
  %v100 = vsel %vm98, %v58, 0
  %v103 = vsel %vm98, %v59, 0
  %v106 = vsel %vm98, %v60, 0
  %v109 = vsel %vm98, %v61, 0
  %111 = vmatprep.subr.bf16.mxu0 0
  %112 = vmatpush1.bf16.msra.mxu0 %v86
  %113 = vmatprep.subr.bf16.mxu0 0
  %114 = vmatpush1.bf16.msra.mxu0 %v87
  %115 = vmatprep.subr.bf16.mxu0 0
  %116 = vmatpush1.bf16.msra.mxu0 %v88
  %117 = vmatprep.subr.bf16.mxu0 0
  %118 = vmatpush1.bf16.msra.mxu0 %v89
  %119 = vmatprep.subr.bf16.mxu0 0
  %120 = vmatpush1.bf16.msra.mxu0 %v90
  %121 = vmatprep.subr.bf16.mxu0 0
  %122 = vmatpush1.bf16.msra.mxu0 %v91
  %123 = vmatprep.subr.bf16.mxu0 0
  %124 = vmatpush1.bf16.msra.mxu0 0
  %125 = vmatprep.subr.bf16.mxu0 0
  %126 = vmatpush1.bf16.msra.mxu0 0
  %127 = vmatprep.subr.bf16.mxu0 0
  %128 = vmatpush1.bf16.msra.mxu0 0
  %129 = vmatprep.subr.bf16.mxu0 0
  %130 = vmatpush1.bf16.msra.mxu0 0
  %131 = vmatprep.subr.bf16.mxu0 0
  %132 = vmatpush1.bf16.msra.mxu0 0
  %133 = vmatprep.subr.bf16.mxu0 0
  %134 = vmatpush1.bf16.msra.mxu0 0
  %135 = vmatprep.subr.bf16.mxu0 0
  %136 = vmatpush1.bf16.msra.mxu0 0
  %137 = vmatprep.subr.bf16.mxu0 0
  %138 = vmatpush1.bf16.msra.mxu0 0
  %139 = vmatprep.subr.bf16.mxu0 0
  %140 = vmatpush1.bf16.msra.mxu0 0
  %141 = vmatprep.subr.bf16.mxu0 0
  %142 = vmatpush1.bf16.msra.mxu0 0
  %143 = vmatprep.mubr.bf16.mxu0 0
  %144 = vmatmul.mubr.bf16.gmra.mrb[0].mxu0 %v100
  %v145 = vpop.f32.mrb[0].mxu0
  %v146 = vadd.f32 %v40, %v145
  %v147 = vpop.f32.mrb[0].mxu0
  %v148 = vpop.f32.mrb[0].mxu0
  %v149 = vadd.f32 %v40, %v148
  %v150 = vpop.f32.mrb[0].mxu0
  %151 = vmatprep.mubr.bf16.mxu0 0
  %152 = vmatmul.mubr.bf16.gmra.mrb[0].mxu0 %v103
  %v153 = vpop.f32.mrb[0].mxu0
  %v154 = vadd.f32 %v40, %v153
  %v155 = vpop.f32.mrb[0].mxu0
  %v156 = vpop.f32.mrb[0].mxu0
  %v157 = vadd.f32 %v40, %v156
  %v158 = vpop.f32.mrb[0].mxu0
  %159 = vmatprep.mubr.bf16.mxu0 0
  %160 = vmatmul.mubr.bf16.gmra.mrb[0].mxu0 %v106
  %v161 = vpop.f32.mrb[0].mxu0
  %v162 = vadd.f32 %v40, %v161
  %v163 = vpop.f32.mrb[0].mxu0
  %v164 = vpop.f32.mrb[0].mxu0
  %v165 = vadd.f32 %v40, %v164
  %v166 = vpop.f32.mrb[0].mxu0
  %167 = vmatprep.mubr.bf16.mxu0 0
  %168 = vmatmul.mubr.bf16.gmra.mrb[0].mxu0 %v109
  %v169 = vpop.f32.mrb[0].mxu0
  %v170 = vadd.f32 %v40, %v169
  %v171 = vpop.f32.mrb[0].mxu0
  %v172 = vpop.f32.mrb[0].mxu0
  %v173 = vadd.f32 %v40, %v172
  %v174 = vpop.f32.mrb[0].mxu0
  %175 = vdwg.mxu0
  %176 = vst [vmem:[%s3] sm:$0xff] %v146
  %177 = vst [vmem:[%s3 + $0x8] sm:$0xff] %v149
  %178 = vst [vmem:[%s3 + $0x10] sm:$0xff] %v154
  %179 = vst [vmem:[%s3 + $0x18] sm:$0xff] %v157
  %180 = vst [vmem:[%s3 + $0x20] sm:$0xff] %v162
  %181 = vst [vmem:[%s3 + $0x28] sm:$0xff] %v165
  %182 = vst [vmem:[%s3 + $0x30] sm:$0xff] %v170
  %183 = vst [vmem:[%s3 + $0x38] sm:$0xff] %v173
  // Predicated region
  $region14: #{factorized_encoder_forward.4} parent=0 // pred_check
    _
  $region15: #{factorized_encoder_forward.4} parent=0 // pred_check_branch
    %185 = sbr.rel (0) target = $region17
  $region16: #{factorized_encoder_forward.4} parent=0 // pred_region
    _
  $region17: #{factorized_encoder_forward.4} parent=0 // pred_fallthru
    _
  // Predicated region
  $region18: #{factorized_encoder_forward.4} parent=0 // pred_check
    _
  $region19: #{factorized_encoder_forward.4} parent=0 // pred_check_branch
    %187 = sbr.rel (0) target = $region21
  $region20: #{factorized_encoder_forward.4} parent=0 // pred_region
    _
  $region21: #{factorized_encoder_forward.4} parent=0 // pred_fallthru
    _

// kernel: factorized_encoder_forward.7
$region0: #{factorized_encoder_forward.7}
  #allocation0 [shape = 'u32[]', space=smem, size = 0x4, offset = 0x4, fixed_abs, tag = 'smem constant byte address 0x4 - core index']
  #allocation1 [shape = 'u32[144,128]{1,0:T(1,128)}', space=vmem, size = 0x12000, scoped, tag = 'internal scratch']
  %s0 = inlined_call_operand.vmem [shape: bf16[2,128], index: 0, kind: input, shape index: {}]
  %s1 = inlined_call_operand.vmem [shape: bf16[128,10], index: 1, kind: input, shape index: {}]
  %s2 = inlined_call_operand.vmem [shape: f32[1,10], index: 2, kind: input, shape index: {}]
  %s3 = inlined_call_operand.hbm [shape: f32[2,10], index: 3, kind: output, shape index: {}]
  %s4 = sld [smem:[#allocation0]]
  $region22: #{factorized_encoder_forward.7} parent=0
    _
  %s6 = ssub.s32 1, %s4
  %s7 = scalar_select 0, %s6, %s4
  $region1: #{factorized_encoder_forward.7} parent=0
    #allocation2 [shape = 'u8[1024]{0}', space=vmem, size = 0x400, scoped, tag = 'output window, operand 0, single buffered']
    #allocation3 [shape = 's32[1]{0}', space=sflag, size = 0x4, scoped, tag = 'scoped memory for factorized_encoder_forward.7']
    %8 = vsyncpa [#allocation3], 0
    // Predicated region
    $region2: #{factorized_encoder_forward.7} parent=1 // pred_check
      _
    $region3: #{factorized_encoder_forward.7} parent=1 // pred_check_branch
      %10 = sbr.rel (0) target = $region5
    $region4: #{factorized_encoder_forward.7} parent=1 // pred_region
      _
    $region5: #{factorized_encoder_forward.7} parent=1 // pred_fallthru
      _
    // Predicated region
    $region6: #{factorized_encoder_forward.7} parent=1 // pred_check
      _
    $region7: #{factorized_encoder_forward.7} parent=1 // pred_check_branch
      %12 = sbr.rel (0) target = $region9
    $region8: #{factorized_encoder_forward.7} parent=1 // pred_region
      _
    $region9: #{factorized_encoder_forward.7} parent=1 // pred_fallthru
      _
    // Predicated region
    $region10: #{factorized_encoder_forward.7} parent=1 // pred_check
      _
    $region11: #{factorized_encoder_forward.7} parent=1 // pred_check_branch
      %14 = sbr.rel (0) target = $region13
    $region12: #{factorized_encoder_forward.7} parent=1 // pred_region
      _
    $region13: #{factorized_encoder_forward.7} parent=1 // pred_fallthru
      _
    %v16 = vld [vmem:[%s0] sm:$0x1]
    %v17 = vld [vmem:[%s1] sm:$0xf]
    %v18 = vld [vmem:[%s1 + $0x4] sm:$0xf]
    %v19 = vld [vmem:[%s1 + $0x8] sm:$0xf]
    %v20 = vld [vmem:[%s1 + $0xc] sm:$0xf]
    %v21 = vld [vmem:[%s1 + $0x10] sm:$0xf]
    %v22 = vld [vmem:[%s1 + $0x14] sm:$0xf]
    %v23 = vld [vmem:[%s1 + $0x18] sm:$0xf]
    %v24 = vld [vmem:[%s1 + $0x1c] sm:$0xf]
    %v25 = vld [vmem:[%s1 + $0x20] sm:$0xf]
    %v26 = vld [vmem:[%s1 + $0x24] sm:$0xf]
    %v27 = vld [vmem:[%s1 + $0x28] sm:$0xf]
    %v28 = vld [vmem:[%s1 + $0x2c] sm:$0xf]
    %v29 = vld [vmem:[%s1 + $0x30] sm:$0xf]
    %v30 = vld [vmem:[%s1 + $0x34] sm:$0xf]
    %v31 = vld [vmem:[%s1 + $0x38] sm:$0xf]
    %v32 = vld [vmem:[%s1 + $0x3c] sm:$0xf]
    %v33 = vld [vmem:[%s2] sm:$0x1]
    %v35 = vlaneseq
    %v36 = vshrl.u32 %v35, 7
    %v37 = vsub.s32 0, %v36
    %v38 = vrot.slane %v33, %v37
    %v56 = vunpack.c.l.b16 %v17
    %v57 = vunpack.c.l.b16 %v18
    %v58 = vunpack.c.l.b16 %v19
    %v59 = vunpack.c.l.b16 %v20
    %v60 = vunpack.c.l.b16 %v21
    %v61 = vunpack.c.l.b16 %v22
    %v62 = vunpack.c.l.b16 %v23
    %v63 = vunpack.c.l.b16 %v24
    %v64 = vunpack.c.l.b16 %v25
    %v65 = vunpack.c.l.b16 %v26
    %v66 = vunpack.c.l.b16 %v27
    %v67 = vunpack.c.l.b16 %v28
    %v68 = vunpack.c.l.b16 %v29
    %v69 = vunpack.c.l.b16 %v30
    %v70 = vunpack.c.l.b16 %v31
    %v71 = vunpack.c.l.b16 %v32
    %v72 = vpack.c.b16 %v57, %v56
    %v73 = vpack.c.b16 %v59, %v58
    %v74 = vpack.c.b16 %v61, %v60
    %v75 = vpack.c.b16 %v63, %v62
    %v76 = vpack.c.b16 %v65, %v64
    %v77 = vpack.c.b16 %v67, %v66
    %v78 = vpack.c.b16 %v69, %v68
    %v79 = vpack.c.b16 %v71, %v70
    %88 = vmatprep.subr.bf16.mxu0 0
    %89 = vmatpush1.bf16.msra.mxu0 %v72
    %90 = vmatprep.subr.bf16.mxu0 0
    %91 = vmatpush1.bf16.msra.mxu0 %v73
    %92 = vmatprep.subr.bf16.mxu0 0
    %93 = vmatpush1.bf16.msra.mxu0 %v74
    %94 = vmatprep.subr.bf16.mxu0 0
    %95 = vmatpush1.bf16.msra.mxu0 %v75
    %96 = vmatprep.subr.bf16.mxu0 0
    %97 = vmatpush1.bf16.msra.mxu0 %v76
    %98 = vmatprep.subr.bf16.mxu0 0
    %99 = vmatpush1.bf16.msra.mxu0 %v77
    %100 = vmatprep.subr.bf16.mxu0 0
    %101 = vmatpush1.bf16.msra.mxu0 %v78
    %102 = vmatprep.subr.bf16.mxu0 0
    %103 = vmatpush1.bf16.msra.mxu0 %v79
    %104 = vmatprep.subr.bf16.mxu0 0
    %105 = vmatpush1.bf16.msra.mxu0 0
    %106 = vmatprep.subr.bf16.mxu0 0
    %107 = vmatpush1.bf16.msra.mxu0 0
    %108 = vmatprep.subr.bf16.mxu0 0
    %109 = vmatpush1.bf16.msra.mxu0 0
    %110 = vmatprep.subr.bf16.mxu0 0
    %111 = vmatpush1.bf16.msra.mxu0 0
    %112 = vmatprep.subr.bf16.mxu0 0
    %113 = vmatpush1.bf16.msra.mxu0 0
    %114 = vmatprep.subr.bf16.mxu0 0
    %115 = vmatpush1.bf16.msra.mxu0 0
    %116 = vmatprep.subr.bf16.mxu0 0
    %117 = vmatpush1.bf16.msra.mxu0 0
    %118 = vmatprep.subr.bf16.mxu0 0
    %119 = vmatpush1.bf16.msra.mxu0 0
    %120 = vmatprep.mubr.bf16.mxu0 0
    %121 = vmatmul.mubr.bf16.gmra.mrb[0].mxu0 %v16
    %v122 = vpop.f32.mrb[0].mxu0
    %v123 = vadd.f32 %v38, %v122
    %v124 = vpop.f32.mrb[0].mxu0
    %v125 = vpop.f32.mrb[0].mxu0
    %v126 = vpop.f32.mrb[0].mxu0
    %127 = vdwg.mxu0
    %vm128 = vcmask 74752
    %129 = vst.msk [vmem:[#allocation2] sm:$0x3] %vm128, %v123
    // Predicated region
    $region14: #{factorized_encoder_forward.7} parent=1 // pred_check
      _
    $region15: #{factorized_encoder_forward.7} parent=1 // pred_check_branch
      %131 = sbr.rel (0) target = $region17
    $region16: #{factorized_encoder_forward.7} parent=1 // pred_region
      %s133 = ssub.s32 32, 32
      %134 = vsyncadd [#allocation3], %s133
      %s136 = sshll.u32 [#allocation2], 4
      %s137 = int_to_ptr.vmem [resolvable:$true] %s136
      %139 = dma.vmem_to_hbm [thread:$0]  %s137, 32, %s3, [#allocation3]
    $region17: #{factorized_encoder_forward.7} parent=1 // pred_fallthru
      _
    // Predicated region
    $region18: #{factorized_encoder_forward.7} parent=1 // pred_check
      _
    $region19: #{factorized_encoder_forward.7} parent=1 // pred_check_branch
      %141 = sbr.rel (0) target = $region21
    $region20: #{factorized_encoder_forward.7} parent=1 // pred_region
      %142 = dma.done [#allocation3], 32
    $region21: #{factorized_encoder_forward.7} parent=1 // pred_fallthru
      _
    %143 = vsyncpa [#allocation3], 1

// kernel: factorized_encoder_forward.5
$region0: #{factorized_encoder_forward.5}
  #allocation0 [shape = 'u32[]', space=smem, size = 0x4, offset = 0x4, fixed_abs, tag = 'smem constant byte address 0x4 - core index']
  #allocation1 [shape = 'u32[144,128]{1,0:T(1,128)}', space=vmem, size = 0x12000, scoped, tag = 'internal scratch']
  %s0 = inlined_call_operand.hbm [shape: f32[4,17,128], index: 0, kind: input, shape index: {}]
  %s1 = inlined_call_operand.hbm [shape: f32[2,1,128], index: 1, kind: input, shape index: {}]
  %s2 = inlined_call_operand.hbm [shape: f32[2,1,128], index: 2, kind: input, shape index: {}]
  %s3 = inlined_call_operand.hbm [shape: bf16[2,128,128], index: 3, kind: input, shape index: {}]
  %s4 = inlined_call_operand.hbm [shape: f32[2,1,128], index: 4, kind: input, shape index: {}]
  %s5 = inlined_call_operand.hbm [shape: bf16[2,128,128], index: 5, kind: input, shape index: {}]
  %s6 = inlined_call_operand.hbm [shape: f32[2,1,128], index: 6, kind: input, shape index: {}]
  %s7 = inlined_call_operand.hbm [shape: bf16[2,128,128], index: 7, kind: input, shape index: {}]
  %s8 = inlined_call_operand.hbm [shape: f32[2,1,128], index: 8, kind: input, shape index: {}]
  %s9 = inlined_call_operand.hbm [shape: bf16[2,128,128], index: 9, kind: input, shape index: {}]
  %s10 = inlined_call_operand.hbm [shape: f32[2,1,128], index: 10, kind: input, shape index: {}]
  %s11 = inlined_call_operand.hbm [shape: f32[2,1,128], index: 11, kind: input, shape index: {}]
  %s12 = inlined_call_operand.hbm [shape: f32[2,1,128], index: 12, kind: input, shape index: {}]
  %s13 = inlined_call_operand.hbm [shape: bf16[2,128,512], index: 13, kind: input, shape index: {}]
  %s14 = inlined_call_operand.hbm [shape: f32[2,1,512], index: 14, kind: input, shape index: {}]
  %s15 = inlined_call_operand.hbm [shape: bf16[2,512,128], index: 15, kind: input, shape index: {}]
  %s16 = inlined_call_operand.hbm [shape: f32[2,1,128], index: 16, kind: input, shape index: {}]
  %s17 = inlined_call_operand.hbm [shape: f32[1,128], index: 17, kind: input, shape index: {}]
  %s18 = inlined_call_operand.hbm [shape: f32[1,128], index: 18, kind: input, shape index: {}]
  %s19 = inlined_call_operand.hbm [shape: f32[4,17,128], index: 19, kind: output, shape index: {}]
  %s20 = sld [smem:[#allocation0]]
  $region197: #{factorized_encoder_forward.5} parent=0
    _
  %s22 = ssub.s32 1, %s20
  %s23 = scalar_select 0, %s22, %s20
  $region1: #{factorized_encoder_forward.5} parent=0
    #allocation2 [shape = 'u8[24576]{0}', space=vmem, size = 0x6000, scoped, tag = 'input window, operand 0']
    #allocation3 [shape = 's32[2]{0}', space=sflag, size = 0x8, scoped, tag = 'scoped memory for factorized_encoder_forward.5']
    #allocation4 [shape = 's32[2]{0}', space=sflag, size = 0x8, scoped, tag = 'scoped memory for factorized_encoder_forward.5']
    #allocation5 [shape = 'u8[1024]{0}', space=vmem, size = 0x400, scoped, tag = 'input window, operand 1']
    #allocation6 [shape = 's32[2]{0}', space=sflag, size = 0x8, scoped, tag = 'scoped memory for factorized_encoder_forward.5']
    #allocation7 [shape = 'u8[1024]{0}', space=vmem, size = 0x400, scoped, tag = 'input window, operand 2']
    #allocation8 [shape = 'u8[65536]{0}', space=vmem, size = 0x10000, scoped, tag = 'input window, operand 3']
    #allocation9 [shape = 's32[2]{0}', space=sflag, size = 0x8, scoped, tag = 'scoped memory for factorized_encoder_forward.5']
    #allocation10 [shape = 'u8[1024]{0}', space=vmem, size = 0x400, scoped, tag = 'input window, operand 4']
    #allocation11 [shape = 'u8[65536]{0}', space=vmem, size = 0x10000, scoped, tag = 'input window, operand 5']
    #allocation12 [shape = 's32[2]{0}', space=sflag, size = 0x8, scoped, tag = 'scoped memory for factorized_encoder_forward.5']
    #allocation13 [shape = 'u8[1024]{0}', space=vmem, size = 0x400, scoped, tag = 'input window, operand 6']
    #allocation14 [shape = 'u8[65536]{0}', space=vmem, size = 0x10000, scoped, tag = 'input window, operand 7']
    #allocation15 [shape = 's32[2]{0}', space=sflag, size = 0x8, scoped, tag = 'scoped memory for factorized_encoder_forward.5']
    #allocation16 [shape = 'u8[1024]{0}', space=vmem, size = 0x400, scoped, tag = 'input window, operand 8']
    #allocation17 [shape = 'u8[65536]{0}', space=vmem, size = 0x10000, scoped, tag = 'input window, operand 9']
    #allocation18 [shape = 's32[2]{0}', space=sflag, size = 0x8, scoped, tag = 'scoped memory for factorized_encoder_forward.5']
    #allocation19 [shape = 'u8[1024]{0}', space=vmem, size = 0x400, scoped, tag = 'input window, operand 10']
    #allocation20 [shape = 'u8[1024]{0}', space=vmem, size = 0x400, scoped, tag = 'input window, operand 11']
    #allocation21 [shape = 's32[2]{0}', space=sflag, size = 0x8, scoped, tag = 'scoped memory for factorized_encoder_forward.5']
    #allocation22 [shape = 'u8[1024]{0}', space=vmem, size = 0x400, scoped, tag = 'input window, operand 12']
    #allocation23 [shape = 'u8[262144]{0}', space=vmem, size = 0x40000, scoped, tag = 'input window, operand 13']
    #allocation24 [shape = 's32[2]{0}', space=sflag, size = 0x8, scoped, tag = 'scoped memory for factorized_encoder_forward.5']
    #allocation25 [shape = 'u8[4096]{0}', space=vmem, size = 0x1000, scoped, tag = 'input window, operand 14']
    #allocation26 [shape = 'u8[262144]{0}', space=vmem, size = 0x40000, scoped, tag = 'input window, operand 15']
    #allocation27 [shape = 's32[2]{0}', space=sflag, size = 0x8, scoped, tag = 'scoped memory for factorized_encoder_forward.5']
    #allocation28 [shape = 'u8[1024]{0}', space=vmem, size = 0x400, scoped, tag = 'input window, operand 16']
    #allocation29 [shape = 'u8[512]{0}', space=vmem, size = 0x400, scoped, tag = 'input window, operand 17, single buffered']
    #allocation30 [shape = 's32[1]{0}', space=sflag, size = 0x4, scoped, tag = 'scoped memory for factorized_encoder_forward.5']
    #allocation31 [shape = 'u8[512]{0}', space=vmem, size = 0x400, scoped, tag = 'input window, operand 18, single buffered']
    #allocation32 [shape = 'u8[24576]{0}', space=vmem, size = 0x6000, scoped, tag = 'output window, operand 0']
    %24 = vsyncpa [#allocation3], 0
    %s25 = scalar_lea.sflag [#allocation3], 1
    %26 = vsyncpa %s25, 0
    %27 = vsyncpa [#allocation6], 0
    %s28 = scalar_lea.sflag [#allocation6], 1
    %29 = vsyncpa %s28, 0
    %30 = vsyncpa [#allocation9], 0
    %s31 = scalar_lea.sflag [#allocation9], 1
    %32 = vsyncpa %s31, 0
    %33 = vsyncpa [#allocation12], 0
    %s34 = scalar_lea.sflag [#allocation12], 1
    %35 = vsyncpa %s34, 0
    %36 = vsyncpa [#allocation15], 0
    %s37 = scalar_lea.sflag [#allocation15], 1
    %38 = vsyncpa %s37, 0
    %39 = vsyncpa [#allocation18], 0
    %s40 = scalar_lea.sflag [#allocation18], 1
    %41 = vsyncpa %s40, 0
    %42 = vsyncpa [#allocation21], 0
    %s43 = scalar_lea.sflag [#allocation21], 1
    %44 = vsyncpa %s43, 0
    %45 = vsyncpa [#allocation24], 0
    %s46 = scalar_lea.sflag [#allocation24], 1
    %47 = vsyncpa %s46, 0
    %48 = vsyncpa [#allocation27], 0
    %s49 = scalar_lea.sflag [#allocation27], 1
    %50 = vsyncpa %s49, 0
    %51 = vsyncpa [#allocation30], 0
    %52 = vsyncpa [#allocation4], 0
    %s53 = scalar_lea.sflag [#allocation4], 1
    %54 = vsyncpa %s53, 0
    loop: start=0, step=1, limit=10
    $region2: #{factorized_encoder_forward.5} parent=1 // loop_pre_header
      _
    $region3: #{factorized_encoder_forward.5} parent=1 // loop_header
      %s56 = sphi 0, %s60
      %p57 = scmp.ge.s32.totalorder %s56, 10
      %s63 = sphi 0, %s75
      %s64 = sphi 0, %s71
      %s65 = sphi 0, %s63
      %s66 = sphi 0, %s64
      %s67 = sphi 0, %s65
      %s68 = sphi 0, %s66
      %s78 = sphi 0, %s80
      %s81 = sphi 0, %s78
      %s82 = sphi 0, %s81
      %s98 = sphi 0, %s82
      %s104 = sphi 0, %s106
      %s107 = sphi 0, %s104
      %s108 = sphi 0, %s107
      %s124 = sphi 0, %s108
      %s130 = sphi 0, %s132
      %s133 = sphi 0, %s130
      %s134 = sphi 0, %s133
      %s150 = sphi 0, %s134
      %s156 = sphi 0, %s158
      %s159 = sphi 0, %s156
      %s160 = sphi 0, %s159
      %s176 = sphi 0, %s160
      %s182 = sphi 0, %s184
      %s185 = sphi 0, %s182
      %s186 = sphi 0, %s185
      %s202 = sphi 0, %s186
      %s208 = sphi 0, %s210
      %s211 = sphi 0, %s208
      %s212 = sphi 0, %s211
      %s228 = sphi 0, %s212
      %s234 = sphi 0, %s236
      %s237 = sphi 0, %s234
      %s238 = sphi 0, %s237
      %s254 = sphi 0, %s238
      %s260 = sphi 0, %s262
      %s263 = sphi 0, %s260
      %s264 = sphi 0, %s263
      %s280 = sphi 0, %s264
      %s286 = sphi 0, %s288
      %s289 = sphi 0, %s286
      %s290 = sphi 0, %s289
      %s306 = sphi 0, %s290
      %s312 = sphi 0, %s314
      %s315 = sphi 0, %s312
      %s316 = sphi 0, %s315
      %s332 = sphi 0, %s316
      %s338 = sphi 0, %s340
      %s341 = sphi 0, %s338
      %s342 = sphi 0, %s341
      %s358 = sphi 0, %s342
      %s364 = sphi 0, %s366
      %s367 = sphi 0, %s364
      %s368 = sphi 0, %s367
      %s384 = sphi 0, %s368
      %s390 = sphi 0, %s392
      %s393 = sphi 0, %s390
      %s394 = sphi 0, %s393
      %s410 = sphi 0, %s394
      %s416 = sphi 0, %s418
      %s419 = sphi 0, %s416
      %s420 = sphi 0, %s419
      %s436 = sphi 0, %s420
      %s442 = sphi 0, %s444
      %s445 = sphi 0, %s442
      %s446 = sphi 0, %s445
      %s462 = sphi 0, %s446
      %s468 = sphi 0, %s470
      %s471 = sphi 0, %s468
      %s472 = sphi 0, %s471
      %s488 = sphi 0, %s472
      %s494 = sphi 0, %s496
      %s497 = sphi 0, %s494
      %s498 = sphi 0, %s497
      %s514 = sphi 0, %s498
      %s518 = sphi 0, %s518
      %s520 = sphi 0, %s518
      %s521 = sphi 0, %s520
      %s535 = sphi 0, %s521
      %s539 = sphi 0, %s539
      %s541 = sphi 0, %s539
      %s542 = sphi 0, %s541
      %s556 = sphi 0, %s542
      %s562 = sphi 0, %s564
      %s565 = sphi 0, %s562
      %s566 = sphi 0, %s565
      %s582 = sphi 0, %s566
    $region4: #{factorized_encoder_forward.5} parent=1 // loop_header_branch
      %59 = sbr.rel (%p57) target = $region8
    $region5: #{factorized_encoder_forward.5} parent=1 // loop_body
      %s61 = ssub.s32 %s56, 1
      %s62 = ssub.s32 %s56, 2
      %s69 = sadd.s32 1, %s64
      %p70 = scmp.ge.s32.totalorder %s69, 2
      %s71 = scalar_select %p70, 0, %s69
      %s72 = sadd.s32 1, %s63
      %s73 = scalar_select %p70, %s72, %s63
      %p74 = scmp.ge.s32.totalorder %s73, 4
      %s75 = scalar_select %p74, 0, %s73
      %s76 = ssub.s32 %s63, %s75
      %p77 = scmp.eq.s32.totalorder %s76, 0
      %s79 = sadd.s32 %s78, 1
      %s80 = scalar_select %p77, %s78, %s79
      %p83 = pneg %p77
      %p84 = scmp.eq.s32.totalorder %s56, 7
      %p85 = por %p83, %p84
      %p86 = scmp.ne.s32.totalorder %s78, %s81
      %p87 = scmp.eq.s32.totalorder %s56, 0
      %p88 = por %p86, %p87
      %p89 = scmp.ne.s32.totalorder %s78, %s81
      %p90 = scmp.eq.s32.totalorder %s61, 7
      %p91 = por %p89, %p90
      %p92 = scmp.ne.s32.totalorder %s81, %s82
      %p93 = scmp.eq.s32.totalorder %s61, 0
      %p94 = por %p92, %p93
      %p95 = scmp.ne.s32.totalorder %s81, %s82
      %p96 = scmp.eq.s32.totalorder %s62, 7
      %p97 = por %p95, %p96
      %p99 = scmp.ne.s32.totalorder %s82, %s98
      %p100 = scmp.eq.s32.totalorder %s62, 0
      %p101 = por %p99, %p100
      %s102 = ssub.s32 %s64, %s71
      %p103 = scmp.eq.s32.totalorder %s102, 0
      %s105 = sadd.s32 %s104, 1
      %s106 = scalar_select %p103, %s104, %s105
      %p109 = pneg %p103
      %p110 = scmp.eq.s32.totalorder %s56, 7
      %p111 = por %p109, %p110
      %p112 = scmp.ne.s32.totalorder %s104, %s107
      %p113 = scmp.eq.s32.totalorder %s56, 0
      %p114 = por %p112, %p113
      %p115 = scmp.ne.s32.totalorder %s104, %s107
      %p116 = scmp.eq.s32.totalorder %s61, 7
      %p117 = por %p115, %p116
      %p118 = scmp.ne.s32.totalorder %s107, %s108
      %p119 = scmp.eq.s32.totalorder %s61, 0
      %p120 = por %p118, %p119
      %p121 = scmp.ne.s32.totalorder %s107, %s108
      %p122 = scmp.eq.s32.totalorder %s62, 7
      %p123 = por %p121, %p122
      %p125 = scmp.ne.s32.totalorder %s108, %s124
      %p126 = scmp.eq.s32.totalorder %s62, 0
      %p127 = por %p125, %p126
      %s128 = ssub.s32 %s64, %s71
      %p129 = scmp.eq.s32.totalorder %s128, 0
      %s131 = sadd.s32 %s130, 1
      %s132 = scalar_select %p129, %s130, %s131
      %p135 = pneg %p129
      %p136 = scmp.eq.s32.totalorder %s56, 7
      %p137 = por %p135, %p136
      %p138 = scmp.ne.s32.totalorder %s130, %s133
      %p139 = scmp.eq.s32.totalorder %s56, 0
      %p140 = por %p138, %p139
      %p141 = scmp.ne.s32.totalorder %s130, %s133
      %p142 = scmp.eq.s32.totalorder %s61, 7
      %p143 = por %p141, %p142
      %p144 = scmp.ne.s32.totalorder %s133, %s134
      %p145 = scmp.eq.s32.totalorder %s61, 0
      %p146 = por %p144, %p145
      %p147 = scmp.ne.s32.totalorder %s133, %s134
      %p148 = scmp.eq.s32.totalorder %s62, 7
      %p149 = por %p147, %p148
      %p151 = scmp.ne.s32.totalorder %s134, %s150
      %p152 = scmp.eq.s32.totalorder %s62, 0
      %p153 = por %p151, %p152
      %s154 = ssub.s32 %s64, %s71
      %p155 = scmp.eq.s32.totalorder %s154, 0
      %s157 = sadd.s32 %s156, 1
      %s158 = scalar_select %p155, %s156, %s157
      %p161 = pneg %p155
      %p162 = scmp.eq.s32.totalorder %s56, 7
      %p163 = por %p161, %p162
      %p164 = scmp.ne.s32.totalorder %s156, %s159
      %p165 = scmp.eq.s32.totalorder %s56, 0
      %p166 = por %p164, %p165
      %p167 = scmp.ne.s32.totalorder %s156, %s159
      %p168 = scmp.eq.s32.totalorder %s61, 7
      %p169 = por %p167, %p168
      %p170 = scmp.ne.s32.totalorder %s159, %s160
      %p171 = scmp.eq.s32.totalorder %s61, 0
      %p172 = por %p170, %p171
      %p173 = scmp.ne.s32.totalorder %s159, %s160
      %p174 = scmp.eq.s32.totalorder %s62, 7
      %p175 = por %p173, %p174
      %p177 = scmp.ne.s32.totalorder %s160, %s176
      %p178 = scmp.eq.s32.totalorder %s62, 0
      %p179 = por %p177, %p178
      %s180 = ssub.s32 %s64, %s71
      %p181 = scmp.eq.s32.totalorder %s180, 0
      %s183 = sadd.s32 %s182, 1
      %s184 = scalar_select %p181, %s182, %s183
      %p187 = pneg %p181
      %p188 = scmp.eq.s32.totalorder %s56, 7
      %p189 = por %p187, %p188
      %p190 = scmp.ne.s32.totalorder %s182, %s185
      %p191 = scmp.eq.s32.totalorder %s56, 0
      %p192 = por %p190, %p191
      %p193 = scmp.ne.s32.totalorder %s182, %s185
      %p194 = scmp.eq.s32.totalorder %s61, 7
      %p195 = por %p193, %p194
      %p196 = scmp.ne.s32.totalorder %s185, %s186
      %p197 = scmp.eq.s32.totalorder %s61, 0
      %p198 = por %p196, %p197
      %p199 = scmp.ne.s32.totalorder %s185, %s186
      %p200 = scmp.eq.s32.totalorder %s62, 7
      %p201 = por %p199, %p200
      %p203 = scmp.ne.s32.totalorder %s186, %s202
      %p204 = scmp.eq.s32.totalorder %s62, 0
      %p205 = por %p203, %p204
      %s206 = ssub.s32 %s64, %s71
      %p207 = scmp.eq.s32.totalorder %s206, 0
      %s209 = sadd.s32 %s208, 1
      %s210 = scalar_select %p207, %s208, %s209
      %p213 = pneg %p207
      %p214 = scmp.eq.s32.totalorder %s56, 7
      %p215 = por %p213, %p214
      %p216 = scmp.ne.s32.totalorder %s208, %s211
      %p217 = scmp.eq.s32.totalorder %s56, 0
      %p218 = por %p216, %p217
      %p219 = scmp.ne.s32.totalorder %s208, %s211
      %p220 = scmp.eq.s32.totalorder %s61, 7
      %p221 = por %p219, %p220
      %p222 = scmp.ne.s32.totalorder %s211, %s212
      %p223 = scmp.eq.s32.totalorder %s61, 0
      %p224 = por %p222, %p223
      %p225 = scmp.ne.s32.totalorder %s211, %s212
      %p226 = scmp.eq.s32.totalorder %s62, 7
      %p227 = por %p225, %p226
      %p229 = scmp.ne.s32.totalorder %s212, %s228
      %p230 = scmp.eq.s32.totalorder %s62, 0
      %p231 = por %p229, %p230
      %s232 = ssub.s32 %s64, %s71
      %p233 = scmp.eq.s32.totalorder %s232, 0
      %s235 = sadd.s32 %s234, 1
      %s236 = scalar_select %p233, %s234, %s235
      %p239 = pneg %p233
      %p240 = scmp.eq.s32.totalorder %s56, 7
      %p241 = por %p239, %p240
      %p242 = scmp.ne.s32.totalorder %s234, %s237
      %p243 = scmp.eq.s32.totalorder %s56, 0
      %p244 = por %p242, %p243
      %p245 = scmp.ne.s32.totalorder %s234, %s237
      %p246 = scmp.eq.s32.totalorder %s61, 7
      %p247 = por %p245, %p246
      %p248 = scmp.ne.s32.totalorder %s237, %s238
      %p249 = scmp.eq.s32.totalorder %s61, 0
      %p250 = por %p248, %p249
      %p251 = scmp.ne.s32.totalorder %s237, %s238
      %p252 = scmp.eq.s32.totalorder %s62, 7
      %p253 = por %p251, %p252
      %p255 = scmp.ne.s32.totalorder %s238, %s254
      %p256 = scmp.eq.s32.totalorder %s62, 0
      %p257 = por %p255, %p256
      %s258 = ssub.s32 %s64, %s71
      %p259 = scmp.eq.s32.totalorder %s258, 0
      %s261 = sadd.s32 %s260, 1
      %s262 = scalar_select %p259, %s260, %s261
      %p265 = pneg %p259
      %p266 = scmp.eq.s32.totalorder %s56, 7
      %p267 = por %p265, %p266
      %p268 = scmp.ne.s32.totalorder %s260, %s263
      %p269 = scmp.eq.s32.totalorder %s56, 0
      %p270 = por %p268, %p269
      %p271 = scmp.ne.s32.totalorder %s260, %s263
      %p272 = scmp.eq.s32.totalorder %s61, 7
      %p273 = por %p271, %p272
      %p274 = scmp.ne.s32.totalorder %s263, %s264
      %p275 = scmp.eq.s32.totalorder %s61, 0
      %p276 = por %p274, %p275
      %p277 = scmp.ne.s32.totalorder %s263, %s264
      %p278 = scmp.eq.s32.totalorder %s62, 7
      %p279 = por %p277, %p278
      %p281 = scmp.ne.s32.totalorder %s264, %s280
      %p282 = scmp.eq.s32.totalorder %s62, 0
      %p283 = por %p281, %p282
      %s284 = ssub.s32 %s64, %s71
      %p285 = scmp.eq.s32.totalorder %s284, 0
      %s287 = sadd.s32 %s286, 1
      %s288 = scalar_select %p285, %s286, %s287
      %p291 = pneg %p285
      %p292 = scmp.eq.s32.totalorder %s56, 7
      %p293 = por %p291, %p292
      %p294 = scmp.ne.s32.totalorder %s286, %s289
      %p295 = scmp.eq.s32.totalorder %s56, 0
      %p296 = por %p294, %p295
      %p297 = scmp.ne.s32.totalorder %s286, %s289
      %p298 = scmp.eq.s32.totalorder %s61, 7
      %p299 = por %p297, %p298
      %p300 = scmp.ne.s32.totalorder %s289, %s290
      %p301 = scmp.eq.s32.totalorder %s61, 0
      %p302 = por %p300, %p301
      %p303 = scmp.ne.s32.totalorder %s289, %s290
      %p304 = scmp.eq.s32.totalorder %s62, 7
      %p305 = por %p303, %p304
      %p307 = scmp.ne.s32.totalorder %s290, %s306
      %p308 = scmp.eq.s32.totalorder %s62, 0
      %p309 = por %p307, %p308
      %s310 = ssub.s32 %s64, %s71
      %p311 = scmp.eq.s32.totalorder %s310, 0
      %s313 = sadd.s32 %s312, 1
      %s314 = scalar_select %p311, %s312, %s313
      %p317 = pneg %p311
      %p318 = scmp.eq.s32.totalorder %s56, 7
      %p319 = por %p317, %p318
      %p320 = scmp.ne.s32.totalorder %s312, %s315
      %p321 = scmp.eq.s32.totalorder %s56, 0
      %p322 = por %p320, %p321
      %p323 = scmp.ne.s32.totalorder %s312, %s315
      %p324 = scmp.eq.s32.totalorder %s61, 7
      %p325 = por %p323, %p324
      %p326 = scmp.ne.s32.totalorder %s315, %s316
      %p327 = scmp.eq.s32.totalorder %s61, 0
      %p328 = por %p326, %p327
      %p329 = scmp.ne.s32.totalorder %s315, %s316
      %p330 = scmp.eq.s32.totalorder %s62, 7
      %p331 = por %p329, %p330
      %p333 = scmp.ne.s32.totalorder %s316, %s332
      %p334 = scmp.eq.s32.totalorder %s62, 0
      %p335 = por %p333, %p334
      %s336 = ssub.s32 %s64, %s71
      %p337 = scmp.eq.s32.totalorder %s336, 0
      %s339 = sadd.s32 %s338, 1
      %s340 = scalar_select %p337, %s338, %s339
      %p343 = pneg %p337
      %p344 = scmp.eq.s32.totalorder %s56, 7
      %p345 = por %p343, %p344
      %p346 = scmp.ne.s32.totalorder %s338, %s341
      %p347 = scmp.eq.s32.totalorder %s56, 0
      %p348 = por %p346, %p347
      %p349 = scmp.ne.s32.totalorder %s338, %s341
      %p350 = scmp.eq.s32.totalorder %s61, 7
      %p351 = por %p349, %p350
      %p352 = scmp.ne.s32.totalorder %s341, %s342
      %p353 = scmp.eq.s32.totalorder %s61, 0
      %p354 = por %p352, %p353
      %p355 = scmp.ne.s32.totalorder %s341, %s342
      %p356 = scmp.eq.s32.totalorder %s62, 7
      %p357 = por %p355, %p356
      %p359 = scmp.ne.s32.totalorder %s342, %s358
      %p360 = scmp.eq.s32.totalorder %s62, 0
      %p361 = por %p359, %p360
      %s362 = ssub.s32 %s64, %s71
      %p363 = scmp.eq.s32.totalorder %s362, 0
      %s365 = sadd.s32 %s364, 1
      %s366 = scalar_select %p363, %s364, %s365
      %p369 = pneg %p363
      %p370 = scmp.eq.s32.totalorder %s56, 7
      %p371 = por %p369, %p370
      %p372 = scmp.ne.s32.totalorder %s364, %s367
      %p373 = scmp.eq.s32.totalorder %s56, 0
      %p374 = por %p372, %p373
      %p375 = scmp.ne.s32.totalorder %s364, %s367
      %p376 = scmp.eq.s32.totalorder %s61, 7
      %p377 = por %p375, %p376
      %p378 = scmp.ne.s32.totalorder %s367, %s368
      %p379 = scmp.eq.s32.totalorder %s61, 0
      %p380 = por %p378, %p379
      %p381 = scmp.ne.s32.totalorder %s367, %s368
      %p382 = scmp.eq.s32.totalorder %s62, 7
      %p383 = por %p381, %p382
      %p385 = scmp.ne.s32.totalorder %s368, %s384
      %p386 = scmp.eq.s32.totalorder %s62, 0
      %p387 = por %p385, %p386
      %s388 = ssub.s32 %s64, %s71
      %p389 = scmp.eq.s32.totalorder %s388, 0
      %s391 = sadd.s32 %s390, 1
      %s392 = scalar_select %p389, %s390, %s391
      %p395 = pneg %p389
      %p396 = scmp.eq.s32.totalorder %s56, 7
      %p397 = por %p395, %p396
      %p398 = scmp.ne.s32.totalorder %s390, %s393
      %p399 = scmp.eq.s32.totalorder %s56, 0
      %p400 = por %p398, %p399
      %p401 = scmp.ne.s32.totalorder %s390, %s393
      %p402 = scmp.eq.s32.totalorder %s61, 7
      %p403 = por %p401, %p402
      %p404 = scmp.ne.s32.totalorder %s393, %s394
      %p405 = scmp.eq.s32.totalorder %s61, 0
      %p406 = por %p404, %p405
      %p407 = scmp.ne.s32.totalorder %s393, %s394
      %p408 = scmp.eq.s32.totalorder %s62, 7
      %p409 = por %p407, %p408
      %p411 = scmp.ne.s32.totalorder %s394, %s410
      %p412 = scmp.eq.s32.totalorder %s62, 0
      %p413 = por %p411, %p412
      %s414 = ssub.s32 %s64, %s71
      %p415 = scmp.eq.s32.totalorder %s414, 0
      %s417 = sadd.s32 %s416, 1
      %s418 = scalar_select %p415, %s416, %s417
      %p421 = pneg %p415
      %p422 = scmp.eq.s32.totalorder %s56, 7
      %p423 = por %p421, %p422
      %p424 = scmp.ne.s32.totalorder %s416, %s419
      %p425 = scmp.eq.s32.totalorder %s56, 0
      %p426 = por %p424, %p425
      %p427 = scmp.ne.s32.totalorder %s416, %s419
      %p428 = scmp.eq.s32.totalorder %s61, 7
      %p429 = por %p427, %p428
      %p430 = scmp.ne.s32.totalorder %s419, %s420
      %p431 = scmp.eq.s32.totalorder %s61, 0
      %p432 = por %p430, %p431
      %p433 = scmp.ne.s32.totalorder %s419, %s420
      %p434 = scmp.eq.s32.totalorder %s62, 7
      %p435 = por %p433, %p434
      %p437 = scmp.ne.s32.totalorder %s420, %s436
      %p438 = scmp.eq.s32.totalorder %s62, 0
      %p439 = por %p437, %p438
      %s440 = ssub.s32 %s64, %s71
      %p441 = scmp.eq.s32.totalorder %s440, 0
      %s443 = sadd.s32 %s442, 1
      %s444 = scalar_select %p441, %s442, %s443
      %p447 = pneg %p441
      %p448 = scmp.eq.s32.totalorder %s56, 7
      %p449 = por %p447, %p448
      %p450 = scmp.ne.s32.totalorder %s442, %s445
      %p451 = scmp.eq.s32.totalorder %s56, 0
      %p452 = por %p450, %p451
      %p453 = scmp.ne.s32.totalorder %s442, %s445
      %p454 = scmp.eq.s32.totalorder %s61, 7
      %p455 = por %p453, %p454
      %p456 = scmp.ne.s32.totalorder %s445, %s446
      %p457 = scmp.eq.s32.totalorder %s61, 0
      %p458 = por %p456, %p457
      %p459 = scmp.ne.s32.totalorder %s445, %s446
      %p460 = scmp.eq.s32.totalorder %s62, 7
      %p461 = por %p459, %p460
      %p463 = scmp.ne.s32.totalorder %s446, %s462
      %p464 = scmp.eq.s32.totalorder %s62, 0
      %p465 = por %p463, %p464
      %s466 = ssub.s32 %s64, %s71
      %p467 = scmp.eq.s32.totalorder %s466, 0
      %s469 = sadd.s32 %s468, 1
      %s470 = scalar_select %p467, %s468, %s469
      %p473 = pneg %p467
      %p474 = scmp.eq.s32.totalorder %s56, 7
      %p475 = por %p473, %p474
      %p476 = scmp.ne.s32.totalorder %s468, %s471
      %p477 = scmp.eq.s32.totalorder %s56, 0
      %p478 = por %p476, %p477
      %p479 = scmp.ne.s32.totalorder %s468, %s471
      %p480 = scmp.eq.s32.totalorder %s61, 7
      %p481 = por %p479, %p480
      %p482 = scmp.ne.s32.totalorder %s471, %s472
      %p483 = scmp.eq.s32.totalorder %s61, 0
      %p484 = por %p482, %p483
      %p485 = scmp.ne.s32.totalorder %s471, %s472
      %p486 = scmp.eq.s32.totalorder %s62, 7
      %p487 = por %p485, %p486
      %p489 = scmp.ne.s32.totalorder %s472, %s488
      %p490 = scmp.eq.s32.totalorder %s62, 0
      %p491 = por %p489, %p490
      %s492 = ssub.s32 %s64, %s71
      %p493 = scmp.eq.s32.totalorder %s492, 0
      %s495 = sadd.s32 %s494, 1
      %s496 = scalar_select %p493, %s494, %s495
      %p499 = pneg %p493
      %p500 = scmp.eq.s32.totalorder %s56, 7
      %p501 = por %p499, %p500
      %p502 = scmp.ne.s32.totalorder %s494, %s497
      %p503 = scmp.eq.s32.totalorder %s56, 0
      %p504 = por %p502, %p503
      %p505 = scmp.ne.s32.totalorder %s494, %s497
      %p506 = scmp.eq.s32.totalorder %s61, 7
      %p507 = por %p505, %p506
      %p508 = scmp.ne.s32.totalorder %s497, %s498
      %p509 = scmp.eq.s32.totalorder %s61, 0
      %p510 = por %p508, %p509
      %p511 = scmp.ne.s32.totalorder %s497, %s498
      %p512 = scmp.eq.s32.totalorder %s62, 7
      %p513 = por %p511, %p512
      %p515 = scmp.ne.s32.totalorder %s498, %s514
      %p516 = scmp.eq.s32.totalorder %s62, 0
      %p517 = por %p515, %p516
      %s519 = sadd.s32 %s518, 1
      %p522 = scmp.eq.s32.totalorder %s56, 7
      %p523 = scmp.ne.s32.totalorder %s518, %s520
      %p524 = scmp.eq.s32.totalorder %s56, 0
      %p525 = por %p523, %p524
      %p526 = scmp.ne.s32.totalorder %s518, %s520
      %p527 = scmp.eq.s32.totalorder %s61, 7
      %p528 = por %p526, %p527
      %p529 = scmp.ne.s32.totalorder %s520, %s521
      %p530 = scmp.eq.s32.totalorder %s61, 0
      %p531 = por %p529, %p530
      %p532 = scmp.ne.s32.totalorder %s520, %s521
      %p533 = scmp.eq.s32.totalorder %s62, 7
      %p534 = por %p532, %p533
      %p536 = scmp.ne.s32.totalorder %s521, %s535
      %p537 = scmp.eq.s32.totalorder %s62, 0
      %p538 = por %p536, %p537
      %s540 = sadd.s32 %s539, 1
      %p543 = scmp.eq.s32.totalorder %s56, 7
      %p544 = scmp.ne.s32.totalorder %s539, %s541
      %p545 = scmp.eq.s32.totalorder %s56, 0
      %p546 = por %p544, %p545
      %p547 = scmp.ne.s32.totalorder %s539, %s541
      %p548 = scmp.eq.s32.totalorder %s61, 7
      %p549 = por %p547, %p548
      %p550 = scmp.ne.s32.totalorder %s541, %s542
      %p551 = scmp.eq.s32.totalorder %s61, 0
      %p552 = por %p550, %p551
      %p553 = scmp.ne.s32.totalorder %s541, %s542
      %p554 = scmp.eq.s32.totalorder %s62, 7
      %p555 = por %p553, %p554
      %p557 = scmp.ne.s32.totalorder %s542, %s556
      %p558 = scmp.eq.s32.totalorder %s62, 0
      %p559 = por %p557, %p558
      %s560 = ssub.s32 %s63, %s75
      %p561 = scmp.eq.s32.totalorder %s560, 0
      %s563 = sadd.s32 %s562, 1
      %s564 = scalar_select %p561, %s562, %s563
      %p567 = pneg %p561
      %p568 = scmp.eq.s32.totalorder %s56, 7
      %p569 = por %p567, %p568
      %p570 = scmp.ne.s32.totalorder %s562, %s565
      %p571 = scmp.eq.s32.totalorder %s56, 0
      %p572 = por %p570, %p571
      %p573 = scmp.ne.s32.totalorder %s562, %s565
      %p574 = scmp.eq.s32.totalorder %s61, 7
      %p575 = por %p573, %p574
      %p576 = scmp.ne.s32.totalorder %s565, %s566
      %p577 = scmp.eq.s32.totalorder %s61, 0
      %p578 = por %p576, %p577
      %p579 = scmp.ne.s32.totalorder %s565, %s566
      %p580 = scmp.eq.s32.totalorder %s62, 7
      %p581 = por %p579, %p580
      %p583 = scmp.ne.s32.totalorder %s566, %s582
      %p584 = scmp.eq.s32.totalorder %s62, 0
      %p585 = por %p583, %p584
      %p586 = scmp.le.s32.totalorder 1, %s56
      %p587 = scmp.lt.s32.totalorder %s56, 9
      %p588 = pnand %p586, %p587
      %p589 = pneg %p588
      // Predicated region
      $region9: #{factorized_encoder_forward.5} parent=5 // pred_check
        _
      $region10: #{factorized_encoder_forward.5} parent=5 // pred_check_branch
        %591 = sbr.rel (%p588) target = $region12
      $region11: #{factorized_encoder_forward.5} parent=5 // pred_region
        %s592 = ssub.s32 %s56, 1
        // Predicated region
        $region13: #{factorized_encoder_forward.5} parent=11 // pred_check
          %p593 = pneg %p531
        $region14: #{factorized_encoder_forward.5} parent=11 // pred_check_branch
          %595 = sbr.rel (%p593) target = $region16
        $region15: #{factorized_encoder_forward.5} parent=11 // pred_region
          %s597 = ssub.s32 16, 16
          %598 = vsyncadd [#allocation30], %s597
          %s600 = sshll.u32 [#allocation29], 4
          %s601 = int_to_ptr.vmem [resolvable:$true] %s600
          %603 = dma.hbm_to_vmem [thread:$0]  %s17, 16, %s601, [#allocation30]
        $region16: #{factorized_encoder_forward.5} parent=11 // pred_fallthru
          _
        // Predicated region
        $region17: #{factorized_encoder_forward.5} parent=11 // pred_check
          %p604 = pneg %p552
        $region18: #{factorized_encoder_forward.5} parent=11 // pred_check_branch
          %606 = sbr.rel (%p604) target = $region20
        $region19: #{factorized_encoder_forward.5} parent=11 // pred_region
          %s608 = ssub.s32 16, 16
          %609 = vsyncadd [#allocation30], %s608
          %s611 = sshll.u32 [#allocation31], 4
          %s612 = int_to_ptr.vmem [resolvable:$true] %s611
          %614 = dma.hbm_to_vmem [thread:$0]  %s18, 16, %s612, [#allocation30]
        $region20: #{factorized_encoder_forward.5} parent=11 // pred_fallthru
          _
      $region12: #{factorized_encoder_forward.5} parent=5 // pred_fallthru
        _
      %p615 = scmp.lt.s32.totalorder %s56, 8
      // Predicated region
      $region21: #{factorized_encoder_forward.5} parent=5 // pred_check
        %p616 = pneg %p615
      $region22: #{factorized_encoder_forward.5} parent=5 // pred_check_branch
        %618 = sbr.rel (%p616) target = $region24
      $region23: #{factorized_encoder_forward.5} parent=5 // pred_region
        // Predicated region
        $region25: #{factorized_encoder_forward.5} parent=23 // pred_check
          %p619 = pneg %p88
        $region26: #{factorized_encoder_forward.5} parent=23 // pred_check_branch
          %621 = sbr.rel (%p619) target = $region28
        $region27: #{factorized_encoder_forward.5} parent=23 // pred_region
          %s622 = sand.u32 %s78, 1
          %s623 = scalar_lea.sflag [#allocation3], %s622
          %s624 = sand.u32 %s78, 1
          %s625 = smul.addr %s624, 24
          %s626 = scalar_lea.vmem [#allocation2], %s625
          %s628 = ssub.s32 384, 384
          %629 = vsyncadd %s623, %s628
          %s630 = smul.addr %s63, 3
          %s631 = smul.addr %s630, 128
          %s632 = scalar_lea.hbm %s0, %s631
          %s633 = sshll.u32 %s626, 4
          %s634 = int_to_ptr.vmem [resolvable:$true] %s633
          %639 = dma.hbm_to_vmem [thread:$0]  %s632, 384, %s634, %s623, 128, 128, 8
        $region28: #{factorized_encoder_forward.5} parent=23 // pred_fallthru
          _
        // Predicated region
        $region29: #{factorized_encoder_forward.5} parent=23 // pred_check
          %p640 = pneg %p114
        $region30: #{factorized_encoder_forward.5} parent=23 // pred_check_branch
          %642 = sbr.rel (%p640) target = $region32
        $region31: #{factorized_encoder_forward.5} parent=23 // pred_region
          %s643 = sand.u32 %s56, 1
          %s644 = scalar_lea.sflag [#allocation6], %s643
          %s645 = sand.u32 %s104, 1
          %s646 = scalar_lea.vmem [#allocation5], %s645
          %s648 = ssub.s32 16, 16
          %649 = vsyncadd %s644, %s648
          %s650 = smul.addr %s64, 16
          %s651 = scalar_lea.hbm %s1, %s650
          %s653 = sshll.u32 %s646, 4
          %s654 = int_to_ptr.vmem [resolvable:$true] %s653
          %656 = dma.hbm_to_vmem [thread:$0]  %s651, 16, %s654, %s644
        $region32: #{factorized_encoder_forward.5} parent=23 // pred_fallthru
          _
        // Predicated region
        $region33: #{factorized_encoder_forward.5} parent=23 // pred_check
          %p657 = pneg %p140
        $region34: #{factorized_encoder_forward.5} parent=23 // pred_check_branch
          %659 = sbr.rel (%p657) target = $region36
        $region35: #{factorized_encoder_forward.5} parent=23 // pred_region
          %s660 = sand.u32 %s56, 1
          %s661 = scalar_lea.sflag [#allocation6], %s660
          %s662 = sand.u32 %s130, 1
          %s663 = scalar_lea.vmem [#allocation7], %s662
          %s665 = ssub.s32 16, 16
          %666 = vsyncadd %s661, %s665
          %s667 = smul.addr %s64, 16
          %s668 = scalar_lea.hbm %s2, %s667
          %s670 = sshll.u32 %s663, 4
          %s671 = int_to_ptr.vmem [resolvable:$true] %s670
          %673 = dma.hbm_to_vmem [thread:$0]  %s668, 16, %s671, %s661
        $region36: #{factorized_encoder_forward.5} parent=23 // pred_fallthru
          _
        // Predicated region
        $region37: #{factorized_encoder_forward.5} parent=23 // pred_check
          %p674 = pneg %p166
        $region38: #{factorized_encoder_forward.5} parent=23 // pred_check_branch
          %676 = sbr.rel (%p674) target = $region40
        $region39: #{factorized_encoder_forward.5} parent=23 // pred_region
          %s677 = sand.u32 %s56, 1
          %s678 = scalar_lea.sflag [#allocation9], %s677
          %s679 = sand.u32 %s156, 1
          %s680 = smul.addr %s679, 64
          %s681 = scalar_lea.vmem [#allocation8], %s680
          %s683 = ssub.s32 1024, 1024
          %684 = vsyncadd %s678, %s683
          %s685 = smul.addr %s64, 16
          %s686 = smul.addr %s685, 64
          %s687 = scalar_lea.hbm %s3, %s686
          %s688 = sshll.u32 %s681, 4
          %s689 = int_to_ptr.vmem [resolvable:$true] %s688
          %694 = dma.hbm_to_vmem [thread:$0]  %s687, 1024, %s689, %s678, 64, 64, 4
        $region40: #{factorized_encoder_forward.5} parent=23 // pred_fallthru
          _
        // Predicated region
        $region41: #{factorized_encoder_forward.5} parent=23 // pred_check
          %p695 = pneg %p192
        $region42: #{factorized_encoder_forward.5} parent=23 // pred_check_branch
          %697 = sbr.rel (%p695) target = $region44
        $region43: #{factorized_encoder_forward.5} parent=23 // pred_region
          %s698 = sand.u32 %s56, 1
          %s699 = scalar_lea.sflag [#allocation9], %s698
          %s700 = sand.u32 %s182, 1
          %s701 = scalar_lea.vmem [#allocation10], %s700
          %s703 = ssub.s32 16, 16
          %704 = vsyncadd %s699, %s703
          %s705 = smul.addr %s64, 16
          %s706 = scalar_lea.hbm %s4, %s705
          %s708 = sshll.u32 %s701, 4
          %s709 = int_to_ptr.vmem [resolvable:$true] %s708
          %711 = dma.hbm_to_vmem [thread:$0]  %s706, 16, %s709, %s699
        $region44: #{factorized_encoder_forward.5} parent=23 // pred_fallthru
          _
        // Predicated region
        $region45: #{factorized_encoder_forward.5} parent=23 // pred_check
          %p712 = pneg %p218
        $region46: #{factorized_encoder_forward.5} parent=23 // pred_check_branch
          %714 = sbr.rel (%p712) target = $region48
        $region47: #{factorized_encoder_forward.5} parent=23 // pred_region
          %s715 = sand.u32 %s56, 1
          %s716 = scalar_lea.sflag [#allocation12], %s715
          %s717 = sand.u32 %s208, 1
          %s718 = smul.addr %s717, 64
          %s719 = scalar_lea.vmem [#allocation11], %s718
          %s721 = ssub.s32 1024, 1024
          %722 = vsyncadd %s716, %s721
          %s723 = smul.addr %s64, 16
          %s724 = smul.addr %s723, 64
          %s725 = scalar_lea.hbm %s5, %s724
          %s726 = sshll.u32 %s719, 4
          %s727 = int_to_ptr.vmem [resolvable:$true] %s726
          %732 = dma.hbm_to_vmem [thread:$0]  %s725, 1024, %s727, %s716, 64, 64, 4
        $region48: #{factorized_encoder_forward.5} parent=23 // pred_fallthru
          _
        // Predicated region
        $region49: #{factorized_encoder_forward.5} parent=23 // pred_check
          %p733 = pneg %p244
        $region50: #{factorized_encoder_forward.5} parent=23 // pred_check_branch
          %735 = sbr.rel (%p733) target = $region52
        $region51: #{factorized_encoder_forward.5} parent=23 // pred_region
          %s736 = sand.u32 %s56, 1
          %s737 = scalar_lea.sflag [#allocation12], %s736
          %s738 = sand.u32 %s234, 1
          %s739 = scalar_lea.vmem [#allocation13], %s738
          %s741 = ssub.s32 16, 16
          %742 = vsyncadd %s737, %s741
          %s743 = smul.addr %s64, 16
          %s744 = scalar_lea.hbm %s6, %s743
          %s746 = sshll.u32 %s739, 4
          %s747 = int_to_ptr.vmem [resolvable:$true] %s746
          %749 = dma.hbm_to_vmem [thread:$0]  %s744, 16, %s747, %s737
        $region52: #{factorized_encoder_forward.5} parent=23 // pred_fallthru
          _
        // Predicated region
        $region53: #{factorized_encoder_forward.5} parent=23 // pred_check
          %p750 = pneg %p270
        $region54: #{factorized_encoder_forward.5} parent=23 // pred_check_branch
          %752 = sbr.rel (%p750) target = $region56
        $region55: #{factorized_encoder_forward.5} parent=23 // pred_region
          %s753 = sand.u32 %s56, 1
          %s754 = scalar_lea.sflag [#allocation15], %s753
          %s755 = sand.u32 %s260, 1
          %s756 = smul.addr %s755, 64
          %s757 = scalar_lea.vmem [#allocation14], %s756
          %s759 = ssub.s32 1024, 1024
          %760 = vsyncadd %s754, %s759
          %s761 = smul.addr %s64, 16
          %s762 = smul.addr %s761, 64
          %s763 = scalar_lea.hbm %s7, %s762
          %s764 = sshll.u32 %s757, 4
          %s765 = int_to_ptr.vmem [resolvable:$true] %s764
          %770 = dma.hbm_to_vmem [thread:$0]  %s763, 1024, %s765, %s754, 64, 64, 4
        $region56: #{factorized_encoder_forward.5} parent=23 // pred_fallthru
          _
        // Predicated region
        $region57: #{factorized_encoder_forward.5} parent=23 // pred_check
          %p771 = pneg %p296
        $region58: #{factorized_encoder_forward.5} parent=23 // pred_check_branch
          %773 = sbr.rel (%p771) target = $region60
        $region59: #{factorized_encoder_forward.5} parent=23 // pred_region
          %s774 = sand.u32 %s56, 1
          %s775 = scalar_lea.sflag [#allocation15], %s774
          %s776 = sand.u32 %s286, 1
          %s777 = scalar_lea.vmem [#allocation16], %s776
          %s779 = ssub.s32 16, 16
          %780 = vsyncadd %s775, %s779
          %s781 = smul.addr %s64, 16
          %s782 = scalar_lea.hbm %s8, %s781
          %s784 = sshll.u32 %s777, 4
          %s785 = int_to_ptr.vmem [resolvable:$true] %s784
          %787 = dma.hbm_to_vmem [thread:$0]  %s782, 16, %s785, %s775
        $region60: #{factorized_encoder_forward.5} parent=23 // pred_fallthru
          _
        // Predicated region
        $region61: #{factorized_encoder_forward.5} parent=23 // pred_check
          %p788 = pneg %p322
        $region62: #{factorized_encoder_forward.5} parent=23 // pred_check_branch
          %790 = sbr.rel (%p788) target = $region64
        $region63: #{factorized_encoder_forward.5} parent=23 // pred_region
          %s791 = sand.u32 %s56, 1
          %s792 = scalar_lea.sflag [#allocation18], %s791
          %s793 = sand.u32 %s312, 1
          %s794 = smul.addr %s793, 64
          %s795 = scalar_lea.vmem [#allocation17], %s794
          %s797 = ssub.s32 1024, 1024
          %798 = vsyncadd %s792, %s797
          %s799 = smul.addr %s64, 16
          %s800 = smul.addr %s799, 64
          %s801 = scalar_lea.hbm %s9, %s800
          %s802 = sshll.u32 %s795, 4
          %s803 = int_to_ptr.vmem [resolvable:$true] %s802
          %808 = dma.hbm_to_vmem [thread:$0]  %s801, 1024, %s803, %s792, 64, 64, 4
        $region64: #{factorized_encoder_forward.5} parent=23 // pred_fallthru
          _
        // Predicated region
        $region65: #{factorized_encoder_forward.5} parent=23 // pred_check
          %p809 = pneg %p348
        $region66: #{factorized_encoder_forward.5} parent=23 // pred_check_branch
          %811 = sbr.rel (%p809) target = $region68
        $region67: #{factorized_encoder_forward.5} parent=23 // pred_region
          %s812 = sand.u32 %s56, 1
          %s813 = scalar_lea.sflag [#allocation18], %s812
          %s814 = sand.u32 %s338, 1
          %s815 = scalar_lea.vmem [#allocation19], %s814
          %s817 = ssub.s32 16, 16
          %818 = vsyncadd %s813, %s817
          %s819 = smul.addr %s64, 16
          %s820 = scalar_lea.hbm %s10, %s819
          %s822 = sshll.u32 %s815, 4
          %s823 = int_to_ptr.vmem [resolvable:$true] %s822
          %825 = dma.hbm_to_vmem [thread:$0]  %s820, 16, %s823, %s813
        $region68: #{factorized_encoder_forward.5} parent=23 // pred_fallthru
          _
        // Predicated region
        $region69: #{factorized_encoder_forward.5} parent=23 // pred_check
          %p826 = pneg %p374
        $region70: #{factorized_encoder_forward.5} parent=23 // pred_check_branch
          %828 = sbr.rel (%p826) target = $region72
        $region71: #{factorized_encoder_forward.5} parent=23 // pred_region
          %s829 = sand.u32 %s56, 1
          %s830 = scalar_lea.sflag [#allocation21], %s829
          %s831 = sand.u32 %s364, 1
          %s832 = scalar_lea.vmem [#allocation20], %s831
          %s834 = ssub.s32 16, 16
          %835 = vsyncadd %s830, %s834
          %s836 = smul.addr %s64, 16
          %s837 = scalar_lea.hbm %s11, %s836
          %s839 = sshll.u32 %s832, 4
          %s840 = int_to_ptr.vmem [resolvable:$true] %s839
          %842 = dma.hbm_to_vmem [thread:$0]  %s837, 16, %s840, %s830
        $region72: #{factorized_encoder_forward.5} parent=23 // pred_fallthru
          _
        // Predicated region
        $region73: #{factorized_encoder_forward.5} parent=23 // pred_check
          %p843 = pneg %p400
        $region74: #{factorized_encoder_forward.5} parent=23 // pred_check_branch
          %845 = sbr.rel (%p843) target = $region76
        $region75: #{factorized_encoder_forward.5} parent=23 // pred_region
          %s846 = sand.u32 %s56, 1
          %s847 = scalar_lea.sflag [#allocation21], %s846
          %s848 = sand.u32 %s390, 1
          %s849 = scalar_lea.vmem [#allocation22], %s848
          %s851 = ssub.s32 16, 16
          %852 = vsyncadd %s847, %s851
          %s853 = smul.addr %s64, 16
          %s854 = scalar_lea.hbm %s12, %s853
          %s856 = sshll.u32 %s849, 4
          %s857 = int_to_ptr.vmem [resolvable:$true] %s856
          %859 = dma.hbm_to_vmem [thread:$0]  %s854, 16, %s857, %s847
        $region76: #{factorized_encoder_forward.5} parent=23 // pred_fallthru
          _
        // Predicated region
        $region77: #{factorized_encoder_forward.5} parent=23 // pred_check
          %p860 = pneg %p426
        $region78: #{factorized_encoder_forward.5} parent=23 // pred_check_branch
          %862 = sbr.rel (%p860) target = $region80
        $region79: #{factorized_encoder_forward.5} parent=23 // pred_region
          %s863 = sand.u32 %s56, 1
          %s864 = scalar_lea.sflag [#allocation24], %s863
          %s865 = sand.u32 %s416, 1
          %s866 = smul.addr %s865, 256
          %s867 = scalar_lea.vmem [#allocation23], %s866
          %s869 = ssub.s32 4096, 4096
          %870 = vsyncadd %s864, %s869
          %s871 = smul.addr %s64, 64
          %s872 = smul.addr %s871, 64
          %s873 = scalar_lea.hbm %s13, %s872
          %s874 = sshll.u32 %s867, 4
          %s875 = int_to_ptr.vmem [resolvable:$true] %s874
          %880 = dma.hbm_to_vmem [thread:$0]  %s873, 4096, %s875, %s864, 256, 256, 16
        $region80: #{factorized_encoder_forward.5} parent=23 // pred_fallthru
          _
        // Predicated region
        $region81: #{factorized_encoder_forward.5} parent=23 // pred_check
          %p881 = pneg %p452
        $region82: #{factorized_encoder_forward.5} parent=23 // pred_check_branch
          %883 = sbr.rel (%p881) target = $region84
        $region83: #{factorized_encoder_forward.5} parent=23 // pred_region
          %s884 = sand.u32 %s56, 1
          %s885 = scalar_lea.sflag [#allocation24], %s884
          %s886 = sand.u32 %s442, 1
          %s887 = smul.addr %s886, 4
          %s888 = scalar_lea.vmem [#allocation25], %s887
          %s890 = ssub.s32 64, 64
          %891 = vsyncadd %s885, %s890
          %s892 = smul.addr %s64, 4
          %s893 = smul.addr %s892, 16
          %s894 = scalar_lea.hbm %s14, %s893
          %s896 = sshll.u32 %s888, 4
          %s897 = int_to_ptr.vmem [resolvable:$true] %s896
          %899 = dma.hbm_to_vmem [thread:$0]  %s894, 64, %s897, %s885
        $region84: #{factorized_encoder_forward.5} parent=23 // pred_fallthru
          _
        // Predicated region
        $region85: #{factorized_encoder_forward.5} parent=23 // pred_check
          %p900 = pneg %p478
        $region86: #{factorized_encoder_forward.5} parent=23 // pred_check_branch
          %902 = sbr.rel (%p900) target = $region88
        $region87: #{factorized_encoder_forward.5} parent=23 // pred_region
          %s903 = sand.u32 %s56, 1
          %s904 = scalar_lea.sflag [#allocation27], %s903
          %s905 = sand.u32 %s468, 1
          %s906 = smul.addr %s905, 256
          %s907 = scalar_lea.vmem [#allocation26], %s906
          %s909 = ssub.s32 4096, 4096
          %910 = vsyncadd %s904, %s909
          %s911 = smul.addr %s64, 64
          %s912 = smul.addr %s911, 64
          %s913 = scalar_lea.hbm %s15, %s912
          %s914 = sshll.u32 %s907, 4
          %s915 = int_to_ptr.vmem [resolvable:$true] %s914
          %920 = dma.hbm_to_vmem [thread:$0]  %s913, 4096, %s915, %s904, 64, 64, 4
        $region88: #{factorized_encoder_forward.5} parent=23 // pred_fallthru
          _
        // Predicated region
        $region89: #{factorized_encoder_forward.5} parent=23 // pred_check
          %p921 = pneg %p504
        $region90: #{factorized_encoder_forward.5} parent=23 // pred_check_branch
          %923 = sbr.rel (%p921) target = $region92
        $region91: #{factorized_encoder_forward.5} parent=23 // pred_region
          %s924 = sand.u32 %s56, 1
          %s925 = scalar_lea.sflag [#allocation27], %s924
          %s926 = sand.u32 %s494, 1
          %s927 = scalar_lea.vmem [#allocation28], %s926
          %s929 = ssub.s32 16, 16
          %930 = vsyncadd %s925, %s929
          %s931 = smul.addr %s64, 16
          %s932 = scalar_lea.hbm %s16, %s931
          %s934 = sshll.u32 %s927, 4
          %s935 = int_to_ptr.vmem [resolvable:$true] %s934
          %937 = dma.hbm_to_vmem [thread:$0]  %s932, 16, %s935, %s925
        $region92: #{factorized_encoder_forward.5} parent=23 // pred_fallthru
          _
      $region24: #{factorized_encoder_forward.5} parent=5 // pred_fallthru
        _
      %p938 = scmp.le.s32.totalorder 1, %s56
      %p939 = scmp.lt.s32.totalorder %s56, 9
      %p940 = pnand %p938, %p939
      %p941 = pneg %p940
      // Predicated region
      $region93: #{factorized_encoder_forward.5} parent=5 // pred_check
        _
      $region94: #{factorized_encoder_forward.5} parent=5 // pred_check_branch
        %943 = sbr.rel (%p940) target = $region96
      $region95: #{factorized_encoder_forward.5} parent=5 // pred_region
        %s944 = ssub.s32 %s56, 1
        %s945 = sand.u32 %s81, 1
        %s946 = scalar_lea.sflag [#allocation3], %s945
        %s947 = sand.u32 %s81, 1
        %s948 = smul.addr %s947, 24
        %s949 = scalar_lea.vmem [#allocation2], %s948
        // Predicated region
        $region97: #{factorized_encoder_forward.5} parent=95 // pred_check
          %p950 = pneg %p94
        $region98: #{factorized_encoder_forward.5} parent=95 // pred_check_branch
          %952 = sbr.rel (%p950) target = $region100
        $region99: #{factorized_encoder_forward.5} parent=95 // pred_region
          %953 = dma.done %s946, 384
        $region100: #{factorized_encoder_forward.5} parent=95 // pred_fallthru
          _
        %s954 = sand.u32 %s61, 1
        %s955 = scalar_lea.sflag [#allocation6], %s954
        %s956 = sand.u32 %s107, 1
        %s957 = scalar_lea.vmem [#allocation5], %s956
        // Predicated region
        $region101: #{factorized_encoder_forward.5} parent=95 // pred_check
          %p958 = pneg %p120
        $region102: #{factorized_encoder_forward.5} parent=95 // pred_check_branch
          %960 = sbr.rel (%p958) target = $region104
        $region103: #{factorized_encoder_forward.5} parent=95 // pred_region
          %961 = dma.done %s955, 16
        $region104: #{factorized_encoder_forward.5} parent=95 // pred_fallthru
          _
        %s962 = sand.u32 %s61, 1
        %s963 = scalar_lea.sflag [#allocation6], %s962
        %s964 = sand.u32 %s133, 1
        %s965 = scalar_lea.vmem [#allocation7], %s964
        // Predicated region
        $region105: #{factorized_encoder_forward.5} parent=95 // pred_check
          %p966 = pneg %p146
        $region106: #{factorized_encoder_forward.5} parent=95 // pred_check_branch
          %968 = sbr.rel (%p966) target = $region108
        $region107: #{factorized_encoder_forward.5} parent=95 // pred_region
          %969 = dma.done %s963, 16
        $region108: #{factorized_encoder_forward.5} parent=95 // pred_fallthru
          _
        %s970 = sand.u32 %s61, 1
        %s971 = scalar_lea.sflag [#allocation9], %s970
        %s972 = sand.u32 %s159, 1
        %s973 = smul.addr %s972, 64
        %s974 = scalar_lea.vmem [#allocation8], %s973
        // Predicated region
        $region109: #{factorized_encoder_forward.5} parent=95 // pred_check
          %p975 = pneg %p172
        $region110: #{factorized_encoder_forward.5} parent=95 // pred_check_branch
          %977 = sbr.rel (%p975) target = $region112
        $region111: #{factorized_encoder_forward.5} parent=95 // pred_region
          %978 = dma.done %s971, 1024
        $region112: #{factorized_encoder_forward.5} parent=95 // pred_fallthru
          _
        %s979 = sand.u32 %s61, 1
        %s980 = scalar_lea.sflag [#allocation9], %s979
        %s981 = sand.u32 %s185, 1
        %s982 = scalar_lea.vmem [#allocation10], %s981
        // Predicated region
        $region113: #{factorized_encoder_forward.5} parent=95 // pred_check
          %p983 = pneg %p198
        $region114: #{factorized_encoder_forward.5} parent=95 // pred_check_branch
          %985 = sbr.rel (%p983) target = $region116
        $region115: #{factorized_encoder_forward.5} parent=95 // pred_region
          %986 = dma.done %s980, 16
        $region116: #{factorized_encoder_forward.5} parent=95 // pred_fallthru
          _
        %s987 = sand.u32 %s61, 1
        %s988 = scalar_lea.sflag [#allocation12], %s987
        %s989 = sand.u32 %s211, 1
        %s990 = smul.addr %s989, 64
        %s991 = scalar_lea.vmem [#allocation11], %s990
        // Predicated region
        $region117: #{factorized_encoder_forward.5} parent=95 // pred_check
          %p992 = pneg %p224
        $region118: #{factorized_encoder_forward.5} parent=95 // pred_check_branch
          %994 = sbr.rel (%p992) target = $region120
        $region119: #{factorized_encoder_forward.5} parent=95 // pred_region
          %995 = dma.done %s988, 1024
        $region120: #{factorized_encoder_forward.5} parent=95 // pred_fallthru
          _
        %s996 = sand.u32 %s61, 1
        %s997 = scalar_lea.sflag [#allocation12], %s996
        %s998 = sand.u32 %s237, 1
        %s999 = scalar_lea.vmem [#allocation13], %s998
        // Predicated region
        $region121: #{factorized_encoder_forward.5} parent=95 // pred_check
          %p1000 = pneg %p250
        $region122: #{factorized_encoder_forward.5} parent=95 // pred_check_branch
          %1002 = sbr.rel (%p1000) target = $region124
        $region123: #{factorized_encoder_forward.5} parent=95 // pred_region
          %1003 = dma.done %s997, 16
        $region124: #{factorized_encoder_forward.5} parent=95 // pred_fallthru
          _
        %s1004 = sand.u32 %s61, 1
        %s1005 = scalar_lea.sflag [#allocation15], %s1004
        %s1006 = sand.u32 %s263, 1
        %s1007 = smul.addr %s1006, 64
        %s1008 = scalar_lea.vmem [#allocation14], %s1007
        // Predicated region
        $region125: #{factorized_encoder_forward.5} parent=95 // pred_check
          %p1009 = pneg %p276
        $region126: #{factorized_encoder_forward.5} parent=95 // pred_check_branch
          %1011 = sbr.rel (%p1009) target = $region128
        $region127: #{factorized_encoder_forward.5} parent=95 // pred_region
          %1012 = dma.done %s1005, 1024
        $region128: #{factorized_encoder_forward.5} parent=95 // pred_fallthru
          _
        %s1013 = sand.u32 %s61, 1
        %s1014 = scalar_lea.sflag [#allocation15], %s1013
        %s1015 = sand.u32 %s289, 1
        %s1016 = scalar_lea.vmem [#allocation16], %s1015
        // Predicated region
        $region129: #{factorized_encoder_forward.5} parent=95 // pred_check
          %p1017 = pneg %p302
        $region130: #{factorized_encoder_forward.5} parent=95 // pred_check_branch
          %1019 = sbr.rel (%p1017) target = $region132
        $region131: #{factorized_encoder_forward.5} parent=95 // pred_region
          %1020 = dma.done %s1014, 16
        $region132: #{factorized_encoder_forward.5} parent=95 // pred_fallthru
          _
        %s1021 = sand.u32 %s61, 1
        %s1022 = scalar_lea.sflag [#allocation18], %s1021
        %s1023 = sand.u32 %s315, 1
        %s1024 = smul.addr %s1023, 64
        %s1025 = scalar_lea.vmem [#allocation17], %s1024
        // Predicated region
        $region133: #{factorized_encoder_forward.5} parent=95 // pred_check
          %p1026 = pneg %p328
        $region134: #{factorized_encoder_forward.5} parent=95 // pred_check_branch
          %1028 = sbr.rel (%p1026) target = $region136
        $region135: #{factorized_encoder_forward.5} parent=95 // pred_region
          %1029 = dma.done %s1022, 1024
        $region136: #{factorized_encoder_forward.5} parent=95 // pred_fallthru
          _
        %s1030 = sand.u32 %s61, 1
        %s1031 = scalar_lea.sflag [#allocation18], %s1030
        %s1032 = sand.u32 %s341, 1
        %s1033 = scalar_lea.vmem [#allocation19], %s1032
        // Predicated region
        $region137: #{factorized_encoder_forward.5} parent=95 // pred_check
          %p1034 = pneg %p354
        $region138: #{factorized_encoder_forward.5} parent=95 // pred_check_branch
          %1036 = sbr.rel (%p1034) target = $region140
        $region139: #{factorized_encoder_forward.5} parent=95 // pred_region
          %1037 = dma.done %s1031, 16
        $region140: #{factorized_encoder_forward.5} parent=95 // pred_fallthru
          _
        %s1038 = sand.u32 %s61, 1
        %s1039 = scalar_lea.sflag [#allocation21], %s1038
        %s1040 = sand.u32 %s367, 1
        %s1041 = scalar_lea.vmem [#allocation20], %s1040
        // Predicated region
        $region141: #{factorized_encoder_forward.5} parent=95 // pred_check
          %p1042 = pneg %p380
        $region142: #{factorized_encoder_forward.5} parent=95 // pred_check_branch
          %1044 = sbr.rel (%p1042) target = $region144
        $region143: #{factorized_encoder_forward.5} parent=95 // pred_region
          %1045 = dma.done %s1039, 16
        $region144: #{factorized_encoder_forward.5} parent=95 // pred_fallthru
          _
        %s1046 = sand.u32 %s61, 1
        %s1047 = scalar_lea.sflag [#allocation21], %s1046
        %s1048 = sand.u32 %s393, 1
        %s1049 = scalar_lea.vmem [#allocation22], %s1048
        // Predicated region
        $region145: #{factorized_encoder_forward.5} parent=95 // pred_check
          %p1050 = pneg %p406
        $region146: #{factorized_encoder_forward.5} parent=95 // pred_check_branch
          %1052 = sbr.rel (%p1050) target = $region148
        $region147: #{factorized_encoder_forward.5} parent=95 // pred_region
          %1053 = dma.done %s1047, 16
        $region148: #{factorized_encoder_forward.5} parent=95 // pred_fallthru
          _
        %s1054 = sand.u32 %s61, 1
        %s1055 = scalar_lea.sflag [#allocation24], %s1054
        %s1056 = sand.u32 %s419, 1
        %s1057 = smul.addr %s1056, 256
        %s1058 = scalar_lea.vmem [#allocation23], %s1057
        // Predicated region
        $region149: #{factorized_encoder_forward.5} parent=95 // pred_check
          %p1059 = pneg %p432
        $region150: #{factorized_encoder_forward.5} parent=95 // pred_check_branch
          %1061 = sbr.rel (%p1059) target = $region152
        $region151: #{factorized_encoder_forward.5} parent=95 // pred_region
          %1062 = dma.done %s1055, 4096
        $region152: #{factorized_encoder_forward.5} parent=95 // pred_fallthru
          _
        %s1063 = sand.u32 %s61, 1
        %s1064 = scalar_lea.sflag [#allocation24], %s1063
        %s1065 = sand.u32 %s445, 1
        %s1066 = smul.addr %s1065, 4
        %s1067 = scalar_lea.vmem [#allocation25], %s1066
        // Predicated region
        $region153: #{factorized_encoder_forward.5} parent=95 // pred_check
          %p1068 = pneg %p458
        $region154: #{factorized_encoder_forward.5} parent=95 // pred_check_branch
          %1070 = sbr.rel (%p1068) target = $region156
        $region155: #{factorized_encoder_forward.5} parent=95 // pred_region
          %1071 = dma.done %s1064, 64
        $region156: #{factorized_encoder_forward.5} parent=95 // pred_fallthru
          _
        %s1072 = sand.u32 %s61, 1
        %s1073 = scalar_lea.sflag [#allocation27], %s1072
        %s1074 = sand.u32 %s471, 1
        %s1075 = smul.addr %s1074, 256
        %s1076 = scalar_lea.vmem [#allocation26], %s1075
        // Predicated region
        $region157: #{factorized_encoder_forward.5} parent=95 // pred_check
          %p1077 = pneg %p484
        $region158: #{factorized_encoder_forward.5} parent=95 // pred_check_branch
          %1079 = sbr.rel (%p1077) target = $region160
        $region159: #{factorized_encoder_forward.5} parent=95 // pred_region
          %1080 = dma.done %s1073, 4096
        $region160: #{factorized_encoder_forward.5} parent=95 // pred_fallthru
          _
        %s1081 = sand.u32 %s61, 1
        %s1082 = scalar_lea.sflag [#allocation27], %s1081
        %s1083 = sand.u32 %s497, 1
        %s1084 = scalar_lea.vmem [#allocation28], %s1083
        // Predicated region
        $region161: #{factorized_encoder_forward.5} parent=95 // pred_check
          %p1085 = pneg %p510
        $region162: #{factorized_encoder_forward.5} parent=95 // pred_check_branch
          %1087 = sbr.rel (%p1085) target = $region164
        $region163: #{factorized_encoder_forward.5} parent=95 // pred_region
          %1088 = dma.done %s1082, 16
        $region164: #{factorized_encoder_forward.5} parent=95 // pred_fallthru
          _
        // Predicated region
        $region165: #{factorized_encoder_forward.5} parent=95 // pred_check
          %p1089 = pneg %p531
        $region166: #{factorized_encoder_forward.5} parent=95 // pred_check_branch
          %1091 = sbr.rel (%p1089) target = $region168
        $region167: #{factorized_encoder_forward.5} parent=95 // pred_region
          %1092 = dma.done [#allocation30], 16
        $region168: #{factorized_encoder_forward.5} parent=95 // pred_fallthru
          _
        // Predicated region
        $region169: #{factorized_encoder_forward.5} parent=95 // pred_check
          %p1093 = pneg %p552
        $region170: #{factorized_encoder_forward.5} parent=95 // pred_check_branch
          %1095 = sbr.rel (%p1093) target = $region172
        $region171: #{factorized_encoder_forward.5} parent=95 // pred_region
          %1096 = dma.done [#allocation30], 16
        $region172: #{factorized_encoder_forward.5} parent=95 // pred_fallthru
          _
        %s1097 = sand.u32 %s81, 1
        %s1098 = scalar_lea.sflag [#allocation3], %s1097
        %s1099 = sand.u32 %s81, 1
        %s1100 = smul.addr %s1099, 24
        %s1101 = scalar_lea.vmem [#allocation2], %s1100
        %p1102 = pneg %p94
        %p1103 = pneg %p91
        %s1104 = sand.u32 %s61, 1
        %s1105 = scalar_lea.sflag [#allocation6], %s1104
        %s1106 = sand.u32 %s107, 1
        %s1107 = scalar_lea.vmem [#allocation5], %s1106
        %p1108 = pneg %p120
        %p1109 = pneg %p117
        %s1110 = sand.u32 %s61, 1
        %s1111 = scalar_lea.sflag [#allocation6], %s1110
        %s1112 = sand.u32 %s133, 1
        %s1113 = scalar_lea.vmem [#allocation7], %s1112
        %p1114 = pneg %p146
        %p1115 = pneg %p143
        %s1116 = sand.u32 %s61, 1
        %s1117 = scalar_lea.sflag [#allocation9], %s1116
        %s1118 = sand.u32 %s159, 1
        %s1119 = smul.addr %s1118, 64
        %s1120 = scalar_lea.vmem [#allocation8], %s1119
        %p1121 = pneg %p172
        %p1122 = pneg %p169
        %s1123 = sand.u32 %s61, 1
        %s1124 = scalar_lea.sflag [#allocation9], %s1123
        %s1125 = sand.u32 %s185, 1
        %s1126 = scalar_lea.vmem [#allocation10], %s1125
        %p1127 = pneg %p198
        %p1128 = pneg %p195
        %s1129 = sand.u32 %s61, 1
        %s1130 = scalar_lea.sflag [#allocation12], %s1129
        %s1131 = sand.u32 %s211, 1
        %s1132 = smul.addr %s1131, 64
        %s1133 = scalar_lea.vmem [#allocation11], %s1132
        %p1134 = pneg %p224
        %p1135 = pneg %p221
        %s1136 = sand.u32 %s61, 1
        %s1137 = scalar_lea.sflag [#allocation12], %s1136
        %s1138 = sand.u32 %s237, 1
        %s1139 = scalar_lea.vmem [#allocation13], %s1138
        %p1140 = pneg %p250
        %p1141 = pneg %p247
        %s1142 = sand.u32 %s61, 1
        %s1143 = scalar_lea.sflag [#allocation15], %s1142
        %s1144 = sand.u32 %s263, 1
        %s1145 = smul.addr %s1144, 64
        %s1146 = scalar_lea.vmem [#allocation14], %s1145
        %p1147 = pneg %p276
        %p1148 = pneg %p273
        %s1149 = sand.u32 %s61, 1
        %s1150 = scalar_lea.sflag [#allocation15], %s1149
        %s1151 = sand.u32 %s289, 1
        %s1152 = scalar_lea.vmem [#allocation16], %s1151
        %p1153 = pneg %p302
        %p1154 = pneg %p299
        %s1155 = sand.u32 %s61, 1
        %s1156 = scalar_lea.sflag [#allocation18], %s1155
        %s1157 = sand.u32 %s315, 1
        %s1158 = smul.addr %s1157, 64
        %s1159 = scalar_lea.vmem [#allocation17], %s1158
        %p1160 = pneg %p328
        %p1161 = pneg %p325
        %s1162 = sand.u32 %s61, 1
        %s1163 = scalar_lea.sflag [#allocation18], %s1162
        %s1164 = sand.u32 %s341, 1
        %s1165 = scalar_lea.vmem [#allocation19], %s1164
        %p1166 = pneg %p354
        %p1167 = pneg %p351
        %s1168 = sand.u32 %s61, 1
        %s1169 = scalar_lea.sflag [#allocation21], %s1168
        %s1170 = sand.u32 %s367, 1
        %s1171 = scalar_lea.vmem [#allocation20], %s1170
        %p1172 = pneg %p380
        %p1173 = pneg %p377
        %s1174 = sand.u32 %s61, 1
        %s1175 = scalar_lea.sflag [#allocation21], %s1174
        %s1176 = sand.u32 %s393, 1
        %s1177 = scalar_lea.vmem [#allocation22], %s1176
        %p1178 = pneg %p406
        %p1179 = pneg %p403
        %s1180 = sand.u32 %s61, 1
        %s1181 = scalar_lea.sflag [#allocation24], %s1180
        %s1182 = sand.u32 %s419, 1
        %s1183 = smul.addr %s1182, 256
        %s1184 = scalar_lea.vmem [#allocation23], %s1183
        %p1185 = pneg %p432
        %p1186 = pneg %p429
        %s1187 = sand.u32 %s61, 1
        %s1188 = scalar_lea.sflag [#allocation24], %s1187
        %s1189 = sand.u32 %s445, 1
        %s1190 = smul.addr %s1189, 4
        %s1191 = scalar_lea.vmem [#allocation25], %s1190
        %p1192 = pneg %p458
        %p1193 = pneg %p455
        %s1194 = sand.u32 %s61, 1
        %s1195 = scalar_lea.sflag [#allocation27], %s1194
        %s1196 = sand.u32 %s471, 1
        %s1197 = smul.addr %s1196, 256
        %s1198 = scalar_lea.vmem [#allocation26], %s1197
        %p1199 = pneg %p484
        %p1200 = pneg %p481
        %s1201 = sand.u32 %s61, 1
        %s1202 = scalar_lea.sflag [#allocation27], %s1201
        %s1203 = sand.u32 %s497, 1
        %s1204 = scalar_lea.vmem [#allocation28], %s1203
        %p1205 = pneg %p510
        %p1206 = pneg %p507
        %p1207 = pneg %p531
        %p1208 = pneg %p528
        %p1209 = pneg %p552
        %p1210 = pneg %p549
        %p1211 = pneg %p578
        %p1212 = pneg %p575
        %s1213 = sand.u32 %s565, 1
        %s1214 = scalar_lea.sflag [#allocation4], %s1213
        %s1215 = sand.u32 %s565, 1
        %s1216 = smul.addr %s1215, 24
        %s1217 = scalar_lea.vmem [#allocation32], %s1216
        %p1219 = scmp.eq.s32.totalorder %s66, 0
        // Predicated region
        $region173: #{factorized_encoder_forward.5} parent=95 // pred_check
          %p1220 = pneg %p1219
        $region174: #{factorized_encoder_forward.5} parent=95 // pred_check_branch
          %1222 = sbr.rel (%p1220) target = $region176
        $region175: #{factorized_encoder_forward.5} parent=95 // pred_region
          %v1223 = vld [vmem:[%s949] sm:$0xff]
          %v1224 = vld [vmem:[%s949 + $0x8] sm:$0xff]
          %v1225 = vld [vmem:[%s949 + $0x10] sm:$0x1]
          %1226 = vst [vmem:[%s1217] sm:$0xff] %v1223
          %1227 = vst [vmem:[%s1217 + $0x8] sm:$0xff] %v1224
          %1228 = vst [vmem:[%s1217 + $0x10] sm:$0x1] %v1225
        $region176: #{factorized_encoder_forward.5} parent=95 // pred_fallthru
          _
        %v1229 = vld [vmem:[%s1217] sm:$0xff]
        %v1230 = vld [vmem:[%s1217 + $0x8] sm:$0xff]
        %v1231 = vld [vmem:[%s1217 + $0x10] sm:$0x1]
        %v1232 = vld [vmem:[%s957] sm:$0x1]
        %v1233 = vld [vmem:[%s965] sm:$0x1]
        %1234 = vadd.xlane.f32.xlu0 %v1229
        %v1235 = vpop.xlane.xlu0 %1234
        %1236 = vadd.xlane.f32.xlu0 %v1230
        %v1237 = vpop.xlane.xlu0 %1236
        %vm1238 = vcmask 1040384
        %v1239 = vsel %vm1238, %v1231, 0.0
        %1240 = vadd.xlane.f32.xlu0 %v1239
        %v1241 = vpop.xlane.xlu0 %1240
        %v1242 = vrcp.pop 128.0
        %v1243 = vmul.f32 %v1235, %v1242
        %v1244 = vmul.f32 %v1237, %v1242
        %v1245 = vmul.f32 %v1241, %v1242
        %v1246 = vsub.f32 %v1229, %v1243
        %v1247 = vsub.f32 %v1230, %v1244
        %v1248 = vsub.f32 %v1231, %v1245
        %v1249 = vmul.f32 %v1246, %v1246
        %v1250 = vmul.f32 %v1247, %v1247
        %v1251 = vmul.f32 %v1248, %v1248
        %1252 = vadd.xlane.f32.xlu0 %v1249
        %v1253 = vpop.xlane.xlu0 %1252
        %1254 = vadd.xlane.f32.xlu0 %v1250
        %v1255 = vpop.xlane.xlu0 %1254
        %v1256 = vsel %vm1238, %v1251, 0.0
        %1257 = vadd.xlane.f32.xlu0 %v1256
        %v1258 = vpop.xlane.xlu0 %1257
        %v1259 = vmul.f32 %v1253, %v1242
        %v1260 = vmul.f32 %v1255, %v1242
        %v1261 = vmul.f32 %v1258, %v1242
        %v1262 = vadd.f32 %v1259, 1e-05
        %v1263 = vadd.f32 %v1260, 1e-05
        %v1264 = vadd.f32 %v1261, 1e-05
        %v1265 = vrsqrt.pop %v1262
        %v1266 = vrsqrt.pop %v1263
        %v1267 = vrsqrt.pop %v1264
        %v1268 = vmul.f32 %v1246, %v1265
        %v1269 = vmul.f32 %v1247, %v1266
        %v1270 = vmul.f32 %v1248, %v1267
        %v1272 = vlaneseq
        %v1273 = vshrl.u32 %v1272, 7
        %v1274 = vsub.s32 0, %v1273
        %v1275 = vrot.slane %v1232, %v1274
        %v1277 = vmul.f32 %v1268, %v1275
        %v1278 = vmul.f32 %v1269, %v1275
        %v1279 = vmul.f32 %v1270, %v1275
        %v1281 = vlaneseq
        %v1282 = vshrl.u32 %v1281, 7
        %v1283 = vsub.s32 0, %v1282
        %v1284 = vrot.slane %v1233, %v1283
        %v1286 = vadd.f32 %v1277, %v1284
        %v1287 = vadd.f32 %v1278, %v1284
        %v1288 = vadd.f32 %v1279, %v1284
        %v1289 = vpack.c.bf16 %v1287, %v1286
        %v1290 = vpack.c.bf16 %v1288, %v1288
        %v1291 = vld [vmem:[%s974] sm:$0xf]
        %v1292 = vld [vmem:[%s974 + $0x4] sm:$0xf]
        %v1293 = vld [vmem:[%s974 + $0x8] sm:$0xf]
        %v1294 = vld [vmem:[%s974 + $0xc] sm:$0xf]
        %v1295 = vld [vmem:[%s974 + $0x10] sm:$0xf]
        %v1296 = vld [vmem:[%s974 + $0x14] sm:$0xf]
        %v1297 = vld [vmem:[%s974 + $0x18] sm:$0xf]
        %v1298 = vld [vmem:[%s974 + $0x1c] sm:$0xf]
        %v1299 = vld [vmem:[%s974 + $0x20] sm:$0xf]
        %v1300 = vld [vmem:[%s974 + $0x24] sm:$0xf]
        %v1301 = vld [vmem:[%s974 + $0x28] sm:$0xf]
        %v1302 = vld [vmem:[%s974 + $0x2c] sm:$0xf]
        %v1303 = vld [vmem:[%s974 + $0x30] sm:$0xf]
        %v1304 = vld [vmem:[%s974 + $0x34] sm:$0xf]
        %v1305 = vld [vmem:[%s974 + $0x38] sm:$0xf]
        %v1306 = vld [vmem:[%s974 + $0x3c] sm:$0xf]
        %v1307 = vld [vmem:[%s982] sm:$0x1]
        %v1309 = vlaneseq
        %v1310 = vshrl.u32 %v1309, 7
        %v1311 = vsub.s32 0, %v1310
        %v1312 = vrot.slane %v1307, %v1311
        %v1330 = vunpack.c.l.b16 %v1291
        %v1331 = vunpack.c.l.b16 %v1292
        %v1332 = vunpack.c.l.b16 %v1293
        %v1333 = vunpack.c.l.b16 %v1294
        %v1334 = vunpack.c.l.b16 %v1295
        %v1335 = vunpack.c.l.b16 %v1296
        %v1336 = vunpack.c.l.b16 %v1297
        %v1337 = vunpack.c.l.b16 %v1298
        %v1338 = vunpack.c.l.b16 %v1299
        %v1339 = vunpack.c.l.b16 %v1300
        %v1340 = vunpack.c.l.b16 %v1301
        %v1341 = vunpack.c.l.b16 %v1302
        %v1342 = vunpack.c.l.b16 %v1303
        %v1343 = vunpack.c.l.b16 %v1304
        %v1344 = vunpack.c.l.b16 %v1305
        %v1345 = vunpack.c.l.b16 %v1306
        %v1346 = vpack.c.b16 %v1331, %v1330
        %v1347 = vpack.c.b16 %v1333, %v1332
        %v1348 = vpack.c.b16 %v1335, %v1334
        %v1349 = vpack.c.b16 %v1337, %v1336
        %v1350 = vpack.c.b16 %v1339, %v1338
        %v1351 = vpack.c.b16 %v1341, %v1340
        %v1352 = vpack.c.b16 %v1343, %v1342
        %v1353 = vpack.c.b16 %v1345, %v1344
        %1362 = vmatprep.subr.bf16.mxu0 0
        %1363 = vmatpush1.bf16.msra.mxu0 %v1346
        %1364 = vmatprep.subr.bf16.mxu0 0
        %1365 = vmatpush1.bf16.msra.mxu0 %v1347
        %1366 = vmatprep.subr.bf16.mxu0 0
        %1367 = vmatpush1.bf16.msra.mxu0 %v1348
        %1368 = vmatprep.subr.bf16.mxu0 0
        %1369 = vmatpush1.bf16.msra.mxu0 %v1349
        %1370 = vmatprep.subr.bf16.mxu0 0
        %1371 = vmatpush1.bf16.msra.mxu0 %v1350
        %1372 = vmatprep.subr.bf16.mxu0 0
        %1373 = vmatpush1.bf16.msra.mxu0 %v1351
        %1374 = vmatprep.subr.bf16.mxu0 0
        %1375 = vmatpush1.bf16.msra.mxu0 %v1352
        %1376 = vmatprep.subr.bf16.mxu0 0
        %1377 = vmatpush1.bf16.msra.mxu0 %v1353
        %1378 = vmatprep.subr.bf16.mxu0 0
        %1379 = vmatpush1.bf16.msra.mxu0 0
        %1380 = vmatprep.subr.bf16.mxu0 0
        %1381 = vmatpush1.bf16.msra.mxu0 0
        %1382 = vmatprep.subr.bf16.mxu0 0
        %1383 = vmatpush1.bf16.msra.mxu0 0
        %1384 = vmatprep.subr.bf16.mxu0 0
        %1385 = vmatpush1.bf16.msra.mxu0 0
        %1386 = vmatprep.subr.bf16.mxu0 0
        %1387 = vmatpush1.bf16.msra.mxu0 0
        %1388 = vmatprep.subr.bf16.mxu0 0
        %1389 = vmatpush1.bf16.msra.mxu0 0
        %1390 = vmatprep.subr.bf16.mxu0 0
        %1391 = vmatpush1.bf16.msra.mxu0 0
        %1392 = vmatprep.subr.bf16.mxu0 0
        %1393 = vmatpush1.bf16.msra.mxu0 0
        %1394 = vmatprep.mubr.bf16.mxu0 0
        %1395 = vmatmul.mubr.bf16.gmra.mrb[0].mxu0 %v1289
        %v1396 = vpop.f32.mrb[0].mxu0
        %v1397 = vadd.f32 %v1312, %v1396
        %v1398 = vpop.f32.mrb[0].mxu0
        %v1399 = vpop.f32.mrb[0].mxu0
        %v1400 = vadd.f32 %v1312, %v1399
        %v1401 = vpop.f32.mrb[0].mxu0
        %1402 = vmatprep.mubr.bf16.mxu0 0
        %1403 = vmatmul.mubr.bf16.gmra.mrb[0].mxu0 %v1290
        %v1404 = vpop.f32.mrb[0].mxu0
        %v1405 = vadd.f32 %v1312, %v1404
        %v1406 = vpop.f32.mrb[0].mxu0
        %v1407 = vpop.f32.mrb[0].mxu0
        %v1408 = vpop.f32.mrb[0].mxu0
        %1409 = vdwg.mxu0
        %v1410 = vld [vmem:[%s991] sm:$0xf]
        %v1411 = vld [vmem:[%s991 + $0x4] sm:$0xf]
        %v1412 = vld [vmem:[%s991 + $0x8] sm:$0xf]
        %v1413 = vld [vmem:[%s991 + $0xc] sm:$0xf]
        %v1414 = vld [vmem:[%s991 + $0x10] sm:$0xf]
        %v1415 = vld [vmem:[%s991 + $0x14] sm:$0xf]
        %v1416 = vld [vmem:[%s991 + $0x18] sm:$0xf]
        %v1417 = vld [vmem:[%s991 + $0x1c] sm:$0xf]
        %v1418 = vld [vmem:[%s991 + $0x20] sm:$0xf]
        %v1419 = vld [vmem:[%s991 + $0x24] sm:$0xf]
        %v1420 = vld [vmem:[%s991 + $0x28] sm:$0xf]
        %v1421 = vld [vmem:[%s991 + $0x2c] sm:$0xf]
        %v1422 = vld [vmem:[%s991 + $0x30] sm:$0xf]
        %v1423 = vld [vmem:[%s991 + $0x34] sm:$0xf]
        %v1424 = vld [vmem:[%s991 + $0x38] sm:$0xf]
        %v1425 = vld [vmem:[%s991 + $0x3c] sm:$0xf]
        %v1426 = vld [vmem:[%s999] sm:$0x1]
        %v1428 = vlaneseq
        %v1429 = vshrl.u32 %v1428, 7
        %v1430 = vsub.s32 0, %v1429
        %v1431 = vrot.slane %v1426, %v1430
        %v1449 = vunpack.c.l.b16 %v1410
        %v1450 = vunpack.c.l.b16 %v1411
        %v1451 = vunpack.c.l.b16 %v1412
        %v1452 = vunpack.c.l.b16 %v1413
        %v1453 = vunpack.c.l.b16 %v1414
        %v1454 = vunpack.c.l.b16 %v1415
        %v1455 = vunpack.c.l.b16 %v1416
        %v1456 = vunpack.c.l.b16 %v1417
        %v1457 = vunpack.c.l.b16 %v1418
        %v1458 = vunpack.c.l.b16 %v1419
        %v1459 = vunpack.c.l.b16 %v1420
        %v1460 = vunpack.c.l.b16 %v1421
        %v1461 = vunpack.c.l.b16 %v1422
        %v1462 = vunpack.c.l.b16 %v1423
        %v1463 = vunpack.c.l.b16 %v1424
        %v1464 = vunpack.c.l.b16 %v1425
        %v1465 = vpack.c.b16 %v1450, %v1449
        %v1466 = vpack.c.b16 %v1452, %v1451
        %v1467 = vpack.c.b16 %v1454, %v1453
        %v1468 = vpack.c.b16 %v1456, %v1455
        %v1469 = vpack.c.b16 %v1458, %v1457
        %v1470 = vpack.c.b16 %v1460, %v1459
        %v1471 = vpack.c.b16 %v1462, %v1461
        %v1472 = vpack.c.b16 %v1464, %v1463
        %1481 = vmatprep.subr.bf16.mxu0 0
        %1482 = vmatpush1.bf16.msra.mxu0 %v1465
        %1483 = vmatprep.subr.bf16.mxu0 0
        %1484 = vmatpush1.bf16.msra.mxu0 %v1466
        %1485 = vmatprep.subr.bf16.mxu0 0
        %1486 = vmatpush1.bf16.msra.mxu0 %v1467
        %1487 = vmatprep.subr.bf16.mxu0 0
        %1488 = vmatpush1.bf16.msra.mxu0 %v1468
        %1489 = vmatprep.subr.bf16.mxu0 0
        %1490 = vmatpush1.bf16.msra.mxu0 %v1469
        %1491 = vmatprep.subr.bf16.mxu0 0
        %1492 = vmatpush1.bf16.msra.mxu0 %v1470
        %1493 = vmatprep.subr.bf16.mxu0 0
        %1494 = vmatpush1.bf16.msra.mxu0 %v1471
        %1495 = vmatprep.subr.bf16.mxu0 0
        %1496 = vmatpush1.bf16.msra.mxu0 %v1472
        %1497 = vmatprep.subr.bf16.mxu0 0
        %1498 = vmatpush1.bf16.msra.mxu0 0
        %1499 = vmatprep.subr.bf16.mxu0 0
        %1500 = vmatpush1.bf16.msra.mxu0 0
        %1501 = vmatprep.subr.bf16.mxu0 0
        %1502 = vmatpush1.bf16.msra.mxu0 0
        %1503 = vmatprep.subr.bf16.mxu0 0
        %1504 = vmatpush1.bf16.msra.mxu0 0
        %1505 = vmatprep.subr.bf16.mxu0 0
        %1506 = vmatpush1.bf16.msra.mxu0 0
        %1507 = vmatprep.subr.bf16.mxu0 0
        %1508 = vmatpush1.bf16.msra.mxu0 0
        %1509 = vmatprep.subr.bf16.mxu0 0
        %1510 = vmatpush1.bf16.msra.mxu0 0
        %1511 = vmatprep.subr.bf16.mxu0 0
        %1512 = vmatpush1.bf16.msra.mxu0 0
        %1513 = vmatprep.mubr.bf16.mxu0 0
        %1514 = vmatmul.mubr.bf16.gmra.mrb[0].mxu0 %v1289
        %v1515 = vpop.f32.mrb[0].mxu0
        %v1516 = vadd.f32 %v1431, %v1515
        %v1517 = vpop.f32.mrb[0].mxu0
        %v1518 = vpop.f32.mrb[0].mxu0
        %v1519 = vadd.f32 %v1431, %v1518
        %v1520 = vpop.f32.mrb[0].mxu0
        %1521 = vmatprep.mubr.bf16.mxu0 0
        %1522 = vmatmul.mubr.bf16.gmra.mrb[0].mxu0 %v1290
        %v1523 = vpop.f32.mrb[0].mxu0
        %v1524 = vadd.f32 %v1431, %v1523
        %v1525 = vpop.f32.mrb[0].mxu0
        %v1526 = vpop.f32.mrb[0].mxu0
        %v1527 = vpop.f32.mrb[0].mxu0
        %1528 = vdwg.mxu0
        %v1529 = vld [vmem:[%s1008] sm:$0xf]
        %v1530 = vld [vmem:[%s1008 + $0x4] sm:$0xf]
        %v1531 = vld [vmem:[%s1008 + $0x8] sm:$0xf]
        %v1532 = vld [vmem:[%s1008 + $0xc] sm:$0xf]
        %v1533 = vld [vmem:[%s1008 + $0x10] sm:$0xf]
        %v1534 = vld [vmem:[%s1008 + $0x14] sm:$0xf]
        %v1535 = vld [vmem:[%s1008 + $0x18] sm:$0xf]
        %v1536 = vld [vmem:[%s1008 + $0x1c] sm:$0xf]
        %v1537 = vld [vmem:[%s1008 + $0x20] sm:$0xf]
        %v1538 = vld [vmem:[%s1008 + $0x24] sm:$0xf]
        %v1539 = vld [vmem:[%s1008 + $0x28] sm:$0xf]
        %v1540 = vld [vmem:[%s1008 + $0x2c] sm:$0xf]
        %v1541 = vld [vmem:[%s1008 + $0x30] sm:$0xf]
        %v1542 = vld [vmem:[%s1008 + $0x34] sm:$0xf]
        %v1543 = vld [vmem:[%s1008 + $0x38] sm:$0xf]
        %v1544 = vld [vmem:[%s1008 + $0x3c] sm:$0xf]
        %v1545 = vld [vmem:[%s1016] sm:$0x1]
        %v1547 = vlaneseq
        %v1548 = vshrl.u32 %v1547, 7
        %v1549 = vsub.s32 0, %v1548
        %v1550 = vrot.slane %v1545, %v1549
        %v1568 = vunpack.c.l.b16 %v1529
        %v1569 = vunpack.c.l.b16 %v1530
        %v1570 = vunpack.c.l.b16 %v1531
        %v1571 = vunpack.c.l.b16 %v1532
        %v1572 = vunpack.c.l.b16 %v1533
        %v1573 = vunpack.c.l.b16 %v1534
        %v1574 = vunpack.c.l.b16 %v1535
        %v1575 = vunpack.c.l.b16 %v1536
        %v1576 = vunpack.c.l.b16 %v1537
        %v1577 = vunpack.c.l.b16 %v1538
        %v1578 = vunpack.c.l.b16 %v1539
        %v1579 = vunpack.c.l.b16 %v1540
        %v1580 = vunpack.c.l.b16 %v1541
        %v1581 = vunpack.c.l.b16 %v1542
        %v1582 = vunpack.c.l.b16 %v1543
        %v1583 = vunpack.c.l.b16 %v1544
        %v1584 = vpack.c.b16 %v1569, %v1568
        %v1585 = vpack.c.b16 %v1571, %v1570
        %v1586 = vpack.c.b16 %v1573, %v1572
        %v1587 = vpack.c.b16 %v1575, %v1574
        %v1588 = vpack.c.b16 %v1577, %v1576
        %v1589 = vpack.c.b16 %v1579, %v1578
        %v1590 = vpack.c.b16 %v1581, %v1580
        %v1591 = vpack.c.b16 %v1583, %v1582
        %1600 = vmatprep.subr.bf16.mxu0 0
        %1601 = vmatpush1.bf16.msra.mxu0 %v1584
        %1602 = vmatprep.subr.bf16.mxu0 0
        %1603 = vmatpush1.bf16.msra.mxu0 %v1585
        %1604 = vmatprep.subr.bf16.mxu0 0
        %1605 = vmatpush1.bf16.msra.mxu0 %v1586
        %1606 = vmatprep.subr.bf16.mxu0 0
        %1607 = vmatpush1.bf16.msra.mxu0 %v1587
        %1608 = vmatprep.subr.bf16.mxu0 0
        %1609 = vmatpush1.bf16.msra.mxu0 %v1588
        %1610 = vmatprep.subr.bf16.mxu0 0
        %1611 = vmatpush1.bf16.msra.mxu0 %v1589
        %1612 = vmatprep.subr.bf16.mxu0 0
        %1613 = vmatpush1.bf16.msra.mxu0 %v1590
        %1614 = vmatprep.subr.bf16.mxu0 0
        %1615 = vmatpush1.bf16.msra.mxu0 %v1591
        %1616 = vmatprep.subr.bf16.mxu0 0
        %1617 = vmatpush1.bf16.msra.mxu0 0
        %1618 = vmatprep.subr.bf16.mxu0 0
        %1619 = vmatpush1.bf16.msra.mxu0 0
        %1620 = vmatprep.subr.bf16.mxu0 0
        %1621 = vmatpush1.bf16.msra.mxu0 0
        %1622 = vmatprep.subr.bf16.mxu0 0
        %1623 = vmatpush1.bf16.msra.mxu0 0
        %1624 = vmatprep.subr.bf16.mxu0 0
        %1625 = vmatpush1.bf16.msra.mxu0 0
        %1626 = vmatprep.subr.bf16.mxu0 0
        %1627 = vmatpush1.bf16.msra.mxu0 0
        %1628 = vmatprep.subr.bf16.mxu0 0
        %1629 = vmatpush1.bf16.msra.mxu0 0
        %1630 = vmatprep.subr.bf16.mxu0 0
        %1631 = vmatpush1.bf16.msra.mxu0 0
        %1632 = vmatprep.mubr.bf16.mxu0 0
        %1633 = vmatmul.mubr.bf16.gmra.mrb[0].mxu0 %v1289
        %v1634 = vpop.f32.mrb[0].mxu0
        %v1635 = vadd.f32 %v1550, %v1634
        %v1636 = vpop.f32.mrb[0].mxu0
        %v1637 = vpop.f32.mrb[0].mxu0
        %v1638 = vadd.f32 %v1550, %v1637
        %v1639 = vpop.f32.mrb[0].mxu0
        %1640 = vmatprep.mubr.bf16.mxu0 0
        %1641 = vmatmul.mubr.bf16.gmra.mrb[0].mxu0 %v1290
        %v1642 = vpop.f32.mrb[0].mxu0
        %v1643 = vadd.f32 %v1550, %v1642
        %v1644 = vpop.f32.mrb[0].mxu0
        %v1645 = vpop.f32.mrb[0].mxu0
        %v1646 = vpop.f32.mrb[0].mxu0
        %1647 = vdwg.mxu0
        %1651 = vrot.lane.b32.xlu0 %v1397, 96
        %v1652 = vpop.permute.xlu0 %1651
        %1653 = vrot.lane.b32.xlu0 %v1400, 96
        %v1654 = vpop.permute.xlu0 %1653
        %1655 = vrot.lane.b32.xlu0 %v1405, 96
        %v1656 = vpop.permute.xlu0 %1655
        %1660 = vrot.lane.b32.xlu0 %v1397, 64
        %v1661 = vpop.permute.xlu0 %1660
        %1662 = vrot.lane.b32.xlu0 %v1400, 64
        %v1663 = vpop.permute.xlu0 %1662
        %1664 = vrot.lane.b32.xlu0 %v1405, 64
        %v1665 = vpop.permute.xlu0 %1664
        %1669 = vrot.lane.b32.xlu0 %v1397, 32
        %v1670 = vpop.permute.xlu0 %1669
        %1671 = vrot.lane.b32.xlu0 %v1400, 32
        %v1672 = vpop.permute.xlu0 %1671
        %1673 = vrot.lane.b32.xlu0 %v1405, 32
        %v1674 = vpop.permute.xlu0 %1673
        %v1678 = vcombine.low %v1397, %v1661
        %v1679 = vcombine.high %v1397, %v1661
        %v1681 = vunpack.c.l.s4 1983009808
        %v1682 = vunpack.c.0.s8 %v1681
        %v1683 = vlaneseq
        %v1684 = vshrl.u32 %v1683, 7
        %v1685 = vsub.s32 %v1682, %v1684
        %v1686 = vrot.slane %v1678, %v1685
        %v1688 = vunpack.c.l.s4 1983009808
        %v1689 = vunpack.c.0.s8 %v1688
        %v1690 = vlaneseq
        %v1691 = vshrl.u32 %v1690, 7
        %v1692 = vsub.s32 %v1689, %v1691
        %v1693 = vrot.slane %v1679, %v1692
        %v1694 = vcombine.low %v1652, %v1670
        %v1695 = vcombine.high %v1652, %v1670
        %v1697 = vunpack.c.l.s4 1983009808
        %v1698 = vunpack.c.0.s8 %v1697
        %v1699 = vlaneseq
        %v1700 = vshrl.u32 %v1699, 7
        %v1701 = vsub.s32 %v1698, %v1700
        %v1702 = vrot.slane %v1694, %v1701
        %v1704 = vunpack.c.l.s4 1983009808
        %v1705 = vunpack.c.0.s8 %v1704
        %v1706 = vlaneseq
        %v1707 = vshrl.u32 %v1706, 7
        %v1708 = vsub.s32 %v1705, %v1707
        %v1709 = vrot.slane %v1695, %v1708
        %v1710 = vcombine.low %v1686, %v1702
        %v1711 = vcombine.high %v1686, %v1702
        %v1713 = vunpack.c.l.s4 1934713408
        %v1714 = vunpack.c.0.s8 %v1713
        %v1715 = vlaneseq
        %v1716 = vshrl.u32 %v1715, 7
        %v1717 = vsub.s32 %v1714, %v1716
        %v1718 = vrot.slane %v1710, %v1717
        %v1720 = vunpack.c.l.s4 1934713408
        %v1721 = vunpack.c.0.s8 %v1720
        %v1722 = vlaneseq
        %v1723 = vshrl.u32 %v1722, 7
        %v1724 = vsub.s32 %v1721, %v1723
        %v1725 = vrot.slane %v1711, %v1724
        %v1726 = vcombine.low %v1693, %v1709
        %v1727 = vcombine.high %v1693, %v1709
        %v1729 = vunpack.c.l.s4 1934713408
        %v1730 = vunpack.c.0.s8 %v1729
        %v1731 = vlaneseq
        %v1732 = vshrl.u32 %v1731, 7
        %v1733 = vsub.s32 %v1730, %v1732
        %v1734 = vrot.slane %v1726, %v1733
        %v1736 = vunpack.c.l.s4 1934713408
        %v1737 = vunpack.c.0.s8 %v1736
        %v1738 = vlaneseq
        %v1739 = vshrl.u32 %v1738, 7
        %v1740 = vsub.s32 %v1737, %v1739
        %v1741 = vrot.slane %v1727, %v1740
        %v1742 = vcombine.high %v1718, 0.0
        %v1743 = vcombine.high %v1725, 0.0
        %v1744 = vcombine.high %v1734, 0.0
        %v1745 = vcombine.high %v1741, 0.0
        %v1746 = vcombine.low %v1400, %v1663
        %v1747 = vcombine.high %v1400, %v1663
        %v1749 = vunpack.c.l.s4 1983009808
        %v1750 = vunpack.c.0.s8 %v1749
        %v1751 = vlaneseq
        %v1752 = vshrl.u32 %v1751, 7
        %v1753 = vsub.s32 %v1750, %v1752
        %v1754 = vrot.slane %v1746, %v1753
        %v1756 = vunpack.c.l.s4 1983009808
        %v1757 = vunpack.c.0.s8 %v1756
        %v1758 = vlaneseq
        %v1759 = vshrl.u32 %v1758, 7
        %v1760 = vsub.s32 %v1757, %v1759
        %v1761 = vrot.slane %v1747, %v1760
        %v1762 = vcombine.low %v1654, %v1672
        %v1763 = vcombine.high %v1654, %v1672
        %v1765 = vunpack.c.l.s4 1983009808
        %v1766 = vunpack.c.0.s8 %v1765
        %v1767 = vlaneseq
        %v1768 = vshrl.u32 %v1767, 7
        %v1769 = vsub.s32 %v1766, %v1768
        %v1770 = vrot.slane %v1762, %v1769
        %v1772 = vunpack.c.l.s4 1983009808
        %v1773 = vunpack.c.0.s8 %v1772
        %v1774 = vlaneseq
        %v1775 = vshrl.u32 %v1774, 7
        %v1776 = vsub.s32 %v1773, %v1775
        %v1777 = vrot.slane %v1763, %v1776
        %v1778 = vcombine.low %v1754, %v1770
        %v1779 = vcombine.high %v1754, %v1770
        %v1781 = vunpack.c.l.s4 1934713408
        %v1782 = vunpack.c.0.s8 %v1781
        %v1783 = vlaneseq
        %v1784 = vshrl.u32 %v1783, 7
        %v1785 = vsub.s32 %v1782, %v1784
        %v1786 = vrot.slane %v1778, %v1785
        %v1788 = vunpack.c.l.s4 1934713408
        %v1789 = vunpack.c.0.s8 %v1788
        %v1790 = vlaneseq
        %v1791 = vshrl.u32 %v1790, 7
        %v1792 = vsub.s32 %v1789, %v1791
        %v1793 = vrot.slane %v1779, %v1792
        %v1794 = vcombine.low %v1761, %v1777
        %v1795 = vcombine.high %v1761, %v1777
        %v1797 = vunpack.c.l.s4 1934713408
        %v1798 = vunpack.c.0.s8 %v1797
        %v1799 = vlaneseq
        %v1800 = vshrl.u32 %v1799, 7
        %v1801 = vsub.s32 %v1798, %v1800
        %v1802 = vrot.slane %v1794, %v1801
        %v1804 = vunpack.c.l.s4 1934713408
        %v1805 = vunpack.c.0.s8 %v1804
        %v1806 = vlaneseq
        %v1807 = vshrl.u32 %v1806, 7
        %v1808 = vsub.s32 %v1805, %v1807
        %v1809 = vrot.slane %v1795, %v1808
        %v1810 = vcombine.high %v1786, 0.0
        %v1811 = vcombine.high %v1793, 0.0
        %v1812 = vcombine.high %v1802, 0.0
        %v1813 = vcombine.high %v1809, 0.0
        %v1814 = vcombine.low %v1405, %v1665
        %v1816 = vunpack.c.l.s4 1983009808
        %v1817 = vunpack.c.0.s8 %v1816
        %v1818 = vlaneseq
        %v1819 = vshrl.u32 %v1818, 7
        %v1820 = vsub.s32 %v1817, %v1819
        %v1821 = vrot.slane %v1814, %v1820
        %v1822 = vcombine.low %v1656, %v1674
        %v1824 = vunpack.c.l.s4 1983009808
        %v1825 = vunpack.c.0.s8 %v1824
        %v1826 = vlaneseq
        %v1827 = vshrl.u32 %v1826, 7
        %v1828 = vsub.s32 %v1825, %v1827
        %v1829 = vrot.slane %v1822, %v1828
        %v1830 = vcombine.low %v1821, %v1829
        %v1831 = vcombine.low %v1718, %v1725
        %v1833 = vunpack.c.l.s4 1983009808
        %v1834 = vunpack.c.0.s8 %v1833
        %v1835 = vlaneseq
        %v1836 = vshrl.u32 %v1835, 7
        %v1837 = vsub.s32 %v1834, %v1836
        %v1838 = vrot.slane %v1831, %v1837
        %v1839 = vcombine.low %v1742, %v1743
        %v1841 = vunpack.c.l.s4 1983009808
        %v1842 = vunpack.c.0.s8 %v1841
        %v1843 = vlaneseq
        %v1844 = vshrl.u32 %v1843, 7
        %v1845 = vsub.s32 %v1842, %v1844
        %v1846 = vrot.slane %v1839, %v1845
        %v1847 = vcombine.low %v1734, %v1741
        %v1849 = vunpack.c.l.s4 1983009808
        %v1850 = vunpack.c.0.s8 %v1849
        %v1851 = vlaneseq
        %v1852 = vshrl.u32 %v1851, 7
        %v1853 = vsub.s32 %v1850, %v1852
        %v1854 = vrot.slane %v1847, %v1853
        %v1855 = vcombine.low %v1744, %v1745
        %v1857 = vunpack.c.l.s4 1983009808
        %v1858 = vunpack.c.0.s8 %v1857
        %v1859 = vlaneseq
        %v1860 = vshrl.u32 %v1859, 7
        %v1861 = vsub.s32 %v1858, %v1860
        %v1862 = vrot.slane %v1855, %v1861
        %v1863 = vcombine.low %v1838, %v1846
        %v1864 = vcombine.high %v1838, %v1846
        %v1866 = vunpack.c.l.s4 1934713408
        %v1867 = vunpack.c.0.s8 %v1866
        %v1868 = vlaneseq
        %v1869 = vshrl.u32 %v1868, 7
        %v1870 = vsub.s32 %v1867, %v1869
        %v1871 = vrot.slane %v1863, %v1870
        %v1873 = vunpack.c.l.s4 1934713408
        %v1874 = vunpack.c.0.s8 %v1873
        %v1875 = vlaneseq
        %v1876 = vshrl.u32 %v1875, 7
        %v1877 = vsub.s32 %v1874, %v1876
        %v1878 = vrot.slane %v1864, %v1877
        %v1879 = vcombine.low %v1854, %v1862
        %v1880 = vcombine.high %v1854, %v1862
        %v1882 = vunpack.c.l.s4 1934713408
        %v1883 = vunpack.c.0.s8 %v1882
        %v1884 = vlaneseq
        %v1885 = vshrl.u32 %v1884, 7
        %v1886 = vsub.s32 %v1883, %v1885
        %v1887 = vrot.slane %v1879, %v1886
        %v1889 = vunpack.c.l.s4 1934713408
        %v1890 = vunpack.c.0.s8 %v1889
        %v1891 = vlaneseq
        %v1892 = vshrl.u32 %v1891, 7
        %v1893 = vsub.s32 %v1890, %v1892
        %v1894 = vrot.slane %v1880, %v1893
        %v1895 = vcombine.low %v1871, %v1887
        %v1896 = vcombine.high %v1871, %v1887
        %v1897 = vcombine.low %v1878, %v1894
        %v1898 = vcombine.high %v1878, %v1894
        %v1899 = vcombine.low %v1786, %v1793
        %v1901 = vunpack.c.l.s4 1983009808
        %v1902 = vunpack.c.0.s8 %v1901
        %v1903 = vlaneseq
        %v1904 = vshrl.u32 %v1903, 7
        %v1905 = vsub.s32 %v1902, %v1904
        %v1906 = vrot.slane %v1899, %v1905
        %v1907 = vcombine.low %v1810, %v1811
        %v1909 = vunpack.c.l.s4 1983009808
        %v1910 = vunpack.c.0.s8 %v1909
        %v1911 = vlaneseq
        %v1912 = vshrl.u32 %v1911, 7
        %v1913 = vsub.s32 %v1910, %v1912
        %v1914 = vrot.slane %v1907, %v1913
        %v1915 = vcombine.low %v1802, %v1809
        %v1917 = vunpack.c.l.s4 1983009808
        %v1918 = vunpack.c.0.s8 %v1917
        %v1919 = vlaneseq
        %v1920 = vshrl.u32 %v1919, 7
        %v1921 = vsub.s32 %v1918, %v1920
        %v1922 = vrot.slane %v1915, %v1921
        %v1923 = vcombine.low %v1812, %v1813
        %v1925 = vunpack.c.l.s4 1983009808
        %v1926 = vunpack.c.0.s8 %v1925
        %v1927 = vlaneseq
        %v1928 = vshrl.u32 %v1927, 7
        %v1929 = vsub.s32 %v1926, %v1928
        %v1930 = vrot.slane %v1923, %v1929
        %v1931 = vcombine.low %v1906, %v1914
        %v1932 = vcombine.high %v1906, %v1914
        %v1934 = vunpack.c.l.s4 1934713408
        %v1935 = vunpack.c.0.s8 %v1934
        %v1936 = vlaneseq
        %v1937 = vshrl.u32 %v1936, 7
        %v1938 = vsub.s32 %v1935, %v1937
        %v1939 = vrot.slane %v1931, %v1938
        %v1941 = vunpack.c.l.s4 1934713408
        %v1942 = vunpack.c.0.s8 %v1941
        %v1943 = vlaneseq
        %v1944 = vshrl.u32 %v1943, 7
        %v1945 = vsub.s32 %v1942, %v1944
        %v1946 = vrot.slane %v1932, %v1945
        %v1947 = vcombine.low %v1922, %v1930
        %v1948 = vcombine.high %v1922, %v1930
        %v1950 = vunpack.c.l.s4 1934713408
        %v1951 = vunpack.c.0.s8 %v1950
        %v1952 = vlaneseq
        %v1953 = vshrl.u32 %v1952, 7
        %v1954 = vsub.s32 %v1951, %v1953
        %v1955 = vrot.slane %v1947, %v1954
        %v1957 = vunpack.c.l.s4 1934713408
        %v1958 = vunpack.c.0.s8 %v1957
        %v1959 = vlaneseq
        %v1960 = vshrl.u32 %v1959, 7
        %v1961 = vsub.s32 %v1958, %v1960
        %v1962 = vrot.slane %v1948, %v1961
        %v1963 = vcombine.low %v1939, %v1955
        %v1964 = vcombine.high %v1939, %v1955
        %v1965 = vcombine.low %v1946, %v1962
        %v1966 = vcombine.high %v1946, %v1962
        %v1968 = vunpack.c.l.s4 1934713408
        %v1969 = vunpack.c.0.s8 %v1968
        %v1970 = vlaneseq
        %v1971 = vshrl.u32 %v1970, 7
        %v1972 = vsub.s32 %v1969, %v1971
        %v1973 = vrot.slane %v1830, %v1972
        %v1975 = vunpack.c.l.s4 1983009808
        %v1976 = vunpack.c.0.s8 %v1975
        %v1977 = vlaneseq
        %v1978 = vshrl.u32 %v1977, 7
        %v1979 = vsub.s32 %v1976, %v1978
        %v1980 = vrot.slane %v1973, %v1979
        %v1981 = vcombine.high %v1980, 0.0
        %v1983 = vunpack.c.l.s4 1934713408
        %v1984 = vunpack.c.0.s8 %v1983
        %v1985 = vlaneseq
        %v1986 = vshrl.u32 %v1985, 7
        %v1987 = vsub.s32 %v1984, %v1986
        %v1988 = vrot.slane %v1980, %v1987
        %v1990 = vunpack.c.l.s4 1934713408
        %v1991 = vunpack.c.0.s8 %v1990
        %v1992 = vlaneseq
        %v1993 = vshrl.u32 %v1992, 7
        %v1994 = vsub.s32 %v1991, %v1993
        %v1995 = vrot.slane %v1981, %v1994
        %v1996 = vcombine.high %v1988, 0.0
        %v1997 = vcombine.high %v1995, 0.0
        %v1998 = vpack.c.bf16 %v1963, %v1895
        %v1999 = vpack.c.bf16 %v1988, %v1988
        %v2000 = vpack.c.bf16 %v1964, %v1896
        %v2001 = vpack.c.bf16 %v1996, %v1996
        %v2002 = vpack.c.bf16 %v1965, %v1897
        %v2003 = vpack.c.bf16 %v1995, %v1995
        %v2004 = vpack.c.bf16 %v1966, %v1898
        %v2005 = vpack.c.bf16 %v1997, %v1997
        %2009 = vrot.lane.b32.xlu0 %v1516, 96
        %v2010 = vpop.permute.xlu0 %2009
        %2011 = vrot.lane.b32.xlu0 %v1519, 96
        %v2012 = vpop.permute.xlu0 %2011
        %2013 = vrot.lane.b32.xlu0 %v1524, 96
        %v2014 = vpop.permute.xlu0 %2013
        %2018 = vrot.lane.b32.xlu0 %v1516, 64
        %v2019 = vpop.permute.xlu0 %2018
        %2020 = vrot.lane.b32.xlu0 %v1519, 64
        %v2021 = vpop.permute.xlu0 %2020
        %2022 = vrot.lane.b32.xlu0 %v1524, 64
        %v2023 = vpop.permute.xlu0 %2022
        %2027 = vrot.lane.b32.xlu0 %v1516, 32
        %v2028 = vpop.permute.xlu0 %2027
        %2029 = vrot.lane.b32.xlu0 %v1519, 32
        %v2030 = vpop.permute.xlu0 %2029
        %2031 = vrot.lane.b32.xlu0 %v1524, 32
        %v2032 = vpop.permute.xlu0 %2031
        %v2036 = vcombine.low %v1516, %v2019
        %v2037 = vcombine.high %v1516, %v2019
        %v2039 = vunpack.c.l.s4 1983009808
        %v2040 = vunpack.c.0.s8 %v2039
        %v2041 = vlaneseq
        %v2042 = vshrl.u32 %v2041, 7
        %v2043 = vsub.s32 %v2040, %v2042
        %v2044 = vrot.slane %v2036, %v2043
        %v2046 = vunpack.c.l.s4 1983009808
        %v2047 = vunpack.c.0.s8 %v2046
        %v2048 = vlaneseq
        %v2049 = vshrl.u32 %v2048, 7
        %v2050 = vsub.s32 %v2047, %v2049
        %v2051 = vrot.slane %v2037, %v2050
        %v2052 = vcombine.low %v2010, %v2028
        %v2053 = vcombine.high %v2010, %v2028
        %v2055 = vunpack.c.l.s4 1983009808
        %v2056 = vunpack.c.0.s8 %v2055
        %v2057 = vlaneseq
        %v2058 = vshrl.u32 %v2057, 7
        %v2059 = vsub.s32 %v2056, %v2058
        %v2060 = vrot.slane %v2052, %v2059
        %v2062 = vunpack.c.l.s4 1983009808
        %v2063 = vunpack.c.0.s8 %v2062
        %v2064 = vlaneseq
        %v2065 = vshrl.u32 %v2064, 7
        %v2066 = vsub.s32 %v2063, %v2065
        %v2067 = vrot.slane %v2053, %v2066
        %v2068 = vcombine.low %v2044, %v2060
        %v2069 = vcombine.high %v2044, %v2060
        %v2071 = vunpack.c.l.s4 1934713408
        %v2072 = vunpack.c.0.s8 %v2071
        %v2073 = vlaneseq
        %v2074 = vshrl.u32 %v2073, 7
        %v2075 = vsub.s32 %v2072, %v2074
        %v2076 = vrot.slane %v2068, %v2075
        %v2078 = vunpack.c.l.s4 1934713408
        %v2079 = vunpack.c.0.s8 %v2078
        %v2080 = vlaneseq
        %v2081 = vshrl.u32 %v2080, 7
        %v2082 = vsub.s32 %v2079, %v2081
        %v2083 = vrot.slane %v2069, %v2082
        %v2084 = vcombine.low %v2051, %v2067
        %v2085 = vcombine.high %v2051, %v2067
        %v2087 = vunpack.c.l.s4 1934713408
        %v2088 = vunpack.c.0.s8 %v2087
        %v2089 = vlaneseq
        %v2090 = vshrl.u32 %v2089, 7
        %v2091 = vsub.s32 %v2088, %v2090
        %v2092 = vrot.slane %v2084, %v2091
        %v2094 = vunpack.c.l.s4 1934713408
        %v2095 = vunpack.c.0.s8 %v2094
        %v2096 = vlaneseq
        %v2097 = vshrl.u32 %v2096, 7
        %v2098 = vsub.s32 %v2095, %v2097
        %v2099 = vrot.slane %v2085, %v2098
        %v2100 = vcombine.high %v2076, 0.0
        %v2101 = vcombine.high %v2083, 0.0
        %v2102 = vcombine.high %v2092, 0.0
        %v2103 = vcombine.high %v2099, 0.0
        %v2104 = vcombine.low %v1519, %v2021
        %v2105 = vcombine.high %v1519, %v2021
        %v2107 = vunpack.c.l.s4 1983009808
        %v2108 = vunpack.c.0.s8 %v2107
        %v2109 = vlaneseq
        %v2110 = vshrl.u32 %v2109, 7
        %v2111 = vsub.s32 %v2108, %v2110
        %v2112 = vrot.slane %v2104, %v2111
        %v2114 = vunpack.c.l.s4 1983009808
        %v2115 = vunpack.c.0.s8 %v2114
        %v2116 = vlaneseq
        %v2117 = vshrl.u32 %v2116, 7
        %v2118 = vsub.s32 %v2115, %v2117
        %v2119 = vrot.slane %v2105, %v2118
        %v2120 = vcombine.low %v2012, %v2030
        %v2121 = vcombine.high %v2012, %v2030
        %v2123 = vunpack.c.l.s4 1983009808
        %v2124 = vunpack.c.0.s8 %v2123
        %v2125 = vlaneseq
        %v2126 = vshrl.u32 %v2125, 7
        %v2127 = vsub.s32 %v2124, %v2126
        %v2128 = vrot.slane %v2120, %v2127
        %v2130 = vunpack.c.l.s4 1983009808
        %v2131 = vunpack.c.0.s8 %v2130
        %v2132 = vlaneseq
        %v2133 = vshrl.u32 %v2132, 7
        %v2134 = vsub.s32 %v2131, %v2133
        %v2135 = vrot.slane %v2121, %v2134
        %v2136 = vcombine.low %v2112, %v2128
        %v2137 = vcombine.high %v2112, %v2128
        %v2139 = vunpack.c.l.s4 1934713408
        %v2140 = vunpack.c.0.s8 %v2139
        %v2141 = vlaneseq
        %v2142 = vshrl.u32 %v2141, 7
        %v2143 = vsub.s32 %v2140, %v2142
        %v2144 = vrot.slane %v2136, %v2143
        %v2146 = vunpack.c.l.s4 1934713408
        %v2147 = vunpack.c.0.s8 %v2146
        %v2148 = vlaneseq
        %v2149 = vshrl.u32 %v2148, 7
        %v2150 = vsub.s32 %v2147, %v2149
        %v2151 = vrot.slane %v2137, %v2150
        %v2152 = vcombine.low %v2119, %v2135
        %v2153 = vcombine.high %v2119, %v2135
        %v2155 = vunpack.c.l.s4 1934713408
        %v2156 = vunpack.c.0.s8 %v2155
        %v2157 = vlaneseq
        %v2158 = vshrl.u32 %v2157, 7
        %v2159 = vsub.s32 %v2156, %v2158
        %v2160 = vrot.slane %v2152, %v2159
        %v2162 = vunpack.c.l.s4 1934713408
        %v2163 = vunpack.c.0.s8 %v2162
        %v2164 = vlaneseq
        %v2165 = vshrl.u32 %v2164, 7
        %v2166 = vsub.s32 %v2163, %v2165
        %v2167 = vrot.slane %v2153, %v2166
        %v2168 = vcombine.high %v2144, 0.0
        %v2169 = vcombine.high %v2151, 0.0
        %v2170 = vcombine.high %v2160, 0.0
        %v2171 = vcombine.high %v2167, 0.0
        %v2172 = vcombine.low %v1524, %v2023
        %v2174 = vunpack.c.l.s4 1983009808
        %v2175 = vunpack.c.0.s8 %v2174
        %v2176 = vlaneseq
        %v2177 = vshrl.u32 %v2176, 7
        %v2178 = vsub.s32 %v2175, %v2177
        %v2179 = vrot.slane %v2172, %v2178
        %v2180 = vcombine.low %v2014, %v2032
        %v2182 = vunpack.c.l.s4 1983009808
        %v2183 = vunpack.c.0.s8 %v2182
        %v2184 = vlaneseq
        %v2185 = vshrl.u32 %v2184, 7
        %v2186 = vsub.s32 %v2183, %v2185
        %v2187 = vrot.slane %v2180, %v2186
        %v2188 = vcombine.low %v2179, %v2187
        %v2189 = vcombine.low %v2076, %v2083
        %v2191 = vunpack.c.l.s4 1983009808
        %v2192 = vunpack.c.0.s8 %v2191
        %v2193 = vlaneseq
        %v2194 = vshrl.u32 %v2193, 7
        %v2195 = vsub.s32 %v2192, %v2194
        %v2196 = vrot.slane %v2189, %v2195
        %v2197 = vcombine.low %v2100, %v2101
        %v2199 = vunpack.c.l.s4 1983009808
        %v2200 = vunpack.c.0.s8 %v2199
        %v2201 = vlaneseq
        %v2202 = vshrl.u32 %v2201, 7
        %v2203 = vsub.s32 %v2200, %v2202
        %v2204 = vrot.slane %v2197, %v2203
        %v2205 = vcombine.low %v2092, %v2099
        %v2207 = vunpack.c.l.s4 1983009808
        %v2208 = vunpack.c.0.s8 %v2207
        %v2209 = vlaneseq
        %v2210 = vshrl.u32 %v2209, 7
        %v2211 = vsub.s32 %v2208, %v2210
        %v2212 = vrot.slane %v2205, %v2211
        %v2213 = vcombine.low %v2102, %v2103
        %v2215 = vunpack.c.l.s4 1983009808
        %v2216 = vunpack.c.0.s8 %v2215
        %v2217 = vlaneseq
        %v2218 = vshrl.u32 %v2217, 7
        %v2219 = vsub.s32 %v2216, %v2218
        %v2220 = vrot.slane %v2213, %v2219
        %v2221 = vcombine.low %v2196, %v2204
        %v2222 = vcombine.high %v2196, %v2204
        %v2224 = vunpack.c.l.s4 1934713408
        %v2225 = vunpack.c.0.s8 %v2224
        %v2226 = vlaneseq
        %v2227 = vshrl.u32 %v2226, 7
        %v2228 = vsub.s32 %v2225, %v2227
        %v2229 = vrot.slane %v2221, %v2228
        %v2231 = vunpack.c.l.s4 1934713408
        %v2232 = vunpack.c.0.s8 %v2231
        %v2233 = vlaneseq
        %v2234 = vshrl.u32 %v2233, 7
        %v2235 = vsub.s32 %v2232, %v2234
        %v2236 = vrot.slane %v2222, %v2235
        %v2237 = vcombine.low %v2212, %v2220
        %v2238 = vcombine.high %v2212, %v2220
        %v2240 = vunpack.c.l.s4 1934713408
        %v2241 = vunpack.c.0.s8 %v2240
        %v2242 = vlaneseq
        %v2243 = vshrl.u32 %v2242, 7
        %v2244 = vsub.s32 %v2241, %v2243
        %v2245 = vrot.slane %v2237, %v2244
        %v2247 = vunpack.c.l.s4 1934713408
        %v2248 = vunpack.c.0.s8 %v2247
        %v2249 = vlaneseq
        %v2250 = vshrl.u32 %v2249, 7
        %v2251 = vsub.s32 %v2248, %v2250
        %v2252 = vrot.slane %v2238, %v2251
        %v2253 = vcombine.low %v2229, %v2245
        %v2254 = vcombine.high %v2229, %v2245
        %v2255 = vcombine.low %v2236, %v2252
        %v2256 = vcombine.high %v2236, %v2252
        %v2257 = vcombine.low %v2144, %v2151
        %v2259 = vunpack.c.l.s4 1983009808
        %v2260 = vunpack.c.0.s8 %v2259
        %v2261 = vlaneseq
        %v2262 = vshrl.u32 %v2261, 7
        %v2263 = vsub.s32 %v2260, %v2262
        %v2264 = vrot.slane %v2257, %v2263
        %v2265 = vcombine.low %v2168, %v2169
        %v2267 = vunpack.c.l.s4 1983009808
        %v2268 = vunpack.c.0.s8 %v2267
        %v2269 = vlaneseq
        %v2270 = vshrl.u32 %v2269, 7
        %v2271 = vsub.s32 %v2268, %v2270
        %v2272 = vrot.slane %v2265, %v2271
        %v2273 = vcombine.low %v2160, %v2167
        %v2275 = vunpack.c.l.s4 1983009808
        %v2276 = vunpack.c.0.s8 %v2275
        %v2277 = vlaneseq
        %v2278 = vshrl.u32 %v2277, 7
        %v2279 = vsub.s32 %v2276, %v2278
        %v2280 = vrot.slane %v2273, %v2279
        %v2281 = vcombine.low %v2170, %v2171
        %v2283 = vunpack.c.l.s4 1983009808
        %v2284 = vunpack.c.0.s8 %v2283
        %v2285 = vlaneseq
        %v2286 = vshrl.u32 %v2285, 7
        %v2287 = vsub.s32 %v2284, %v2286
        %v2288 = vrot.slane %v2281, %v2287
        %v2289 = vcombine.low %v2264, %v2272
        %v2290 = vcombine.high %v2264, %v2272
        %v2292 = vunpack.c.l.s4 1934713408
        %v2293 = vunpack.c.0.s8 %v2292
        %v2294 = vlaneseq
        %v2295 = vshrl.u32 %v2294, 7
        %v2296 = vsub.s32 %v2293, %v2295
        %v2297 = vrot.slane %v2289, %v2296
        %v2299 = vunpack.c.l.s4 1934713408
        %v2300 = vunpack.c.0.s8 %v2299
        %v2301 = vlaneseq
        %v2302 = vshrl.u32 %v2301, 7
        %v2303 = vsub.s32 %v2300, %v2302
        %v2304 = vrot.slane %v2290, %v2303
        %v2305 = vcombine.low %v2280, %v2288
        %v2306 = vcombine.high %v2280, %v2288
        %v2308 = vunpack.c.l.s4 1934713408
        %v2309 = vunpack.c.0.s8 %v2308
        %v2310 = vlaneseq
        %v2311 = vshrl.u32 %v2310, 7
        %v2312 = vsub.s32 %v2309, %v2311
        %v2313 = vrot.slane %v2305, %v2312
        %v2315 = vunpack.c.l.s4 1934713408
        %v2316 = vunpack.c.0.s8 %v2315
        %v2317 = vlaneseq
        %v2318 = vshrl.u32 %v2317, 7
        %v2319 = vsub.s32 %v2316, %v2318
        %v2320 = vrot.slane %v2306, %v2319
        %v2321 = vcombine.low %v2297, %v2313
        %v2322 = vcombine.high %v2297, %v2313
        %v2323 = vcombine.low %v2304, %v2320
        %v2324 = vcombine.high %v2304, %v2320
        %v2326 = vunpack.c.l.s4 1934713408
        %v2327 = vunpack.c.0.s8 %v2326
        %v2328 = vlaneseq
        %v2329 = vshrl.u32 %v2328, 7
        %v2330 = vsub.s32 %v2327, %v2329
        %v2331 = vrot.slane %v2188, %v2330
        %v2333 = vunpack.c.l.s4 1983009808
        %v2334 = vunpack.c.0.s8 %v2333
        %v2335 = vlaneseq
        %v2336 = vshrl.u32 %v2335, 7
        %v2337 = vsub.s32 %v2334, %v2336
        %v2338 = vrot.slane %v2331, %v2337
        %v2339 = vcombine.high %v2338, 0.0
        %v2341 = vunpack.c.l.s4 1934713408
        %v2342 = vunpack.c.0.s8 %v2341
        %v2343 = vlaneseq
        %v2344 = vshrl.u32 %v2343, 7
        %v2345 = vsub.s32 %v2342, %v2344
        %v2346 = vrot.slane %v2338, %v2345
        %v2348 = vunpack.c.l.s4 1934713408
        %v2349 = vunpack.c.0.s8 %v2348
        %v2350 = vlaneseq
        %v2351 = vshrl.u32 %v2350, 7
        %v2352 = vsub.s32 %v2349, %v2351
        %v2353 = vrot.slane %v2339, %v2352
        %v2354 = vcombine.high %v2346, 0.0
        %v2355 = vcombine.high %v2353, 0.0
        %v2356 = vpack.c.bf16 %v2321, %v2253
        %v2357 = vpack.c.bf16 %v2346, %v2346
        %v2358 = vpack.c.bf16 %v2322, %v2254
        %v2359 = vpack.c.bf16 %v2354, %v2354
        %v2360 = vpack.c.bf16 %v2323, %v2255
        %v2361 = vpack.c.bf16 %v2353, %v2353
        %v2362 = vpack.c.bf16 %v2324, %v2256
        %v2363 = vpack.c.bf16 %v2355, %v2355
        %2367 = vrot.lane.b32.xlu0 %v1635, 96
        %v2368 = vpop.permute.xlu0 %2367
        %2369 = vrot.lane.b32.xlu0 %v1638, 96
        %v2370 = vpop.permute.xlu0 %2369
        %2371 = vrot.lane.b32.xlu0 %v1643, 96
        %v2372 = vpop.permute.xlu0 %2371
        %2376 = vrot.lane.b32.xlu0 %v1635, 64
        %v2377 = vpop.permute.xlu0 %2376
        %2378 = vrot.lane.b32.xlu0 %v1638, 64
        %v2379 = vpop.permute.xlu0 %2378
        %2380 = vrot.lane.b32.xlu0 %v1643, 64
        %v2381 = vpop.permute.xlu0 %2380
        %2385 = vrot.lane.b32.xlu0 %v1635, 32
        %v2386 = vpop.permute.xlu0 %2385
        %2387 = vrot.lane.b32.xlu0 %v1638, 32
        %v2388 = vpop.permute.xlu0 %2387
        %2389 = vrot.lane.b32.xlu0 %v1643, 32
        %v2390 = vpop.permute.xlu0 %2389
        %v2394 = vcombine.low %v1635, %v2377
        %v2395 = vcombine.high %v1635, %v2377
        %v2397 = vunpack.c.l.s4 1983009808
        %v2398 = vunpack.c.0.s8 %v2397
        %v2399 = vlaneseq
        %v2400 = vshrl.u32 %v2399, 7
        %v2401 = vsub.s32 %v2398, %v2400
        %v2402 = vrot.slane %v2394, %v2401
        %v2404 = vunpack.c.l.s4 1983009808
        %v2405 = vunpack.c.0.s8 %v2404
        %v2406 = vlaneseq
        %v2407 = vshrl.u32 %v2406, 7
        %v2408 = vsub.s32 %v2405, %v2407
        %v2409 = vrot.slane %v2395, %v2408
        %v2410 = vcombine.low %v2368, %v2386
        %v2411 = vcombine.high %v2368, %v2386
        %v2413 = vunpack.c.l.s4 1983009808
        %v2414 = vunpack.c.0.s8 %v2413
        %v2415 = vlaneseq
        %v2416 = vshrl.u32 %v2415, 7
        %v2417 = vsub.s32 %v2414, %v2416
        %v2418 = vrot.slane %v2410, %v2417
        %v2420 = vunpack.c.l.s4 1983009808
        %v2421 = vunpack.c.0.s8 %v2420
        %v2422 = vlaneseq
        %v2423 = vshrl.u32 %v2422, 7
        %v2424 = vsub.s32 %v2421, %v2423
        %v2425 = vrot.slane %v2411, %v2424
        %v2426 = vcombine.low %v2402, %v2418
        %v2427 = vcombine.high %v2402, %v2418
        %v2429 = vunpack.c.l.s4 1934713408
        %v2430 = vunpack.c.0.s8 %v2429
        %v2431 = vlaneseq
        %v2432 = vshrl.u32 %v2431, 7
        %v2433 = vsub.s32 %v2430, %v2432
        %v2434 = vrot.slane %v2426, %v2433
        %v2436 = vunpack.c.l.s4 1934713408
        %v2437 = vunpack.c.0.s8 %v2436
        %v2438 = vlaneseq
        %v2439 = vshrl.u32 %v2438, 7
        %v2440 = vsub.s32 %v2437, %v2439
        %v2441 = vrot.slane %v2427, %v2440
        %v2442 = vcombine.low %v2409, %v2425
        %v2443 = vcombine.high %v2409, %v2425
        %v2445 = vunpack.c.l.s4 1934713408
        %v2446 = vunpack.c.0.s8 %v2445
        %v2447 = vlaneseq
        %v2448 = vshrl.u32 %v2447, 7
        %v2449 = vsub.s32 %v2446, %v2448
        %v2450 = vrot.slane %v2442, %v2449
        %v2452 = vunpack.c.l.s4 1934713408
        %v2453 = vunpack.c.0.s8 %v2452
        %v2454 = vlaneseq
        %v2455 = vshrl.u32 %v2454, 7
        %v2456 = vsub.s32 %v2453, %v2455
        %v2457 = vrot.slane %v2443, %v2456
        %v2458 = vcombine.high %v2434, 0.0
        %v2459 = vcombine.high %v2441, 0.0
        %v2460 = vcombine.high %v2450, 0.0
        %v2461 = vcombine.high %v2457, 0.0
        %v2462 = vcombine.low %v1638, %v2379
        %v2463 = vcombine.high %v1638, %v2379
        %v2465 = vunpack.c.l.s4 1983009808
        %v2466 = vunpack.c.0.s8 %v2465
        %v2467 = vlaneseq
        %v2468 = vshrl.u32 %v2467, 7
        %v2469 = vsub.s32 %v2466, %v2468
        %v2470 = vrot.slane %v2462, %v2469
        %v2472 = vunpack.c.l.s4 1983009808
        %v2473 = vunpack.c.0.s8 %v2472
        %v2474 = vlaneseq
        %v2475 = vshrl.u32 %v2474, 7
        %v2476 = vsub.s32 %v2473, %v2475
        %v2477 = vrot.slane %v2463, %v2476
        %v2478 = vcombine.low %v2370, %v2388
        %v2479 = vcombine.high %v2370, %v2388
        %v2481 = vunpack.c.l.s4 1983009808
        %v2482 = vunpack.c.0.s8 %v2481
        %v2483 = vlaneseq
        %v2484 = vshrl.u32 %v2483, 7
        %v2485 = vsub.s32 %v2482, %v2484
        %v2486 = vrot.slane %v2478, %v2485
        %v2488 = vunpack.c.l.s4 1983009808
        %v2489 = vunpack.c.0.s8 %v2488
        %v2490 = vlaneseq
        %v2491 = vshrl.u32 %v2490, 7
        %v2492 = vsub.s32 %v2489, %v2491
        %v2493 = vrot.slane %v2479, %v2492
        %v2494 = vcombine.low %v2470, %v2486
        %v2495 = vcombine.high %v2470, %v2486
        %v2497 = vunpack.c.l.s4 1934713408
        %v2498 = vunpack.c.0.s8 %v2497
        %v2499 = vlaneseq
        %v2500 = vshrl.u32 %v2499, 7
        %v2501 = vsub.s32 %v2498, %v2500
        %v2502 = vrot.slane %v2494, %v2501
        %v2504 = vunpack.c.l.s4 1934713408
        %v2505 = vunpack.c.0.s8 %v2504
        %v2506 = vlaneseq
        %v2507 = vshrl.u32 %v2506, 7
        %v2508 = vsub.s32 %v2505, %v2507
        %v2509 = vrot.slane %v2495, %v2508
        %v2510 = vcombine.low %v2477, %v2493
        %v2511 = vcombine.high %v2477, %v2493
        %v2513 = vunpack.c.l.s4 1934713408
        %v2514 = vunpack.c.0.s8 %v2513
        %v2515 = vlaneseq
        %v2516 = vshrl.u32 %v2515, 7
        %v2517 = vsub.s32 %v2514, %v2516
        %v2518 = vrot.slane %v2510, %v2517
        %v2520 = vunpack.c.l.s4 1934713408
        %v2521 = vunpack.c.0.s8 %v2520
        %v2522 = vlaneseq
        %v2523 = vshrl.u32 %v2522, 7
        %v2524 = vsub.s32 %v2521, %v2523
        %v2525 = vrot.slane %v2511, %v2524
        %v2526 = vcombine.high %v2502, 0.0
        %v2527 = vcombine.high %v2509, 0.0
        %v2528 = vcombine.high %v2518, 0.0
        %v2529 = vcombine.high %v2525, 0.0
        %v2530 = vcombine.low %v1643, %v2381
        %v2532 = vunpack.c.l.s4 1983009808
        %v2533 = vunpack.c.0.s8 %v2532
        %v2534 = vlaneseq
        %v2535 = vshrl.u32 %v2534, 7
        %v2536 = vsub.s32 %v2533, %v2535
        %v2537 = vrot.slane %v2530, %v2536
        %v2538 = vcombine.low %v2372, %v2390
        %v2540 = vunpack.c.l.s4 1983009808
        %v2541 = vunpack.c.0.s8 %v2540
        %v2542 = vlaneseq
        %v2543 = vshrl.u32 %v2542, 7
        %v2544 = vsub.s32 %v2541, %v2543
        %v2545 = vrot.slane %v2538, %v2544
        %v2546 = vcombine.low %v2537, %v2545
        %v2547 = vcombine.low %v2434, %v2441
        %v2549 = vunpack.c.l.s4 1983009808
        %v2550 = vunpack.c.0.s8 %v2549
        %v2551 = vlaneseq
        %v2552 = vshrl.u32 %v2551, 7
        %v2553 = vsub.s32 %v2550, %v2552
        %v2554 = vrot.slane %v2547, %v2553
        %v2555 = vcombine.low %v2458, %v2459
        %v2557 = vunpack.c.l.s4 1983009808
        %v2558 = vunpack.c.0.s8 %v2557
        %v2559 = vlaneseq
        %v2560 = vshrl.u32 %v2559, 7
        %v2561 = vsub.s32 %v2558, %v2560
        %v2562 = vrot.slane %v2555, %v2561
        %v2563 = vcombine.low %v2450, %v2457
        %v2565 = vunpack.c.l.s4 1983009808
        %v2566 = vunpack.c.0.s8 %v2565
        %v2567 = vlaneseq
        %v2568 = vshrl.u32 %v2567, 7
        %v2569 = vsub.s32 %v2566, %v2568
        %v2570 = vrot.slane %v2563, %v2569
        %v2571 = vcombine.low %v2460, %v2461
        %v2573 = vunpack.c.l.s4 1983009808
        %v2574 = vunpack.c.0.s8 %v2573
        %v2575 = vlaneseq
        %v2576 = vshrl.u32 %v2575, 7
        %v2577 = vsub.s32 %v2574, %v2576
        %v2578 = vrot.slane %v2571, %v2577
        %v2579 = vcombine.low %v2554, %v2562
        %v2580 = vcombine.high %v2554, %v2562
        %v2582 = vunpack.c.l.s4 1934713408
        %v2583 = vunpack.c.0.s8 %v2582
        %v2584 = vlaneseq
        %v2585 = vshrl.u32 %v2584, 7
        %v2586 = vsub.s32 %v2583, %v2585
        %v2587 = vrot.slane %v2579, %v2586
        %v2589 = vunpack.c.l.s4 1934713408
        %v2590 = vunpack.c.0.s8 %v2589
        %v2591 = vlaneseq
        %v2592 = vshrl.u32 %v2591, 7
        %v2593 = vsub.s32 %v2590, %v2592
        %v2594 = vrot.slane %v2580, %v2593
        %v2595 = vcombine.low %v2570, %v2578
        %v2596 = vcombine.high %v2570, %v2578
        %v2598 = vunpack.c.l.s4 1934713408
        %v2599 = vunpack.c.0.s8 %v2598
        %v2600 = vlaneseq
        %v2601 = vshrl.u32 %v2600, 7
        %v2602 = vsub.s32 %v2599, %v2601
        %v2603 = vrot.slane %v2595, %v2602
        %v2605 = vunpack.c.l.s4 1934713408
        %v2606 = vunpack.c.0.s8 %v2605
        %v2607 = vlaneseq
        %v2608 = vshrl.u32 %v2607, 7
        %v2609 = vsub.s32 %v2606, %v2608
        %v2610 = vrot.slane %v2596, %v2609
        %v2611 = vcombine.low %v2587, %v2603
        %v2612 = vcombine.high %v2587, %v2603
        %v2613 = vcombine.low %v2594, %v2610
        %v2614 = vcombine.high %v2594, %v2610
        %v2615 = vcombine.low %v2502, %v2509
        %v2617 = vunpack.c.l.s4 1983009808
        %v2618 = vunpack.c.0.s8 %v2617
        %v2619 = vlaneseq
        %v2620 = vshrl.u32 %v2619, 7
        %v2621 = vsub.s32 %v2618, %v2620
        %v2622 = vrot.slane %v2615, %v2621
        %v2623 = vcombine.low %v2526, %v2527
        %v2625 = vunpack.c.l.s4 1983009808
        %v2626 = vunpack.c.0.s8 %v2625
        %v2627 = vlaneseq
        %v2628 = vshrl.u32 %v2627, 7
        %v2629 = vsub.s32 %v2626, %v2628
        %v2630 = vrot.slane %v2623, %v2629
        %v2631 = vcombine.low %v2518, %v2525
        %v2633 = vunpack.c.l.s4 1983009808
        %v2634 = vunpack.c.0.s8 %v2633
        %v2635 = vlaneseq
        %v2636 = vshrl.u32 %v2635, 7
        %v2637 = vsub.s32 %v2634, %v2636
        %v2638 = vrot.slane %v2631, %v2637
        %v2639 = vcombine.low %v2528, %v2529
        %v2641 = vunpack.c.l.s4 1983009808
        %v2642 = vunpack.c.0.s8 %v2641
        %v2643 = vlaneseq
        %v2644 = vshrl.u32 %v2643, 7
        %v2645 = vsub.s32 %v2642, %v2644
        %v2646 = vrot.slane %v2639, %v2645
        %v2647 = vcombine.low %v2622, %v2630
        %v2648 = vcombine.high %v2622, %v2630
        %v2650 = vunpack.c.l.s4 1934713408
        %v2651 = vunpack.c.0.s8 %v2650
        %v2652 = vlaneseq
        %v2653 = vshrl.u32 %v2652, 7
        %v2654 = vsub.s32 %v2651, %v2653
        %v2655 = vrot.slane %v2647, %v2654
        %v2657 = vunpack.c.l.s4 1934713408
        %v2658 = vunpack.c.0.s8 %v2657
        %v2659 = vlaneseq
        %v2660 = vshrl.u32 %v2659, 7
        %v2661 = vsub.s32 %v2658, %v2660
        %v2662 = vrot.slane %v2648, %v2661
        %v2663 = vcombine.low %v2638, %v2646
        %v2664 = vcombine.high %v2638, %v2646
        %v2666 = vunpack.c.l.s4 1934713408
        %v2667 = vunpack.c.0.s8 %v2666
        %v2668 = vlaneseq
        %v2669 = vshrl.u32 %v2668, 7
        %v2670 = vsub.s32 %v2667, %v2669
        %v2671 = vrot.slane %v2663, %v2670
        %v2673 = vunpack.c.l.s4 1934713408
        %v2674 = vunpack.c.0.s8 %v2673
        %v2675 = vlaneseq
        %v2676 = vshrl.u32 %v2675, 7
        %v2677 = vsub.s32 %v2674, %v2676
        %v2678 = vrot.slane %v2664, %v2677
        %v2679 = vcombine.low %v2655, %v2671
        %v2680 = vcombine.high %v2655, %v2671
        %v2681 = vcombine.low %v2662, %v2678
        %v2682 = vcombine.high %v2662, %v2678
        %v2684 = vunpack.c.l.s4 1934713408
        %v2685 = vunpack.c.0.s8 %v2684
        %v2686 = vlaneseq
        %v2687 = vshrl.u32 %v2686, 7
        %v2688 = vsub.s32 %v2685, %v2687
        %v2689 = vrot.slane %v2546, %v2688
        %v2691 = vunpack.c.l.s4 1983009808
        %v2692 = vunpack.c.0.s8 %v2691
        %v2693 = vlaneseq
        %v2694 = vshrl.u32 %v2693, 7
        %v2695 = vsub.s32 %v2692, %v2694
        %v2696 = vrot.slane %v2689, %v2695
        %v2697 = vcombine.high %v2696, 0.0
        %v2699 = vunpack.c.l.s4 1934713408
        %v2700 = vunpack.c.0.s8 %v2699
        %v2701 = vlaneseq
        %v2702 = vshrl.u32 %v2701, 7
        %v2703 = vsub.s32 %v2700, %v2702
        %v2704 = vrot.slane %v2696, %v2703
        %v2706 = vunpack.c.l.s4 1934713408
        %v2707 = vunpack.c.0.s8 %v2706
        %v2708 = vlaneseq
        %v2709 = vshrl.u32 %v2708, 7
        %v2710 = vsub.s32 %v2707, %v2709
        %v2711 = vrot.slane %v2697, %v2710
        %v2712 = vcombine.high %v2704, 0.0
        %v2713 = vcombine.high %v2711, 0.0
        %v2714 = vpack.c.bf16 %v2679, %v2611
        %v2715 = vpack.c.bf16 %v2704, %v2704
        %v2716 = vpack.c.bf16 %v2680, %v2612
        %v2717 = vpack.c.bf16 %v2712, %v2712
        %v2718 = vpack.c.bf16 %v2681, %v2613
        %v2719 = vpack.c.bf16 %v2711, %v2711
        %v2720 = vpack.c.bf16 %v2682, %v2614
        %v2721 = vpack.c.bf16 %v2713, %v2713
        %vm2722 = vcmask 261120
        %v2724 = vsel %vm2722, %v1998, 0
        %v2727 = vsel %vm2722, %v1999, 0
        %v2730 = vsel %vm2722, %v2356, 0
        %v2733 = vsel %vm2722, %v2357, 0
        %2735 = vmatprep.subr.bf16.mxu0 0
        %2736 = vmatpush1.bf16.xpose.msra.mxu0 %v2730
        %2737 = vmatprep.subr.bf16.mxu0 0
        %2738 = vmatpush1.bf16.xpose.msra.mxu0 %v2733
        %2739 = vmatprep.subr.bf16.mxu0 0
        %2740 = vmatpush1.bf16.xpose.msra.mxu0 0
        %2741 = vmatprep.subr.bf16.mxu0 0
        %2742 = vmatpush1.bf16.xpose.msra.mxu0 0
        %2743 = vmatprep.subr.bf16.mxu0 0
        %2744 = vmatpush1.bf16.xpose.msra.mxu0 0
        %2745 = vmatprep.subr.bf16.mxu0 0
        %2746 = vmatpush1.bf16.xpose.msra.mxu0 0
        %2747 = vmatprep.subr.bf16.mxu0 0
        %2748 = vmatpush1.bf16.xpose.msra.mxu0 0
        %2749 = vmatprep.subr.bf16.mxu0 0
        %2750 = vmatpush1.bf16.xpose.msra.mxu0 0
        %2751 = vmatprep.subr.bf16.mxu0 0
        %2752 = vmatpush1.bf16.xpose.msra.mxu0 0
        %2753 = vmatprep.subr.bf16.mxu0 0
        %2754 = vmatpush1.bf16.xpose.msra.mxu0 0
        %2755 = vmatprep.subr.bf16.mxu0 0
        %2756 = vmatpush1.bf16.xpose.msra.mxu0 0
        %2757 = vmatprep.subr.bf16.mxu0 0
        %2758 = vmatpush1.bf16.xpose.msra.mxu0 0
        %2759 = vmatprep.subr.bf16.mxu0 0
        %2760 = vmatpush1.bf16.xpose.msra.mxu0 0
        %2761 = vmatprep.subr.bf16.mxu0 0
        %2762 = vmatpush1.bf16.xpose.msra.mxu0 0
        %2763 = vmatprep.subr.bf16.mxu0 0
        %2764 = vmatpush1.bf16.xpose.msra.mxu0 0
        %2765 = vmatprep.subr.bf16.mxu0 0
        %2766 = vmatpush1.bf16.xpose.msra.mxu0 0
        %2767 = vmatprep.mubr.bf16.mxu0 0
        %2768 = vmatmul.mubr.bf16.gmra.mrb[0].mxu0 %v2724
        %v2769 = vpop.f32.mrb[0].mxu0
        %v2770 = vadd.f32 0.0, %v2769
        %v2771 = vpop.f32.mrb[0].mxu0
        %v2772 = vpop.f32.mrb[0].mxu0
        %v2773 = vadd.f32 0.0, %v2772
        %v2774 = vpop.f32.mrb[0].mxu0
        %2775 = vmatprep.mubr.bf16.mxu0 0
        %2776 = vmatmul.mubr.bf16.gmra.mrb[0].mxu0 %v2727
        %v2777 = vpop.f32.mrb[0].mxu0
        %v2778 = vadd.f32 0.0, %v2777
        %v2779 = vpop.f32.mrb[0].mxu0
        %v2780 = vpop.f32.mrb[0].mxu0
        %v2781 = vpop.f32.mrb[0].mxu0
        %2782 = vdwg.mxu0
        %v2784 = vsel %vm2722, %v2000, 0
        %v2787 = vsel %vm2722, %v2001, 0
        %v2790 = vsel %vm2722, %v2358, 0
        %v2793 = vsel %vm2722, %v2359, 0
        %2795 = vmatprep.subr.bf16.mxu0 0
        %2796 = vmatpush1.bf16.xpose.msra.mxu0 %v2790
        %2797 = vmatprep.subr.bf16.mxu0 0
        %2798 = vmatpush1.bf16.xpose.msra.mxu0 %v2793
        %2799 = vmatprep.subr.bf16.mxu0 0
        %2800 = vmatpush1.bf16.xpose.msra.mxu0 0
        %2801 = vmatprep.subr.bf16.mxu0 0
        %2802 = vmatpush1.bf16.xpose.msra.mxu0 0
        %2803 = vmatprep.subr.bf16.mxu0 0
        %2804 = vmatpush1.bf16.xpose.msra.mxu0 0
        %2805 = vmatprep.subr.bf16.mxu0 0
        %2806 = vmatpush1.bf16.xpose.msra.mxu0 0
        %2807 = vmatprep.subr.bf16.mxu0 0
        %2808 = vmatpush1.bf16.xpose.msra.mxu0 0
        %2809 = vmatprep.subr.bf16.mxu0 0
        %2810 = vmatpush1.bf16.xpose.msra.mxu0 0
        %2811 = vmatprep.subr.bf16.mxu0 0
        %2812 = vmatpush1.bf16.xpose.msra.mxu0 0
        %2813 = vmatprep.subr.bf16.mxu0 0
        %2814 = vmatpush1.bf16.xpose.msra.mxu0 0
        %2815 = vmatprep.subr.bf16.mxu0 0
        %2816 = vmatpush1.bf16.xpose.msra.mxu0 0
        %2817 = vmatprep.subr.bf16.mxu0 0
        %2818 = vmatpush1.bf16.xpose.msra.mxu0 0
        %2819 = vmatprep.subr.bf16.mxu0 0
        %2820 = vmatpush1.bf16.xpose.msra.mxu0 0
        %2821 = vmatprep.subr.bf16.mxu0 0
        %2822 = vmatpush1.bf16.xpose.msra.mxu0 0
        %2823 = vmatprep.subr.bf16.mxu0 0
        %2824 = vmatpush1.bf16.xpose.msra.mxu0 0
        %2825 = vmatprep.subr.bf16.mxu0 0
        %2826 = vmatpush1.bf16.xpose.msra.mxu0 0
        %2827 = vmatprep.mubr.bf16.mxu0 0
        %2828 = vmatmul.mubr.bf16.gmra.mrb[0].mxu0 %v2784
        %v2829 = vpop.f32.mrb[0].mxu0
        %v2830 = vadd.f32 0.0, %v2829
        %v2831 = vpop.f32.mrb[0].mxu0
        %v2832 = vpop.f32.mrb[0].mxu0
        %v2833 = vadd.f32 0.0, %v2832
        %v2834 = vpop.f32.mrb[0].mxu0
        %2835 = vmatprep.mubr.bf16.mxu0 0
        %2836 = vmatmul.mubr.bf16.gmra.mrb[0].mxu0 %v2787
        %v2837 = vpop.f32.mrb[0].mxu0
        %v2838 = vadd.f32 0.0, %v2837
        %v2839 = vpop.f32.mrb[0].mxu0
        %v2840 = vpop.f32.mrb[0].mxu0
        %v2841 = vpop.f32.mrb[0].mxu0
        %2842 = vdwg.mxu0
        %v2844 = vsel %vm2722, %v2002, 0
        %v2847 = vsel %vm2722, %v2003, 0
        %v2850 = vsel %vm2722, %v2360, 0
        %v2853 = vsel %vm2722, %v2361, 0
        %2855 = vmatprep.subr.bf16.mxu0 0
        %2856 = vmatpush1.bf16.xpose.msra.mxu0 %v2850
        %2857 = vmatprep.subr.bf16.mxu0 0
        %2858 = vmatpush1.bf16.xpose.msra.mxu0 %v2853
        %2859 = vmatprep.subr.bf16.mxu0 0
        %2860 = vmatpush1.bf16.xpose.msra.mxu0 0
        %2861 = vmatprep.subr.bf16.mxu0 0
        %2862 = vmatpush1.bf16.xpose.msra.mxu0 0
        %2863 = vmatprep.subr.bf16.mxu0 0
        %2864 = vmatpush1.bf16.xpose.msra.mxu0 0
        %2865 = vmatprep.subr.bf16.mxu0 0
        %2866 = vmatpush1.bf16.xpose.msra.mxu0 0
        %2867 = vmatprep.subr.bf16.mxu0 0
        %2868 = vmatpush1.bf16.xpose.msra.mxu0 0
        %2869 = vmatprep.subr.bf16.mxu0 0
        %2870 = vmatpush1.bf16.xpose.msra.mxu0 0
        %2871 = vmatprep.subr.bf16.mxu0 0
        %2872 = vmatpush1.bf16.xpose.msra.mxu0 0
        %2873 = vmatprep.subr.bf16.mxu0 0
        %2874 = vmatpush1.bf16.xpose.msra.mxu0 0
        %2875 = vmatprep.subr.bf16.mxu0 0
        %2876 = vmatpush1.bf16.xpose.msra.mxu0 0
        %2877 = vmatprep.subr.bf16.mxu0 0
        %2878 = vmatpush1.bf16.xpose.msra.mxu0 0
        %2879 = vmatprep.subr.bf16.mxu0 0
        %2880 = vmatpush1.bf16.xpose.msra.mxu0 0
        %2881 = vmatprep.subr.bf16.mxu0 0
        %2882 = vmatpush1.bf16.xpose.msra.mxu0 0
        %2883 = vmatprep.subr.bf16.mxu0 0
        %2884 = vmatpush1.bf16.xpose.msra.mxu0 0
        %2885 = vmatprep.subr.bf16.mxu0 0
        %2886 = vmatpush1.bf16.xpose.msra.mxu0 0
        %2887 = vmatprep.mubr.bf16.mxu0 0
        %2888 = vmatmul.mubr.bf16.gmra.mrb[0].mxu0 %v2844
        %v2889 = vpop.f32.mrb[0].mxu0
        %v2890 = vadd.f32 0.0, %v2889
        %v2891 = vpop.f32.mrb[0].mxu0
        %v2892 = vpop.f32.mrb[0].mxu0
        %v2893 = vadd.f32 0.0, %v2892
        %v2894 = vpop.f32.mrb[0].mxu0
        %2895 = vmatprep.mubr.bf16.mxu0 0
        %2896 = vmatmul.mubr.bf16.gmra.mrb[0].mxu0 %v2847
        %v2897 = vpop.f32.mrb[0].mxu0
        %v2898 = vadd.f32 0.0, %v2897
        %v2899 = vpop.f32.mrb[0].mxu0
        %v2900 = vpop.f32.mrb[0].mxu0
        %v2901 = vpop.f32.mrb[0].mxu0
        %2902 = vdwg.mxu0
        %v2904 = vsel %vm2722, %v2004, 0
        %v2907 = vsel %vm2722, %v2005, 0
        %v2910 = vsel %vm2722, %v2362, 0
        %v2913 = vsel %vm2722, %v2363, 0
        %2915 = vmatprep.subr.bf16.mxu0 0
        %2916 = vmatpush1.bf16.xpose.msra.mxu0 %v2910
        %2917 = vmatprep.subr.bf16.mxu0 0
        %2918 = vmatpush1.bf16.xpose.msra.mxu0 %v2913
        %2919 = vmatprep.subr.bf16.mxu0 0
        %2920 = vmatpush1.bf16.xpose.msra.mxu0 0
        %2921 = vmatprep.subr.bf16.mxu0 0
        %2922 = vmatpush1.bf16.xpose.msra.mxu0 0
        %2923 = vmatprep.subr.bf16.mxu0 0
        %2924 = vmatpush1.bf16.xpose.msra.mxu0 0
        %2925 = vmatprep.subr.bf16.mxu0 0
        %2926 = vmatpush1.bf16.xpose.msra.mxu0 0
        %2927 = vmatprep.subr.bf16.mxu0 0
        %2928 = vmatpush1.bf16.xpose.msra.mxu0 0
        %2929 = vmatprep.subr.bf16.mxu0 0
        %2930 = vmatpush1.bf16.xpose.msra.mxu0 0
        %2931 = vmatprep.subr.bf16.mxu0 0
        %2932 = vmatpush1.bf16.xpose.msra.mxu0 0
        %2933 = vmatprep.subr.bf16.mxu0 0
        %2934 = vmatpush1.bf16.xpose.msra.mxu0 0
        %2935 = vmatprep.subr.bf16.mxu0 0
        %2936 = vmatpush1.bf16.xpose.msra.mxu0 0
        %2937 = vmatprep.subr.bf16.mxu0 0
        %2938 = vmatpush1.bf16.xpose.msra.mxu0 0
        %2939 = vmatprep.subr.bf16.mxu0 0
        %2940 = vmatpush1.bf16.xpose.msra.mxu0 0
        %2941 = vmatprep.subr.bf16.mxu0 0
        %2942 = vmatpush1.bf16.xpose.msra.mxu0 0
        %2943 = vmatprep.subr.bf16.mxu0 0
        %2944 = vmatpush1.bf16.xpose.msra.mxu0 0
        %2945 = vmatprep.subr.bf16.mxu0 0
        %2946 = vmatpush1.bf16.xpose.msra.mxu0 0
        %2947 = vmatprep.mubr.bf16.mxu0 0
        %2948 = vmatmul.mubr.bf16.gmra.mrb[0].mxu0 %v2904
        %v2949 = vpop.f32.mrb[0].mxu0
        %v2950 = vadd.f32 0.0, %v2949
        %v2951 = vpop.f32.mrb[0].mxu0
        %v2952 = vpop.f32.mrb[0].mxu0
        %v2953 = vadd.f32 0.0, %v2952
        %v2954 = vpop.f32.mrb[0].mxu0
        %2955 = vmatprep.mubr.bf16.mxu0 0
        %2956 = vmatmul.mubr.bf16.gmra.mrb[0].mxu0 %v2907
        %v2957 = vpop.f32.mrb[0].mxu0
        %v2958 = vadd.f32 0.0, %v2957
        %v2959 = vpop.f32.mrb[0].mxu0
        %v2960 = vpop.f32.mrb[0].mxu0
        %v2961 = vpop.f32.mrb[0].mxu0
        %2962 = vdwg.mxu0
        %v2963 = vmul.f32 %v2770, 0.17677669
        %v2964 = vmul.f32 %v2773, 0.17677669
        %v2965 = vmul.f32 %v2778, 0.17677669
        %v2966 = vmul.f32 %v2830, 0.17677669
        %v2967 = vmul.f32 %v2833, 0.17677669
        %v2968 = vmul.f32 %v2838, 0.17677669
        %v2969 = vmul.f32 %v2890, 0.17677669
        %v2970 = vmul.f32 %v2893, 0.17677669
        %v2971 = vmul.f32 %v2898, 0.17677669
        %v2972 = vmul.f32 %v2950, 0.17677669
        %v2973 = vmul.f32 %v2953, 0.17677669
        %v2974 = vmul.f32 %v2958, 0.17677669
        %vm2975 = vcmask 138240
        %v2976 = vsel %vm2975, %v2963, -inf
        %2977 = vmax.xlane.f32.xlu0 %v2976
        %v2978 = vpop.xlane.xlu0 %2977
        %v2979 = vsel %vm2975, %v2964, -inf
        %2980 = vmax.xlane.f32.xlu0 %v2979
        %v2981 = vpop.xlane.xlu0 %2980
        %vm2982 = vcmask 131072
        %v2983 = vsel %vm2982, %v2965, -inf
        %2984 = vmax.xlane.f32.xlu0 %v2983
        %v2985 = vpop.xlane.xlu0 %2984
        %v2986 = vsel %vm2975, %v2966, -inf
        %2987 = vmax.xlane.f32.xlu0 %v2986
        %v2988 = vpop.xlane.xlu0 %2987
        %v2989 = vsel %vm2975, %v2967, -inf
        %2990 = vmax.xlane.f32.xlu0 %v2989
        %v2991 = vpop.xlane.xlu0 %2990
        %v2992 = vsel %vm2982, %v2968, -inf
        %2993 = vmax.xlane.f32.xlu0 %v2992
        %v2994 = vpop.xlane.xlu0 %2993
        %v2995 = vsel %vm2975, %v2969, -inf
        %2996 = vmax.xlane.f32.xlu0 %v2995
        %v2997 = vpop.xlane.xlu0 %2996
        %v2998 = vsel %vm2975, %v2970, -inf
        %2999 = vmax.xlane.f32.xlu0 %v2998
        %v3000 = vpop.xlane.xlu0 %2999
        %v3001 = vsel %vm2982, %v2971, -inf
        %3002 = vmax.xlane.f32.xlu0 %v3001
        %v3003 = vpop.xlane.xlu0 %3002
        %v3004 = vsel %vm2975, %v2972, -inf
        %3005 = vmax.xlane.f32.xlu0 %v3004
        %v3006 = vpop.xlane.xlu0 %3005
        %v3007 = vsel %vm2975, %v2973, -inf
        %3008 = vmax.xlane.f32.xlu0 %v3007
        %v3009 = vpop.xlane.xlu0 %3008
        %v3010 = vsel %vm2982, %v2974, -inf
        %3011 = vmax.xlane.f32.xlu0 %v3010
        %v3012 = vpop.xlane.xlu0 %3011
        %v3013 = vsub.f32 %v2963, %v2978
        %v3014 = vsub.f32 %v2964, %v2981
        %v3015 = vsub.f32 %v2965, %v2985
        %v3016 = vsub.f32 %v2966, %v2988
        %v3017 = vsub.f32 %v2967, %v2991
        %v3018 = vsub.f32 %v2968, %v2994
        %v3019 = vsub.f32 %v2969, %v2997
        %v3020 = vsub.f32 %v2970, %v3000
        %v3021 = vsub.f32 %v2971, %v3003
        %v3022 = vsub.f32 %v2972, %v3006
        %v3023 = vsub.f32 %v2973, %v3009
        %v3024 = vsub.f32 %v2974, %v3012
        %v3025 = vmul.f32 %v3013, 1.442695
        %v3026 = vpow.pop %v3025
        %v3027 = vmul.f32 %v3014, 1.442695
        %v3028 = vpow.pop %v3027
        %v3029 = vmul.f32 %v3015, 1.442695
        %v3030 = vpow.pop %v3029
        %v3031 = vmul.f32 %v3016, 1.442695
        %v3032 = vpow.pop %v3031
        %v3033 = vmul.f32 %v3017, 1.442695
        %v3034 = vpow.pop %v3033
        %v3035 = vmul.f32 %v3018, 1.442695
        %v3036 = vpow.pop %v3035
        %v3037 = vmul.f32 %v3019, 1.442695
        %v3038 = vpow.pop %v3037
        %v3039 = vmul.f32 %v3020, 1.442695
        %v3040 = vpow.pop %v3039
        %v3041 = vmul.f32 %v3021, 1.442695
        %v3042 = vpow.pop %v3041
        %v3043 = vmul.f32 %v3022, 1.442695
        %v3044 = vpow.pop %v3043
        %v3045 = vmul.f32 %v3023, 1.442695
        %v3046 = vpow.pop %v3045
        %v3047 = vmul.f32 %v3024, 1.442695
        %v3048 = vpow.pop %v3047
        %v3049 = vsel %vm2975, %v3026, 0.0
        %3050 = vadd.xlane.f32.xlu0 %v3049
        %v3051 = vpop.xlane.xlu0 %3050
        %v3052 = vsel %vm2975, %v3028, 0.0
        %3053 = vadd.xlane.f32.xlu0 %v3052
        %v3054 = vpop.xlane.xlu0 %3053
        %v3055 = vsel %vm2982, %v3030, 0.0
        %3056 = vadd.xlane.f32.xlu0 %v3055
        %v3057 = vpop.xlane.xlu0 %3056
        %v3058 = vsel %vm2975, %v3032, 0.0
        %3059 = vadd.xlane.f32.xlu0 %v3058
        %v3060 = vpop.xlane.xlu0 %3059
        %v3061 = vsel %vm2975, %v3034, 0.0
        %3062 = vadd.xlane.f32.xlu0 %v3061
        %v3063 = vpop.xlane.xlu0 %3062
        %v3064 = vsel %vm2982, %v3036, 0.0
        %3065 = vadd.xlane.f32.xlu0 %v3064
        %v3066 = vpop.xlane.xlu0 %3065
        %v3067 = vsel %vm2975, %v3038, 0.0
        %3068 = vadd.xlane.f32.xlu0 %v3067
        %v3069 = vpop.xlane.xlu0 %3068
        %v3070 = vsel %vm2975, %v3040, 0.0
        %3071 = vadd.xlane.f32.xlu0 %v3070
        %v3072 = vpop.xlane.xlu0 %3071
        %v3073 = vsel %vm2982, %v3042, 0.0
        %3074 = vadd.xlane.f32.xlu0 %v3073
        %v3075 = vpop.xlane.xlu0 %3074
        %v3076 = vsel %vm2975, %v3044, 0.0
        %3077 = vadd.xlane.f32.xlu0 %v3076
        %v3078 = vpop.xlane.xlu0 %3077
        %v3079 = vsel %vm2975, %v3046, 0.0
        %3080 = vadd.xlane.f32.xlu0 %v3079
        %v3081 = vpop.xlane.xlu0 %3080
        %v3082 = vsel %vm2982, %v3048, 0.0
        %3083 = vadd.xlane.f32.xlu0 %v3082
        %v3084 = vpop.xlane.xlu0 %3083
        %v3085 = vrcp.pop %v3051
        %v3086 = vrcp.pop %v3054
        %v3087 = vrcp.pop %v3057
        %v3088 = vrcp.pop %v3060
        %v3089 = vrcp.pop %v3063
        %v3090 = vrcp.pop %v3066
        %v3091 = vrcp.pop %v3069
        %v3092 = vrcp.pop %v3072
        %v3093 = vrcp.pop %v3075
        %v3094 = vrcp.pop %v3078
        %v3095 = vrcp.pop %v3081
        %v3096 = vrcp.pop %v3084
        %v3097 = vmul.f32 %v3026, %v3085
        %v3098 = vmul.f32 %v3028, %v3086
        %v3099 = vmul.f32 %v3030, %v3087
        %v3100 = vmul.f32 %v3032, %v3088
        %v3101 = vmul.f32 %v3034, %v3089
        %v3102 = vmul.f32 %v3036, %v3090
        %v3103 = vmul.f32 %v3038, %v3091
        %v3104 = vmul.f32 %v3040, %v3092
        %v3105 = vmul.f32 %v3042, %v3093
        %v3106 = vmul.f32 %v3044, %v3094
        %v3107 = vmul.f32 %v3046, %v3095
        %v3108 = vmul.f32 %v3048, %v3096
        %v3109 = vpack.c.bf16 %v3098, %v3097
        %v3110 = vpack.c.bf16 %v3099, %v3099
        %v3111 = vpack.c.bf16 %v3101, %v3100
        %v3112 = vpack.c.bf16 %v3102, %v3102
        %v3113 = vpack.c.bf16 %v3104, %v3103
        %v3114 = vpack.c.bf16 %v3105, %v3105
        %v3115 = vpack.c.bf16 %v3107, %v3106
        %v3116 = vpack.c.bf16 %v3108, %v3108
        %v3118 = vsel %vm2975, %v3109, 0
        %v3121 = vsel %vm2975, %v3110, 0
        %v3123 = vsel 0, 4294967295, 65535
        %v3124 = vsel %vm1238, %v3123, 0
        %v3126 = vand.u32 %v2715, %v3124
        %3128 = vmatprep.subr.bf16.mxu0 0
        %3129 = vmatpush1.bf16.msra.mxu0 %v2714
        %3130 = vmatprep.subr.bf16.mxu0 0
        %3131 = vmatpush1.bf16.msra.mxu0 %v3126
        %3132 = vmatprep.subr.bf16.mxu0 0
        %3133 = vmatpush1.bf16.msra.mxu0 0
        %3134 = vmatprep.subr.bf16.mxu0 0
        %3135 = vmatpush1.bf16.msra.mxu0 0
        %3136 = vmatprep.subr.bf16.mxu0 0
        %3137 = vmatpush1.bf16.msra.mxu0 0
        %3138 = vmatprep.subr.bf16.mxu0 0
        %3139 = vmatpush1.bf16.msra.mxu0 0
        %3140 = vmatprep.subr.bf16.mxu0 0
        %3141 = vmatpush1.bf16.msra.mxu0 0
        %3142 = vmatprep.subr.bf16.mxu0 0
        %3143 = vmatpush1.bf16.msra.mxu0 0
        %3144 = vmatprep.subr.bf16.mxu0 0
        %3145 = vmatpush1.bf16.msra.mxu0 0
        %3146 = vmatprep.subr.bf16.mxu0 0
        %3147 = vmatpush1.bf16.msra.mxu0 0
        %3148 = vmatprep.subr.bf16.mxu0 0
        %3149 = vmatpush1.bf16.msra.mxu0 0
        %3150 = vmatprep.subr.bf16.mxu0 0
        %3151 = vmatpush1.bf16.msra.mxu0 0
        %3152 = vmatprep.subr.bf16.mxu0 0
        %3153 = vmatpush1.bf16.msra.mxu0 0
        %3154 = vmatprep.subr.bf16.mxu0 0
        %3155 = vmatpush1.bf16.msra.mxu0 0
        %3156 = vmatprep.subr.bf16.mxu0 0
        %3157 = vmatpush1.bf16.msra.mxu0 0
        %3158 = vmatprep.subr.bf16.mxu0 0
        %3159 = vmatpush1.bf16.msra.mxu0 0
        %3160 = vmatprep.mubr.bf16.mxu0 0
        %3161 = vmatmul.mubr.bf16.gmra.mrb[0].mxu0 %v3118
        %v3162 = vpop.f32.mrb[0].mxu0
        %v3163 = vadd.f32 0.0, %v3162
        %v3164 = vpop.f32.mrb[0].mxu0
        %v3165 = vpop.f32.mrb[0].mxu0
        %v3166 = vadd.f32 0.0, %v3165
        %v3167 = vpop.f32.mrb[0].mxu0
        %3168 = vmatprep.mubr.bf16.mxu0 0
        %3169 = vmatmul.mubr.bf16.gmra.mrb[0].mxu0 %v3121
        %v3170 = vpop.f32.mrb[0].mxu0
        %v3171 = vadd.f32 0.0, %v3170
        %v3172 = vpop.f32.mrb[0].mxu0
        %v3173 = vpop.f32.mrb[0].mxu0
        %v3174 = vpop.f32.mrb[0].mxu0
        %3175 = vdwg.mxu0
        %v3177 = vsel %vm2975, %v3111, 0
        %v3180 = vsel %vm2975, %v3112, 0
        %v3183 = vand.u32 %v2717, %v3124
        %3185 = vmatprep.subr.bf16.mxu0 0
        %3186 = vmatpush1.bf16.msra.mxu0 %v2716
        %3187 = vmatprep.subr.bf16.mxu0 0
        %3188 = vmatpush1.bf16.msra.mxu0 %v3183
        %3189 = vmatprep.subr.bf16.mxu0 0
        %3190 = vmatpush1.bf16.msra.mxu0 0
        %3191 = vmatprep.subr.bf16.mxu0 0
        %3192 = vmatpush1.bf16.msra.mxu0 0
        %3193 = vmatprep.subr.bf16.mxu0 0
        %3194 = vmatpush1.bf16.msra.mxu0 0
        %3195 = vmatprep.subr.bf16.mxu0 0
        %3196 = vmatpush1.bf16.msra.mxu0 0
        %3197 = vmatprep.subr.bf16.mxu0 0
        %3198 = vmatpush1.bf16.msra.mxu0 0
        %3199 = vmatprep.subr.bf16.mxu0 0
        %3200 = vmatpush1.bf16.msra.mxu0 0
        %3201 = vmatprep.subr.bf16.mxu0 0
        %3202 = vmatpush1.bf16.msra.mxu0 0
        %3203 = vmatprep.subr.bf16.mxu0 0
        %3204 = vmatpush1.bf16.msra.mxu0 0
        %3205 = vmatprep.subr.bf16.mxu0 0
        %3206 = vmatpush1.bf16.msra.mxu0 0
        %3207 = vmatprep.subr.bf16.mxu0 0
        %3208 = vmatpush1.bf16.msra.mxu0 0
        %3209 = vmatprep.subr.bf16.mxu0 0
        %3210 = vmatpush1.bf16.msra.mxu0 0
        %3211 = vmatprep.subr.bf16.mxu0 0
        %3212 = vmatpush1.bf16.msra.mxu0 0
        %3213 = vmatprep.subr.bf16.mxu0 0
        %3214 = vmatpush1.bf16.msra.mxu0 0
        %3215 = vmatprep.subr.bf16.mxu0 0
        %3216 = vmatpush1.bf16.msra.mxu0 0
        %3217 = vmatprep.mubr.bf16.mxu0 0
        %3218 = vmatmul.mubr.bf16.gmra.mrb[0].mxu0 %v3177
        %v3219 = vpop.f32.mrb[0].mxu0
        %v3220 = vadd.f32 0.0, %v3219
        %v3221 = vpop.f32.mrb[0].mxu0
        %v3222 = vpop.f32.mrb[0].mxu0
        %v3223 = vadd.f32 0.0, %v3222
        %v3224 = vpop.f32.mrb[0].mxu0
        %3225 = vmatprep.mubr.bf16.mxu0 0
        %3226 = vmatmul.mubr.bf16.gmra.mrb[0].mxu0 %v3180
        %v3227 = vpop.f32.mrb[0].mxu0
        %v3228 = vadd.f32 0.0, %v3227
        %v3229 = vpop.f32.mrb[0].mxu0
        %v3230 = vpop.f32.mrb[0].mxu0
        %v3231 = vpop.f32.mrb[0].mxu0
        %3232 = vdwg.mxu0
        %v3234 = vsel %vm2975, %v3113, 0
        %v3237 = vsel %vm2975, %v3114, 0
        %v3240 = vand.u32 %v2719, %v3124
        %3242 = vmatprep.subr.bf16.mxu0 0
        %3243 = vmatpush1.bf16.msra.mxu0 %v2718
        %3244 = vmatprep.subr.bf16.mxu0 0
        %3245 = vmatpush1.bf16.msra.mxu0 %v3240
        %3246 = vmatprep.subr.bf16.mxu0 0
        %3247 = vmatpush1.bf16.msra.mxu0 0
        %3248 = vmatprep.subr.bf16.mxu0 0
        %3249 = vmatpush1.bf16.msra.mxu0 0
        %3250 = vmatprep.subr.bf16.mxu0 0
        %3251 = vmatpush1.bf16.msra.mxu0 0
        %3252 = vmatprep.subr.bf16.mxu0 0
        %3253 = vmatpush1.bf16.msra.mxu0 0
        %3254 = vmatprep.subr.bf16.mxu0 0
        %3255 = vmatpush1.bf16.msra.mxu0 0
        %3256 = vmatprep.subr.bf16.mxu0 0
        %3257 = vmatpush1.bf16.msra.mxu0 0
        %3258 = vmatprep.subr.bf16.mxu0 0
        %3259 = vmatpush1.bf16.msra.mxu0 0
        %3260 = vmatprep.subr.bf16.mxu0 0
        %3261 = vmatpush1.bf16.msra.mxu0 0
        %3262 = vmatprep.subr.bf16.mxu0 0
        %3263 = vmatpush1.bf16.msra.mxu0 0
        %3264 = vmatprep.subr.bf16.mxu0 0
        %3265 = vmatpush1.bf16.msra.mxu0 0
        %3266 = vmatprep.subr.bf16.mxu0 0
        %3267 = vmatpush1.bf16.msra.mxu0 0
        %3268 = vmatprep.subr.bf16.mxu0 0
        %3269 = vmatpush1.bf16.msra.mxu0 0
        %3270 = vmatprep.subr.bf16.mxu0 0
        %3271 = vmatpush1.bf16.msra.mxu0 0
        %3272 = vmatprep.subr.bf16.mxu0 0
        %3273 = vmatpush1.bf16.msra.mxu0 0
        %3274 = vmatprep.mubr.bf16.mxu0 0
        %3275 = vmatmul.mubr.bf16.gmra.mrb[0].mxu0 %v3234
        %v3276 = vpop.f32.mrb[0].mxu0
        %v3277 = vadd.f32 0.0, %v3276
        %v3278 = vpop.f32.mrb[0].mxu0
        %v3279 = vpop.f32.mrb[0].mxu0
        %v3280 = vadd.f32 0.0, %v3279
        %v3281 = vpop.f32.mrb[0].mxu0
        %3282 = vmatprep.mubr.bf16.mxu0 0
        %3283 = vmatmul.mubr.bf16.gmra.mrb[0].mxu0 %v3237
        %v3284 = vpop.f32.mrb[0].mxu0
        %v3285 = vadd.f32 0.0, %v3284
        %v3286 = vpop.f32.mrb[0].mxu0
        %v3287 = vpop.f32.mrb[0].mxu0
        %v3288 = vpop.f32.mrb[0].mxu0
        %3289 = vdwg.mxu0
        %v3291 = vsel %vm2975, %v3115, 0
        %v3294 = vsel %vm2975, %v3116, 0
        %v3297 = vand.u32 %v2721, %v3124
        %3299 = vmatprep.subr.bf16.mxu0 0
        %3300 = vmatpush1.bf16.msra.mxu0 %v2720
        %3301 = vmatprep.subr.bf16.mxu0 0
        %3302 = vmatpush1.bf16.msra.mxu0 %v3297
        %3303 = vmatprep.subr.bf16.mxu0 0
        %3304 = vmatpush1.bf16.msra.mxu0 0
        %3305 = vmatprep.subr.bf16.mxu0 0
        %3306 = vmatpush1.bf16.msra.mxu0 0
        %3307 = vmatprep.subr.bf16.mxu0 0
        %3308 = vmatpush1.bf16.msra.mxu0 0
        %3309 = vmatprep.subr.bf16.mxu0 0
        %3310 = vmatpush1.bf16.msra.mxu0 0
        %3311 = vmatprep.subr.bf16.mxu0 0
        %3312 = vmatpush1.bf16.msra.mxu0 0
        %3313 = vmatprep.subr.bf16.mxu0 0
        %3314 = vmatpush1.bf16.msra.mxu0 0
        %3315 = vmatprep.subr.bf16.mxu0 0
        %3316 = vmatpush1.bf16.msra.mxu0 0
        %3317 = vmatprep.subr.bf16.mxu0 0
        %3318 = vmatpush1.bf16.msra.mxu0 0
        %3319 = vmatprep.subr.bf16.mxu0 0
        %3320 = vmatpush1.bf16.msra.mxu0 0
        %3321 = vmatprep.subr.bf16.mxu0 0
        %3322 = vmatpush1.bf16.msra.mxu0 0
        %3323 = vmatprep.subr.bf16.mxu0 0
        %3324 = vmatpush1.bf16.msra.mxu0 0
        %3325 = vmatprep.subr.bf16.mxu0 0
        %3326 = vmatpush1.bf16.msra.mxu0 0
        %3327 = vmatprep.subr.bf16.mxu0 0
        %3328 = vmatpush1.bf16.msra.mxu0 0
        %3329 = vmatprep.subr.bf16.mxu0 0
        %3330 = vmatpush1.bf16.msra.mxu0 0
        %3331 = vmatprep.mubr.bf16.mxu0 0
        %3332 = vmatmul.mubr.bf16.gmra.mrb[0].mxu0 %v3291
        %v3333 = vpop.f32.mrb[0].mxu0
        %v3334 = vadd.f32 0.0, %v3333
        %v3335 = vpop.f32.mrb[0].mxu0
        %v3336 = vpop.f32.mrb[0].mxu0
        %v3337 = vadd.f32 0.0, %v3336
        %v3338 = vpop.f32.mrb[0].mxu0
        %3339 = vmatprep.mubr.bf16.mxu0 0
        %3340 = vmatmul.mubr.bf16.gmra.mrb[0].mxu0 %v3294
        %v3341 = vpop.f32.mrb[0].mxu0
        %v3342 = vadd.f32 0.0, %v3341
        %v3343 = vpop.f32.mrb[0].mxu0
        %v3344 = vpop.f32.mrb[0].mxu0
        %v3345 = vpop.f32.mrb[0].mxu0
        %3346 = vdwg.mxu0
        %v3347 = vcombine.low %v3163, %v3277
        %v3348 = vcombine.high %v3163, %v3277
        %v3350 = vunpack.c.l.s4 1983009808
        %v3351 = vunpack.c.0.s8 %v3350
        %v3352 = vlaneseq
        %v3353 = vshrl.u32 %v3352, 7
        %v3354 = vsub.s32 %v3351, %v3353
        %v3355 = vrot.slane %v3347, %v3354
        %v3357 = vunpack.c.l.s4 1983009808
        %v3358 = vunpack.c.0.s8 %v3357
        %v3359 = vlaneseq
        %v3360 = vshrl.u32 %v3359, 7
        %v3361 = vsub.s32 %v3358, %v3360
        %v3362 = vrot.slane %v3348, %v3361
        %v3363 = vcombine.low %v3220, %v3334
        %v3364 = vcombine.high %v3220, %v3334
        %v3366 = vunpack.c.l.s4 1983009808
        %v3367 = vunpack.c.0.s8 %v3366
        %v3368 = vlaneseq
        %v3369 = vshrl.u32 %v3368, 7
        %v3370 = vsub.s32 %v3367, %v3369
        %v3371 = vrot.slane %v3363, %v3370
        %v3373 = vunpack.c.l.s4 1983009808
        %v3374 = vunpack.c.0.s8 %v3373
        %v3375 = vlaneseq
        %v3376 = vshrl.u32 %v3375, 7
        %v3377 = vsub.s32 %v3374, %v3376
        %v3378 = vrot.slane %v3364, %v3377
        %v3379 = vcombine.low %v3355, %v3371
        %v3380 = vcombine.high %v3355, %v3371
        %v3382 = vunpack.c.l.s4 1934713408
        %v3383 = vunpack.c.0.s8 %v3382
        %v3384 = vlaneseq
        %v3385 = vshrl.u32 %v3384, 7
        %v3386 = vsub.s32 %v3383, %v3385
        %v3387 = vrot.slane %v3379, %v3386
        %v3389 = vunpack.c.l.s4 1934713408
        %v3390 = vunpack.c.0.s8 %v3389
        %v3391 = vlaneseq
        %v3392 = vshrl.u32 %v3391, 7
        %v3393 = vsub.s32 %v3390, %v3392
        %v3394 = vrot.slane %v3380, %v3393
        %v3395 = vcombine.low %v3362, %v3378
        %v3396 = vcombine.high %v3362, %v3378
        %v3398 = vunpack.c.l.s4 1934713408
        %v3399 = vunpack.c.0.s8 %v3398
        %v3400 = vlaneseq
        %v3401 = vshrl.u32 %v3400, 7
        %v3402 = vsub.s32 %v3399, %v3401
        %v3403 = vrot.slane %v3395, %v3402
        %v3405 = vunpack.c.l.s4 1934713408
        %v3406 = vunpack.c.0.s8 %v3405
        %v3407 = vlaneseq
        %v3408 = vshrl.u32 %v3407, 7
        %v3409 = vsub.s32 %v3406, %v3408
        %v3410 = vrot.slane %v3396, %v3409
        %v3411 = vcombine.high %v3387, 0.0
        %v3412 = vcombine.high %v3394, 0.0
        %v3413 = vcombine.high %v3403, 0.0
        %v3414 = vcombine.high %v3410, 0.0
        %v3415 = vcombine.low %v3166, %v3280
        %v3416 = vcombine.high %v3166, %v3280
        %v3418 = vunpack.c.l.s4 1983009808
        %v3419 = vunpack.c.0.s8 %v3418
        %v3420 = vlaneseq
        %v3421 = vshrl.u32 %v3420, 7
        %v3422 = vsub.s32 %v3419, %v3421
        %v3423 = vrot.slane %v3415, %v3422
        %v3425 = vunpack.c.l.s4 1983009808
        %v3426 = vunpack.c.0.s8 %v3425
        %v3427 = vlaneseq
        %v3428 = vshrl.u32 %v3427, 7
        %v3429 = vsub.s32 %v3426, %v3428
        %v3430 = vrot.slane %v3416, %v3429
        %v3431 = vcombine.low %v3223, %v3337
        %v3432 = vcombine.high %v3223, %v3337
        %v3434 = vunpack.c.l.s4 1983009808
        %v3435 = vunpack.c.0.s8 %v3434
        %v3436 = vlaneseq
        %v3437 = vshrl.u32 %v3436, 7
        %v3438 = vsub.s32 %v3435, %v3437
        %v3439 = vrot.slane %v3431, %v3438
        %v3441 = vunpack.c.l.s4 1983009808
        %v3442 = vunpack.c.0.s8 %v3441
        %v3443 = vlaneseq
        %v3444 = vshrl.u32 %v3443, 7
        %v3445 = vsub.s32 %v3442, %v3444
        %v3446 = vrot.slane %v3432, %v3445
        %v3447 = vcombine.low %v3423, %v3439
        %v3448 = vcombine.high %v3423, %v3439
        %v3450 = vunpack.c.l.s4 1934713408
        %v3451 = vunpack.c.0.s8 %v3450
        %v3452 = vlaneseq
        %v3453 = vshrl.u32 %v3452, 7
        %v3454 = vsub.s32 %v3451, %v3453
        %v3455 = vrot.slane %v3447, %v3454
        %v3457 = vunpack.c.l.s4 1934713408
        %v3458 = vunpack.c.0.s8 %v3457
        %v3459 = vlaneseq
        %v3460 = vshrl.u32 %v3459, 7
        %v3461 = vsub.s32 %v3458, %v3460
        %v3462 = vrot.slane %v3448, %v3461
        %v3463 = vcombine.low %v3430, %v3446
        %v3464 = vcombine.high %v3430, %v3446
        %v3466 = vunpack.c.l.s4 1934713408
        %v3467 = vunpack.c.0.s8 %v3466
        %v3468 = vlaneseq
        %v3469 = vshrl.u32 %v3468, 7
        %v3470 = vsub.s32 %v3467, %v3469
        %v3471 = vrot.slane %v3463, %v3470
        %v3473 = vunpack.c.l.s4 1934713408
        %v3474 = vunpack.c.0.s8 %v3473
        %v3475 = vlaneseq
        %v3476 = vshrl.u32 %v3475, 7
        %v3477 = vsub.s32 %v3474, %v3476
        %v3478 = vrot.slane %v3464, %v3477
        %v3479 = vcombine.high %v3455, 0.0
        %v3480 = vcombine.high %v3462, 0.0
        %v3481 = vcombine.high %v3471, 0.0
        %v3482 = vcombine.high %v3478, 0.0
        %v3483 = vcombine.low %v3171, %v3285
        %v3485 = vunpack.c.l.s4 1983009808
        %v3486 = vunpack.c.0.s8 %v3485
        %v3487 = vlaneseq
        %v3488 = vshrl.u32 %v3487, 7
        %v3489 = vsub.s32 %v3486, %v3488
        %v3490 = vrot.slane %v3483, %v3489
        %v3491 = vcombine.low %v3228, %v3342
        %v3493 = vunpack.c.l.s4 1983009808
        %v3494 = vunpack.c.0.s8 %v3493
        %v3495 = vlaneseq
        %v3496 = vshrl.u32 %v3495, 7
        %v3497 = vsub.s32 %v3494, %v3496
        %v3498 = vrot.slane %v3491, %v3497
        %v3499 = vcombine.low %v3490, %v3498
        %v3500 = vcombine.low %v3387, %v3394
        %v3502 = vunpack.c.l.s4 1983009808
        %v3503 = vunpack.c.0.s8 %v3502
        %v3504 = vlaneseq
        %v3505 = vshrl.u32 %v3504, 7
        %v3506 = vsub.s32 %v3503, %v3505
        %v3507 = vrot.slane %v3500, %v3506
        %v3508 = vcombine.low %v3411, %v3412
        %v3510 = vunpack.c.l.s4 1983009808
        %v3511 = vunpack.c.0.s8 %v3510
        %v3512 = vlaneseq
        %v3513 = vshrl.u32 %v3512, 7
        %v3514 = vsub.s32 %v3511, %v3513
        %v3515 = vrot.slane %v3508, %v3514
        %v3516 = vcombine.low %v3403, %v3410
        %v3518 = vunpack.c.l.s4 1983009808
        %v3519 = vunpack.c.0.s8 %v3518
        %v3520 = vlaneseq
        %v3521 = vshrl.u32 %v3520, 7
        %v3522 = vsub.s32 %v3519, %v3521
        %v3523 = vrot.slane %v3516, %v3522
        %v3524 = vcombine.low %v3413, %v3414
        %v3526 = vunpack.c.l.s4 1983009808
        %v3527 = vunpack.c.0.s8 %v3526
        %v3528 = vlaneseq
        %v3529 = vshrl.u32 %v3528, 7
        %v3530 = vsub.s32 %v3527, %v3529
        %v3531 = vrot.slane %v3524, %v3530
        %v3532 = vcombine.low %v3507, %v3515
        %v3533 = vcombine.high %v3507, %v3515
        %v3535 = vunpack.c.l.s4 1934713408
        %v3536 = vunpack.c.0.s8 %v3535
        %v3537 = vlaneseq
        %v3538 = vshrl.u32 %v3537, 7
        %v3539 = vsub.s32 %v3536, %v3538
        %v3540 = vrot.slane %v3532, %v3539
        %v3542 = vunpack.c.l.s4 1934713408
        %v3543 = vunpack.c.0.s8 %v3542
        %v3544 = vlaneseq
        %v3545 = vshrl.u32 %v3544, 7
        %v3546 = vsub.s32 %v3543, %v3545
        %v3547 = vrot.slane %v3533, %v3546
        %v3548 = vcombine.low %v3523, %v3531
        %v3549 = vcombine.high %v3523, %v3531
        %v3551 = vunpack.c.l.s4 1934713408
        %v3552 = vunpack.c.0.s8 %v3551
        %v3553 = vlaneseq
        %v3554 = vshrl.u32 %v3553, 7
        %v3555 = vsub.s32 %v3552, %v3554
        %v3556 = vrot.slane %v3548, %v3555
        %v3558 = vunpack.c.l.s4 1934713408
        %v3559 = vunpack.c.0.s8 %v3558
        %v3560 = vlaneseq
        %v3561 = vshrl.u32 %v3560, 7
        %v3562 = vsub.s32 %v3559, %v3561
        %v3563 = vrot.slane %v3549, %v3562
        %v3564 = vcombine.low %v3540, %v3556
        %v3565 = vcombine.high %v3540, %v3556
        %v3566 = vcombine.low %v3547, %v3563
        %v3567 = vcombine.high %v3547, %v3563
        %v3568 = vcombine.low %v3455, %v3462
        %v3570 = vunpack.c.l.s4 1983009808
        %v3571 = vunpack.c.0.s8 %v3570
        %v3572 = vlaneseq
        %v3573 = vshrl.u32 %v3572, 7
        %v3574 = vsub.s32 %v3571, %v3573
        %v3575 = vrot.slane %v3568, %v3574
        %v3576 = vcombine.low %v3479, %v3480
        %v3578 = vunpack.c.l.s4 1983009808
        %v3579 = vunpack.c.0.s8 %v3578
        %v3580 = vlaneseq
        %v3581 = vshrl.u32 %v3580, 7
        %v3582 = vsub.s32 %v3579, %v3581
        %v3583 = vrot.slane %v3576, %v3582
        %v3584 = vcombine.low %v3471, %v3478
        %v3586 = vunpack.c.l.s4 1983009808
        %v3587 = vunpack.c.0.s8 %v3586
        %v3588 = vlaneseq
        %v3589 = vshrl.u32 %v3588, 7
        %v3590 = vsub.s32 %v3587, %v3589
        %v3591 = vrot.slane %v3584, %v3590
        %v3592 = vcombine.low %v3481, %v3482
        %v3594 = vunpack.c.l.s4 1983009808
        %v3595 = vunpack.c.0.s8 %v3594
        %v3596 = vlaneseq
        %v3597 = vshrl.u32 %v3596, 7
        %v3598 = vsub.s32 %v3595, %v3597
        %v3599 = vrot.slane %v3592, %v3598
        %v3600 = vcombine.low %v3575, %v3583
        %v3601 = vcombine.high %v3575, %v3583
        %v3603 = vunpack.c.l.s4 1934713408
        %v3604 = vunpack.c.0.s8 %v3603
        %v3605 = vlaneseq
        %v3606 = vshrl.u32 %v3605, 7
        %v3607 = vsub.s32 %v3604, %v3606
        %v3608 = vrot.slane %v3600, %v3607
        %v3610 = vunpack.c.l.s4 1934713408
        %v3611 = vunpack.c.0.s8 %v3610
        %v3612 = vlaneseq
        %v3613 = vshrl.u32 %v3612, 7
        %v3614 = vsub.s32 %v3611, %v3613
        %v3615 = vrot.slane %v3601, %v3614
        %v3616 = vcombine.low %v3591, %v3599
        %v3617 = vcombine.high %v3591, %v3599
        %v3619 = vunpack.c.l.s4 1934713408
        %v3620 = vunpack.c.0.s8 %v3619
        %v3621 = vlaneseq
        %v3622 = vshrl.u32 %v3621, 7
        %v3623 = vsub.s32 %v3620, %v3622
        %v3624 = vrot.slane %v3616, %v3623
        %v3626 = vunpack.c.l.s4 1934713408
        %v3627 = vunpack.c.0.s8 %v3626
        %v3628 = vlaneseq
        %v3629 = vshrl.u32 %v3628, 7
        %v3630 = vsub.s32 %v3627, %v3629
        %v3631 = vrot.slane %v3617, %v3630
        %v3632 = vcombine.low %v3608, %v3624
        %v3633 = vcombine.high %v3608, %v3624
        %v3634 = vcombine.low %v3615, %v3631
        %v3635 = vcombine.high %v3615, %v3631
        %v3637 = vunpack.c.l.s4 1934713408
        %v3638 = vunpack.c.0.s8 %v3637
        %v3639 = vlaneseq
        %v3640 = vshrl.u32 %v3639, 7
        %v3641 = vsub.s32 %v3638, %v3640
        %v3642 = vrot.slane %v3499, %v3641
        %v3644 = vunpack.c.l.s4 1983009808
        %v3645 = vunpack.c.0.s8 %v3644
        %v3646 = vlaneseq
        %v3647 = vshrl.u32 %v3646, 7
        %v3648 = vsub.s32 %v3645, %v3647
        %v3649 = vrot.slane %v3642, %v3648
        %v3650 = vcombine.high %v3649, 0.0
        %v3652 = vunpack.c.l.s4 1934713408
        %v3653 = vunpack.c.0.s8 %v3652
        %v3654 = vlaneseq
        %v3655 = vshrl.u32 %v3654, 7
        %v3656 = vsub.s32 %v3653, %v3655
        %v3657 = vrot.slane %v3649, %v3656
        %v3659 = vunpack.c.l.s4 1934713408
        %v3660 = vunpack.c.0.s8 %v3659
        %v3661 = vlaneseq
        %v3662 = vshrl.u32 %v3661, 7
        %v3663 = vsub.s32 %v3660, %v3662
        %v3664 = vrot.slane %v3650, %v3663
        %v3665 = vcombine.high %v3657, 0.0
        %v3666 = vcombine.high %v3664, 0.0
        %3670 = vrot.lane.b32.xlu0 %v3565, 32
        %v3671 = vpop.permute.xlu0 %3670
        %3672 = vrot.lane.b32.xlu0 %v3633, 32
        %v3673 = vpop.permute.xlu0 %3672
        %3674 = vrot.lane.b32.xlu0 %v3665, 32
        %v3675 = vpop.permute.xlu0 %3674
        %3682 = vrot.lane.b32.xlu0 %v3566, 64
        %v3683 = vpop.permute.xlu0 %3682
        %3684 = vrot.lane.b32.xlu0 %v3634, 64
        %v3685 = vpop.permute.xlu0 %3684
        %3686 = vrot.lane.b32.xlu0 %v3664, 64
        %v3687 = vpop.permute.xlu0 %3686
        %3694 = vrot.lane.b32.xlu0 %v3567, 96
        %v3695 = vpop.permute.xlu0 %3694
        %3696 = vrot.lane.b32.xlu0 %v3635, 96
        %v3697 = vpop.permute.xlu0 %3696
        %3698 = vrot.lane.b32.xlu0 %v3666, 96
        %v3699 = vpop.permute.xlu0 %3698
        %v3703 = vsel %vm2722, %v3564, %v3671
        %v3704 = vsel %vm2722, %v3632, %v3673
        %v3705 = vsel %vm2722, %v3657, %v3675
        %vm3706 = vcmask 523264
        %v3707 = vsel %vm3706, %v3703, %v3683
        %v3708 = vsel %vm3706, %v3704, %v3685
        %v3709 = vsel %vm3706, %v3705, %v3687
        %vm3710 = vcmask 785408
        %v3711 = vsel %vm3710, %v3707, %v3695
        %v3712 = vsel %vm3710, %v3708, %v3697
        %v3713 = vsel %vm3710, %v3709, %v3699
        %v3714 = vpack.c.bf16 %v3712, %v3711
        %v3715 = vpack.c.bf16 %v3713, %v3713
        %v3716 = vld [vmem:[%s1025] sm:$0xf]
        %v3717 = vld [vmem:[%s1025 + $0x4] sm:$0xf]
        %v3718 = vld [vmem:[%s1025 + $0x8] sm:$0xf]
        %v3719 = vld [vmem:[%s1025 + $0xc] sm:$0xf]
        %v3720 = vld [vmem:[%s1025 + $0x10] sm:$0xf]
        %v3721 = vld [vmem:[%s1025 + $0x14] sm:$0xf]
        %v3722 = vld [vmem:[%s1025 + $0x18] sm:$0xf]
        %v3723 = vld [vmem:[%s1025 + $0x1c] sm:$0xf]
        %v3724 = vld [vmem:[%s1025 + $0x20] sm:$0xf]
        %v3725 = vld [vmem:[%s1025 + $0x24] sm:$0xf]
        %v3726 = vld [vmem:[%s1025 + $0x28] sm:$0xf]
        %v3727 = vld [vmem:[%s1025 + $0x2c] sm:$0xf]
        %v3728 = vld [vmem:[%s1025 + $0x30] sm:$0xf]
        %v3729 = vld [vmem:[%s1025 + $0x34] sm:$0xf]
        %v3730 = vld [vmem:[%s1025 + $0x38] sm:$0xf]
        %v3731 = vld [vmem:[%s1025 + $0x3c] sm:$0xf]
        %v3732 = vld [vmem:[%s1033] sm:$0x1]
        %v3734 = vlaneseq
        %v3735 = vshrl.u32 %v3734, 7
        %v3736 = vsub.s32 0, %v3735
        %v3737 = vrot.slane %v3732, %v3736
        %v3755 = vunpack.c.l.b16 %v3716
        %v3756 = vunpack.c.l.b16 %v3717
        %v3757 = vunpack.c.l.b16 %v3718
        %v3758 = vunpack.c.l.b16 %v3719
        %v3759 = vunpack.c.l.b16 %v3720
        %v3760 = vunpack.c.l.b16 %v3721
        %v3761 = vunpack.c.l.b16 %v3722
        %v3762 = vunpack.c.l.b16 %v3723
        %v3763 = vunpack.c.l.b16 %v3724
        %v3764 = vunpack.c.l.b16 %v3725
        %v3765 = vunpack.c.l.b16 %v3726
        %v3766 = vunpack.c.l.b16 %v3727
        %v3767 = vunpack.c.l.b16 %v3728
        %v3768 = vunpack.c.l.b16 %v3729
        %v3769 = vunpack.c.l.b16 %v3730
        %v3770 = vunpack.c.l.b16 %v3731
        %v3771 = vpack.c.b16 %v3756, %v3755
        %v3772 = vpack.c.b16 %v3758, %v3757
        %v3773 = vpack.c.b16 %v3760, %v3759
        %v3774 = vpack.c.b16 %v3762, %v3761
        %v3775 = vpack.c.b16 %v3764, %v3763
        %v3776 = vpack.c.b16 %v3766, %v3765
        %v3777 = vpack.c.b16 %v3768, %v3767
        %v3778 = vpack.c.b16 %v3770, %v3769
        %3787 = vmatprep.subr.bf16.mxu0 0
        %3788 = vmatpush1.bf16.msra.mxu0 %v3771
        %3789 = vmatprep.subr.bf16.mxu0 0
        %3790 = vmatpush1.bf16.msra.mxu0 %v3772
        %3791 = vmatprep.subr.bf16.mxu0 0
        %3792 = vmatpush1.bf16.msra.mxu0 %v3773
        %3793 = vmatprep.subr.bf16.mxu0 0
        %3794 = vmatpush1.bf16.msra.mxu0 %v3774
        %3795 = vmatprep.subr.bf16.mxu0 0
        %3796 = vmatpush1.bf16.msra.mxu0 %v3775
        %3797 = vmatprep.subr.bf16.mxu0 0
        %3798 = vmatpush1.bf16.msra.mxu0 %v3776
        %3799 = vmatprep.subr.bf16.mxu0 0
        %3800 = vmatpush1.bf16.msra.mxu0 %v3777
        %3801 = vmatprep.subr.bf16.mxu0 0
        %3802 = vmatpush1.bf16.msra.mxu0 %v3778
        %3803 = vmatprep.subr.bf16.mxu0 0
        %3804 = vmatpush1.bf16.msra.mxu0 0
        %3805 = vmatprep.subr.bf16.mxu0 0
        %3806 = vmatpush1.bf16.msra.mxu0 0
        %3807 = vmatprep.subr.bf16.mxu0 0
        %3808 = vmatpush1.bf16.msra.mxu0 0
        %3809 = vmatprep.subr.bf16.mxu0 0
        %3810 = vmatpush1.bf16.msra.mxu0 0
        %3811 = vmatprep.subr.bf16.mxu0 0
        %3812 = vmatpush1.bf16.msra.mxu0 0
        %3813 = vmatprep.subr.bf16.mxu0 0
        %3814 = vmatpush1.bf16.msra.mxu0 0
        %3815 = vmatprep.subr.bf16.mxu0 0
        %3816 = vmatpush1.bf16.msra.mxu0 0
        %3817 = vmatprep.subr.bf16.mxu0 0
        %3818 = vmatpush1.bf16.msra.mxu0 0
        %3819 = vmatprep.mubr.bf16.mxu0 0
        %3820 = vmatmul.mubr.bf16.gmra.mrb[0].mxu0 %v3714
        %v3821 = vpop.f32.mrb[0].mxu0
        %v3822 = vadd.f32 %v3737, %v3821
        %v3823 = vpop.f32.mrb[0].mxu0
        %v3824 = vpop.f32.mrb[0].mxu0
        %v3825 = vadd.f32 %v3737, %v3824
        %v3826 = vpop.f32.mrb[0].mxu0
        %3827 = vmatprep.mubr.bf16.mxu0 0
        %3828 = vmatmul.mubr.bf16.gmra.mrb[0].mxu0 %v3715
        %v3829 = vpop.f32.mrb[0].mxu0
        %v3830 = vadd.f32 %v3737, %v3829
        %v3831 = vpop.f32.mrb[0].mxu0
        %v3832 = vpop.f32.mrb[0].mxu0
        %v3833 = vpop.f32.mrb[0].mxu0
        %3834 = vdwg.mxu0
        %v3835 = vadd.f32 %v3822, %v1229
        %v3836 = vadd.f32 %v3825, %v1230
        %v3837 = vadd.f32 %v3830, %v1231
        %v3838 = vld [vmem:[%s1041] sm:$0x1]
        %v3839 = vld [vmem:[%s1049] sm:$0x1]
        %3840 = vadd.xlane.f32.xlu0 %v3835
        %v3841 = vpop.xlane.xlu0 %3840
        %3842 = vadd.xlane.f32.xlu0 %v3836
        %v3843 = vpop.xlane.xlu0 %3842
        %v3844 = vsel %vm1238, %v3837, 0.0
        %3845 = vadd.xlane.f32.xlu0 %v3844
        %v3846 = vpop.xlane.xlu0 %3845
        %v3847 = vmul.f32 %v3841, %v1242
        %v3848 = vmul.f32 %v3843, %v1242
        %v3849 = vmul.f32 %v3846, %v1242
        %v3850 = vsub.f32 %v3835, %v3847
        %v3851 = vsub.f32 %v3836, %v3848
        %v3852 = vsub.f32 %v3837, %v3849
        %v3853 = vmul.f32 %v3850, %v3850
        %v3854 = vmul.f32 %v3851, %v3851
        %v3855 = vmul.f32 %v3852, %v3852
        %3856 = vadd.xlane.f32.xlu0 %v3853
        %v3857 = vpop.xlane.xlu0 %3856
        %3858 = vadd.xlane.f32.xlu0 %v3854
        %v3859 = vpop.xlane.xlu0 %3858
        %v3860 = vsel %vm1238, %v3855, 0.0
        %3861 = vadd.xlane.f32.xlu0 %v3860
        %v3862 = vpop.xlane.xlu0 %3861
        %v3863 = vmul.f32 %v3857, %v1242
        %v3864 = vmul.f32 %v3859, %v1242
        %v3865 = vmul.f32 %v3862, %v1242
        %v3866 = vadd.f32 %v3863, 1e-05
        %v3867 = vadd.f32 %v3864, 1e-05
        %v3868 = vadd.f32 %v3865, 1e-05
        %v3869 = vrsqrt.pop %v3866
        %v3870 = vrsqrt.pop %v3867
        %v3871 = vrsqrt.pop %v3868
        %v3872 = vmul.f32 %v3850, %v3869
        %v3873 = vmul.f32 %v3851, %v3870
        %v3874 = vmul.f32 %v3852, %v3871
        %v3876 = vlaneseq
        %v3877 = vshrl.u32 %v3876, 7
        %v3878 = vsub.s32 0, %v3877
        %v3879 = vrot.slane %v3838, %v3878
        %v3881 = vmul.f32 %v3872, %v3879
        %v3882 = vmul.f32 %v3873, %v3879
        %v3883 = vmul.f32 %v3874, %v3879
        %v3885 = vlaneseq
        %v3886 = vshrl.u32 %v3885, 7
        %v3887 = vsub.s32 0, %v3886
        %v3888 = vrot.slane %v3839, %v3887
        %v3890 = vadd.f32 %v3881, %v3888
        %v3891 = vadd.f32 %v3882, %v3888
        %v3892 = vadd.f32 %v3883, %v3888
        %v3893 = vpack.c.bf16 %v3891, %v3890
        %v3894 = vpack.c.bf16 %v3892, %v3892
        %v3895 = vld [vmem:[%s1058] sm:$0xff]
        %v3896 = vld [vmem:[%s1058 + $0x8] sm:$0xff]
        %v3897 = vld [vmem:[%s1058 + $0x10] sm:$0xff]
        %v3898 = vld [vmem:[%s1058 + $0x18] sm:$0xff]
        %v3899 = vld [vmem:[%s1058 + $0x20] sm:$0xff]
        %v3900 = vld [vmem:[%s1058 + $0x28] sm:$0xff]
        %v3901 = vld [vmem:[%s1058 + $0x30] sm:$0xff]
        %v3902 = vld [vmem:[%s1058 + $0x38] sm:$0xff]
        %v3903 = vld [vmem:[%s1058 + $0x40] sm:$0xff]
        %v3904 = vld [vmem:[%s1058 + $0x48] sm:$0xff]
        %v3905 = vld [vmem:[%s1058 + $0x50] sm:$0xff]
        %v3906 = vld [vmem:[%s1058 + $0x58] sm:$0xff]
        %v3907 = vld [vmem:[%s1058 + $0x60] sm:$0xff]
        %v3908 = vld [vmem:[%s1058 + $0x68] sm:$0xff]
        %v3909 = vld [vmem:[%s1058 + $0x70] sm:$0xff]
        %v3910 = vld [vmem:[%s1058 + $0x78] sm:$0xff]
        %v3911 = vld [vmem:[%s1058 + $0x80] sm:$0xff]
        %v3912 = vld [vmem:[%s1058 + $0x88] sm:$0xff]
        %v3913 = vld [vmem:[%s1058 + $0x90] sm:$0xff]
        %v3914 = vld [vmem:[%s1058 + $0x98] sm:$0xff]
        %v3915 = vld [vmem:[%s1058 + $0xa0] sm:$0xff]
        %v3916 = vld [vmem:[%s1058 + $0xa8] sm:$0xff]
        %v3917 = vld [vmem:[%s1058 + $0xb0] sm:$0xff]
        %v3918 = vld [vmem:[%s1058 + $0xb8] sm:$0xff]
        %v3919 = vld [vmem:[%s1058 + $0xc0] sm:$0xff]
        %v3920 = vld [vmem:[%s1058 + $0xc8] sm:$0xff]
        %v3921 = vld [vmem:[%s1058 + $0xd0] sm:$0xff]
        %v3922 = vld [vmem:[%s1058 + $0xd8] sm:$0xff]
        %v3923 = vld [vmem:[%s1058 + $0xe0] sm:$0xff]
        %v3924 = vld [vmem:[%s1058 + $0xe8] sm:$0xff]
        %v3925 = vld [vmem:[%s1058 + $0xf0] sm:$0xff]
        %v3926 = vld [vmem:[%s1058 + $0xf8] sm:$0xff]
        %v3927 = vld [vmem:[%s1067] sm:$0xf]
        %v3929 = vlaneseq
        %v3930 = vshrl.u32 %v3929, 7
        %v3931 = vsub.s32 0, %v3930
        %v3932 = vrot.slane %v3927, %v3931
        %v3933 = vlaneseq
        %v3934 = vshrl.u32 %v3933, 7
        %v3935 = vsub.s32 1, %v3934
        %v3936 = vrot.slane %v3927, %v3935
        %v3937 = vlaneseq
        %v3938 = vshrl.u32 %v3937, 7
        %v3939 = vsub.s32 2, %v3938
        %v3940 = vrot.slane %v3927, %v3939
        %v3941 = vlaneseq
        %v3942 = vshrl.u32 %v3941, 7
        %v3943 = vsub.s32 3, %v3942
        %v3944 = vrot.slane %v3927, %v3943
        %v3981 = vunpack.c.l.b16 %v3895
        %v3982 = vunpack.c.h.b16 %v3895
        %v3983 = vunpack.c.l.b16 %v3896
        %v3984 = vunpack.c.h.b16 %v3896
        %v3985 = vunpack.c.l.b16 %v3897
        %v3986 = vunpack.c.h.b16 %v3897
        %v3987 = vunpack.c.l.b16 %v3898
        %v3988 = vunpack.c.h.b16 %v3898
        %v3989 = vunpack.c.l.b16 %v3899
        %v3990 = vunpack.c.h.b16 %v3899
        %v3991 = vunpack.c.l.b16 %v3900
        %v3992 = vunpack.c.h.b16 %v3900
        %v3993 = vunpack.c.l.b16 %v3901
        %v3994 = vunpack.c.h.b16 %v3901
        %v3995 = vunpack.c.l.b16 %v3902
        %v3996 = vunpack.c.h.b16 %v3902
        %v3997 = vunpack.c.l.b16 %v3903
        %v3998 = vunpack.c.h.b16 %v3903
        %v3999 = vunpack.c.l.b16 %v3904
        %v4000 = vunpack.c.h.b16 %v3904
        %v4001 = vunpack.c.l.b16 %v3905
        %v4002 = vunpack.c.h.b16 %v3905
        %v4003 = vunpack.c.l.b16 %v3906
        %v4004 = vunpack.c.h.b16 %v3906
        %v4005 = vunpack.c.l.b16 %v3907
        %v4006 = vunpack.c.h.b16 %v3907
        %v4007 = vunpack.c.l.b16 %v3908
        %v4008 = vunpack.c.h.b16 %v3908
        %v4009 = vunpack.c.l.b16 %v3909
        %v4010 = vunpack.c.h.b16 %v3909
        %v4011 = vunpack.c.l.b16 %v3910
        %v4012 = vunpack.c.h.b16 %v3910
        %v4013 = vunpack.c.l.b16 %v3911
        %v4014 = vunpack.c.h.b16 %v3911
        %v4015 = vunpack.c.l.b16 %v3912
        %v4016 = vunpack.c.h.b16 %v3912
        %v4017 = vunpack.c.l.b16 %v3913
        %v4018 = vunpack.c.h.b16 %v3913
        %v4019 = vunpack.c.l.b16 %v3914
        %v4020 = vunpack.c.h.b16 %v3914
        %v4021 = vunpack.c.l.b16 %v3915
        %v4022 = vunpack.c.h.b16 %v3915
        %v4023 = vunpack.c.l.b16 %v3916
        %v4024 = vunpack.c.h.b16 %v3916
        %v4025 = vunpack.c.l.b16 %v3917
        %v4026 = vunpack.c.h.b16 %v3917
        %v4027 = vunpack.c.l.b16 %v3918
        %v4028 = vunpack.c.h.b16 %v3918
        %v4029 = vunpack.c.l.b16 %v3919
        %v4030 = vunpack.c.h.b16 %v3919
        %v4031 = vunpack.c.l.b16 %v3920
        %v4032 = vunpack.c.h.b16 %v3920
        %v4033 = vunpack.c.l.b16 %v3921
        %v4034 = vunpack.c.h.b16 %v3921
        %v4035 = vunpack.c.l.b16 %v3922
        %v4036 = vunpack.c.h.b16 %v3922
        %v4037 = vunpack.c.l.b16 %v3923
        %v4038 = vunpack.c.h.b16 %v3923
        %v4039 = vunpack.c.l.b16 %v3924
        %v4040 = vunpack.c.h.b16 %v3924
        %v4041 = vunpack.c.l.b16 %v3925
        %v4042 = vunpack.c.h.b16 %v3925
        %v4043 = vunpack.c.l.b16 %v3926
        %v4044 = vunpack.c.h.b16 %v3926
        %v4045 = vpack.c.b16 %v3985, %v3981
        %v4046 = vpack.c.b16 %v3986, %v3982
        %v4047 = vpack.c.b16 %v3987, %v3983
        %v4048 = vpack.c.b16 %v3988, %v3984
        %v4049 = vpack.c.b16 %v3993, %v3989
        %v4050 = vpack.c.b16 %v3994, %v3990
        %v4051 = vpack.c.b16 %v3995, %v3991
        %v4052 = vpack.c.b16 %v3996, %v3992
        %v4053 = vpack.c.b16 %v4001, %v3997
        %v4054 = vpack.c.b16 %v4002, %v3998
        %v4055 = vpack.c.b16 %v4003, %v3999
        %v4056 = vpack.c.b16 %v4004, %v4000
        %v4057 = vpack.c.b16 %v4009, %v4005
        %v4058 = vpack.c.b16 %v4010, %v4006
        %v4059 = vpack.c.b16 %v4011, %v4007
        %v4060 = vpack.c.b16 %v4012, %v4008
        %v4061 = vpack.c.b16 %v4017, %v4013
        %v4062 = vpack.c.b16 %v4018, %v4014
        %v4063 = vpack.c.b16 %v4019, %v4015
        %v4064 = vpack.c.b16 %v4020, %v4016
        %v4065 = vpack.c.b16 %v4025, %v4021
        %v4066 = vpack.c.b16 %v4026, %v4022
        %v4067 = vpack.c.b16 %v4027, %v4023
        %v4068 = vpack.c.b16 %v4028, %v4024
        %v4069 = vpack.c.b16 %v4033, %v4029
        %v4070 = vpack.c.b16 %v4034, %v4030
        %v4071 = vpack.c.b16 %v4035, %v4031
        %v4072 = vpack.c.b16 %v4036, %v4032
        %v4073 = vpack.c.b16 %v4041, %v4037
        %v4074 = vpack.c.b16 %v4042, %v4038
        %v4075 = vpack.c.b16 %v4043, %v4039
        %v4076 = vpack.c.b16 %v4044, %v4040
        %4109 = vmatprep.subr.bf16.mxu0 %v4046
        %4110 = vmatpush1.bf16.msra.mxu0 %v4045
        %4111 = vmatprep.subr.bf16.mxu0 %v4050
        %4112 = vmatpush1.bf16.msra.mxu0 %v4049
        %4113 = vmatprep.subr.bf16.mxu0 %v4054
        %4114 = vmatpush1.bf16.msra.mxu0 %v4053
        %4115 = vmatprep.subr.bf16.mxu0 %v4058
        %4116 = vmatpush1.bf16.msra.mxu0 %v4057
        %4117 = vmatprep.subr.bf16.mxu0 %v4062
        %4118 = vmatpush1.bf16.msra.mxu0 %v4061
        %4119 = vmatprep.subr.bf16.mxu0 %v4066
        %4120 = vmatpush1.bf16.msra.mxu0 %v4065
        %4121 = vmatprep.subr.bf16.mxu0 %v4070
        %4122 = vmatpush1.bf16.msra.mxu0 %v4069
        %4123 = vmatprep.subr.bf16.mxu0 %v4074
        %4124 = vmatpush1.bf16.msra.mxu0 %v4073
        %4125 = vmatprep.subr.bf16.mxu0 0
        %4126 = vmatpush1.bf16.msra.mxu0 0
        %4127 = vmatprep.subr.bf16.mxu0 0
        %4128 = vmatpush1.bf16.msra.mxu0 0
        %4129 = vmatprep.subr.bf16.mxu0 0
        %4130 = vmatpush1.bf16.msra.mxu0 0
        %4131 = vmatprep.subr.bf16.mxu0 0
        %4132 = vmatpush1.bf16.msra.mxu0 0
        %4133 = vmatprep.subr.bf16.mxu0 0
        %4134 = vmatpush1.bf16.msra.mxu0 0
        %4135 = vmatprep.subr.bf16.mxu0 0
        %4136 = vmatpush1.bf16.msra.mxu0 0
        %4137 = vmatprep.subr.bf16.mxu0 0
        %4138 = vmatpush1.bf16.msra.mxu0 0
        %4139 = vmatprep.subr.bf16.mxu0 0
        %4140 = vmatpush1.bf16.msra.mxu0 0
        %4141 = vmatprep.mubr.bf16.mxu0 0
        %4142 = vmatmul.mubr.bf16.gmra.mrb[0].mxu0 %v3893
        %v4143 = vpop.f32.mrb[0].mxu0
        %v4144 = vadd.f32 %v3932, %v4143
        %v4145 = vpop.f32.mrb[0].mxu0
        %v4146 = vadd.f32 %v3936, %v4145
        %v4147 = vpop.f32.mrb[0].mxu0
        %v4148 = vadd.f32 %v3932, %v4147
        %v4149 = vpop.f32.mrb[0].mxu0
        %v4150 = vadd.f32 %v3936, %v4149
        %4151 = vmatprep.mubr.bf16.mxu0 0
        %4152 = vmatmul.mubr.bf16.gmra.mrb[0].mxu0 %v3894
        %v4153 = vpop.f32.mrb[0].mxu0
        %v4154 = vadd.f32 %v3932, %v4153
        %v4155 = vpop.f32.mrb[0].mxu0
        %v4156 = vadd.f32 %v3936, %v4155
        %v4157 = vpop.f32.mrb[0].mxu0
        %v4158 = vpop.f32.mrb[0].mxu0
        %4159 = vdwg.mxu0
        %4160 = vmatprep.subr.bf16.mxu0 %v4048
        %4161 = vmatpush1.bf16.msra.mxu0 %v4047
        %4162 = vmatprep.subr.bf16.mxu0 %v4052
        %4163 = vmatpush1.bf16.msra.mxu0 %v4051
        %4164 = vmatprep.subr.bf16.mxu0 %v4056
        %4165 = vmatpush1.bf16.msra.mxu0 %v4055
        %4166 = vmatprep.subr.bf16.mxu0 %v4060
        %4167 = vmatpush1.bf16.msra.mxu0 %v4059
        %4168 = vmatprep.subr.bf16.mxu0 %v4064
        %4169 = vmatpush1.bf16.msra.mxu0 %v4063
        %4170 = vmatprep.subr.bf16.mxu0 %v4068
        %4171 = vmatpush1.bf16.msra.mxu0 %v4067
        %4172 = vmatprep.subr.bf16.mxu0 %v4072
        %4173 = vmatpush1.bf16.msra.mxu0 %v4071
        %4174 = vmatprep.subr.bf16.mxu0 %v4076
        %4175 = vmatpush1.bf16.msra.mxu0 %v4075
        %4176 = vmatprep.subr.bf16.mxu0 0
        %4177 = vmatpush1.bf16.msra.mxu0 0
        %4178 = vmatprep.subr.bf16.mxu0 0
        %4179 = vmatpush1.bf16.msra.mxu0 0
        %4180 = vmatprep.subr.bf16.mxu0 0
        %4181 = vmatpush1.bf16.msra.mxu0 0
        %4182 = vmatprep.subr.bf16.mxu0 0
        %4183 = vmatpush1.bf16.msra.mxu0 0
        %4184 = vmatprep.subr.bf16.mxu0 0
        %4185 = vmatpush1.bf16.msra.mxu0 0
        %4186 = vmatprep.subr.bf16.mxu0 0
        %4187 = vmatpush1.bf16.msra.mxu0 0
        %4188 = vmatprep.subr.bf16.mxu0 0
        %4189 = vmatpush1.bf16.msra.mxu0 0
        %4190 = vmatprep.subr.bf16.mxu0 0
        %4191 = vmatpush1.bf16.msra.mxu0 0
        %4192 = vmatprep.mubr.bf16.mxu0 0
        %4193 = vmatmul.mubr.bf16.gmra.mrb[0].mxu0 %v3893
        %v4194 = vpop.f32.mrb[0].mxu0
        %v4195 = vadd.f32 %v3940, %v4194
        %v4196 = vpop.f32.mrb[0].mxu0
        %v4197 = vadd.f32 %v3944, %v4196
        %v4198 = vpop.f32.mrb[0].mxu0
        %v4199 = vadd.f32 %v3940, %v4198
        %v4200 = vpop.f32.mrb[0].mxu0
        %v4201 = vadd.f32 %v3944, %v4200
        %4202 = vmatprep.mubr.bf16.mxu0 0
        %4203 = vmatmul.mubr.bf16.gmra.mrb[0].mxu0 %v3894
        %v4204 = vpop.f32.mrb[0].mxu0
        %v4205 = vadd.f32 %v3940, %v4204
        %v4206 = vpop.f32.mrb[0].mxu0
        %v4207 = vadd.f32 %v3944, %v4206
        %v4208 = vpop.f32.mrb[0].mxu0
        %v4209 = vpop.f32.mrb[0].mxu0
        %4210 = vdwg.mxu0
        %v4211 = vmul.f32 %v4144, 0.5
        %v4212 = vmul.f32 %v4146, 0.5
        %v4213 = vmul.f32 %v4195, 0.5
        %v4214 = vmul.f32 %v4197, 0.5
        %v4215 = vmul.f32 %v4148, 0.5
        %v4216 = vmul.f32 %v4150, 0.5
        %v4217 = vmul.f32 %v4199, 0.5
        %v4218 = vmul.f32 %v4201, 0.5
        %v4219 = vmul.f32 %v4154, 0.5
        %v4220 = vmul.f32 %v4156, 0.5
        %v4221 = vmul.f32 %v4205, 0.5
        %v4222 = vmul.f32 %v4207, 0.5
        %v4223 = vmul.f32 %v4144, 0.044715
        %v4224 = vmul.f32 %v4146, 0.044715
        %v4225 = vmul.f32 %v4195, 0.044715
        %v4226 = vmul.f32 %v4197, 0.044715
        %v4227 = vmul.f32 %v4148, 0.044715
        %v4228 = vmul.f32 %v4150, 0.044715
        %v4229 = vmul.f32 %v4199, 0.044715
        %v4230 = vmul.f32 %v4201, 0.044715
        %v4231 = vmul.f32 %v4154, 0.044715
        %v4232 = vmul.f32 %v4156, 0.044715
        %v4233 = vmul.f32 %v4205, 0.044715
        %v4234 = vmul.f32 %v4207, 0.044715
        %v4235 = vmul.f32 %v4223, %v4144
        %v4236 = vmul.f32 %v4224, %v4146
        %v4237 = vmul.f32 %v4225, %v4195
        %v4238 = vmul.f32 %v4226, %v4197
        %v4239 = vmul.f32 %v4227, %v4148
        %v4240 = vmul.f32 %v4228, %v4150
        %v4241 = vmul.f32 %v4229, %v4199
        %v4242 = vmul.f32 %v4230, %v4201
        %v4243 = vmul.f32 %v4231, %v4154
        %v4244 = vmul.f32 %v4232, %v4156
        %v4245 = vmul.f32 %v4233, %v4205
        %v4246 = vmul.f32 %v4234, %v4207
        %v4247 = vmul.f32 %v4235, %v4144
        %v4248 = vmul.f32 %v4236, %v4146
        %v4249 = vmul.f32 %v4237, %v4195
        %v4250 = vmul.f32 %v4238, %v4197
        %v4251 = vmul.f32 %v4239, %v4148
        %v4252 = vmul.f32 %v4240, %v4150
        %v4253 = vmul.f32 %v4241, %v4199
        %v4254 = vmul.f32 %v4242, %v4201
        %v4255 = vmul.f32 %v4243, %v4154
        %v4256 = vmul.f32 %v4244, %v4156
        %v4257 = vmul.f32 %v4245, %v4205
        %v4258 = vmul.f32 %v4246, %v4207
        %v4259 = vadd.f32 %v4144, %v4247
        %v4260 = vadd.f32 %v4146, %v4248
        %v4261 = vadd.f32 %v4195, %v4249
        %v4262 = vadd.f32 %v4197, %v4250
        %v4263 = vadd.f32 %v4148, %v4251
        %v4264 = vadd.f32 %v4150, %v4252
        %v4265 = vadd.f32 %v4199, %v4253
        %v4266 = vadd.f32 %v4201, %v4254
        %v4267 = vadd.f32 %v4154, %v4255
        %v4268 = vadd.f32 %v4156, %v4256
        %v4269 = vadd.f32 %v4205, %v4257
        %v4270 = vadd.f32 %v4207, %v4258
        %v4271 = vmul.f32 %v4259, 0.7978846
        %v4272 = vmul.f32 %v4260, 0.7978846
        %v4273 = vmul.f32 %v4261, 0.7978846
        %v4274 = vmul.f32 %v4262, 0.7978846
        %v4275 = vmul.f32 %v4263, 0.7978846
        %v4276 = vmul.f32 %v4264, 0.7978846
        %v4277 = vmul.f32 %v4265, 0.7978846
        %v4278 = vmul.f32 %v4266, 0.7978846
        %v4279 = vmul.f32 %v4267, 0.7978846
        %v4280 = vmul.f32 %v4268, 0.7978846
        %v4281 = vmul.f32 %v4269, 0.7978846
        %v4282 = vmul.f32 %v4270, 0.7978846
        %v4283 = vtanh.pop %v4271
        %v4284 = vtanh.pop %v4272
        %v4285 = vtanh.pop %v4273
        %v4286 = vtanh.pop %v4274
        %v4287 = vtanh.pop %v4275
        %v4288 = vtanh.pop %v4276
        %v4289 = vtanh.pop %v4277
        %v4290 = vtanh.pop %v4278
        %v4291 = vtanh.pop %v4279
        %v4292 = vtanh.pop %v4280
        %v4293 = vtanh.pop %v4281
        %v4294 = vtanh.pop %v4282
        %v4295 = vadd.f32 %v4283, 1.0
        %v4296 = vadd.f32 %v4284, 1.0
        %v4297 = vadd.f32 %v4285, 1.0
        %v4298 = vadd.f32 %v4286, 1.0
        %v4299 = vadd.f32 %v4287, 1.0
        %v4300 = vadd.f32 %v4288, 1.0
        %v4301 = vadd.f32 %v4289, 1.0
        %v4302 = vadd.f32 %v4290, 1.0
        %v4303 = vadd.f32 %v4291, 1.0
        %v4304 = vadd.f32 %v4292, 1.0
        %v4305 = vadd.f32 %v4293, 1.0
        %v4306 = vadd.f32 %v4294, 1.0
        %v4307 = vmul.f32 %v4211, %v4295
        %v4308 = vmul.f32 %v4212, %v4296
        %v4309 = vmul.f32 %v4213, %v4297
        %v4310 = vmul.f32 %v4214, %v4298
        %v4311 = vmul.f32 %v4215, %v4299
        %v4312 = vmul.f32 %v4216, %v4300
        %v4313 = vmul.f32 %v4217, %v4301
        %v4314 = vmul.f32 %v4218, %v4302
        %v4315 = vmul.f32 %v4219, %v4303
        %v4316 = vmul.f32 %v4220, %v4304
        %v4317 = vmul.f32 %v4221, %v4305
        %v4318 = vmul.f32 %v4222, %v4306
        %v4319 = vpack.c.bf16 %v4311, %v4307
        %v4320 = vpack.c.bf16 %v4312, %v4308
        %v4321 = vpack.c.bf16 %v4313, %v4309
        %v4322 = vpack.c.bf16 %v4314, %v4310
        %v4323 = vpack.c.bf16 %v4315, %v4315
        %v4324 = vpack.c.bf16 %v4316, %v4316
        %v4325 = vpack.c.bf16 %v4317, %v4317
        %v4326 = vpack.c.bf16 %v4318, %v4318
        %v4327 = vld [vmem:[%s1076] sm:$0xf]
        %v4328 = vld [vmem:[%s1076 + $0x4] sm:$0xf]
        %v4329 = vld [vmem:[%s1076 + $0x8] sm:$0xf]
        %v4330 = vld [vmem:[%s1076 + $0xc] sm:$0xf]
        %v4331 = vld [vmem:[%s1076 + $0x10] sm:$0xf]
        %v4332 = vld [vmem:[%s1076 + $0x14] sm:$0xf]
        %v4333 = vld [vmem:[%s1076 + $0x18] sm:$0xf]
        %v4334 = vld [vmem:[%s1076 + $0x1c] sm:$0xf]
        %v4335 = vld [vmem:[%s1076 + $0x20] sm:$0xf]
        %v4336 = vld [vmem:[%s1076 + $0x24] sm:$0xf]
        %v4337 = vld [vmem:[%s1076 + $0x28] sm:$0xf]
        %v4338 = vld [vmem:[%s1076 + $0x2c] sm:$0xf]
        %v4339 = vld [vmem:[%s1076 + $0x30] sm:$0xf]
        %v4340 = vld [vmem:[%s1076 + $0x34] sm:$0xf]
        %v4341 = vld [vmem:[%s1076 + $0x38] sm:$0xf]
        %v4342 = vld [vmem:[%s1076 + $0x3c] sm:$0xf]
        %v4343 = vld [vmem:[%s1076 + $0x40] sm:$0xf]
        %v4344 = vld [vmem:[%s1076 + $0x44] sm:$0xf]
        %v4345 = vld [vmem:[%s1076 + $0x48] sm:$0xf]
        %v4346 = vld [vmem:[%s1076 + $0x4c] sm:$0xf]
        %v4347 = vld [vmem:[%s1076 + $0x50] sm:$0xf]
        %v4348 = vld [vmem:[%s1076 + $0x54] sm:$0xf]
        %v4349 = vld [vmem:[%s1076 + $0x58] sm:$0xf]
        %v4350 = vld [vmem:[%s1076 + $0x5c] sm:$0xf]
        %v4351 = vld [vmem:[%s1076 + $0x60] sm:$0xf]
        %v4352 = vld [vmem:[%s1076 + $0x64] sm:$0xf]
        %v4353 = vld [vmem:[%s1076 + $0x68] sm:$0xf]
        %v4354 = vld [vmem:[%s1076 + $0x6c] sm:$0xf]
        %v4355 = vld [vmem:[%s1076 + $0x70] sm:$0xf]
        %v4356 = vld [vmem:[%s1076 + $0x74] sm:$0xf]
        %v4357 = vld [vmem:[%s1076 + $0x78] sm:$0xf]
        %v4358 = vld [vmem:[%s1076 + $0x7c] sm:$0xf]
        %v4359 = vld [vmem:[%s1076 + $0x80] sm:$0xf]
        %v4360 = vld [vmem:[%s1076 + $0x84] sm:$0xf]
        %v4361 = vld [vmem:[%s1076 + $0x88] sm:$0xf]
        %v4362 = vld [vmem:[%s1076 + $0x8c] sm:$0xf]
        %v4363 = vld [vmem:[%s1076 + $0x90] sm:$0xf]
        %v4364 = vld [vmem:[%s1076 + $0x94] sm:$0xf]
        %v4365 = vld [vmem:[%s1076 + $0x98] sm:$0xf]
        %v4366 = vld [vmem:[%s1076 + $0x9c] sm:$0xf]
        %v4367 = vld [vmem:[%s1076 + $0xa0] sm:$0xf]
        %v4368 = vld [vmem:[%s1076 + $0xa4] sm:$0xf]
        %v4369 = vld [vmem:[%s1076 + $0xa8] sm:$0xf]
        %v4370 = vld [vmem:[%s1076 + $0xac] sm:$0xf]
        %v4371 = vld [vmem:[%s1076 + $0xb0] sm:$0xf]
        %v4372 = vld [vmem:[%s1076 + $0xb4] sm:$0xf]
        %v4373 = vld [vmem:[%s1076 + $0xb8] sm:$0xf]
        %v4374 = vld [vmem:[%s1076 + $0xbc] sm:$0xf]
        %v4375 = vld [vmem:[%s1076 + $0xc0] sm:$0xf]
        %v4376 = vld [vmem:[%s1076 + $0xc4] sm:$0xf]
        %v4377 = vld [vmem:[%s1076 + $0xc8] sm:$0xf]
        %v4378 = vld [vmem:[%s1076 + $0xcc] sm:$0xf]
        %v4379 = vld [vmem:[%s1076 + $0xd0] sm:$0xf]
        %v4380 = vld [vmem:[%s1076 + $0xd4] sm:$0xf]
        %v4381 = vld [vmem:[%s1076 + $0xd8] sm:$0xf]
        %v4382 = vld [vmem:[%s1076 + $0xdc] sm:$0xf]
        %v4383 = vld [vmem:[%s1076 + $0xe0] sm:$0xf]
        %v4384 = vld [vmem:[%s1076 + $0xe4] sm:$0xf]
        %v4385 = vld [vmem:[%s1076 + $0xe8] sm:$0xf]
        %v4386 = vld [vmem:[%s1076 + $0xec] sm:$0xf]
        %v4387 = vld [vmem:[%s1076 + $0xf0] sm:$0xf]
        %v4388 = vld [vmem:[%s1076 + $0xf4] sm:$0xf]
        %v4389 = vld [vmem:[%s1076 + $0xf8] sm:$0xf]
        %v4390 = vld [vmem:[%s1076 + $0xfc] sm:$0xf]
        %v4391 = vld [vmem:[%s1084] sm:$0x1]
        %v4393 = vlaneseq
        %v4394 = vshrl.u32 %v4393, 7
        %v4395 = vsub.s32 0, %v4394
        %v4396 = vrot.slane %v4391, %v4395
        %v4462 = vunpack.c.l.b16 %v4327
        %v4463 = vunpack.c.l.b16 %v4328
        %v4464 = vunpack.c.l.b16 %v4329
        %v4465 = vunpack.c.l.b16 %v4330
        %v4466 = vunpack.c.l.b16 %v4331
        %v4467 = vunpack.c.l.b16 %v4332
        %v4468 = vunpack.c.l.b16 %v4333
        %v4469 = vunpack.c.l.b16 %v4334
        %v4470 = vunpack.c.l.b16 %v4335
        %v4471 = vunpack.c.l.b16 %v4336
        %v4472 = vunpack.c.l.b16 %v4337
        %v4473 = vunpack.c.l.b16 %v4338
        %v4474 = vunpack.c.l.b16 %v4339
        %v4475 = vunpack.c.l.b16 %v4340
        %v4476 = vunpack.c.l.b16 %v4341
        %v4477 = vunpack.c.l.b16 %v4342
        %v4478 = vunpack.c.l.b16 %v4343
        %v4479 = vunpack.c.l.b16 %v4344
        %v4480 = vunpack.c.l.b16 %v4345
        %v4481 = vunpack.c.l.b16 %v4346
        %v4482 = vunpack.c.l.b16 %v4347
        %v4483 = vunpack.c.l.b16 %v4348
        %v4484 = vunpack.c.l.b16 %v4349
        %v4485 = vunpack.c.l.b16 %v4350
        %v4486 = vunpack.c.l.b16 %v4351
        %v4487 = vunpack.c.l.b16 %v4352
        %v4488 = vunpack.c.l.b16 %v4353
        %v4489 = vunpack.c.l.b16 %v4354
        %v4490 = vunpack.c.l.b16 %v4355
        %v4491 = vunpack.c.l.b16 %v4356
        %v4492 = vunpack.c.l.b16 %v4357
        %v4493 = vunpack.c.l.b16 %v4358
        %v4494 = vunpack.c.l.b16 %v4359
        %v4495 = vunpack.c.l.b16 %v4360
        %v4496 = vunpack.c.l.b16 %v4361
        %v4497 = vunpack.c.l.b16 %v4362
        %v4498 = vunpack.c.l.b16 %v4363
        %v4499 = vunpack.c.l.b16 %v4364
        %v4500 = vunpack.c.l.b16 %v4365
        %v4501 = vunpack.c.l.b16 %v4366
        %v4502 = vunpack.c.l.b16 %v4367
        %v4503 = vunpack.c.l.b16 %v4368
        %v4504 = vunpack.c.l.b16 %v4369
        %v4505 = vunpack.c.l.b16 %v4370
        %v4506 = vunpack.c.l.b16 %v4371
        %v4507 = vunpack.c.l.b16 %v4372
        %v4508 = vunpack.c.l.b16 %v4373
        %v4509 = vunpack.c.l.b16 %v4374
        %v4510 = vunpack.c.l.b16 %v4375
        %v4511 = vunpack.c.l.b16 %v4376
        %v4512 = vunpack.c.l.b16 %v4377
        %v4513 = vunpack.c.l.b16 %v4378
        %v4514 = vunpack.c.l.b16 %v4379
        %v4515 = vunpack.c.l.b16 %v4380
        %v4516 = vunpack.c.l.b16 %v4381
        %v4517 = vunpack.c.l.b16 %v4382
        %v4518 = vunpack.c.l.b16 %v4383
        %v4519 = vunpack.c.l.b16 %v4384
        %v4520 = vunpack.c.l.b16 %v4385
        %v4521 = vunpack.c.l.b16 %v4386
        %v4522 = vunpack.c.l.b16 %v4387
        %v4523 = vunpack.c.l.b16 %v4388
        %v4524 = vunpack.c.l.b16 %v4389
        %v4525 = vunpack.c.l.b16 %v4390
        %v4526 = vpack.c.b16 %v4463, %v4462
        %v4527 = vpack.c.b16 %v4465, %v4464
        %v4528 = vpack.c.b16 %v4467, %v4466
        %v4529 = vpack.c.b16 %v4469, %v4468
        %v4530 = vpack.c.b16 %v4471, %v4470
        %v4531 = vpack.c.b16 %v4473, %v4472
        %v4532 = vpack.c.b16 %v4475, %v4474
        %v4533 = vpack.c.b16 %v4477, %v4476
        %v4534 = vpack.c.b16 %v4479, %v4478
        %v4535 = vpack.c.b16 %v4481, %v4480
        %v4536 = vpack.c.b16 %v4483, %v4482
        %v4537 = vpack.c.b16 %v4485, %v4484
        %v4538 = vpack.c.b16 %v4487, %v4486
        %v4539 = vpack.c.b16 %v4489, %v4488
        %v4540 = vpack.c.b16 %v4491, %v4490
        %v4541 = vpack.c.b16 %v4493, %v4492
        %v4542 = vpack.c.b16 %v4495, %v4494
        %v4543 = vpack.c.b16 %v4497, %v4496
        %v4544 = vpack.c.b16 %v4499, %v4498
        %v4545 = vpack.c.b16 %v4501, %v4500
        %v4546 = vpack.c.b16 %v4503, %v4502
        %v4547 = vpack.c.b16 %v4505, %v4504
        %v4548 = vpack.c.b16 %v4507, %v4506
        %v4549 = vpack.c.b16 %v4509, %v4508
        %v4550 = vpack.c.b16 %v4511, %v4510
        %v4551 = vpack.c.b16 %v4513, %v4512
        %v4552 = vpack.c.b16 %v4515, %v4514
        %v4553 = vpack.c.b16 %v4517, %v4516
        %v4554 = vpack.c.b16 %v4519, %v4518
        %v4555 = vpack.c.b16 %v4521, %v4520
        %v4556 = vpack.c.b16 %v4523, %v4522
        %v4557 = vpack.c.b16 %v4525, %v4524
        %4590 = vmatprep.subr.bf16.mxu0 0
        %4591 = vmatpush1.bf16.msra.mxu0 %v4526
        %4592 = vmatprep.subr.bf16.mxu0 0
        %4593 = vmatpush1.bf16.msra.mxu0 %v4527
        %4594 = vmatprep.subr.bf16.mxu0 0
        %4595 = vmatpush1.bf16.msra.mxu0 %v4528
        %4596 = vmatprep.subr.bf16.mxu0 0
        %4597 = vmatpush1.bf16.msra.mxu0 %v4529
        %4598 = vmatprep.subr.bf16.mxu0 0
        %4599 = vmatpush1.bf16.msra.mxu0 %v4530
        %4600 = vmatprep.subr.bf16.mxu0 0
        %4601 = vmatpush1.bf16.msra.mxu0 %v4531
        %4602 = vmatprep.subr.bf16.mxu0 0
        %4603 = vmatpush1.bf16.msra.mxu0 %v4532
        %4604 = vmatprep.subr.bf16.mxu0 0
        %4605 = vmatpush1.bf16.msra.mxu0 %v4533
        %4606 = vmatprep.subr.bf16.mxu0 0
        %4607 = vmatpush1.bf16.msra.mxu0 %v4534
        %4608 = vmatprep.subr.bf16.mxu0 0
        %4609 = vmatpush1.bf16.msra.mxu0 %v4535
        %4610 = vmatprep.subr.bf16.mxu0 0
        %4611 = vmatpush1.bf16.msra.mxu0 %v4536
        %4612 = vmatprep.subr.bf16.mxu0 0
        %4613 = vmatpush1.bf16.msra.mxu0 %v4537
        %4614 = vmatprep.subr.bf16.mxu0 0
        %4615 = vmatpush1.bf16.msra.mxu0 %v4538
        %4616 = vmatprep.subr.bf16.mxu0 0
        %4617 = vmatpush1.bf16.msra.mxu0 %v4539
        %4618 = vmatprep.subr.bf16.mxu0 0
        %4619 = vmatpush1.bf16.msra.mxu0 %v4540
        %4620 = vmatprep.subr.bf16.mxu0 0
        %4621 = vmatpush1.bf16.msra.mxu0 %v4541
        %4622 = vmatprep.mubr.bf16.mxu0 %v4320
        %4623 = vmatmul.mubr.bf16.gmra.mrb[0].mxu0 %v4319
        %v4624 = vpop.f32.mrb[0].mxu0
        %v4625 = vadd.f32 %v4396, %v4624
        %v4626 = vpop.f32.mrb[0].mxu0
        %v4627 = vpop.f32.mrb[0].mxu0
        %v4628 = vadd.f32 %v4396, %v4627
        %v4629 = vpop.f32.mrb[0].mxu0
        %4630 = vmatprep.mubr.bf16.mxu0 %v4324
        %4631 = vmatmul.mubr.bf16.gmra.mrb[0].mxu0 %v4323
        %v4632 = vpop.f32.mrb[0].mxu0
        %v4633 = vadd.f32 %v4396, %v4632
        %v4634 = vpop.f32.mrb[0].mxu0
        %v4635 = vpop.f32.mrb[0].mxu0
        %v4636 = vpop.f32.mrb[0].mxu0
        %4637 = vdwg.mxu0
        %4638 = vmatprep.subr.bf16.mxu0 0
        %4639 = vmatpush1.bf16.msra.mxu0 %v4542
        %4640 = vmatprep.subr.bf16.mxu0 0
        %4641 = vmatpush1.bf16.msra.mxu0 %v4543
        %4642 = vmatprep.subr.bf16.mxu0 0
        %4643 = vmatpush1.bf16.msra.mxu0 %v4544
        %4644 = vmatprep.subr.bf16.mxu0 0
        %4645 = vmatpush1.bf16.msra.mxu0 %v4545
        %4646 = vmatprep.subr.bf16.mxu0 0
        %4647 = vmatpush1.bf16.msra.mxu0 %v4546
        %4648 = vmatprep.subr.bf16.mxu0 0
        %4649 = vmatpush1.bf16.msra.mxu0 %v4547
        %4650 = vmatprep.subr.bf16.mxu0 0
        %4651 = vmatpush1.bf16.msra.mxu0 %v4548
        %4652 = vmatprep.subr.bf16.mxu0 0
        %4653 = vmatpush1.bf16.msra.mxu0 %v4549
        %4654 = vmatprep.subr.bf16.mxu0 0
        %4655 = vmatpush1.bf16.msra.mxu0 %v4550
        %4656 = vmatprep.subr.bf16.mxu0 0
        %4657 = vmatpush1.bf16.msra.mxu0 %v4551
        %4658 = vmatprep.subr.bf16.mxu0 0
        %4659 = vmatpush1.bf16.msra.mxu0 %v4552
        %4660 = vmatprep.subr.bf16.mxu0 0
        %4661 = vmatpush1.bf16.msra.mxu0 %v4553
        %4662 = vmatprep.subr.bf16.mxu0 0
        %4663 = vmatpush1.bf16.msra.mxu0 %v4554
        %4664 = vmatprep.subr.bf16.mxu0 0
        %4665 = vmatpush1.bf16.msra.mxu0 %v4555
        %4666 = vmatprep.subr.bf16.mxu0 0
        %4667 = vmatpush1.bf16.msra.mxu0 %v4556
        %4668 = vmatprep.subr.bf16.mxu0 0
        %4669 = vmatpush1.bf16.msra.mxu0 %v4557
        %4670 = vmatprep.mubr.bf16.mxu0 %v4322
        %4671 = vmatmul.mubr.bf16.gmra.mrb[0].mxu0 %v4321
        %v4672 = vpop.f32.mrb[0].mxu0
        %v4673 = vadd.f32 %v4625, %v4672
        %v4674 = vpop.f32.mrb[0].mxu0
        %v4675 = vpop.f32.mrb[0].mxu0
        %v4676 = vadd.f32 %v4628, %v4675
        %v4677 = vpop.f32.mrb[0].mxu0
        %4678 = vmatprep.mubr.bf16.mxu0 %v4326
        %4679 = vmatmul.mubr.bf16.gmra.mrb[0].mxu0 %v4325
        %v4680 = vpop.f32.mrb[0].mxu0
        %v4681 = vadd.f32 %v4633, %v4680
        %v4682 = vpop.f32.mrb[0].mxu0
        %v4683 = vpop.f32.mrb[0].mxu0
        %v4684 = vpop.f32.mrb[0].mxu0
        %4685 = vdwg.mxu0
        %v4686 = vadd.f32 %v4673, %v3835
        %v4687 = vadd.f32 %v4676, %v3836
        %v4688 = vadd.f32 %v4681, %v3837
        %p4689 = scmp.lt.s32.totalorder %s66, 1
        // Predicated region
        $region177: #{factorized_encoder_forward.5} parent=95 // pred_check
          %p4690 = pneg %p4689
        $region178: #{factorized_encoder_forward.5} parent=95 // pred_check_branch
          %4692 = sbr.rel (%p4690) target = $region180
        $region179: #{factorized_encoder_forward.5} parent=95 // pred_region
          %4693 = vst [vmem:[%s1217] sm:$0xff] %v4686
          %4694 = vst [vmem:[%s1217 + $0x8] sm:$0xff] %v4687
          %4695 = vst [vmem:[%s1217 + $0x10] sm:$0x1] %v4688
        $region180: #{factorized_encoder_forward.5} parent=95 // pred_fallthru
          _
        %p4696 = scmp.eq.s32.totalorder %s66, 1
        // Predicated region
        $region181: #{factorized_encoder_forward.5} parent=95 // pred_check
          %p4697 = pneg %p4696
        $region182: #{factorized_encoder_forward.5} parent=95 // pred_check_branch
          %4699 = sbr.rel (%p4697) target = $region184
        $region183: #{factorized_encoder_forward.5} parent=95 // pred_region
          %v4700 = vld [vmem:[#allocation29] sm:$0x1]
          %v4701 = vld [vmem:[#allocation31] sm:$0x1]
          %4702 = vadd.xlane.f32.xlu0 %v4686
          %v4703 = vpop.xlane.xlu0 %4702
          %4704 = vadd.xlane.f32.xlu0 %v4687
          %v4705 = vpop.xlane.xlu0 %4704
          %v4706 = vsel %vm1238, %v4688, 0.0
          %4707 = vadd.xlane.f32.xlu0 %v4706
          %v4708 = vpop.xlane.xlu0 %4707
          %v4709 = vmul.f32 %v4703, %v1242
          %v4710 = vmul.f32 %v4705, %v1242
          %v4711 = vmul.f32 %v4708, %v1242
          %v4712 = vsub.f32 %v4686, %v4709
          %v4713 = vsub.f32 %v4687, %v4710
          %v4714 = vsub.f32 %v4688, %v4711
          %v4715 = vmul.f32 %v4712, %v4712
          %v4716 = vmul.f32 %v4713, %v4713
          %v4717 = vmul.f32 %v4714, %v4714
          %4718 = vadd.xlane.f32.xlu0 %v4715
          %v4719 = vpop.xlane.xlu0 %4718
          %4720 = vadd.xlane.f32.xlu0 %v4716
          %v4721 = vpop.xlane.xlu0 %4720
          %v4722 = vsel %vm1238, %v4717, 0.0
          %4723 = vadd.xlane.f32.xlu0 %v4722
          %v4724 = vpop.xlane.xlu0 %4723
          %v4725 = vmul.f32 %v4719, %v1242
          %v4726 = vmul.f32 %v4721, %v1242
          %v4727 = vmul.f32 %v4724, %v1242
          %v4728 = vadd.f32 %v4725, 1e-05
          %v4729 = vadd.f32 %v4726, 1e-05
          %v4730 = vadd.f32 %v4727, 1e-05
          %v4731 = vrsqrt.pop %v4728
          %v4732 = vrsqrt.pop %v4729
          %v4733 = vrsqrt.pop %v4730
          %v4734 = vmul.f32 %v4712, %v4731
          %v4735 = vmul.f32 %v4713, %v4732
          %v4736 = vmul.f32 %v4714, %v4733
          %v4738 = vlaneseq
          %v4739 = vshrl.u32 %v4738, 7
          %v4740 = vsub.s32 0, %v4739
          %v4741 = vrot.slane %v4700, %v4740
          %v4743 = vmul.f32 %v4734, %v4741
          %v4744 = vmul.f32 %v4735, %v4741
          %v4745 = vmul.f32 %v4736, %v4741
          %v4747 = vlaneseq
          %v4748 = vshrl.u32 %v4747, 7
          %v4749 = vsub.s32 0, %v4748
          %v4750 = vrot.slane %v4701, %v4749
          %v4752 = vadd.f32 %v4743, %v4750
          %v4753 = vadd.f32 %v4744, %v4750
          %v4754 = vadd.f32 %v4745, %v4750
          %4755 = vst [vmem:[%s1217] sm:$0xff] %v4752
          %4756 = vst [vmem:[%s1217 + $0x8] sm:$0xff] %v4753
          %4757 = vst [vmem:[%s1217 + $0x10] sm:$0x1] %v4754
        $region184: #{factorized_encoder_forward.5} parent=95 // pred_fallthru
          _
        %s4758 = sand.u32 %s565, 1
        %s4759 = scalar_lea.sflag [#allocation4], %s4758
        %s4760 = sand.u32 %s565, 1
        %s4761 = smul.addr %s4760, 24
        %s4762 = scalar_lea.vmem [#allocation32], %s4761
        // Predicated region
        $region185: #{factorized_encoder_forward.5} parent=95 // pred_check
          %p4763 = pneg %p575
        $region186: #{factorized_encoder_forward.5} parent=95 // pred_check_branch
          %4765 = sbr.rel (%p4763) target = $region188
        $region187: #{factorized_encoder_forward.5} parent=95 // pred_region
          %s4767 = ssub.s32 384, 384
          %4768 = vsyncadd %s4759, %s4767
          %s4769 = smul.addr %s65, 3
          %s4770 = smul.addr %s4769, 128
          %s4771 = scalar_lea.hbm %s19, %s4770
          %s4772 = sshll.u32 %s4762, 4
          %s4773 = int_to_ptr.vmem [resolvable:$true] %s4772
          %4778 = dma.vmem_to_hbm [thread:$0]  %s4773, 384, %s4771, %s4759, 128, 128, 8
        $region188: #{factorized_encoder_forward.5} parent=95 // pred_fallthru
          _
      $region96: #{factorized_encoder_forward.5} parent=5 // pred_fallthru
        _
      %p4779 = scmp.le.s32.totalorder 2, %s56
      // Predicated region
      $region189: #{factorized_encoder_forward.5} parent=5 // pred_check
        %p4780 = pneg %p4779
      $region190: #{factorized_encoder_forward.5} parent=5 // pred_check_branch
        %4782 = sbr.rel (%p4780) target = $region192
      $region191: #{factorized_encoder_forward.5} parent=5 // pred_region
        %s4783 = ssub.s32 %s56, 2
        // Predicated region
        $region193: #{factorized_encoder_forward.5} parent=191 // pred_check
          %p4784 = pneg %p581
        $region194: #{factorized_encoder_forward.5} parent=191 // pred_check_branch
          %4786 = sbr.rel (%p4784) target = $region196
        $region195: #{factorized_encoder_forward.5} parent=191 // pred_region
          %s4787 = sand.u32 %s566, 1
          %s4788 = scalar_lea.sflag [#allocation4], %s4787
          %s4789 = sand.u32 %s566, 1
          %s4790 = smul.addr %s4789, 24
          %s4791 = scalar_lea.vmem [#allocation32], %s4790
          %4792 = dma.done %s4788, 384
        $region196: #{factorized_encoder_forward.5} parent=191 // pred_fallthru
          _
      $region192: #{factorized_encoder_forward.5} parent=5 // pred_fallthru
        _
    $region6: #{factorized_encoder_forward.5} parent=1 // loop_footer
      %s60 = sadd.s32 1, %s56
    $region7: #{factorized_encoder_forward.5} parent=1 // loop_footer_branch
      %55 = sbr.rel target = $region3
    $region8: #{factorized_encoder_forward.5} parent=1 // loop_exit
      _
    %4793 = vsyncpa [#allocation3], 1
    %s4794 = scalar_lea.sflag [#allocation3], 1
    %4795 = vsyncpa %s4794, 1
    %4796 = vsyncpa [#allocation6], 1
    %s4797 = scalar_lea.sflag [#allocation6], 1
    %4798 = vsyncpa %s4797, 1
    %4799 = vsyncpa [#allocation9], 1
    %s4800 = scalar_lea.sflag [#allocation9], 1
    %4801 = vsyncpa %s4800, 1
    %4802 = vsyncpa [#allocation12], 1
    %s4803 = scalar_lea.sflag [#allocation12], 1
    %4804 = vsyncpa %s4803, 1
    %4805 = vsyncpa [#allocation15], 1
    %s4806 = scalar_lea.sflag [#allocation15], 1
    %4807 = vsyncpa %s4806, 1
    %4808 = vsyncpa [#allocation18], 1
    %s4809 = scalar_lea.sflag [#allocation18], 1
    %4810 = vsyncpa %s4809, 1
    %4811 = vsyncpa [#allocation21], 1
    %s4812 = scalar_lea.sflag [#allocation21], 1
    %4813 = vsyncpa %s4812, 1
    %4814 = vsyncpa [#allocation24], 1
    %s4815 = scalar_lea.sflag [#allocation24], 1
    %4816 = vsyncpa %s4815, 1
    %4817 = vsyncpa [#allocation27], 1
    %s4818 = scalar_lea.sflag [#allocation27], 1
    %4819 = vsyncpa %s4818, 1
    %4820 = vsyncpa [#allocation30], 1
    %4821 = vsyncpa [#allocation4], 1
    %s4822 = scalar_lea.sflag [#allocation4], 1
    %4823 = vsyncpa %s4822, 1

// kernel: factorized_encoder_forward.6
$region0: #{factorized_encoder_forward.6}
  #allocation0 [shape = 'u32[]', space=smem, size = 0x4, offset = 0x4, fixed_abs, tag = 'smem constant byte address 0x4 - core index']
  #allocation1 [shape = 'u32[144,128]{1,0:T(1,128)}', space=vmem, size = 0x12000, scoped, tag = 'internal scratch']
  %s0 = inlined_call_operand.hbm [shape: f32[2,3,128], index: 0, kind: input, shape index: {}]
  %s1 = inlined_call_operand.hbm [shape: f32[2,1,128], index: 1, kind: input, shape index: {}]
  %s2 = inlined_call_operand.hbm [shape: f32[2,1,128], index: 2, kind: input, shape index: {}]
  %s3 = inlined_call_operand.hbm [shape: bf16[2,128,128], index: 3, kind: input, shape index: {}]
  %s4 = inlined_call_operand.hbm [shape: f32[2,1,128], index: 4, kind: input, shape index: {}]
  %s5 = inlined_call_operand.hbm [shape: bf16[2,128,128], index: 5, kind: input, shape index: {}]
  %s6 = inlined_call_operand.hbm [shape: f32[2,1,128], index: 6, kind: input, shape index: {}]
  %s7 = inlined_call_operand.hbm [shape: bf16[2,128,128], index: 7, kind: input, shape index: {}]
  %s8 = inlined_call_operand.hbm [shape: f32[2,1,128], index: 8, kind: input, shape index: {}]
  %s9 = inlined_call_operand.hbm [shape: bf16[2,128,128], index: 9, kind: input, shape index: {}]
  %s10 = inlined_call_operand.hbm [shape: f32[2,1,128], index: 10, kind: input, shape index: {}]
  %s11 = inlined_call_operand.hbm [shape: f32[2,1,128], index: 11, kind: input, shape index: {}]
  %s12 = inlined_call_operand.hbm [shape: f32[2,1,128], index: 12, kind: input, shape index: {}]
  %s13 = inlined_call_operand.hbm [shape: bf16[2,128,512], index: 13, kind: input, shape index: {}]
  %s14 = inlined_call_operand.hbm [shape: f32[2,1,512], index: 14, kind: input, shape index: {}]
  %s15 = inlined_call_operand.hbm [shape: bf16[2,512,128], index: 15, kind: input, shape index: {}]
  %s16 = inlined_call_operand.hbm [shape: f32[2,1,128], index: 16, kind: input, shape index: {}]
  %s17 = inlined_call_operand.hbm [shape: f32[1,128], index: 17, kind: input, shape index: {}]
  %s18 = inlined_call_operand.hbm [shape: f32[1,128], index: 18, kind: input, shape index: {}]
  %s19 = inlined_call_operand.hbm [shape: f32[2,3,128], index: 19, kind: output, shape index: {}]
  %s20 = sld [smem:[#allocation0]]
  $region197: #{factorized_encoder_forward.6} parent=0
    _
  %s22 = ssub.s32 1, %s20
  %s23 = scalar_select 0, %s22, %s20
  $region1: #{factorized_encoder_forward.6} parent=0
    #allocation2 [shape = 'u8[4096]{0}', space=vmem, size = 0x1000, scoped, tag = 'input window, operand 0']
    #allocation3 [shape = 's32[2]{0}', space=sflag, size = 0x8, scoped, tag = 'scoped memory for factorized_encoder_forward.6']
    #allocation4 [shape = 's32[2]{0}', space=sflag, size = 0x8, scoped, tag = 'scoped memory for factorized_encoder_forward.6']
    #allocation5 [shape = 'u8[1024]{0}', space=vmem, size = 0x400, scoped, tag = 'input window, operand 1']
    #allocation6 [shape = 's32[2]{0}', space=sflag, size = 0x8, scoped, tag = 'scoped memory for factorized_encoder_forward.6']
    #allocation7 [shape = 'u8[1024]{0}', space=vmem, size = 0x400, scoped, tag = 'input window, operand 2']
    #allocation8 [shape = 'u8[65536]{0}', space=vmem, size = 0x10000, scoped, tag = 'input window, operand 3']
    #allocation9 [shape = 's32[2]{0}', space=sflag, size = 0x8, scoped, tag = 'scoped memory for factorized_encoder_forward.6']
    #allocation10 [shape = 'u8[1024]{0}', space=vmem, size = 0x400, scoped, tag = 'input window, operand 4']
    #allocation11 [shape = 'u8[65536]{0}', space=vmem, size = 0x10000, scoped, tag = 'input window, operand 5']
    #allocation12 [shape = 's32[2]{0}', space=sflag, size = 0x8, scoped, tag = 'scoped memory for factorized_encoder_forward.6']
    #allocation13 [shape = 'u8[1024]{0}', space=vmem, size = 0x400, scoped, tag = 'input window, operand 6']
    #allocation14 [shape = 'u8[65536]{0}', space=vmem, size = 0x10000, scoped, tag = 'input window, operand 7']
    #allocation15 [shape = 's32[2]{0}', space=sflag, size = 0x8, scoped, tag = 'scoped memory for factorized_encoder_forward.6']
    #allocation16 [shape = 'u8[1024]{0}', space=vmem, size = 0x400, scoped, tag = 'input window, operand 8']
    #allocation17 [shape = 'u8[65536]{0}', space=vmem, size = 0x10000, scoped, tag = 'input window, operand 9']
    #allocation18 [shape = 's32[2]{0}', space=sflag, size = 0x8, scoped, tag = 'scoped memory for factorized_encoder_forward.6']
    #allocation19 [shape = 'u8[1024]{0}', space=vmem, size = 0x400, scoped, tag = 'input window, operand 10']
    #allocation20 [shape = 'u8[1024]{0}', space=vmem, size = 0x400, scoped, tag = 'input window, operand 11']
    #allocation21 [shape = 's32[2]{0}', space=sflag, size = 0x8, scoped, tag = 'scoped memory for factorized_encoder_forward.6']
    #allocation22 [shape = 'u8[1024]{0}', space=vmem, size = 0x400, scoped, tag = 'input window, operand 12']
    #allocation23 [shape = 'u8[262144]{0}', space=vmem, size = 0x40000, scoped, tag = 'input window, operand 13']
    #allocation24 [shape = 's32[2]{0}', space=sflag, size = 0x8, scoped, tag = 'scoped memory for factorized_encoder_forward.6']
    #allocation25 [shape = 'u8[4096]{0}', space=vmem, size = 0x1000, scoped, tag = 'input window, operand 14']
    #allocation26 [shape = 'u8[262144]{0}', space=vmem, size = 0x40000, scoped, tag = 'input window, operand 15']
    #allocation27 [shape = 's32[2]{0}', space=sflag, size = 0x8, scoped, tag = 'scoped memory for factorized_encoder_forward.6']
    #allocation28 [shape = 'u8[1024]{0}', space=vmem, size = 0x400, scoped, tag = 'input window, operand 16']
    #allocation29 [shape = 'u8[512]{0}', space=vmem, size = 0x400, scoped, tag = 'input window, operand 17, single buffered']
    #allocation30 [shape = 's32[1]{0}', space=sflag, size = 0x4, scoped, tag = 'scoped memory for factorized_encoder_forward.6']
    #allocation31 [shape = 'u8[512]{0}', space=vmem, size = 0x400, scoped, tag = 'input window, operand 18, single buffered']
    #allocation32 [shape = 'u8[4096]{0}', space=vmem, size = 0x1000, scoped, tag = 'output window, operand 0']
    %24 = vsyncpa [#allocation3], 0
    %s25 = scalar_lea.sflag [#allocation3], 1
    %26 = vsyncpa %s25, 0
    %27 = vsyncpa [#allocation6], 0
    %s28 = scalar_lea.sflag [#allocation6], 1
    %29 = vsyncpa %s28, 0
    %30 = vsyncpa [#allocation9], 0
    %s31 = scalar_lea.sflag [#allocation9], 1
    %32 = vsyncpa %s31, 0
    %33 = vsyncpa [#allocation12], 0
    %s34 = scalar_lea.sflag [#allocation12], 1
    %35 = vsyncpa %s34, 0
    %36 = vsyncpa [#allocation15], 0
    %s37 = scalar_lea.sflag [#allocation15], 1
    %38 = vsyncpa %s37, 0
    %39 = vsyncpa [#allocation18], 0
    %s40 = scalar_lea.sflag [#allocation18], 1
    %41 = vsyncpa %s40, 0
    %42 = vsyncpa [#allocation21], 0
    %s43 = scalar_lea.sflag [#allocation21], 1
    %44 = vsyncpa %s43, 0
    %45 = vsyncpa [#allocation24], 0
    %s46 = scalar_lea.sflag [#allocation24], 1
    %47 = vsyncpa %s46, 0
    %48 = vsyncpa [#allocation27], 0
    %s49 = scalar_lea.sflag [#allocation27], 1
    %50 = vsyncpa %s49, 0
    %51 = vsyncpa [#allocation30], 0
    %52 = vsyncpa [#allocation4], 0
    %s53 = scalar_lea.sflag [#allocation4], 1
    %54 = vsyncpa %s53, 0
    loop: start=0, step=1, limit=6
    $region2: #{factorized_encoder_forward.6} parent=1 // loop_pre_header
      _
    $region3: #{factorized_encoder_forward.6} parent=1 // loop_header
      %s56 = sphi 0, %s60
      %p57 = scmp.ge.s32.totalorder %s56, 6
      %s63 = sphi 0, %s75
      %s64 = sphi 0, %s71
      %s65 = sphi 0, %s63
      %s66 = sphi 0, %s64
      %s67 = sphi 0, %s65
      %s68 = sphi 0, %s66
      %s78 = sphi 0, %s80
      %s81 = sphi 0, %s78
      %s82 = sphi 0, %s81
      %s98 = sphi 0, %s82
      %s104 = sphi 0, %s106
      %s107 = sphi 0, %s104
      %s108 = sphi 0, %s107
      %s124 = sphi 0, %s108
      %s130 = sphi 0, %s132
      %s133 = sphi 0, %s130
      %s134 = sphi 0, %s133
      %s150 = sphi 0, %s134
      %s156 = sphi 0, %s158
      %s159 = sphi 0, %s156
      %s160 = sphi 0, %s159
      %s176 = sphi 0, %s160
      %s182 = sphi 0, %s184
      %s185 = sphi 0, %s182
      %s186 = sphi 0, %s185
      %s202 = sphi 0, %s186
      %s208 = sphi 0, %s210
      %s211 = sphi 0, %s208
      %s212 = sphi 0, %s211
      %s228 = sphi 0, %s212
      %s234 = sphi 0, %s236
      %s237 = sphi 0, %s234
      %s238 = sphi 0, %s237
      %s254 = sphi 0, %s238
      %s260 = sphi 0, %s262
      %s263 = sphi 0, %s260
      %s264 = sphi 0, %s263
      %s280 = sphi 0, %s264
      %s286 = sphi 0, %s288
      %s289 = sphi 0, %s286
      %s290 = sphi 0, %s289
      %s306 = sphi 0, %s290
      %s312 = sphi 0, %s314
      %s315 = sphi 0, %s312
      %s316 = sphi 0, %s315
      %s332 = sphi 0, %s316
      %s338 = sphi 0, %s340
      %s341 = sphi 0, %s338
      %s342 = sphi 0, %s341
      %s358 = sphi 0, %s342
      %s364 = sphi 0, %s366
      %s367 = sphi 0, %s364
      %s368 = sphi 0, %s367
      %s384 = sphi 0, %s368
      %s390 = sphi 0, %s392
      %s393 = sphi 0, %s390
      %s394 = sphi 0, %s393
      %s410 = sphi 0, %s394
      %s416 = sphi 0, %s418
      %s419 = sphi 0, %s416
      %s420 = sphi 0, %s419
      %s436 = sphi 0, %s420
      %s442 = sphi 0, %s444
      %s445 = sphi 0, %s442
      %s446 = sphi 0, %s445
      %s462 = sphi 0, %s446
      %s468 = sphi 0, %s470
      %s471 = sphi 0, %s468
      %s472 = sphi 0, %s471
      %s488 = sphi 0, %s472
      %s494 = sphi 0, %s496
      %s497 = sphi 0, %s494
      %s498 = sphi 0, %s497
      %s514 = sphi 0, %s498
      %s518 = sphi 0, %s518
      %s520 = sphi 0, %s518
      %s521 = sphi 0, %s520
      %s535 = sphi 0, %s521
      %s539 = sphi 0, %s539
      %s541 = sphi 0, %s539
      %s542 = sphi 0, %s541
      %s556 = sphi 0, %s542
      %s562 = sphi 0, %s564
      %s565 = sphi 0, %s562
      %s566 = sphi 0, %s565
      %s582 = sphi 0, %s566
    $region4: #{factorized_encoder_forward.6} parent=1 // loop_header_branch
      %59 = sbr.rel (%p57) target = $region8
    $region5: #{factorized_encoder_forward.6} parent=1 // loop_body
      %s61 = ssub.s32 %s56, 1
      %s62 = ssub.s32 %s56, 2
      %s69 = sadd.s32 1, %s64
      %p70 = scmp.ge.s32.totalorder %s69, 2
      %s71 = scalar_select %p70, 0, %s69
      %s72 = sadd.s32 1, %s63
      %s73 = scalar_select %p70, %s72, %s63
      %p74 = scmp.ge.s32.totalorder %s73, 2
      %s75 = scalar_select %p74, 0, %s73
      %s76 = ssub.s32 %s63, %s75
      %p77 = scmp.eq.s32.totalorder %s76, 0
      %s79 = sadd.s32 %s78, 1
      %s80 = scalar_select %p77, %s78, %s79
      %p83 = pneg %p77
      %p84 = scmp.eq.s32.totalorder %s56, 3
      %p85 = por %p83, %p84
      %p86 = scmp.ne.s32.totalorder %s78, %s81
      %p87 = scmp.eq.s32.totalorder %s56, 0
      %p88 = por %p86, %p87
      %p89 = scmp.ne.s32.totalorder %s78, %s81
      %p90 = scmp.eq.s32.totalorder %s61, 3
      %p91 = por %p89, %p90
      %p92 = scmp.ne.s32.totalorder %s81, %s82
      %p93 = scmp.eq.s32.totalorder %s61, 0
      %p94 = por %p92, %p93
      %p95 = scmp.ne.s32.totalorder %s81, %s82
      %p96 = scmp.eq.s32.totalorder %s62, 3
      %p97 = por %p95, %p96
      %p99 = scmp.ne.s32.totalorder %s82, %s98
      %p100 = scmp.eq.s32.totalorder %s62, 0
      %p101 = por %p99, %p100
      %s102 = ssub.s32 %s64, %s71
      %p103 = scmp.eq.s32.totalorder %s102, 0
      %s105 = sadd.s32 %s104, 1
      %s106 = scalar_select %p103, %s104, %s105
      %p109 = pneg %p103
      %p110 = scmp.eq.s32.totalorder %s56, 3
      %p111 = por %p109, %p110
      %p112 = scmp.ne.s32.totalorder %s104, %s107
      %p113 = scmp.eq.s32.totalorder %s56, 0
      %p114 = por %p112, %p113
      %p115 = scmp.ne.s32.totalorder %s104, %s107
      %p116 = scmp.eq.s32.totalorder %s61, 3
      %p117 = por %p115, %p116
      %p118 = scmp.ne.s32.totalorder %s107, %s108
      %p119 = scmp.eq.s32.totalorder %s61, 0
      %p120 = por %p118, %p119
      %p121 = scmp.ne.s32.totalorder %s107, %s108
      %p122 = scmp.eq.s32.totalorder %s62, 3
      %p123 = por %p121, %p122
      %p125 = scmp.ne.s32.totalorder %s108, %s124
      %p126 = scmp.eq.s32.totalorder %s62, 0
      %p127 = por %p125, %p126
      %s128 = ssub.s32 %s64, %s71
      %p129 = scmp.eq.s32.totalorder %s128, 0
      %s131 = sadd.s32 %s130, 1
      %s132 = scalar_select %p129, %s130, %s131
      %p135 = pneg %p129
      %p136 = scmp.eq.s32.totalorder %s56, 3
      %p137 = por %p135, %p136
      %p138 = scmp.ne.s32.totalorder %s130, %s133
      %p139 = scmp.eq.s32.totalorder %s56, 0
      %p140 = por %p138, %p139
      %p141 = scmp.ne.s32.totalorder %s130, %s133
      %p142 = scmp.eq.s32.totalorder %s61, 3
      %p143 = por %p141, %p142
      %p144 = scmp.ne.s32.totalorder %s133, %s134
      %p145 = scmp.eq.s32.totalorder %s61, 0
      %p146 = por %p144, %p145
      %p147 = scmp.ne.s32.totalorder %s133, %s134
      %p148 = scmp.eq.s32.totalorder %s62, 3
      %p149 = por %p147, %p148
      %p151 = scmp.ne.s32.totalorder %s134, %s150
      %p152 = scmp.eq.s32.totalorder %s62, 0
      %p153 = por %p151, %p152
      %s154 = ssub.s32 %s64, %s71
      %p155 = scmp.eq.s32.totalorder %s154, 0
      %s157 = sadd.s32 %s156, 1
      %s158 = scalar_select %p155, %s156, %s157
      %p161 = pneg %p155
      %p162 = scmp.eq.s32.totalorder %s56, 3
      %p163 = por %p161, %p162
      %p164 = scmp.ne.s32.totalorder %s156, %s159
      %p165 = scmp.eq.s32.totalorder %s56, 0
      %p166 = por %p164, %p165
      %p167 = scmp.ne.s32.totalorder %s156, %s159
      %p168 = scmp.eq.s32.totalorder %s61, 3
      %p169 = por %p167, %p168
      %p170 = scmp.ne.s32.totalorder %s159, %s160
      %p171 = scmp.eq.s32.totalorder %s61, 0
      %p172 = por %p170, %p171
      %p173 = scmp.ne.s32.totalorder %s159, %s160
      %p174 = scmp.eq.s32.totalorder %s62, 3
      %p175 = por %p173, %p174
      %p177 = scmp.ne.s32.totalorder %s160, %s176
      %p178 = scmp.eq.s32.totalorder %s62, 0
      %p179 = por %p177, %p178
      %s180 = ssub.s32 %s64, %s71
      %p181 = scmp.eq.s32.totalorder %s180, 0
      %s183 = sadd.s32 %s182, 1
      %s184 = scalar_select %p181, %s182, %s183
      %p187 = pneg %p181
      %p188 = scmp.eq.s32.totalorder %s56, 3
      %p189 = por %p187, %p188
      %p190 = scmp.ne.s32.totalorder %s182, %s185
      %p191 = scmp.eq.s32.totalorder %s56, 0
      %p192 = por %p190, %p191
      %p193 = scmp.ne.s32.totalorder %s182, %s185
      %p194 = scmp.eq.s32.totalorder %s61, 3
      %p195 = por %p193, %p194
      %p196 = scmp.ne.s32.totalorder %s185, %s186
      %p197 = scmp.eq.s32.totalorder %s61, 0
      %p198 = por %p196, %p197
      %p199 = scmp.ne.s32.totalorder %s185, %s186
      %p200 = scmp.eq.s32.totalorder %s62, 3
      %p201 = por %p199, %p200
      %p203 = scmp.ne.s32.totalorder %s186, %s202
      %p204 = scmp.eq.s32.totalorder %s62, 0
      %p205 = por %p203, %p204
      %s206 = ssub.s32 %s64, %s71
      %p207 = scmp.eq.s32.totalorder %s206, 0
      %s209 = sadd.s32 %s208, 1
      %s210 = scalar_select %p207, %s208, %s209
      %p213 = pneg %p207
      %p214 = scmp.eq.s32.totalorder %s56, 3
      %p215 = por %p213, %p214
      %p216 = scmp.ne.s32.totalorder %s208, %s211
      %p217 = scmp.eq.s32.totalorder %s56, 0
      %p218 = por %p216, %p217
      %p219 = scmp.ne.s32.totalorder %s208, %s211
      %p220 = scmp.eq.s32.totalorder %s61, 3
      %p221 = por %p219, %p220
      %p222 = scmp.ne.s32.totalorder %s211, %s212
      %p223 = scmp.eq.s32.totalorder %s61, 0
      %p224 = por %p222, %p223
      %p225 = scmp.ne.s32.totalorder %s211, %s212
      %p226 = scmp.eq.s32.totalorder %s62, 3
      %p227 = por %p225, %p226
      %p229 = scmp.ne.s32.totalorder %s212, %s228
      %p230 = scmp.eq.s32.totalorder %s62, 0
      %p231 = por %p229, %p230
      %s232 = ssub.s32 %s64, %s71
      %p233 = scmp.eq.s32.totalorder %s232, 0
      %s235 = sadd.s32 %s234, 1
      %s236 = scalar_select %p233, %s234, %s235
      %p239 = pneg %p233
      %p240 = scmp.eq.s32.totalorder %s56, 3
      %p241 = por %p239, %p240
      %p242 = scmp.ne.s32.totalorder %s234, %s237
      %p243 = scmp.eq.s32.totalorder %s56, 0
      %p244 = por %p242, %p243
      %p245 = scmp.ne.s32.totalorder %s234, %s237
      %p246 = scmp.eq.s32.totalorder %s61, 3
      %p247 = por %p245, %p246
      %p248 = scmp.ne.s32.totalorder %s237, %s238
      %p249 = scmp.eq.s32.totalorder %s61, 0
      %p250 = por %p248, %p249
      %p251 = scmp.ne.s32.totalorder %s237, %s238
      %p252 = scmp.eq.s32.totalorder %s62, 3
      %p253 = por %p251, %p252
      %p255 = scmp.ne.s32.totalorder %s238, %s254
      %p256 = scmp.eq.s32.totalorder %s62, 0
      %p257 = por %p255, %p256
      %s258 = ssub.s32 %s64, %s71
      %p259 = scmp.eq.s32.totalorder %s258, 0
      %s261 = sadd.s32 %s260, 1
      %s262 = scalar_select %p259, %s260, %s261
      %p265 = pneg %p259
      %p266 = scmp.eq.s32.totalorder %s56, 3
      %p267 = por %p265, %p266
      %p268 = scmp.ne.s32.totalorder %s260, %s263
      %p269 = scmp.eq.s32.totalorder %s56, 0
      %p270 = por %p268, %p269
      %p271 = scmp.ne.s32.totalorder %s260, %s263
      %p272 = scmp.eq.s32.totalorder %s61, 3
      %p273 = por %p271, %p272
      %p274 = scmp.ne.s32.totalorder %s263, %s264
      %p275 = scmp.eq.s32.totalorder %s61, 0
      %p276 = por %p274, %p275
      %p277 = scmp.ne.s32.totalorder %s263, %s264
      %p278 = scmp.eq.s32.totalorder %s62, 3
      %p279 = por %p277, %p278
      %p281 = scmp.ne.s32.totalorder %s264, %s280
      %p282 = scmp.eq.s32.totalorder %s62, 0
      %p283 = por %p281, %p282
      %s284 = ssub.s32 %s64, %s71
      %p285 = scmp.eq.s32.totalorder %s284, 0
      %s287 = sadd.s32 %s286, 1
      %s288 = scalar_select %p285, %s286, %s287
      %p291 = pneg %p285
      %p292 = scmp.eq.s32.totalorder %s56, 3
      %p293 = por %p291, %p292
      %p294 = scmp.ne.s32.totalorder %s286, %s289
      %p295 = scmp.eq.s32.totalorder %s56, 0
      %p296 = por %p294, %p295
      %p297 = scmp.ne.s32.totalorder %s286, %s289
      %p298 = scmp.eq.s32.totalorder %s61, 3
      %p299 = por %p297, %p298
      %p300 = scmp.ne.s32.totalorder %s289, %s290
      %p301 = scmp.eq.s32.totalorder %s61, 0
      %p302 = por %p300, %p301
      %p303 = scmp.ne.s32.totalorder %s289, %s290
      %p304 = scmp.eq.s32.totalorder %s62, 3
      %p305 = por %p303, %p304
      %p307 = scmp.ne.s32.totalorder %s290, %s306
      %p308 = scmp.eq.s32.totalorder %s62, 0
      %p309 = por %p307, %p308
      %s310 = ssub.s32 %s64, %s71
      %p311 = scmp.eq.s32.totalorder %s310, 0
      %s313 = sadd.s32 %s312, 1
      %s314 = scalar_select %p311, %s312, %s313
      %p317 = pneg %p311
      %p318 = scmp.eq.s32.totalorder %s56, 3
      %p319 = por %p317, %p318
      %p320 = scmp.ne.s32.totalorder %s312, %s315
      %p321 = scmp.eq.s32.totalorder %s56, 0
      %p322 = por %p320, %p321
      %p323 = scmp.ne.s32.totalorder %s312, %s315
      %p324 = scmp.eq.s32.totalorder %s61, 3
      %p325 = por %p323, %p324
      %p326 = scmp.ne.s32.totalorder %s315, %s316
      %p327 = scmp.eq.s32.totalorder %s61, 0
      %p328 = por %p326, %p327
      %p329 = scmp.ne.s32.totalorder %s315, %s316
      %p330 = scmp.eq.s32.totalorder %s62, 3
      %p331 = por %p329, %p330
      %p333 = scmp.ne.s32.totalorder %s316, %s332
      %p334 = scmp.eq.s32.totalorder %s62, 0
      %p335 = por %p333, %p334
      %s336 = ssub.s32 %s64, %s71
      %p337 = scmp.eq.s32.totalorder %s336, 0
      %s339 = sadd.s32 %s338, 1
      %s340 = scalar_select %p337, %s338, %s339
      %p343 = pneg %p337
      %p344 = scmp.eq.s32.totalorder %s56, 3
      %p345 = por %p343, %p344
      %p346 = scmp.ne.s32.totalorder %s338, %s341
      %p347 = scmp.eq.s32.totalorder %s56, 0
      %p348 = por %p346, %p347
      %p349 = scmp.ne.s32.totalorder %s338, %s341
      %p350 = scmp.eq.s32.totalorder %s61, 3
      %p351 = por %p349, %p350
      %p352 = scmp.ne.s32.totalorder %s341, %s342
      %p353 = scmp.eq.s32.totalorder %s61, 0
      %p354 = por %p352, %p353
      %p355 = scmp.ne.s32.totalorder %s341, %s342
      %p356 = scmp.eq.s32.totalorder %s62, 3
      %p357 = por %p355, %p356
      %p359 = scmp.ne.s32.totalorder %s342, %s358
      %p360 = scmp.eq.s32.totalorder %s62, 0
      %p361 = por %p359, %p360
      %s362 = ssub.s32 %s64, %s71
      %p363 = scmp.eq.s32.totalorder %s362, 0
      %s365 = sadd.s32 %s364, 1
      %s366 = scalar_select %p363, %s364, %s365
      %p369 = pneg %p363
      %p370 = scmp.eq.s32.totalorder %s56, 3
      %p371 = por %p369, %p370
      %p372 = scmp.ne.s32.totalorder %s364, %s367
      %p373 = scmp.eq.s32.totalorder %s56, 0
      %p374 = por %p372, %p373
      %p375 = scmp.ne.s32.totalorder %s364, %s367
      %p376 = scmp.eq.s32.totalorder %s61, 3
      %p377 = por %p375, %p376
      %p378 = scmp.ne.s32.totalorder %s367, %s368
      %p379 = scmp.eq.s32.totalorder %s61, 0
      %p380 = por %p378, %p379
      %p381 = scmp.ne.s32.totalorder %s367, %s368
      %p382 = scmp.eq.s32.totalorder %s62, 3
      %p383 = por %p381, %p382
      %p385 = scmp.ne.s32.totalorder %s368, %s384
      %p386 = scmp.eq.s32.totalorder %s62, 0
      %p387 = por %p385, %p386
      %s388 = ssub.s32 %s64, %s71
      %p389 = scmp.eq.s32.totalorder %s388, 0
      %s391 = sadd.s32 %s390, 1
      %s392 = scalar_select %p389, %s390, %s391
      %p395 = pneg %p389
      %p396 = scmp.eq.s32.totalorder %s56, 3
      %p397 = por %p395, %p396
      %p398 = scmp.ne.s32.totalorder %s390, %s393
      %p399 = scmp.eq.s32.totalorder %s56, 0
      %p400 = por %p398, %p399
      %p401 = scmp.ne.s32.totalorder %s390, %s393
      %p402 = scmp.eq.s32.totalorder %s61, 3
      %p403 = por %p401, %p402
      %p404 = scmp.ne.s32.totalorder %s393, %s394
      %p405 = scmp.eq.s32.totalorder %s61, 0
      %p406 = por %p404, %p405
      %p407 = scmp.ne.s32.totalorder %s393, %s394
      %p408 = scmp.eq.s32.totalorder %s62, 3
      %p409 = por %p407, %p408
      %p411 = scmp.ne.s32.totalorder %s394, %s410
      %p412 = scmp.eq.s32.totalorder %s62, 0
      %p413 = por %p411, %p412
      %s414 = ssub.s32 %s64, %s71
      %p415 = scmp.eq.s32.totalorder %s414, 0
      %s417 = sadd.s32 %s416, 1
      %s418 = scalar_select %p415, %s416, %s417
      %p421 = pneg %p415
      %p422 = scmp.eq.s32.totalorder %s56, 3
      %p423 = por %p421, %p422
      %p424 = scmp.ne.s32.totalorder %s416, %s419
      %p425 = scmp.eq.s32.totalorder %s56, 0
      %p426 = por %p424, %p425
      %p427 = scmp.ne.s32.totalorder %s416, %s419
      %p428 = scmp.eq.s32.totalorder %s61, 3
      %p429 = por %p427, %p428
      %p430 = scmp.ne.s32.totalorder %s419, %s420
      %p431 = scmp.eq.s32.totalorder %s61, 0
      %p432 = por %p430, %p431
      %p433 = scmp.ne.s32.totalorder %s419, %s420
      %p434 = scmp.eq.s32.totalorder %s62, 3
      %p435 = por %p433, %p434
      %p437 = scmp.ne.s32.totalorder %s420, %s436
      %p438 = scmp.eq.s32.totalorder %s62, 0
      %p439 = por %p437, %p438
      %s440 = ssub.s32 %s64, %s71
      %p441 = scmp.eq.s32.totalorder %s440, 0
      %s443 = sadd.s32 %s442, 1
      %s444 = scalar_select %p441, %s442, %s443
      %p447 = pneg %p441
      %p448 = scmp.eq.s32.totalorder %s56, 3
      %p449 = por %p447, %p448
      %p450 = scmp.ne.s32.totalorder %s442, %s445
      %p451 = scmp.eq.s32.totalorder %s56, 0
      %p452 = por %p450, %p451
      %p453 = scmp.ne.s32.totalorder %s442, %s445
      %p454 = scmp.eq.s32.totalorder %s61, 3
      %p455 = por %p453, %p454
      %p456 = scmp.ne.s32.totalorder %s445, %s446
      %p457 = scmp.eq.s32.totalorder %s61, 0
      %p458 = por %p456, %p457
      %p459 = scmp.ne.s32.totalorder %s445, %s446
      %p460 = scmp.eq.s32.totalorder %s62, 3
      %p461 = por %p459, %p460
      %p463 = scmp.ne.s32.totalorder %s446, %s462
      %p464 = scmp.eq.s32.totalorder %s62, 0
      %p465 = por %p463, %p464
      %s466 = ssub.s32 %s64, %s71
      %p467 = scmp.eq.s32.totalorder %s466, 0
      %s469 = sadd.s32 %s468, 1
      %s470 = scalar_select %p467, %s468, %s469
      %p473 = pneg %p467
      %p474 = scmp.eq.s32.totalorder %s56, 3
      %p475 = por %p473, %p474
      %p476 = scmp.ne.s32.totalorder %s468, %s471
      %p477 = scmp.eq.s32.totalorder %s56, 0
      %p478 = por %p476, %p477
      %p479 = scmp.ne.s32.totalorder %s468, %s471
      %p480 = scmp.eq.s32.totalorder %s61, 3
      %p481 = por %p479, %p480
      %p482 = scmp.ne.s32.totalorder %s471, %s472
      %p483 = scmp.eq.s32.totalorder %s61, 0
      %p484 = por %p482, %p483
      %p485 = scmp.ne.s32.totalorder %s471, %s472
      %p486 = scmp.eq.s32.totalorder %s62, 3
      %p487 = por %p485, %p486
      %p489 = scmp.ne.s32.totalorder %s472, %s488
      %p490 = scmp.eq.s32.totalorder %s62, 0
      %p491 = por %p489, %p490
      %s492 = ssub.s32 %s64, %s71
      %p493 = scmp.eq.s32.totalorder %s492, 0
      %s495 = sadd.s32 %s494, 1
      %s496 = scalar_select %p493, %s494, %s495
      %p499 = pneg %p493
      %p500 = scmp.eq.s32.totalorder %s56, 3
      %p501 = por %p499, %p500
      %p502 = scmp.ne.s32.totalorder %s494, %s497
      %p503 = scmp.eq.s32.totalorder %s56, 0
      %p504 = por %p502, %p503
      %p505 = scmp.ne.s32.totalorder %s494, %s497
      %p506 = scmp.eq.s32.totalorder %s61, 3
      %p507 = por %p505, %p506
      %p508 = scmp.ne.s32.totalorder %s497, %s498
      %p509 = scmp.eq.s32.totalorder %s61, 0
      %p510 = por %p508, %p509
      %p511 = scmp.ne.s32.totalorder %s497, %s498
      %p512 = scmp.eq.s32.totalorder %s62, 3
      %p513 = por %p511, %p512
      %p515 = scmp.ne.s32.totalorder %s498, %s514
      %p516 = scmp.eq.s32.totalorder %s62, 0
      %p517 = por %p515, %p516
      %s519 = sadd.s32 %s518, 1
      %p522 = scmp.eq.s32.totalorder %s56, 3
      %p523 = scmp.ne.s32.totalorder %s518, %s520
      %p524 = scmp.eq.s32.totalorder %s56, 0
      %p525 = por %p523, %p524
      %p526 = scmp.ne.s32.totalorder %s518, %s520
      %p527 = scmp.eq.s32.totalorder %s61, 3
      %p528 = por %p526, %p527
      %p529 = scmp.ne.s32.totalorder %s520, %s521
      %p530 = scmp.eq.s32.totalorder %s61, 0
      %p531 = por %p529, %p530
      %p532 = scmp.ne.s32.totalorder %s520, %s521
      %p533 = scmp.eq.s32.totalorder %s62, 3
      %p534 = por %p532, %p533
      %p536 = scmp.ne.s32.totalorder %s521, %s535
      %p537 = scmp.eq.s32.totalorder %s62, 0
      %p538 = por %p536, %p537
      %s540 = sadd.s32 %s539, 1
      %p543 = scmp.eq.s32.totalorder %s56, 3
      %p544 = scmp.ne.s32.totalorder %s539, %s541
      %p545 = scmp.eq.s32.totalorder %s56, 0
      %p546 = por %p544, %p545
      %p547 = scmp.ne.s32.totalorder %s539, %s541
      %p548 = scmp.eq.s32.totalorder %s61, 3
      %p549 = por %p547, %p548
      %p550 = scmp.ne.s32.totalorder %s541, %s542
      %p551 = scmp.eq.s32.totalorder %s61, 0
      %p552 = por %p550, %p551
      %p553 = scmp.ne.s32.totalorder %s541, %s542
      %p554 = scmp.eq.s32.totalorder %s62, 3
      %p555 = por %p553, %p554
      %p557 = scmp.ne.s32.totalorder %s542, %s556
      %p558 = scmp.eq.s32.totalorder %s62, 0
      %p559 = por %p557, %p558
      %s560 = ssub.s32 %s63, %s75
      %p561 = scmp.eq.s32.totalorder %s560, 0
      %s563 = sadd.s32 %s562, 1
      %s564 = scalar_select %p561, %s562, %s563
      %p567 = pneg %p561
      %p568 = scmp.eq.s32.totalorder %s56, 3
      %p569 = por %p567, %p568
      %p570 = scmp.ne.s32.totalorder %s562, %s565
      %p571 = scmp.eq.s32.totalorder %s56, 0
      %p572 = por %p570, %p571
      %p573 = scmp.ne.s32.totalorder %s562, %s565
      %p574 = scmp.eq.s32.totalorder %s61, 3
      %p575 = por %p573, %p574
      %p576 = scmp.ne.s32.totalorder %s565, %s566
      %p577 = scmp.eq.s32.totalorder %s61, 0
      %p578 = por %p576, %p577
      %p579 = scmp.ne.s32.totalorder %s565, %s566
      %p580 = scmp.eq.s32.totalorder %s62, 3
      %p581 = por %p579, %p580
      %p583 = scmp.ne.s32.totalorder %s566, %s582
      %p584 = scmp.eq.s32.totalorder %s62, 0
      %p585 = por %p583, %p584
      %p586 = scmp.le.s32.totalorder 1, %s56
      %p587 = scmp.lt.s32.totalorder %s56, 5
      %p588 = pnand %p586, %p587
      %p589 = pneg %p588
      // Predicated region
      $region9: #{factorized_encoder_forward.6} parent=5 // pred_check
        _
      $region10: #{factorized_encoder_forward.6} parent=5 // pred_check_branch
        %591 = sbr.rel (%p588) target = $region12
      $region11: #{factorized_encoder_forward.6} parent=5 // pred_region
        %s592 = ssub.s32 %s56, 1
        // Predicated region
        $region13: #{factorized_encoder_forward.6} parent=11 // pred_check
          %p593 = pneg %p531
        $region14: #{factorized_encoder_forward.6} parent=11 // pred_check_branch
          %595 = sbr.rel (%p593) target = $region16
        $region15: #{factorized_encoder_forward.6} parent=11 // pred_region
          %s597 = ssub.s32 16, 16
          %598 = vsyncadd [#allocation30], %s597
          %s600 = sshll.u32 [#allocation29], 4
          %s601 = int_to_ptr.vmem [resolvable:$true] %s600
          %603 = dma.hbm_to_vmem [thread:$0]  %s17, 16, %s601, [#allocation30]
        $region16: #{factorized_encoder_forward.6} parent=11 // pred_fallthru
          _
        // Predicated region
        $region17: #{factorized_encoder_forward.6} parent=11 // pred_check
          %p604 = pneg %p552
        $region18: #{factorized_encoder_forward.6} parent=11 // pred_check_branch
          %606 = sbr.rel (%p604) target = $region20
        $region19: #{factorized_encoder_forward.6} parent=11 // pred_region
          %s608 = ssub.s32 16, 16
          %609 = vsyncadd [#allocation30], %s608
          %s611 = sshll.u32 [#allocation31], 4
          %s612 = int_to_ptr.vmem [resolvable:$true] %s611
          %614 = dma.hbm_to_vmem [thread:$0]  %s18, 16, %s612, [#allocation30]
        $region20: #{factorized_encoder_forward.6} parent=11 // pred_fallthru
          _
      $region12: #{factorized_encoder_forward.6} parent=5 // pred_fallthru
        _
      %p615 = scmp.lt.s32.totalorder %s56, 4
      // Predicated region
      $region21: #{factorized_encoder_forward.6} parent=5 // pred_check
        %p616 = pneg %p615
      $region22: #{factorized_encoder_forward.6} parent=5 // pred_check_branch
        %618 = sbr.rel (%p616) target = $region24
      $region23: #{factorized_encoder_forward.6} parent=5 // pred_region
        // Predicated region
        $region25: #{factorized_encoder_forward.6} parent=23 // pred_check
          %p619 = pneg %p88
        $region26: #{factorized_encoder_forward.6} parent=23 // pred_check_branch
          %621 = sbr.rel (%p619) target = $region28
        $region27: #{factorized_encoder_forward.6} parent=23 // pred_region
          %s622 = sand.u32 %s78, 1
          %s623 = scalar_lea.sflag [#allocation3], %s622
          %s624 = sand.u32 %s78, 1
          %s625 = smul.addr %s624, 4
          %s626 = scalar_lea.vmem [#allocation2], %s625
          %s628 = ssub.s32 64, 64
          %629 = vsyncadd %s623, %s628
          %s630 = smul.addr %s63, 64
          %s631 = scalar_lea.hbm %s0, %s630
          %s633 = sshll.u32 %s626, 4
          %s634 = int_to_ptr.vmem [resolvable:$true] %s633
          %636 = dma.hbm_to_vmem [thread:$0]  %s631, 64, %s634, %s623
        $region28: #{factorized_encoder_forward.6} parent=23 // pred_fallthru
          _
        // Predicated region
        $region29: #{factorized_encoder_forward.6} parent=23 // pred_check
          %p637 = pneg %p114
        $region30: #{factorized_encoder_forward.6} parent=23 // pred_check_branch
          %639 = sbr.rel (%p637) target = $region32
        $region31: #{factorized_encoder_forward.6} parent=23 // pred_region
          %s640 = sand.u32 %s56, 1
          %s641 = scalar_lea.sflag [#allocation6], %s640
          %s642 = sand.u32 %s104, 1
          %s643 = scalar_lea.vmem [#allocation5], %s642
          %s645 = ssub.s32 16, 16
          %646 = vsyncadd %s641, %s645
          %s647 = smul.addr %s64, 16
          %s648 = scalar_lea.hbm %s1, %s647
          %s650 = sshll.u32 %s643, 4
          %s651 = int_to_ptr.vmem [resolvable:$true] %s650
          %653 = dma.hbm_to_vmem [thread:$0]  %s648, 16, %s651, %s641
        $region32: #{factorized_encoder_forward.6} parent=23 // pred_fallthru
          _
        // Predicated region
        $region33: #{factorized_encoder_forward.6} parent=23 // pred_check
          %p654 = pneg %p140
        $region34: #{factorized_encoder_forward.6} parent=23 // pred_check_branch
          %656 = sbr.rel (%p654) target = $region36
        $region35: #{factorized_encoder_forward.6} parent=23 // pred_region
          %s657 = sand.u32 %s56, 1
          %s658 = scalar_lea.sflag [#allocation6], %s657
          %s659 = sand.u32 %s130, 1
          %s660 = scalar_lea.vmem [#allocation7], %s659
          %s662 = ssub.s32 16, 16
          %663 = vsyncadd %s658, %s662
          %s664 = smul.addr %s64, 16
          %s665 = scalar_lea.hbm %s2, %s664
          %s667 = sshll.u32 %s660, 4
          %s668 = int_to_ptr.vmem [resolvable:$true] %s667
          %670 = dma.hbm_to_vmem [thread:$0]  %s665, 16, %s668, %s658
        $region36: #{factorized_encoder_forward.6} parent=23 // pred_fallthru
          _
        // Predicated region
        $region37: #{factorized_encoder_forward.6} parent=23 // pred_check
          %p671 = pneg %p166
        $region38: #{factorized_encoder_forward.6} parent=23 // pred_check_branch
          %673 = sbr.rel (%p671) target = $region40
        $region39: #{factorized_encoder_forward.6} parent=23 // pred_region
          %s674 = sand.u32 %s56, 1
          %s675 = scalar_lea.sflag [#allocation9], %s674
          %s676 = sand.u32 %s156, 1
          %s677 = smul.addr %s676, 64
          %s678 = scalar_lea.vmem [#allocation8], %s677
          %s680 = ssub.s32 1024, 1024
          %681 = vsyncadd %s675, %s680
          %s682 = smul.addr %s64, 16
          %s683 = smul.addr %s682, 64
          %s684 = scalar_lea.hbm %s3, %s683
          %s685 = sshll.u32 %s678, 4
          %s686 = int_to_ptr.vmem [resolvable:$true] %s685
          %691 = dma.hbm_to_vmem [thread:$0]  %s684, 1024, %s686, %s675, 64, 64, 4
        $region40: #{factorized_encoder_forward.6} parent=23 // pred_fallthru
          _
        // Predicated region
        $region41: #{factorized_encoder_forward.6} parent=23 // pred_check
          %p692 = pneg %p192
        $region42: #{factorized_encoder_forward.6} parent=23 // pred_check_branch
          %694 = sbr.rel (%p692) target = $region44
        $region43: #{factorized_encoder_forward.6} parent=23 // pred_region
          %s695 = sand.u32 %s56, 1
          %s696 = scalar_lea.sflag [#allocation9], %s695
          %s697 = sand.u32 %s182, 1
          %s698 = scalar_lea.vmem [#allocation10], %s697
          %s700 = ssub.s32 16, 16
          %701 = vsyncadd %s696, %s700
          %s702 = smul.addr %s64, 16
          %s703 = scalar_lea.hbm %s4, %s702
          %s705 = sshll.u32 %s698, 4
          %s706 = int_to_ptr.vmem [resolvable:$true] %s705
          %708 = dma.hbm_to_vmem [thread:$0]  %s703, 16, %s706, %s696
        $region44: #{factorized_encoder_forward.6} parent=23 // pred_fallthru
          _
        // Predicated region
        $region45: #{factorized_encoder_forward.6} parent=23 // pred_check
          %p709 = pneg %p218
        $region46: #{factorized_encoder_forward.6} parent=23 // pred_check_branch
          %711 = sbr.rel (%p709) target = $region48
        $region47: #{factorized_encoder_forward.6} parent=23 // pred_region
          %s712 = sand.u32 %s56, 1
          %s713 = scalar_lea.sflag [#allocation12], %s712
          %s714 = sand.u32 %s208, 1
          %s715 = smul.addr %s714, 64
          %s716 = scalar_lea.vmem [#allocation11], %s715
          %s718 = ssub.s32 1024, 1024
          %719 = vsyncadd %s713, %s718
          %s720 = smul.addr %s64, 16
          %s721 = smul.addr %s720, 64
          %s722 = scalar_lea.hbm %s5, %s721
          %s723 = sshll.u32 %s716, 4
          %s724 = int_to_ptr.vmem [resolvable:$true] %s723
          %729 = dma.hbm_to_vmem [thread:$0]  %s722, 1024, %s724, %s713, 64, 64, 4
        $region48: #{factorized_encoder_forward.6} parent=23 // pred_fallthru
          _
        // Predicated region
        $region49: #{factorized_encoder_forward.6} parent=23 // pred_check
          %p730 = pneg %p244
        $region50: #{factorized_encoder_forward.6} parent=23 // pred_check_branch
          %732 = sbr.rel (%p730) target = $region52
        $region51: #{factorized_encoder_forward.6} parent=23 // pred_region
          %s733 = sand.u32 %s56, 1
          %s734 = scalar_lea.sflag [#allocation12], %s733
          %s735 = sand.u32 %s234, 1
          %s736 = scalar_lea.vmem [#allocation13], %s735
          %s738 = ssub.s32 16, 16
          %739 = vsyncadd %s734, %s738
          %s740 = smul.addr %s64, 16
          %s741 = scalar_lea.hbm %s6, %s740
          %s743 = sshll.u32 %s736, 4
          %s744 = int_to_ptr.vmem [resolvable:$true] %s743
          %746 = dma.hbm_to_vmem [thread:$0]  %s741, 16, %s744, %s734
        $region52: #{factorized_encoder_forward.6} parent=23 // pred_fallthru
          _
        // Predicated region
        $region53: #{factorized_encoder_forward.6} parent=23 // pred_check
          %p747 = pneg %p270
        $region54: #{factorized_encoder_forward.6} parent=23 // pred_check_branch
          %749 = sbr.rel (%p747) target = $region56
        $region55: #{factorized_encoder_forward.6} parent=23 // pred_region
          %s750 = sand.u32 %s56, 1
          %s751 = scalar_lea.sflag [#allocation15], %s750
          %s752 = sand.u32 %s260, 1
          %s753 = smul.addr %s752, 64
          %s754 = scalar_lea.vmem [#allocation14], %s753
          %s756 = ssub.s32 1024, 1024
          %757 = vsyncadd %s751, %s756
          %s758 = smul.addr %s64, 16
          %s759 = smul.addr %s758, 64
          %s760 = scalar_lea.hbm %s7, %s759
          %s761 = sshll.u32 %s754, 4
          %s762 = int_to_ptr.vmem [resolvable:$true] %s761
          %767 = dma.hbm_to_vmem [thread:$0]  %s760, 1024, %s762, %s751, 64, 64, 4
        $region56: #{factorized_encoder_forward.6} parent=23 // pred_fallthru
          _
        // Predicated region
        $region57: #{factorized_encoder_forward.6} parent=23 // pred_check
          %p768 = pneg %p296
        $region58: #{factorized_encoder_forward.6} parent=23 // pred_check_branch
          %770 = sbr.rel (%p768) target = $region60
        $region59: #{factorized_encoder_forward.6} parent=23 // pred_region
          %s771 = sand.u32 %s56, 1
          %s772 = scalar_lea.sflag [#allocation15], %s771
          %s773 = sand.u32 %s286, 1
          %s774 = scalar_lea.vmem [#allocation16], %s773
          %s776 = ssub.s32 16, 16
          %777 = vsyncadd %s772, %s776
          %s778 = smul.addr %s64, 16
          %s779 = scalar_lea.hbm %s8, %s778
          %s781 = sshll.u32 %s774, 4
          %s782 = int_to_ptr.vmem [resolvable:$true] %s781
          %784 = dma.hbm_to_vmem [thread:$0]  %s779, 16, %s782, %s772
        $region60: #{factorized_encoder_forward.6} parent=23 // pred_fallthru
          _
        // Predicated region
        $region61: #{factorized_encoder_forward.6} parent=23 // pred_check
          %p785 = pneg %p322
        $region62: #{factorized_encoder_forward.6} parent=23 // pred_check_branch
          %787 = sbr.rel (%p785) target = $region64
        $region63: #{factorized_encoder_forward.6} parent=23 // pred_region
          %s788 = sand.u32 %s56, 1
          %s789 = scalar_lea.sflag [#allocation18], %s788
          %s790 = sand.u32 %s312, 1
          %s791 = smul.addr %s790, 64
          %s792 = scalar_lea.vmem [#allocation17], %s791
          %s794 = ssub.s32 1024, 1024
          %795 = vsyncadd %s789, %s794
          %s796 = smul.addr %s64, 16
          %s797 = smul.addr %s796, 64
          %s798 = scalar_lea.hbm %s9, %s797
          %s799 = sshll.u32 %s792, 4
          %s800 = int_to_ptr.vmem [resolvable:$true] %s799
          %805 = dma.hbm_to_vmem [thread:$0]  %s798, 1024, %s800, %s789, 64, 64, 4
        $region64: #{factorized_encoder_forward.6} parent=23 // pred_fallthru
          _
        // Predicated region
        $region65: #{factorized_encoder_forward.6} parent=23 // pred_check
          %p806 = pneg %p348
        $region66: #{factorized_encoder_forward.6} parent=23 // pred_check_branch
          %808 = sbr.rel (%p806) target = $region68
        $region67: #{factorized_encoder_forward.6} parent=23 // pred_region
          %s809 = sand.u32 %s56, 1
          %s810 = scalar_lea.sflag [#allocation18], %s809
          %s811 = sand.u32 %s338, 1
          %s812 = scalar_lea.vmem [#allocation19], %s811
          %s814 = ssub.s32 16, 16
          %815 = vsyncadd %s810, %s814
          %s816 = smul.addr %s64, 16
          %s817 = scalar_lea.hbm %s10, %s816
          %s819 = sshll.u32 %s812, 4
          %s820 = int_to_ptr.vmem [resolvable:$true] %s819
          %822 = dma.hbm_to_vmem [thread:$0]  %s817, 16, %s820, %s810
        $region68: #{factorized_encoder_forward.6} parent=23 // pred_fallthru
          _
        // Predicated region
        $region69: #{factorized_encoder_forward.6} parent=23 // pred_check
          %p823 = pneg %p374
        $region70: #{factorized_encoder_forward.6} parent=23 // pred_check_branch
          %825 = sbr.rel (%p823) target = $region72
        $region71: #{factorized_encoder_forward.6} parent=23 // pred_region
          %s826 = sand.u32 %s56, 1
          %s827 = scalar_lea.sflag [#allocation21], %s826
          %s828 = sand.u32 %s364, 1
          %s829 = scalar_lea.vmem [#allocation20], %s828
          %s831 = ssub.s32 16, 16
          %832 = vsyncadd %s827, %s831
          %s833 = smul.addr %s64, 16
          %s834 = scalar_lea.hbm %s11, %s833
          %s836 = sshll.u32 %s829, 4
          %s837 = int_to_ptr.vmem [resolvable:$true] %s836
          %839 = dma.hbm_to_vmem [thread:$0]  %s834, 16, %s837, %s827
        $region72: #{factorized_encoder_forward.6} parent=23 // pred_fallthru
          _
        // Predicated region
        $region73: #{factorized_encoder_forward.6} parent=23 // pred_check
          %p840 = pneg %p400
        $region74: #{factorized_encoder_forward.6} parent=23 // pred_check_branch
          %842 = sbr.rel (%p840) target = $region76
        $region75: #{factorized_encoder_forward.6} parent=23 // pred_region
          %s843 = sand.u32 %s56, 1
          %s844 = scalar_lea.sflag [#allocation21], %s843
          %s845 = sand.u32 %s390, 1
          %s846 = scalar_lea.vmem [#allocation22], %s845
          %s848 = ssub.s32 16, 16
          %849 = vsyncadd %s844, %s848
          %s850 = smul.addr %s64, 16
          %s851 = scalar_lea.hbm %s12, %s850
          %s853 = sshll.u32 %s846, 4
          %s854 = int_to_ptr.vmem [resolvable:$true] %s853
          %856 = dma.hbm_to_vmem [thread:$0]  %s851, 16, %s854, %s844
        $region76: #{factorized_encoder_forward.6} parent=23 // pred_fallthru
          _
        // Predicated region
        $region77: #{factorized_encoder_forward.6} parent=23 // pred_check
          %p857 = pneg %p426
        $region78: #{factorized_encoder_forward.6} parent=23 // pred_check_branch
          %859 = sbr.rel (%p857) target = $region80
        $region79: #{factorized_encoder_forward.6} parent=23 // pred_region
          %s860 = sand.u32 %s56, 1
          %s861 = scalar_lea.sflag [#allocation24], %s860
          %s862 = sand.u32 %s416, 1
          %s863 = smul.addr %s862, 256
          %s864 = scalar_lea.vmem [#allocation23], %s863
          %s866 = ssub.s32 4096, 4096
          %867 = vsyncadd %s861, %s866
          %s868 = smul.addr %s64, 64
          %s869 = smul.addr %s868, 64
          %s870 = scalar_lea.hbm %s13, %s869
          %s871 = sshll.u32 %s864, 4
          %s872 = int_to_ptr.vmem [resolvable:$true] %s871
          %877 = dma.hbm_to_vmem [thread:$0]  %s870, 4096, %s872, %s861, 256, 256, 16
        $region80: #{factorized_encoder_forward.6} parent=23 // pred_fallthru
          _
        // Predicated region
        $region81: #{factorized_encoder_forward.6} parent=23 // pred_check
          %p878 = pneg %p452
        $region82: #{factorized_encoder_forward.6} parent=23 // pred_check_branch
          %880 = sbr.rel (%p878) target = $region84
        $region83: #{factorized_encoder_forward.6} parent=23 // pred_region
          %s881 = sand.u32 %s56, 1
          %s882 = scalar_lea.sflag [#allocation24], %s881
          %s883 = sand.u32 %s442, 1
          %s884 = smul.addr %s883, 4
          %s885 = scalar_lea.vmem [#allocation25], %s884
          %s887 = ssub.s32 64, 64
          %888 = vsyncadd %s882, %s887
          %s889 = smul.addr %s64, 4
          %s890 = smul.addr %s889, 16
          %s891 = scalar_lea.hbm %s14, %s890
          %s893 = sshll.u32 %s885, 4
          %s894 = int_to_ptr.vmem [resolvable:$true] %s893
          %896 = dma.hbm_to_vmem [thread:$0]  %s891, 64, %s894, %s882
        $region84: #{factorized_encoder_forward.6} parent=23 // pred_fallthru
          _
        // Predicated region
        $region85: #{factorized_encoder_forward.6} parent=23 // pred_check
          %p897 = pneg %p478
        $region86: #{factorized_encoder_forward.6} parent=23 // pred_check_branch
          %899 = sbr.rel (%p897) target = $region88
        $region87: #{factorized_encoder_forward.6} parent=23 // pred_region
          %s900 = sand.u32 %s56, 1
          %s901 = scalar_lea.sflag [#allocation27], %s900
          %s902 = sand.u32 %s468, 1
          %s903 = smul.addr %s902, 256
          %s904 = scalar_lea.vmem [#allocation26], %s903
          %s906 = ssub.s32 4096, 4096
          %907 = vsyncadd %s901, %s906
          %s908 = smul.addr %s64, 64
          %s909 = smul.addr %s908, 64
          %s910 = scalar_lea.hbm %s15, %s909
          %s911 = sshll.u32 %s904, 4
          %s912 = int_to_ptr.vmem [resolvable:$true] %s911
          %917 = dma.hbm_to_vmem [thread:$0]  %s910, 4096, %s912, %s901, 64, 64, 4
        $region88: #{factorized_encoder_forward.6} parent=23 // pred_fallthru
          _
        // Predicated region
        $region89: #{factorized_encoder_forward.6} parent=23 // pred_check
          %p918 = pneg %p504
        $region90: #{factorized_encoder_forward.6} parent=23 // pred_check_branch
          %920 = sbr.rel (%p918) target = $region92
        $region91: #{factorized_encoder_forward.6} parent=23 // pred_region
          %s921 = sand.u32 %s56, 1
          %s922 = scalar_lea.sflag [#allocation27], %s921
          %s923 = sand.u32 %s494, 1
          %s924 = scalar_lea.vmem [#allocation28], %s923
          %s926 = ssub.s32 16, 16
          %927 = vsyncadd %s922, %s926
          %s928 = smul.addr %s64, 16
          %s929 = scalar_lea.hbm %s16, %s928
          %s931 = sshll.u32 %s924, 4
          %s932 = int_to_ptr.vmem [resolvable:$true] %s931
          %934 = dma.hbm_to_vmem [thread:$0]  %s929, 16, %s932, %s922
        $region92: #{factorized_encoder_forward.6} parent=23 // pred_fallthru
          _
      $region24: #{factorized_encoder_forward.6} parent=5 // pred_fallthru
        _
      %p935 = scmp.le.s32.totalorder 1, %s56
      %p936 = scmp.lt.s32.totalorder %s56, 5
      %p937 = pnand %p935, %p936
      %p938 = pneg %p937
      // Predicated region
      $region93: #{factorized_encoder_forward.6} parent=5 // pred_check
        _
      $region94: #{factorized_encoder_forward.6} parent=5 // pred_check_branch
        %940 = sbr.rel (%p937) target = $region96
      $region95: #{factorized_encoder_forward.6} parent=5 // pred_region
        %s941 = ssub.s32 %s56, 1
        %s942 = sand.u32 %s81, 1
        %s943 = scalar_lea.sflag [#allocation3], %s942
        %s944 = sand.u32 %s81, 1
        %s945 = smul.addr %s944, 4
        %s946 = scalar_lea.vmem [#allocation2], %s945
        // Predicated region
        $region97: #{factorized_encoder_forward.6} parent=95 // pred_check
          %p947 = pneg %p94
        $region98: #{factorized_encoder_forward.6} parent=95 // pred_check_branch
          %949 = sbr.rel (%p947) target = $region100
        $region99: #{factorized_encoder_forward.6} parent=95 // pred_region
          %950 = dma.done %s943, 64
        $region100: #{factorized_encoder_forward.6} parent=95 // pred_fallthru
          _
        %s951 = sand.u32 %s61, 1
        %s952 = scalar_lea.sflag [#allocation6], %s951
        %s953 = sand.u32 %s107, 1
        %s954 = scalar_lea.vmem [#allocation5], %s953
        // Predicated region
        $region101: #{factorized_encoder_forward.6} parent=95 // pred_check
          %p955 = pneg %p120
        $region102: #{factorized_encoder_forward.6} parent=95 // pred_check_branch
          %957 = sbr.rel (%p955) target = $region104
        $region103: #{factorized_encoder_forward.6} parent=95 // pred_region
          %958 = dma.done %s952, 16
        $region104: #{factorized_encoder_forward.6} parent=95 // pred_fallthru
          _
        %s959 = sand.u32 %s61, 1
        %s960 = scalar_lea.sflag [#allocation6], %s959
        %s961 = sand.u32 %s133, 1
        %s962 = scalar_lea.vmem [#allocation7], %s961
        // Predicated region
        $region105: #{factorized_encoder_forward.6} parent=95 // pred_check
          %p963 = pneg %p146
        $region106: #{factorized_encoder_forward.6} parent=95 // pred_check_branch
          %965 = sbr.rel (%p963) target = $region108
        $region107: #{factorized_encoder_forward.6} parent=95 // pred_region
          %966 = dma.done %s960, 16
        $region108: #{factorized_encoder_forward.6} parent=95 // pred_fallthru
          _
        %s967 = sand.u32 %s61, 1
        %s968 = scalar_lea.sflag [#allocation9], %s967
        %s969 = sand.u32 %s159, 1
        %s970 = smul.addr %s969, 64
        %s971 = scalar_lea.vmem [#allocation8], %s970
        // Predicated region
        $region109: #{factorized_encoder_forward.6} parent=95 // pred_check
          %p972 = pneg %p172
        $region110: #{factorized_encoder_forward.6} parent=95 // pred_check_branch
          %974 = sbr.rel (%p972) target = $region112
        $region111: #{factorized_encoder_forward.6} parent=95 // pred_region
          %975 = dma.done %s968, 1024
        $region112: #{factorized_encoder_forward.6} parent=95 // pred_fallthru
          _
        %s976 = sand.u32 %s61, 1
        %s977 = scalar_lea.sflag [#allocation9], %s976
        %s978 = sand.u32 %s185, 1
        %s979 = scalar_lea.vmem [#allocation10], %s978
        // Predicated region
        $region113: #{factorized_encoder_forward.6} parent=95 // pred_check
          %p980 = pneg %p198
        $region114: #{factorized_encoder_forward.6} parent=95 // pred_check_branch
          %982 = sbr.rel (%p980) target = $region116
        $region115: #{factorized_encoder_forward.6} parent=95 // pred_region
          %983 = dma.done %s977, 16
        $region116: #{factorized_encoder_forward.6} parent=95 // pred_fallthru
          _
        %s984 = sand.u32 %s61, 1
        %s985 = scalar_lea.sflag [#allocation12], %s984
        %s986 = sand.u32 %s211, 1
        %s987 = smul.addr %s986, 64
        %s988 = scalar_lea.vmem [#allocation11], %s987
        // Predicated region
        $region117: #{factorized_encoder_forward.6} parent=95 // pred_check
          %p989 = pneg %p224
        $region118: #{factorized_encoder_forward.6} parent=95 // pred_check_branch
          %991 = sbr.rel (%p989) target = $region120
        $region119: #{factorized_encoder_forward.6} parent=95 // pred_region
          %992 = dma.done %s985, 1024
        $region120: #{factorized_encoder_forward.6} parent=95 // pred_fallthru
          _
        %s993 = sand.u32 %s61, 1
        %s994 = scalar_lea.sflag [#allocation12], %s993
        %s995 = sand.u32 %s237, 1
        %s996 = scalar_lea.vmem [#allocation13], %s995
        // Predicated region
        $region121: #{factorized_encoder_forward.6} parent=95 // pred_check
          %p997 = pneg %p250
        $region122: #{factorized_encoder_forward.6} parent=95 // pred_check_branch
          %999 = sbr.rel (%p997) target = $region124
        $region123: #{factorized_encoder_forward.6} parent=95 // pred_region
          %1000 = dma.done %s994, 16
        $region124: #{factorized_encoder_forward.6} parent=95 // pred_fallthru
          _
        %s1001 = sand.u32 %s61, 1
        %s1002 = scalar_lea.sflag [#allocation15], %s1001
        %s1003 = sand.u32 %s263, 1
        %s1004 = smul.addr %s1003, 64
        %s1005 = scalar_lea.vmem [#allocation14], %s1004
        // Predicated region
        $region125: #{factorized_encoder_forward.6} parent=95 // pred_check
          %p1006 = pneg %p276
        $region126: #{factorized_encoder_forward.6} parent=95 // pred_check_branch
          %1008 = sbr.rel (%p1006) target = $region128
        $region127: #{factorized_encoder_forward.6} parent=95 // pred_region
          %1009 = dma.done %s1002, 1024
        $region128: #{factorized_encoder_forward.6} parent=95 // pred_fallthru
          _
        %s1010 = sand.u32 %s61, 1
        %s1011 = scalar_lea.sflag [#allocation15], %s1010
        %s1012 = sand.u32 %s289, 1
        %s1013 = scalar_lea.vmem [#allocation16], %s1012
        // Predicated region
        $region129: #{factorized_encoder_forward.6} parent=95 // pred_check
          %p1014 = pneg %p302
        $region130: #{factorized_encoder_forward.6} parent=95 // pred_check_branch
          %1016 = sbr.rel (%p1014) target = $region132
        $region131: #{factorized_encoder_forward.6} parent=95 // pred_region
          %1017 = dma.done %s1011, 16
        $region132: #{factorized_encoder_forward.6} parent=95 // pred_fallthru
          _
        %s1018 = sand.u32 %s61, 1
        %s1019 = scalar_lea.sflag [#allocation18], %s1018
        %s1020 = sand.u32 %s315, 1
        %s1021 = smul.addr %s1020, 64
        %s1022 = scalar_lea.vmem [#allocation17], %s1021
        // Predicated region
        $region133: #{factorized_encoder_forward.6} parent=95 // pred_check
          %p1023 = pneg %p328
        $region134: #{factorized_encoder_forward.6} parent=95 // pred_check_branch
          %1025 = sbr.rel (%p1023) target = $region136
        $region135: #{factorized_encoder_forward.6} parent=95 // pred_region
          %1026 = dma.done %s1019, 1024
        $region136: #{factorized_encoder_forward.6} parent=95 // pred_fallthru
          _
        %s1027 = sand.u32 %s61, 1
        %s1028 = scalar_lea.sflag [#allocation18], %s1027
        %s1029 = sand.u32 %s341, 1
        %s1030 = scalar_lea.vmem [#allocation19], %s1029
        // Predicated region
        $region137: #{factorized_encoder_forward.6} parent=95 // pred_check
          %p1031 = pneg %p354
        $region138: #{factorized_encoder_forward.6} parent=95 // pred_check_branch
          %1033 = sbr.rel (%p1031) target = $region140
        $region139: #{factorized_encoder_forward.6} parent=95 // pred_region
          %1034 = dma.done %s1028, 16
        $region140: #{factorized_encoder_forward.6} parent=95 // pred_fallthru
          _
        %s1035 = sand.u32 %s61, 1
        %s1036 = scalar_lea.sflag [#allocation21], %s1035
        %s1037 = sand.u32 %s367, 1
        %s1038 = scalar_lea.vmem [#allocation20], %s1037
        // Predicated region
        $region141: #{factorized_encoder_forward.6} parent=95 // pred_check
          %p1039 = pneg %p380
        $region142: #{factorized_encoder_forward.6} parent=95 // pred_check_branch
          %1041 = sbr.rel (%p1039) target = $region144
        $region143: #{factorized_encoder_forward.6} parent=95 // pred_region
          %1042 = dma.done %s1036, 16
        $region144: #{factorized_encoder_forward.6} parent=95 // pred_fallthru
          _
        %s1043 = sand.u32 %s61, 1
        %s1044 = scalar_lea.sflag [#allocation21], %s1043
        %s1045 = sand.u32 %s393, 1
        %s1046 = scalar_lea.vmem [#allocation22], %s1045
        // Predicated region
        $region145: #{factorized_encoder_forward.6} parent=95 // pred_check
          %p1047 = pneg %p406
        $region146: #{factorized_encoder_forward.6} parent=95 // pred_check_branch
          %1049 = sbr.rel (%p1047) target = $region148
        $region147: #{factorized_encoder_forward.6} parent=95 // pred_region
          %1050 = dma.done %s1044, 16
        $region148: #{factorized_encoder_forward.6} parent=95 // pred_fallthru
          _
        %s1051 = sand.u32 %s61, 1
        %s1052 = scalar_lea.sflag [#allocation24], %s1051
        %s1053 = sand.u32 %s419, 1
        %s1054 = smul.addr %s1053, 256
        %s1055 = scalar_lea.vmem [#allocation23], %s1054
        // Predicated region
        $region149: #{factorized_encoder_forward.6} parent=95 // pred_check
          %p1056 = pneg %p432
        $region150: #{factorized_encoder_forward.6} parent=95 // pred_check_branch
          %1058 = sbr.rel (%p1056) target = $region152
        $region151: #{factorized_encoder_forward.6} parent=95 // pred_region
          %1059 = dma.done %s1052, 4096
        $region152: #{factorized_encoder_forward.6} parent=95 // pred_fallthru
          _
        %s1060 = sand.u32 %s61, 1
        %s1061 = scalar_lea.sflag [#allocation24], %s1060
        %s1062 = sand.u32 %s445, 1
        %s1063 = smul.addr %s1062, 4
        %s1064 = scalar_lea.vmem [#allocation25], %s1063
        // Predicated region
        $region153: #{factorized_encoder_forward.6} parent=95 // pred_check
          %p1065 = pneg %p458
        $region154: #{factorized_encoder_forward.6} parent=95 // pred_check_branch
          %1067 = sbr.rel (%p1065) target = $region156
        $region155: #{factorized_encoder_forward.6} parent=95 // pred_region
          %1068 = dma.done %s1061, 64
        $region156: #{factorized_encoder_forward.6} parent=95 // pred_fallthru
          _
        %s1069 = sand.u32 %s61, 1
        %s1070 = scalar_lea.sflag [#allocation27], %s1069
        %s1071 = sand.u32 %s471, 1
        %s1072 = smul.addr %s1071, 256
        %s1073 = scalar_lea.vmem [#allocation26], %s1072
        // Predicated region
        $region157: #{factorized_encoder_forward.6} parent=95 // pred_check
          %p1074 = pneg %p484
        $region158: #{factorized_encoder_forward.6} parent=95 // pred_check_branch
          %1076 = sbr.rel (%p1074) target = $region160
        $region159: #{factorized_encoder_forward.6} parent=95 // pred_region
          %1077 = dma.done %s1070, 4096
        $region160: #{factorized_encoder_forward.6} parent=95 // pred_fallthru
          _
        %s1078 = sand.u32 %s61, 1
        %s1079 = scalar_lea.sflag [#allocation27], %s1078
        %s1080 = sand.u32 %s497, 1
        %s1081 = scalar_lea.vmem [#allocation28], %s1080
        // Predicated region
        $region161: #{factorized_encoder_forward.6} parent=95 // pred_check
          %p1082 = pneg %p510
        $region162: #{factorized_encoder_forward.6} parent=95 // pred_check_branch
          %1084 = sbr.rel (%p1082) target = $region164
        $region163: #{factorized_encoder_forward.6} parent=95 // pred_region
          %1085 = dma.done %s1079, 16
        $region164: #{factorized_encoder_forward.6} parent=95 // pred_fallthru
          _
        // Predicated region
        $region165: #{factorized_encoder_forward.6} parent=95 // pred_check
          %p1086 = pneg %p531
        $region166: #{factorized_encoder_forward.6} parent=95 // pred_check_branch
          %1088 = sbr.rel (%p1086) target = $region168
        $region167: #{factorized_encoder_forward.6} parent=95 // pred_region
          %1089 = dma.done [#allocation30], 16
        $region168: #{factorized_encoder_forward.6} parent=95 // pred_fallthru
          _
        // Predicated region
        $region169: #{factorized_encoder_forward.6} parent=95 // pred_check
          %p1090 = pneg %p552
        $region170: #{factorized_encoder_forward.6} parent=95 // pred_check_branch
          %1092 = sbr.rel (%p1090) target = $region172
        $region171: #{factorized_encoder_forward.6} parent=95 // pred_region
          %1093 = dma.done [#allocation30], 16
        $region172: #{factorized_encoder_forward.6} parent=95 // pred_fallthru
          _
        %s1094 = sand.u32 %s81, 1
        %s1095 = scalar_lea.sflag [#allocation3], %s1094
        %s1096 = sand.u32 %s81, 1
        %s1097 = smul.addr %s1096, 4
        %s1098 = scalar_lea.vmem [#allocation2], %s1097
        %p1099 = pneg %p94
        %p1100 = pneg %p91
        %s1101 = sand.u32 %s61, 1
        %s1102 = scalar_lea.sflag [#allocation6], %s1101
        %s1103 = sand.u32 %s107, 1
        %s1104 = scalar_lea.vmem [#allocation5], %s1103
        %p1105 = pneg %p120
        %p1106 = pneg %p117
        %s1107 = sand.u32 %s61, 1
        %s1108 = scalar_lea.sflag [#allocation6], %s1107
        %s1109 = sand.u32 %s133, 1
        %s1110 = scalar_lea.vmem [#allocation7], %s1109
        %p1111 = pneg %p146
        %p1112 = pneg %p143
        %s1113 = sand.u32 %s61, 1
        %s1114 = scalar_lea.sflag [#allocation9], %s1113
        %s1115 = sand.u32 %s159, 1
        %s1116 = smul.addr %s1115, 64
        %s1117 = scalar_lea.vmem [#allocation8], %s1116
        %p1118 = pneg %p172
        %p1119 = pneg %p169
        %s1120 = sand.u32 %s61, 1
        %s1121 = scalar_lea.sflag [#allocation9], %s1120
        %s1122 = sand.u32 %s185, 1
        %s1123 = scalar_lea.vmem [#allocation10], %s1122
        %p1124 = pneg %p198
        %p1125 = pneg %p195
        %s1126 = sand.u32 %s61, 1
        %s1127 = scalar_lea.sflag [#allocation12], %s1126
        %s1128 = sand.u32 %s211, 1
        %s1129 = smul.addr %s1128, 64
        %s1130 = scalar_lea.vmem [#allocation11], %s1129
        %p1131 = pneg %p224
        %p1132 = pneg %p221
        %s1133 = sand.u32 %s61, 1
        %s1134 = scalar_lea.sflag [#allocation12], %s1133
        %s1135 = sand.u32 %s237, 1
        %s1136 = scalar_lea.vmem [#allocation13], %s1135
        %p1137 = pneg %p250
        %p1138 = pneg %p247
        %s1139 = sand.u32 %s61, 1
        %s1140 = scalar_lea.sflag [#allocation15], %s1139
        %s1141 = sand.u32 %s263, 1
        %s1142 = smul.addr %s1141, 64
        %s1143 = scalar_lea.vmem [#allocation14], %s1142
        %p1144 = pneg %p276
        %p1145 = pneg %p273
        %s1146 = sand.u32 %s61, 1
        %s1147 = scalar_lea.sflag [#allocation15], %s1146
        %s1148 = sand.u32 %s289, 1
        %s1149 = scalar_lea.vmem [#allocation16], %s1148
        %p1150 = pneg %p302
        %p1151 = pneg %p299
        %s1152 = sand.u32 %s61, 1
        %s1153 = scalar_lea.sflag [#allocation18], %s1152
        %s1154 = sand.u32 %s315, 1
        %s1155 = smul.addr %s1154, 64
        %s1156 = scalar_lea.vmem [#allocation17], %s1155
        %p1157 = pneg %p328
        %p1158 = pneg %p325
        %s1159 = sand.u32 %s61, 1
        %s1160 = scalar_lea.sflag [#allocation18], %s1159
        %s1161 = sand.u32 %s341, 1
        %s1162 = scalar_lea.vmem [#allocation19], %s1161
        %p1163 = pneg %p354
        %p1164 = pneg %p351
        %s1165 = sand.u32 %s61, 1
        %s1166 = scalar_lea.sflag [#allocation21], %s1165
        %s1167 = sand.u32 %s367, 1
        %s1168 = scalar_lea.vmem [#allocation20], %s1167
        %p1169 = pneg %p380
        %p1170 = pneg %p377
        %s1171 = sand.u32 %s61, 1
        %s1172 = scalar_lea.sflag [#allocation21], %s1171
        %s1173 = sand.u32 %s393, 1
        %s1174 = scalar_lea.vmem [#allocation22], %s1173
        %p1175 = pneg %p406
        %p1176 = pneg %p403
        %s1177 = sand.u32 %s61, 1
        %s1178 = scalar_lea.sflag [#allocation24], %s1177
        %s1179 = sand.u32 %s419, 1
        %s1180 = smul.addr %s1179, 256
        %s1181 = scalar_lea.vmem [#allocation23], %s1180
        %p1182 = pneg %p432
        %p1183 = pneg %p429
        %s1184 = sand.u32 %s61, 1
        %s1185 = scalar_lea.sflag [#allocation24], %s1184
        %s1186 = sand.u32 %s445, 1
        %s1187 = smul.addr %s1186, 4
        %s1188 = scalar_lea.vmem [#allocation25], %s1187
        %p1189 = pneg %p458
        %p1190 = pneg %p455
        %s1191 = sand.u32 %s61, 1
        %s1192 = scalar_lea.sflag [#allocation27], %s1191
        %s1193 = sand.u32 %s471, 1
        %s1194 = smul.addr %s1193, 256
        %s1195 = scalar_lea.vmem [#allocation26], %s1194
        %p1196 = pneg %p484
        %p1197 = pneg %p481
        %s1198 = sand.u32 %s61, 1
        %s1199 = scalar_lea.sflag [#allocation27], %s1198
        %s1200 = sand.u32 %s497, 1
        %s1201 = scalar_lea.vmem [#allocation28], %s1200
        %p1202 = pneg %p510
        %p1203 = pneg %p507
        %p1204 = pneg %p531
        %p1205 = pneg %p528
        %p1206 = pneg %p552
        %p1207 = pneg %p549
        %p1208 = pneg %p578
        %p1209 = pneg %p575
        %s1210 = sand.u32 %s565, 1
        %s1211 = scalar_lea.sflag [#allocation4], %s1210
        %s1212 = sand.u32 %s565, 1
        %s1213 = smul.addr %s1212, 4
        %s1214 = scalar_lea.vmem [#allocation32], %s1213
        %p1216 = scmp.eq.s32.totalorder %s66, 0
        // Predicated region
        $region173: #{factorized_encoder_forward.6} parent=95 // pred_check
          %p1217 = pneg %p1216
        $region174: #{factorized_encoder_forward.6} parent=95 // pred_check_branch
          %1219 = sbr.rel (%p1217) target = $region176
        $region175: #{factorized_encoder_forward.6} parent=95 // pred_region
          %v1220 = vld [vmem:[%s946] sm:$0x7]
          %1221 = vst [vmem:[%s1214] sm:$0x7] %v1220
        $region176: #{factorized_encoder_forward.6} parent=95 // pred_fallthru
          _
        %v1222 = vld [vmem:[%s1214] sm:$0x7]
        %v1223 = vld [vmem:[%s954] sm:$0x1]
        %v1224 = vld [vmem:[%s962] sm:$0x1]
        %vm1225 = vcmask 1042432
        %v1226 = vsel %vm1225, %v1222, 0.0
        %1227 = vadd.xlane.f32.xlu0 %v1226
        %v1228 = vpop.xlane.xlu0 %1227
        %v1229 = vrcp.pop 128.0
        %v1230 = vmul.f32 %v1228, %v1229
        %v1231 = vsub.f32 %v1222, %v1230
        %v1232 = vmul.f32 %v1231, %v1231
        %v1233 = vsel %vm1225, %v1232, 0.0
        %1234 = vadd.xlane.f32.xlu0 %v1233
        %v1235 = vpop.xlane.xlu0 %1234
        %v1236 = vmul.f32 %v1235, %v1229
        %v1237 = vadd.f32 %v1236, 1e-05
        %v1238 = vrsqrt.pop %v1237
        %v1239 = vmul.f32 %v1231, %v1238
        %v1241 = vlaneseq
        %v1242 = vshrl.u32 %v1241, 7
        %v1243 = vsub.s32 0, %v1242
        %v1244 = vrot.slane %v1223, %v1243
        %v1246 = vmul.f32 %v1239, %v1244
        %v1248 = vlaneseq
        %v1249 = vshrl.u32 %v1248, 7
        %v1250 = vsub.s32 0, %v1249
        %v1251 = vrot.slane %v1224, %v1250
        %v1253 = vadd.f32 %v1246, %v1251
        %v1254 = vpack.c.bf16 %v1253, %v1253
        %v1255 = vld [vmem:[%s971] sm:$0xf]
        %v1256 = vld [vmem:[%s971 + $0x4] sm:$0xf]
        %v1257 = vld [vmem:[%s971 + $0x8] sm:$0xf]
        %v1258 = vld [vmem:[%s971 + $0xc] sm:$0xf]
        %v1259 = vld [vmem:[%s971 + $0x10] sm:$0xf]
        %v1260 = vld [vmem:[%s971 + $0x14] sm:$0xf]
        %v1261 = vld [vmem:[%s971 + $0x18] sm:$0xf]
        %v1262 = vld [vmem:[%s971 + $0x1c] sm:$0xf]
        %v1263 = vld [vmem:[%s971 + $0x20] sm:$0xf]
        %v1264 = vld [vmem:[%s971 + $0x24] sm:$0xf]
        %v1265 = vld [vmem:[%s971 + $0x28] sm:$0xf]
        %v1266 = vld [vmem:[%s971 + $0x2c] sm:$0xf]
        %v1267 = vld [vmem:[%s971 + $0x30] sm:$0xf]
        %v1268 = vld [vmem:[%s971 + $0x34] sm:$0xf]
        %v1269 = vld [vmem:[%s971 + $0x38] sm:$0xf]
        %v1270 = vld [vmem:[%s971 + $0x3c] sm:$0xf]
        %v1271 = vld [vmem:[%s979] sm:$0x1]
        %v1273 = vlaneseq
        %v1274 = vshrl.u32 %v1273, 7
        %v1275 = vsub.s32 0, %v1274
        %v1276 = vrot.slane %v1271, %v1275
        %v1294 = vunpack.c.l.b16 %v1255
        %v1295 = vunpack.c.l.b16 %v1256
        %v1296 = vunpack.c.l.b16 %v1257
        %v1297 = vunpack.c.l.b16 %v1258
        %v1298 = vunpack.c.l.b16 %v1259
        %v1299 = vunpack.c.l.b16 %v1260
        %v1300 = vunpack.c.l.b16 %v1261
        %v1301 = vunpack.c.l.b16 %v1262
        %v1302 = vunpack.c.l.b16 %v1263
        %v1303 = vunpack.c.l.b16 %v1264
        %v1304 = vunpack.c.l.b16 %v1265
        %v1305 = vunpack.c.l.b16 %v1266
        %v1306 = vunpack.c.l.b16 %v1267
        %v1307 = vunpack.c.l.b16 %v1268
        %v1308 = vunpack.c.l.b16 %v1269
        %v1309 = vunpack.c.l.b16 %v1270
        %v1310 = vpack.c.b16 %v1295, %v1294
        %v1311 = vpack.c.b16 %v1297, %v1296
        %v1312 = vpack.c.b16 %v1299, %v1298
        %v1313 = vpack.c.b16 %v1301, %v1300
        %v1314 = vpack.c.b16 %v1303, %v1302
        %v1315 = vpack.c.b16 %v1305, %v1304
        %v1316 = vpack.c.b16 %v1307, %v1306
        %v1317 = vpack.c.b16 %v1309, %v1308
        %1326 = vmatprep.subr.bf16.mxu0 0
        %1327 = vmatpush1.bf16.msra.mxu0 %v1310
        %1328 = vmatprep.subr.bf16.mxu0 0
        %1329 = vmatpush1.bf16.msra.mxu0 %v1311
        %1330 = vmatprep.subr.bf16.mxu0 0
        %1331 = vmatpush1.bf16.msra.mxu0 %v1312
        %1332 = vmatprep.subr.bf16.mxu0 0
        %1333 = vmatpush1.bf16.msra.mxu0 %v1313
        %1334 = vmatprep.subr.bf16.mxu0 0
        %1335 = vmatpush1.bf16.msra.mxu0 %v1314
        %1336 = vmatprep.subr.bf16.mxu0 0
        %1337 = vmatpush1.bf16.msra.mxu0 %v1315
        %1338 = vmatprep.subr.bf16.mxu0 0
        %1339 = vmatpush1.bf16.msra.mxu0 %v1316
        %1340 = vmatprep.subr.bf16.mxu0 0
        %1341 = vmatpush1.bf16.msra.mxu0 %v1317
        %1342 = vmatprep.subr.bf16.mxu0 0
        %1343 = vmatpush1.bf16.msra.mxu0 0
        %1344 = vmatprep.subr.bf16.mxu0 0
        %1345 = vmatpush1.bf16.msra.mxu0 0
        %1346 = vmatprep.subr.bf16.mxu0 0
        %1347 = vmatpush1.bf16.msra.mxu0 0
        %1348 = vmatprep.subr.bf16.mxu0 0
        %1349 = vmatpush1.bf16.msra.mxu0 0
        %1350 = vmatprep.subr.bf16.mxu0 0
        %1351 = vmatpush1.bf16.msra.mxu0 0
        %1352 = vmatprep.subr.bf16.mxu0 0
        %1353 = vmatpush1.bf16.msra.mxu0 0
        %1354 = vmatprep.subr.bf16.mxu0 0
        %1355 = vmatpush1.bf16.msra.mxu0 0
        %1356 = vmatprep.subr.bf16.mxu0 0
        %1357 = vmatpush1.bf16.msra.mxu0 0
        %1358 = vmatprep.mubr.bf16.mxu0 0
        %1359 = vmatmul.mubr.bf16.gmra.mrb[0].mxu0 %v1254
        %v1360 = vpop.f32.mrb[0].mxu0
        %v1361 = vadd.f32 %v1276, %v1360
        %v1362 = vpop.f32.mrb[0].mxu0
        %v1363 = vpop.f32.mrb[0].mxu0
        %v1364 = vpop.f32.mrb[0].mxu0
        %1365 = vdwg.mxu0
        %v1366 = vld [vmem:[%s988] sm:$0xf]
        %v1367 = vld [vmem:[%s988 + $0x4] sm:$0xf]
        %v1368 = vld [vmem:[%s988 + $0x8] sm:$0xf]
        %v1369 = vld [vmem:[%s988 + $0xc] sm:$0xf]
        %v1370 = vld [vmem:[%s988 + $0x10] sm:$0xf]
        %v1371 = vld [vmem:[%s988 + $0x14] sm:$0xf]
        %v1372 = vld [vmem:[%s988 + $0x18] sm:$0xf]
        %v1373 = vld [vmem:[%s988 + $0x1c] sm:$0xf]
        %v1374 = vld [vmem:[%s988 + $0x20] sm:$0xf]
        %v1375 = vld [vmem:[%s988 + $0x24] sm:$0xf]
        %v1376 = vld [vmem:[%s988 + $0x28] sm:$0xf]
        %v1377 = vld [vmem:[%s988 + $0x2c] sm:$0xf]
        %v1378 = vld [vmem:[%s988 + $0x30] sm:$0xf]
        %v1379 = vld [vmem:[%s988 + $0x34] sm:$0xf]
        %v1380 = vld [vmem:[%s988 + $0x38] sm:$0xf]
        %v1381 = vld [vmem:[%s988 + $0x3c] sm:$0xf]
        %v1382 = vld [vmem:[%s996] sm:$0x1]
        %v1384 = vlaneseq
        %v1385 = vshrl.u32 %v1384, 7
        %v1386 = vsub.s32 0, %v1385
        %v1387 = vrot.slane %v1382, %v1386
        %v1405 = vunpack.c.l.b16 %v1366
        %v1406 = vunpack.c.l.b16 %v1367
        %v1407 = vunpack.c.l.b16 %v1368
        %v1408 = vunpack.c.l.b16 %v1369
        %v1409 = vunpack.c.l.b16 %v1370
        %v1410 = vunpack.c.l.b16 %v1371
        %v1411 = vunpack.c.l.b16 %v1372
        %v1412 = vunpack.c.l.b16 %v1373
        %v1413 = vunpack.c.l.b16 %v1374
        %v1414 = vunpack.c.l.b16 %v1375
        %v1415 = vunpack.c.l.b16 %v1376
        %v1416 = vunpack.c.l.b16 %v1377
        %v1417 = vunpack.c.l.b16 %v1378
        %v1418 = vunpack.c.l.b16 %v1379
        %v1419 = vunpack.c.l.b16 %v1380
        %v1420 = vunpack.c.l.b16 %v1381
        %v1421 = vpack.c.b16 %v1406, %v1405
        %v1422 = vpack.c.b16 %v1408, %v1407
        %v1423 = vpack.c.b16 %v1410, %v1409
        %v1424 = vpack.c.b16 %v1412, %v1411
        %v1425 = vpack.c.b16 %v1414, %v1413
        %v1426 = vpack.c.b16 %v1416, %v1415
        %v1427 = vpack.c.b16 %v1418, %v1417
        %v1428 = vpack.c.b16 %v1420, %v1419
        %1437 = vmatprep.subr.bf16.mxu0 0
        %1438 = vmatpush1.bf16.msra.mxu0 %v1421
        %1439 = vmatprep.subr.bf16.mxu0 0
        %1440 = vmatpush1.bf16.msra.mxu0 %v1422
        %1441 = vmatprep.subr.bf16.mxu0 0
        %1442 = vmatpush1.bf16.msra.mxu0 %v1423
        %1443 = vmatprep.subr.bf16.mxu0 0
        %1444 = vmatpush1.bf16.msra.mxu0 %v1424
        %1445 = vmatprep.subr.bf16.mxu0 0
        %1446 = vmatpush1.bf16.msra.mxu0 %v1425
        %1447 = vmatprep.subr.bf16.mxu0 0
        %1448 = vmatpush1.bf16.msra.mxu0 %v1426
        %1449 = vmatprep.subr.bf16.mxu0 0
        %1450 = vmatpush1.bf16.msra.mxu0 %v1427
        %1451 = vmatprep.subr.bf16.mxu0 0
        %1452 = vmatpush1.bf16.msra.mxu0 %v1428
        %1453 = vmatprep.subr.bf16.mxu0 0
        %1454 = vmatpush1.bf16.msra.mxu0 0
        %1455 = vmatprep.subr.bf16.mxu0 0
        %1456 = vmatpush1.bf16.msra.mxu0 0
        %1457 = vmatprep.subr.bf16.mxu0 0
        %1458 = vmatpush1.bf16.msra.mxu0 0
        %1459 = vmatprep.subr.bf16.mxu0 0
        %1460 = vmatpush1.bf16.msra.mxu0 0
        %1461 = vmatprep.subr.bf16.mxu0 0
        %1462 = vmatpush1.bf16.msra.mxu0 0
        %1463 = vmatprep.subr.bf16.mxu0 0
        %1464 = vmatpush1.bf16.msra.mxu0 0
        %1465 = vmatprep.subr.bf16.mxu0 0
        %1466 = vmatpush1.bf16.msra.mxu0 0
        %1467 = vmatprep.subr.bf16.mxu0 0
        %1468 = vmatpush1.bf16.msra.mxu0 0
        %1469 = vmatprep.mubr.bf16.mxu0 0
        %1470 = vmatmul.mubr.bf16.gmra.mrb[0].mxu0 %v1254
        %v1471 = vpop.f32.mrb[0].mxu0
        %v1472 = vadd.f32 %v1387, %v1471
        %v1473 = vpop.f32.mrb[0].mxu0
        %v1474 = vpop.f32.mrb[0].mxu0
        %v1475 = vpop.f32.mrb[0].mxu0
        %1476 = vdwg.mxu0
        %v1477 = vld [vmem:[%s1005] sm:$0xf]
        %v1478 = vld [vmem:[%s1005 + $0x4] sm:$0xf]
        %v1479 = vld [vmem:[%s1005 + $0x8] sm:$0xf]
        %v1480 = vld [vmem:[%s1005 + $0xc] sm:$0xf]
        %v1481 = vld [vmem:[%s1005 + $0x10] sm:$0xf]
        %v1482 = vld [vmem:[%s1005 + $0x14] sm:$0xf]
        %v1483 = vld [vmem:[%s1005 + $0x18] sm:$0xf]
        %v1484 = vld [vmem:[%s1005 + $0x1c] sm:$0xf]
        %v1485 = vld [vmem:[%s1005 + $0x20] sm:$0xf]
        %v1486 = vld [vmem:[%s1005 + $0x24] sm:$0xf]
        %v1487 = vld [vmem:[%s1005 + $0x28] sm:$0xf]
        %v1488 = vld [vmem:[%s1005 + $0x2c] sm:$0xf]
        %v1489 = vld [vmem:[%s1005 + $0x30] sm:$0xf]
        %v1490 = vld [vmem:[%s1005 + $0x34] sm:$0xf]
        %v1491 = vld [vmem:[%s1005 + $0x38] sm:$0xf]
        %v1492 = vld [vmem:[%s1005 + $0x3c] sm:$0xf]
        %v1493 = vld [vmem:[%s1013] sm:$0x1]
        %v1495 = vlaneseq
        %v1496 = vshrl.u32 %v1495, 7
        %v1497 = vsub.s32 0, %v1496
        %v1498 = vrot.slane %v1493, %v1497
        %v1516 = vunpack.c.l.b16 %v1477
        %v1517 = vunpack.c.l.b16 %v1478
        %v1518 = vunpack.c.l.b16 %v1479
        %v1519 = vunpack.c.l.b16 %v1480
        %v1520 = vunpack.c.l.b16 %v1481
        %v1521 = vunpack.c.l.b16 %v1482
        %v1522 = vunpack.c.l.b16 %v1483
        %v1523 = vunpack.c.l.b16 %v1484
        %v1524 = vunpack.c.l.b16 %v1485
        %v1525 = vunpack.c.l.b16 %v1486
        %v1526 = vunpack.c.l.b16 %v1487
        %v1527 = vunpack.c.l.b16 %v1488
        %v1528 = vunpack.c.l.b16 %v1489
        %v1529 = vunpack.c.l.b16 %v1490
        %v1530 = vunpack.c.l.b16 %v1491
        %v1531 = vunpack.c.l.b16 %v1492
        %v1532 = vpack.c.b16 %v1517, %v1516
        %v1533 = vpack.c.b16 %v1519, %v1518
        %v1534 = vpack.c.b16 %v1521, %v1520
        %v1535 = vpack.c.b16 %v1523, %v1522
        %v1536 = vpack.c.b16 %v1525, %v1524
        %v1537 = vpack.c.b16 %v1527, %v1526
        %v1538 = vpack.c.b16 %v1529, %v1528
        %v1539 = vpack.c.b16 %v1531, %v1530
        %1548 = vmatprep.subr.bf16.mxu0 0
        %1549 = vmatpush1.bf16.msra.mxu0 %v1532
        %1550 = vmatprep.subr.bf16.mxu0 0
        %1551 = vmatpush1.bf16.msra.mxu0 %v1533
        %1552 = vmatprep.subr.bf16.mxu0 0
        %1553 = vmatpush1.bf16.msra.mxu0 %v1534
        %1554 = vmatprep.subr.bf16.mxu0 0
        %1555 = vmatpush1.bf16.msra.mxu0 %v1535
        %1556 = vmatprep.subr.bf16.mxu0 0
        %1557 = vmatpush1.bf16.msra.mxu0 %v1536
        %1558 = vmatprep.subr.bf16.mxu0 0
        %1559 = vmatpush1.bf16.msra.mxu0 %v1537
        %1560 = vmatprep.subr.bf16.mxu0 0
        %1561 = vmatpush1.bf16.msra.mxu0 %v1538
        %1562 = vmatprep.subr.bf16.mxu0 0
        %1563 = vmatpush1.bf16.msra.mxu0 %v1539
        %1564 = vmatprep.subr.bf16.mxu0 0
        %1565 = vmatpush1.bf16.msra.mxu0 0
        %1566 = vmatprep.subr.bf16.mxu0 0
        %1567 = vmatpush1.bf16.msra.mxu0 0
        %1568 = vmatprep.subr.bf16.mxu0 0
        %1569 = vmatpush1.bf16.msra.mxu0 0
        %1570 = vmatprep.subr.bf16.mxu0 0
        %1571 = vmatpush1.bf16.msra.mxu0 0
        %1572 = vmatprep.subr.bf16.mxu0 0
        %1573 = vmatpush1.bf16.msra.mxu0 0
        %1574 = vmatprep.subr.bf16.mxu0 0
        %1575 = vmatpush1.bf16.msra.mxu0 0
        %1576 = vmatprep.subr.bf16.mxu0 0
        %1577 = vmatpush1.bf16.msra.mxu0 0
        %1578 = vmatprep.subr.bf16.mxu0 0
        %1579 = vmatpush1.bf16.msra.mxu0 0
        %1580 = vmatprep.mubr.bf16.mxu0 0
        %1581 = vmatmul.mubr.bf16.gmra.mrb[0].mxu0 %v1254
        %v1582 = vpop.f32.mrb[0].mxu0
        %v1583 = vadd.f32 %v1498, %v1582
        %v1584 = vpop.f32.mrb[0].mxu0
        %v1585 = vpop.f32.mrb[0].mxu0
        %v1586 = vpop.f32.mrb[0].mxu0
        %1587 = vdwg.mxu0
        %1589 = vrot.lane.b32.xlu0 %v1361, 96
        %v1590 = vpop.permute.xlu0 %1589
        %1592 = vrot.lane.b32.xlu0 %v1361, 64
        %v1593 = vpop.permute.xlu0 %1592
        %1595 = vrot.lane.b32.xlu0 %v1361, 32
        %v1596 = vpop.permute.xlu0 %1595
        %v1598 = vcombine.low %v1361, %v1593
        %v1600 = vunpack.c.l.s4 1983009808
        %v1601 = vunpack.c.0.s8 %v1600
        %v1602 = vlaneseq
        %v1603 = vshrl.u32 %v1602, 7
        %v1604 = vsub.s32 %v1601, %v1603
        %v1605 = vrot.slane %v1598, %v1604
        %v1606 = vcombine.low %v1590, %v1596
        %v1608 = vunpack.c.l.s4 1983009808
        %v1609 = vunpack.c.0.s8 %v1608
        %v1610 = vlaneseq
        %v1611 = vshrl.u32 %v1610, 7
        %v1612 = vsub.s32 %v1609, %v1611
        %v1613 = vrot.slane %v1606, %v1612
        %v1614 = vcombine.low %v1605, %v1613
        %v1615 = vcombine.high %v1605, %v1613
        %v1617 = vunpack.c.l.s4 1934713408
        %v1618 = vunpack.c.0.s8 %v1617
        %v1619 = vlaneseq
        %v1620 = vshrl.u32 %v1619, 7
        %v1621 = vsub.s32 %v1618, %v1620
        %v1622 = vrot.slane %v1614, %v1621
        %v1624 = vunpack.c.l.s4 1934713408
        %v1625 = vunpack.c.0.s8 %v1624
        %v1626 = vlaneseq
        %v1627 = vshrl.u32 %v1626, 7
        %v1628 = vsub.s32 %v1625, %v1627
        %v1629 = vrot.slane %v1615, %v1628
        %v1630 = vcombine.low %v1622, %v1629
        %v1632 = vunpack.c.l.s4 1983009808
        %v1633 = vunpack.c.0.s8 %v1632
        %v1634 = vlaneseq
        %v1635 = vshrl.u32 %v1634, 7
        %v1636 = vsub.s32 %v1633, %v1635
        %v1637 = vrot.slane %v1630, %v1636
        %v1638 = vcombine.high %v1622, 0.0
        %v1640 = vunpack.c.l.s4 1983009808
        %v1641 = vunpack.c.0.s8 %v1640
        %v1642 = vlaneseq
        %v1643 = vshrl.u32 %v1642, 7
        %v1644 = vsub.s32 %v1641, %v1643
        %v1645 = vrot.slane %v1638, %v1644
        %v1646 = vcombine.low %v1637, %v1645
        %v1647 = vcombine.high %v1637, %v1645
        %v1649 = vunpack.c.l.s4 1934713408
        %v1650 = vunpack.c.0.s8 %v1649
        %v1651 = vlaneseq
        %v1652 = vshrl.u32 %v1651, 7
        %v1653 = vsub.s32 %v1650, %v1652
        %v1654 = vrot.slane %v1646, %v1653
        %v1656 = vunpack.c.l.s4 1934713408
        %v1657 = vunpack.c.0.s8 %v1656
        %v1658 = vlaneseq
        %v1659 = vshrl.u32 %v1658, 7
        %v1660 = vsub.s32 %v1657, %v1659
        %v1661 = vrot.slane %v1647, %v1660
        %v1662 = vcombine.high %v1654, 0.0
        %v1663 = vcombine.high %v1661, 0.0
        %v1664 = vpack.c.bf16 %v1654, %v1654
        %v1665 = vpack.c.bf16 %v1662, %v1662
        %v1666 = vpack.c.bf16 %v1661, %v1661
        %v1667 = vpack.c.bf16 %v1663, %v1663
        %1669 = vrot.lane.b32.xlu0 %v1472, 96
        %v1670 = vpop.permute.xlu0 %1669
        %1672 = vrot.lane.b32.xlu0 %v1472, 64
        %v1673 = vpop.permute.xlu0 %1672
        %1675 = vrot.lane.b32.xlu0 %v1472, 32
        %v1676 = vpop.permute.xlu0 %1675
        %v1678 = vcombine.low %v1472, %v1673
        %v1680 = vunpack.c.l.s4 1983009808
        %v1681 = vunpack.c.0.s8 %v1680
        %v1682 = vlaneseq
        %v1683 = vshrl.u32 %v1682, 7
        %v1684 = vsub.s32 %v1681, %v1683
        %v1685 = vrot.slane %v1678, %v1684
        %v1686 = vcombine.low %v1670, %v1676
        %v1688 = vunpack.c.l.s4 1983009808
        %v1689 = vunpack.c.0.s8 %v1688
        %v1690 = vlaneseq
        %v1691 = vshrl.u32 %v1690, 7
        %v1692 = vsub.s32 %v1689, %v1691
        %v1693 = vrot.slane %v1686, %v1692
        %v1694 = vcombine.low %v1685, %v1693
        %v1695 = vcombine.high %v1685, %v1693
        %v1697 = vunpack.c.l.s4 1934713408
        %v1698 = vunpack.c.0.s8 %v1697
        %v1699 = vlaneseq
        %v1700 = vshrl.u32 %v1699, 7
        %v1701 = vsub.s32 %v1698, %v1700
        %v1702 = vrot.slane %v1694, %v1701
        %v1704 = vunpack.c.l.s4 1934713408
        %v1705 = vunpack.c.0.s8 %v1704
        %v1706 = vlaneseq
        %v1707 = vshrl.u32 %v1706, 7
        %v1708 = vsub.s32 %v1705, %v1707
        %v1709 = vrot.slane %v1695, %v1708
        %v1710 = vcombine.low %v1702, %v1709
        %v1712 = vunpack.c.l.s4 1983009808
        %v1713 = vunpack.c.0.s8 %v1712
        %v1714 = vlaneseq
        %v1715 = vshrl.u32 %v1714, 7
        %v1716 = vsub.s32 %v1713, %v1715
        %v1717 = vrot.slane %v1710, %v1716
        %v1718 = vcombine.high %v1702, 0.0
        %v1720 = vunpack.c.l.s4 1983009808
        %v1721 = vunpack.c.0.s8 %v1720
        %v1722 = vlaneseq
        %v1723 = vshrl.u32 %v1722, 7
        %v1724 = vsub.s32 %v1721, %v1723
        %v1725 = vrot.slane %v1718, %v1724
        %v1726 = vcombine.low %v1717, %v1725
        %v1727 = vcombine.high %v1717, %v1725
        %v1729 = vunpack.c.l.s4 1934713408
        %v1730 = vunpack.c.0.s8 %v1729
        %v1731 = vlaneseq
        %v1732 = vshrl.u32 %v1731, 7
        %v1733 = vsub.s32 %v1730, %v1732
        %v1734 = vrot.slane %v1726, %v1733
        %v1736 = vunpack.c.l.s4 1934713408
        %v1737 = vunpack.c.0.s8 %v1736
        %v1738 = vlaneseq
        %v1739 = vshrl.u32 %v1738, 7
        %v1740 = vsub.s32 %v1737, %v1739
        %v1741 = vrot.slane %v1727, %v1740
        %v1742 = vcombine.high %v1734, 0.0
        %v1743 = vcombine.high %v1741, 0.0
        %v1744 = vpack.c.bf16 %v1734, %v1734
        %v1745 = vpack.c.bf16 %v1742, %v1742
        %v1746 = vpack.c.bf16 %v1741, %v1741
        %v1747 = vpack.c.bf16 %v1743, %v1743
        %1749 = vrot.lane.b32.xlu0 %v1583, 96
        %v1750 = vpop.permute.xlu0 %1749
        %1752 = vrot.lane.b32.xlu0 %v1583, 64
        %v1753 = vpop.permute.xlu0 %1752
        %1755 = vrot.lane.b32.xlu0 %v1583, 32
        %v1756 = vpop.permute.xlu0 %1755
        %v1758 = vcombine.low %v1583, %v1753
        %v1760 = vunpack.c.l.s4 1983009808
        %v1761 = vunpack.c.0.s8 %v1760
        %v1762 = vlaneseq
        %v1763 = vshrl.u32 %v1762, 7
        %v1764 = vsub.s32 %v1761, %v1763
        %v1765 = vrot.slane %v1758, %v1764
        %v1766 = vcombine.low %v1750, %v1756
        %v1768 = vunpack.c.l.s4 1983009808
        %v1769 = vunpack.c.0.s8 %v1768
        %v1770 = vlaneseq
        %v1771 = vshrl.u32 %v1770, 7
        %v1772 = vsub.s32 %v1769, %v1771
        %v1773 = vrot.slane %v1766, %v1772
        %v1774 = vcombine.low %v1765, %v1773
        %v1775 = vcombine.high %v1765, %v1773
        %v1777 = vunpack.c.l.s4 1934713408
        %v1778 = vunpack.c.0.s8 %v1777
        %v1779 = vlaneseq
        %v1780 = vshrl.u32 %v1779, 7
        %v1781 = vsub.s32 %v1778, %v1780
        %v1782 = vrot.slane %v1774, %v1781
        %v1784 = vunpack.c.l.s4 1934713408
        %v1785 = vunpack.c.0.s8 %v1784
        %v1786 = vlaneseq
        %v1787 = vshrl.u32 %v1786, 7
        %v1788 = vsub.s32 %v1785, %v1787
        %v1789 = vrot.slane %v1775, %v1788
        %v1790 = vcombine.low %v1782, %v1789
        %v1792 = vunpack.c.l.s4 1983009808
        %v1793 = vunpack.c.0.s8 %v1792
        %v1794 = vlaneseq
        %v1795 = vshrl.u32 %v1794, 7
        %v1796 = vsub.s32 %v1793, %v1795
        %v1797 = vrot.slane %v1790, %v1796
        %v1798 = vcombine.high %v1782, 0.0
        %v1800 = vunpack.c.l.s4 1983009808
        %v1801 = vunpack.c.0.s8 %v1800
        %v1802 = vlaneseq
        %v1803 = vshrl.u32 %v1802, 7
        %v1804 = vsub.s32 %v1801, %v1803
        %v1805 = vrot.slane %v1798, %v1804
        %v1806 = vcombine.low %v1797, %v1805
        %v1807 = vcombine.high %v1797, %v1805
        %v1809 = vunpack.c.l.s4 1934713408
        %v1810 = vunpack.c.0.s8 %v1809
        %v1811 = vlaneseq
        %v1812 = vshrl.u32 %v1811, 7
        %v1813 = vsub.s32 %v1810, %v1812
        %v1814 = vrot.slane %v1806, %v1813
        %v1816 = vunpack.c.l.s4 1934713408
        %v1817 = vunpack.c.0.s8 %v1816
        %v1818 = vlaneseq
        %v1819 = vshrl.u32 %v1818, 7
        %v1820 = vsub.s32 %v1817, %v1819
        %v1821 = vrot.slane %v1807, %v1820
        %v1822 = vcombine.high %v1814, 0.0
        %v1823 = vcombine.high %v1821, 0.0
        %v1824 = vpack.c.bf16 %v1814, %v1814
        %v1825 = vpack.c.bf16 %v1822, %v1822
        %v1826 = vpack.c.bf16 %v1821, %v1821
        %v1827 = vpack.c.bf16 %v1823, %v1823
        %vm1828 = vcmask 261120
        %v1830 = vsel %vm1828, %v1664, 0
        %v1833 = vsel %vm1828, %v1744, 0
        %1835 = vmatprep.subr.bf16.mxu0 0
        %1836 = vmatpush1.bf16.xpose.msra.mxu0 %v1833
        %1837 = vmatprep.subr.bf16.mxu0 0
        %1838 = vmatpush1.bf16.xpose.msra.mxu0 0
        %1839 = vmatprep.subr.bf16.mxu0 0
        %1840 = vmatpush1.bf16.xpose.msra.mxu0 0
        %1841 = vmatprep.subr.bf16.mxu0 0
        %1842 = vmatpush1.bf16.xpose.msra.mxu0 0
        %1843 = vmatprep.subr.bf16.mxu0 0
        %1844 = vmatpush1.bf16.xpose.msra.mxu0 0
        %1845 = vmatprep.subr.bf16.mxu0 0
        %1846 = vmatpush1.bf16.xpose.msra.mxu0 0
        %1847 = vmatprep.subr.bf16.mxu0 0
        %1848 = vmatpush1.bf16.xpose.msra.mxu0 0
        %1849 = vmatprep.subr.bf16.mxu0 0
        %1850 = vmatpush1.bf16.xpose.msra.mxu0 0
        %1851 = vmatprep.subr.bf16.mxu0 0
        %1852 = vmatpush1.bf16.xpose.msra.mxu0 0
        %1853 = vmatprep.subr.bf16.mxu0 0
        %1854 = vmatpush1.bf16.xpose.msra.mxu0 0
        %1855 = vmatprep.subr.bf16.mxu0 0
        %1856 = vmatpush1.bf16.xpose.msra.mxu0 0
        %1857 = vmatprep.subr.bf16.mxu0 0
        %1858 = vmatpush1.bf16.xpose.msra.mxu0 0
        %1859 = vmatprep.subr.bf16.mxu0 0
        %1860 = vmatpush1.bf16.xpose.msra.mxu0 0
        %1861 = vmatprep.subr.bf16.mxu0 0
        %1862 = vmatpush1.bf16.xpose.msra.mxu0 0
        %1863 = vmatprep.subr.bf16.mxu0 0
        %1864 = vmatpush1.bf16.xpose.msra.mxu0 0
        %1865 = vmatprep.subr.bf16.mxu0 0
        %1866 = vmatpush1.bf16.xpose.msra.mxu0 0
        %1867 = vmatprep.mubr.bf16.mxu0 0
        %1868 = vmatmul.mubr.bf16.gmra.mrb[0].mxu0 %v1830
        %v1869 = vpop.f32.mrb[0].mxu0
        %v1870 = vadd.f32 0.0, %v1869
        %v1871 = vpop.f32.mrb[0].mxu0
        %v1872 = vpop.f32.mrb[0].mxu0
        %v1873 = vpop.f32.mrb[0].mxu0
        %1874 = vdwg.mxu0
        %v1876 = vsel %vm1828, %v1665, 0
        %v1879 = vsel %vm1828, %v1745, 0
        %1881 = vmatprep.subr.bf16.mxu0 0
        %1882 = vmatpush1.bf16.xpose.msra.mxu0 %v1879
        %1883 = vmatprep.subr.bf16.mxu0 0
        %1884 = vmatpush1.bf16.xpose.msra.mxu0 0
        %1885 = vmatprep.subr.bf16.mxu0 0
        %1886 = vmatpush1.bf16.xpose.msra.mxu0 0
        %1887 = vmatprep.subr.bf16.mxu0 0
        %1888 = vmatpush1.bf16.xpose.msra.mxu0 0
        %1889 = vmatprep.subr.bf16.mxu0 0
        %1890 = vmatpush1.bf16.xpose.msra.mxu0 0
        %1891 = vmatprep.subr.bf16.mxu0 0
        %1892 = vmatpush1.bf16.xpose.msra.mxu0 0
        %1893 = vmatprep.subr.bf16.mxu0 0
        %1894 = vmatpush1.bf16.xpose.msra.mxu0 0
        %1895 = vmatprep.subr.bf16.mxu0 0
        %1896 = vmatpush1.bf16.xpose.msra.mxu0 0
        %1897 = vmatprep.subr.bf16.mxu0 0
        %1898 = vmatpush1.bf16.xpose.msra.mxu0 0
        %1899 = vmatprep.subr.bf16.mxu0 0
        %1900 = vmatpush1.bf16.xpose.msra.mxu0 0
        %1901 = vmatprep.subr.bf16.mxu0 0
        %1902 = vmatpush1.bf16.xpose.msra.mxu0 0
        %1903 = vmatprep.subr.bf16.mxu0 0
        %1904 = vmatpush1.bf16.xpose.msra.mxu0 0
        %1905 = vmatprep.subr.bf16.mxu0 0
        %1906 = vmatpush1.bf16.xpose.msra.mxu0 0
        %1907 = vmatprep.subr.bf16.mxu0 0
        %1908 = vmatpush1.bf16.xpose.msra.mxu0 0
        %1909 = vmatprep.subr.bf16.mxu0 0
        %1910 = vmatpush1.bf16.xpose.msra.mxu0 0
        %1911 = vmatprep.subr.bf16.mxu0 0
        %1912 = vmatpush1.bf16.xpose.msra.mxu0 0
        %1913 = vmatprep.mubr.bf16.mxu0 0
        %1914 = vmatmul.mubr.bf16.gmra.mrb[0].mxu0 %v1876
        %v1915 = vpop.f32.mrb[0].mxu0
        %v1916 = vadd.f32 0.0, %v1915
        %v1917 = vpop.f32.mrb[0].mxu0
        %v1918 = vpop.f32.mrb[0].mxu0
        %v1919 = vpop.f32.mrb[0].mxu0
        %1920 = vdwg.mxu0
        %v1922 = vsel %vm1828, %v1666, 0
        %v1925 = vsel %vm1828, %v1746, 0
        %1927 = vmatprep.subr.bf16.mxu0 0
        %1928 = vmatpush1.bf16.xpose.msra.mxu0 %v1925
        %1929 = vmatprep.subr.bf16.mxu0 0
        %1930 = vmatpush1.bf16.xpose.msra.mxu0 0
        %1931 = vmatprep.subr.bf16.mxu0 0
        %1932 = vmatpush1.bf16.xpose.msra.mxu0 0
        %1933 = vmatprep.subr.bf16.mxu0 0
        %1934 = vmatpush1.bf16.xpose.msra.mxu0 0
        %1935 = vmatprep.subr.bf16.mxu0 0
        %1936 = vmatpush1.bf16.xpose.msra.mxu0 0
        %1937 = vmatprep.subr.bf16.mxu0 0
        %1938 = vmatpush1.bf16.xpose.msra.mxu0 0
        %1939 = vmatprep.subr.bf16.mxu0 0
        %1940 = vmatpush1.bf16.xpose.msra.mxu0 0
        %1941 = vmatprep.subr.bf16.mxu0 0
        %1942 = vmatpush1.bf16.xpose.msra.mxu0 0
        %1943 = vmatprep.subr.bf16.mxu0 0
        %1944 = vmatpush1.bf16.xpose.msra.mxu0 0
        %1945 = vmatprep.subr.bf16.mxu0 0
        %1946 = vmatpush1.bf16.xpose.msra.mxu0 0
        %1947 = vmatprep.subr.bf16.mxu0 0
        %1948 = vmatpush1.bf16.xpose.msra.mxu0 0
        %1949 = vmatprep.subr.bf16.mxu0 0
        %1950 = vmatpush1.bf16.xpose.msra.mxu0 0
        %1951 = vmatprep.subr.bf16.mxu0 0
        %1952 = vmatpush1.bf16.xpose.msra.mxu0 0
        %1953 = vmatprep.subr.bf16.mxu0 0
        %1954 = vmatpush1.bf16.xpose.msra.mxu0 0
        %1955 = vmatprep.subr.bf16.mxu0 0
        %1956 = vmatpush1.bf16.xpose.msra.mxu0 0
        %1957 = vmatprep.subr.bf16.mxu0 0
        %1958 = vmatpush1.bf16.xpose.msra.mxu0 0
        %1959 = vmatprep.mubr.bf16.mxu0 0
        %1960 = vmatmul.mubr.bf16.gmra.mrb[0].mxu0 %v1922
        %v1961 = vpop.f32.mrb[0].mxu0
        %v1962 = vadd.f32 0.0, %v1961
        %v1963 = vpop.f32.mrb[0].mxu0
        %v1964 = vpop.f32.mrb[0].mxu0
        %v1965 = vpop.f32.mrb[0].mxu0
        %1966 = vdwg.mxu0
        %v1968 = vsel %vm1828, %v1667, 0
        %v1971 = vsel %vm1828, %v1747, 0
        %1973 = vmatprep.subr.bf16.mxu0 0
        %1974 = vmatpush1.bf16.xpose.msra.mxu0 %v1971
        %1975 = vmatprep.subr.bf16.mxu0 0
        %1976 = vmatpush1.bf16.xpose.msra.mxu0 0
        %1977 = vmatprep.subr.bf16.mxu0 0
        %1978 = vmatpush1.bf16.xpose.msra.mxu0 0
        %1979 = vmatprep.subr.bf16.mxu0 0
        %1980 = vmatpush1.bf16.xpose.msra.mxu0 0
        %1981 = vmatprep.subr.bf16.mxu0 0
        %1982 = vmatpush1.bf16.xpose.msra.mxu0 0
        %1983 = vmatprep.subr.bf16.mxu0 0
        %1984 = vmatpush1.bf16.xpose.msra.mxu0 0
        %1985 = vmatprep.subr.bf16.mxu0 0
        %1986 = vmatpush1.bf16.xpose.msra.mxu0 0
        %1987 = vmatprep.subr.bf16.mxu0 0
        %1988 = vmatpush1.bf16.xpose.msra.mxu0 0
        %1989 = vmatprep.subr.bf16.mxu0 0
        %1990 = vmatpush1.bf16.xpose.msra.mxu0 0
        %1991 = vmatprep.subr.bf16.mxu0 0
        %1992 = vmatpush1.bf16.xpose.msra.mxu0 0
        %1993 = vmatprep.subr.bf16.mxu0 0
        %1994 = vmatpush1.bf16.xpose.msra.mxu0 0
        %1995 = vmatprep.subr.bf16.mxu0 0
        %1996 = vmatpush1.bf16.xpose.msra.mxu0 0
        %1997 = vmatprep.subr.bf16.mxu0 0
        %1998 = vmatpush1.bf16.xpose.msra.mxu0 0
        %1999 = vmatprep.subr.bf16.mxu0 0
        %2000 = vmatpush1.bf16.xpose.msra.mxu0 0
        %2001 = vmatprep.subr.bf16.mxu0 0
        %2002 = vmatpush1.bf16.xpose.msra.mxu0 0
        %2003 = vmatprep.subr.bf16.mxu0 0
        %2004 = vmatpush1.bf16.xpose.msra.mxu0 0
        %2005 = vmatprep.mubr.bf16.mxu0 0
        %2006 = vmatmul.mubr.bf16.gmra.mrb[0].mxu0 %v1968
        %v2007 = vpop.f32.mrb[0].mxu0
        %v2008 = vadd.f32 0.0, %v2007
        %v2009 = vpop.f32.mrb[0].mxu0
        %v2010 = vpop.f32.mrb[0].mxu0
        %v2011 = vpop.f32.mrb[0].mxu0
        %2012 = vdwg.mxu0
        %v2013 = vmul.f32 %v1870, 0.17677669
        %v2014 = vmul.f32 %v1916, 0.17677669
        %v2015 = vmul.f32 %v1962, 0.17677669
        %v2016 = vmul.f32 %v2008, 0.17677669
        %vm2017 = vcmask 18432
        %v2018 = vsel %vm2017, %v2013, -inf
        %2019 = vmax.xlane.f32.xlu0 %v2018
        %v2020 = vpop.xlane.xlu0 %2019
        %v2021 = vsel %vm2017, %v2014, -inf
        %2022 = vmax.xlane.f32.xlu0 %v2021
        %v2023 = vpop.xlane.xlu0 %2022
        %v2024 = vsel %vm2017, %v2015, -inf
        %2025 = vmax.xlane.f32.xlu0 %v2024
        %v2026 = vpop.xlane.xlu0 %2025
        %v2027 = vsel %vm2017, %v2016, -inf
        %2028 = vmax.xlane.f32.xlu0 %v2027
        %v2029 = vpop.xlane.xlu0 %2028
        %v2030 = vsub.f32 %v2013, %v2020
        %v2031 = vsub.f32 %v2014, %v2023
        %v2032 = vsub.f32 %v2015, %v2026
        %v2033 = vsub.f32 %v2016, %v2029
        %v2034 = vmul.f32 %v2030, 1.442695
        %v2035 = vpow.pop %v2034
        %v2036 = vmul.f32 %v2031, 1.442695
        %v2037 = vpow.pop %v2036
        %v2038 = vmul.f32 %v2032, 1.442695
        %v2039 = vpow.pop %v2038
        %v2040 = vmul.f32 %v2033, 1.442695
        %v2041 = vpow.pop %v2040
        %v2042 = vsel %vm2017, %v2035, 0.0
        %2043 = vadd.xlane.f32.xlu0 %v2042
        %v2044 = vpop.xlane.xlu0 %2043
        %v2045 = vsel %vm2017, %v2037, 0.0
        %2046 = vadd.xlane.f32.xlu0 %v2045
        %v2047 = vpop.xlane.xlu0 %2046
        %v2048 = vsel %vm2017, %v2039, 0.0
        %2049 = vadd.xlane.f32.xlu0 %v2048
        %v2050 = vpop.xlane.xlu0 %2049
        %v2051 = vsel %vm2017, %v2041, 0.0
        %2052 = vadd.xlane.f32.xlu0 %v2051
        %v2053 = vpop.xlane.xlu0 %2052
        %v2054 = vrcp.pop %v2044
        %v2055 = vrcp.pop %v2047
        %v2056 = vrcp.pop %v2050
        %v2057 = vrcp.pop %v2053
        %v2058 = vmul.f32 %v2035, %v2054
        %v2059 = vmul.f32 %v2037, %v2055
        %v2060 = vmul.f32 %v2039, %v2056
        %v2061 = vmul.f32 %v2041, %v2057
        %v2062 = vpack.c.bf16 %v2058, %v2058
        %v2063 = vpack.c.bf16 %v2059, %v2059
        %v2064 = vpack.c.bf16 %v2060, %v2060
        %v2065 = vpack.c.bf16 %v2061, %v2061
        %vm2066 = vcmask 23552
        %v2068 = vsel %vm2066, %v2062, 0
        %vm2070 = vcmask 1040384
        %vm2071 = vcmask 1041408
        %v2072 = vsel %vm2070, 4294967295, 65535
        %v2073 = vsel %vm2071, %v2072, 0
        %v2075 = vand.u32 %v1824, %v2073
        %2077 = vmatprep.subr.bf16.mxu0 0
        %2078 = vmatpush1.bf16.msra.mxu0 %v2075
        %2079 = vmatprep.subr.bf16.mxu0 0
        %2080 = vmatpush1.bf16.msra.mxu0 0
        %2081 = vmatprep.subr.bf16.mxu0 0
        %2082 = vmatpush1.bf16.msra.mxu0 0
        %2083 = vmatprep.subr.bf16.mxu0 0
        %2084 = vmatpush1.bf16.msra.mxu0 0
        %2085 = vmatprep.subr.bf16.mxu0 0
        %2086 = vmatpush1.bf16.msra.mxu0 0
        %2087 = vmatprep.subr.bf16.mxu0 0
        %2088 = vmatpush1.bf16.msra.mxu0 0
        %2089 = vmatprep.subr.bf16.mxu0 0
        %2090 = vmatpush1.bf16.msra.mxu0 0
        %2091 = vmatprep.subr.bf16.mxu0 0
        %2092 = vmatpush1.bf16.msra.mxu0 0
        %2093 = vmatprep.subr.bf16.mxu0 0
        %2094 = vmatpush1.bf16.msra.mxu0 0
        %2095 = vmatprep.subr.bf16.mxu0 0
        %2096 = vmatpush1.bf16.msra.mxu0 0
        %2097 = vmatprep.subr.bf16.mxu0 0
        %2098 = vmatpush1.bf16.msra.mxu0 0
        %2099 = vmatprep.subr.bf16.mxu0 0
        %2100 = vmatpush1.bf16.msra.mxu0 0
        %2101 = vmatprep.subr.bf16.mxu0 0
        %2102 = vmatpush1.bf16.msra.mxu0 0
        %2103 = vmatprep.subr.bf16.mxu0 0
        %2104 = vmatpush1.bf16.msra.mxu0 0
        %2105 = vmatprep.subr.bf16.mxu0 0
        %2106 = vmatpush1.bf16.msra.mxu0 0
        %2107 = vmatprep.subr.bf16.mxu0 0
        %2108 = vmatpush1.bf16.msra.mxu0 0
        %2109 = vmatprep.mubr.bf16.mxu0 0
        %2110 = vmatmul.mubr.bf16.gmra.mrb[0].mxu0 %v2068
        %v2111 = vpop.f32.mrb[0].mxu0
        %v2112 = vadd.f32 0.0, %v2111
        %v2113 = vpop.f32.mrb[0].mxu0
        %v2114 = vpop.f32.mrb[0].mxu0
        %v2115 = vpop.f32.mrb[0].mxu0
        %2116 = vdwg.mxu0
        %v2118 = vsel %vm2066, %v2063, 0
        %v2121 = vand.u32 %v1825, %v2073
        %2123 = vmatprep.subr.bf16.mxu0 0
        %2124 = vmatpush1.bf16.msra.mxu0 %v2121
        %2125 = vmatprep.subr.bf16.mxu0 0
        %2126 = vmatpush1.bf16.msra.mxu0 0
        %2127 = vmatprep.subr.bf16.mxu0 0
        %2128 = vmatpush1.bf16.msra.mxu0 0
        %2129 = vmatprep.subr.bf16.mxu0 0
        %2130 = vmatpush1.bf16.msra.mxu0 0
        %2131 = vmatprep.subr.bf16.mxu0 0
        %2132 = vmatpush1.bf16.msra.mxu0 0
        %2133 = vmatprep.subr.bf16.mxu0 0
        %2134 = vmatpush1.bf16.msra.mxu0 0
        %2135 = vmatprep.subr.bf16.mxu0 0
        %2136 = vmatpush1.bf16.msra.mxu0 0
        %2137 = vmatprep.subr.bf16.mxu0 0
        %2138 = vmatpush1.bf16.msra.mxu0 0
        %2139 = vmatprep.subr.bf16.mxu0 0
        %2140 = vmatpush1.bf16.msra.mxu0 0
        %2141 = vmatprep.subr.bf16.mxu0 0
        %2142 = vmatpush1.bf16.msra.mxu0 0
        %2143 = vmatprep.subr.bf16.mxu0 0
        %2144 = vmatpush1.bf16.msra.mxu0 0
        %2145 = vmatprep.subr.bf16.mxu0 0
        %2146 = vmatpush1.bf16.msra.mxu0 0
        %2147 = vmatprep.subr.bf16.mxu0 0
        %2148 = vmatpush1.bf16.msra.mxu0 0
        %2149 = vmatprep.subr.bf16.mxu0 0
        %2150 = vmatpush1.bf16.msra.mxu0 0
        %2151 = vmatprep.subr.bf16.mxu0 0
        %2152 = vmatpush1.bf16.msra.mxu0 0
        %2153 = vmatprep.subr.bf16.mxu0 0
        %2154 = vmatpush1.bf16.msra.mxu0 0
        %2155 = vmatprep.mubr.bf16.mxu0 0
        %2156 = vmatmul.mubr.bf16.gmra.mrb[0].mxu0 %v2118
        %v2157 = vpop.f32.mrb[0].mxu0
        %v2158 = vadd.f32 0.0, %v2157
        %v2159 = vpop.f32.mrb[0].mxu0
        %v2160 = vpop.f32.mrb[0].mxu0
        %v2161 = vpop.f32.mrb[0].mxu0
        %2162 = vdwg.mxu0
        %v2164 = vsel %vm2066, %v2064, 0
        %v2167 = vand.u32 %v1826, %v2073
        %2169 = vmatprep.subr.bf16.mxu0 0
        %2170 = vmatpush1.bf16.msra.mxu0 %v2167
        %2171 = vmatprep.subr.bf16.mxu0 0
        %2172 = vmatpush1.bf16.msra.mxu0 0
        %2173 = vmatprep.subr.bf16.mxu0 0
        %2174 = vmatpush1.bf16.msra.mxu0 0
        %2175 = vmatprep.subr.bf16.mxu0 0
        %2176 = vmatpush1.bf16.msra.mxu0 0
        %2177 = vmatprep.subr.bf16.mxu0 0
        %2178 = vmatpush1.bf16.msra.mxu0 0
        %2179 = vmatprep.subr.bf16.mxu0 0
        %2180 = vmatpush1.bf16.msra.mxu0 0
        %2181 = vmatprep.subr.bf16.mxu0 0
        %2182 = vmatpush1.bf16.msra.mxu0 0
        %2183 = vmatprep.subr.bf16.mxu0 0
        %2184 = vmatpush1.bf16.msra.mxu0 0
        %2185 = vmatprep.subr.bf16.mxu0 0
        %2186 = vmatpush1.bf16.msra.mxu0 0
        %2187 = vmatprep.subr.bf16.mxu0 0
        %2188 = vmatpush1.bf16.msra.mxu0 0
        %2189 = vmatprep.subr.bf16.mxu0 0
        %2190 = vmatpush1.bf16.msra.mxu0 0
        %2191 = vmatprep.subr.bf16.mxu0 0
        %2192 = vmatpush1.bf16.msra.mxu0 0
        %2193 = vmatprep.subr.bf16.mxu0 0
        %2194 = vmatpush1.bf16.msra.mxu0 0
        %2195 = vmatprep.subr.bf16.mxu0 0
        %2196 = vmatpush1.bf16.msra.mxu0 0
        %2197 = vmatprep.subr.bf16.mxu0 0
        %2198 = vmatpush1.bf16.msra.mxu0 0
        %2199 = vmatprep.subr.bf16.mxu0 0
        %2200 = vmatpush1.bf16.msra.mxu0 0
        %2201 = vmatprep.mubr.bf16.mxu0 0
        %2202 = vmatmul.mubr.bf16.gmra.mrb[0].mxu0 %v2164
        %v2203 = vpop.f32.mrb[0].mxu0
        %v2204 = vadd.f32 0.0, %v2203
        %v2205 = vpop.f32.mrb[0].mxu0
        %v2206 = vpop.f32.mrb[0].mxu0
        %v2207 = vpop.f32.mrb[0].mxu0
        %2208 = vdwg.mxu0
        %v2210 = vsel %vm2066, %v2065, 0
        %v2213 = vand.u32 %v1827, %v2073
        %2215 = vmatprep.subr.bf16.mxu0 0
        %2216 = vmatpush1.bf16.msra.mxu0 %v2213
        %2217 = vmatprep.subr.bf16.mxu0 0
        %2218 = vmatpush1.bf16.msra.mxu0 0
        %2219 = vmatprep.subr.bf16.mxu0 0
        %2220 = vmatpush1.bf16.msra.mxu0 0
        %2221 = vmatprep.subr.bf16.mxu0 0
        %2222 = vmatpush1.bf16.msra.mxu0 0
        %2223 = vmatprep.subr.bf16.mxu0 0
        %2224 = vmatpush1.bf16.msra.mxu0 0
        %2225 = vmatprep.subr.bf16.mxu0 0
        %2226 = vmatpush1.bf16.msra.mxu0 0
        %2227 = vmatprep.subr.bf16.mxu0 0
        %2228 = vmatpush1.bf16.msra.mxu0 0
        %2229 = vmatprep.subr.bf16.mxu0 0
        %2230 = vmatpush1.bf16.msra.mxu0 0
        %2231 = vmatprep.subr.bf16.mxu0 0
        %2232 = vmatpush1.bf16.msra.mxu0 0
        %2233 = vmatprep.subr.bf16.mxu0 0
        %2234 = vmatpush1.bf16.msra.mxu0 0
        %2235 = vmatprep.subr.bf16.mxu0 0
        %2236 = vmatpush1.bf16.msra.mxu0 0
        %2237 = vmatprep.subr.bf16.mxu0 0
        %2238 = vmatpush1.bf16.msra.mxu0 0
        %2239 = vmatprep.subr.bf16.mxu0 0
        %2240 = vmatpush1.bf16.msra.mxu0 0
        %2241 = vmatprep.subr.bf16.mxu0 0
        %2242 = vmatpush1.bf16.msra.mxu0 0
        %2243 = vmatprep.subr.bf16.mxu0 0
        %2244 = vmatpush1.bf16.msra.mxu0 0
        %2245 = vmatprep.subr.bf16.mxu0 0
        %2246 = vmatpush1.bf16.msra.mxu0 0
        %2247 = vmatprep.mubr.bf16.mxu0 0
        %2248 = vmatmul.mubr.bf16.gmra.mrb[0].mxu0 %v2210
        %v2249 = vpop.f32.mrb[0].mxu0
        %v2250 = vadd.f32 0.0, %v2249
        %v2251 = vpop.f32.mrb[0].mxu0
        %v2252 = vpop.f32.mrb[0].mxu0
        %v2253 = vpop.f32.mrb[0].mxu0
        %2254 = vdwg.mxu0
        %v2255 = vcombine.low %v2112, %v2204
        %v2257 = vunpack.c.l.s4 1983009808
        %v2258 = vunpack.c.0.s8 %v2257
        %v2259 = vlaneseq
        %v2260 = vshrl.u32 %v2259, 7
        %v2261 = vsub.s32 %v2258, %v2260
        %v2262 = vrot.slane %v2255, %v2261
        %v2263 = vcombine.low %v2158, %v2250
        %v2265 = vunpack.c.l.s4 1983009808
        %v2266 = vunpack.c.0.s8 %v2265
        %v2267 = vlaneseq
        %v2268 = vshrl.u32 %v2267, 7
        %v2269 = vsub.s32 %v2266, %v2268
        %v2270 = vrot.slane %v2263, %v2269
        %v2271 = vcombine.low %v2262, %v2270
        %v2272 = vcombine.high %v2262, %v2270
        %v2274 = vunpack.c.l.s4 1934713408
        %v2275 = vunpack.c.0.s8 %v2274
        %v2276 = vlaneseq
        %v2277 = vshrl.u32 %v2276, 7
        %v2278 = vsub.s32 %v2275, %v2277
        %v2279 = vrot.slane %v2271, %v2278
        %v2281 = vunpack.c.l.s4 1934713408
        %v2282 = vunpack.c.0.s8 %v2281
        %v2283 = vlaneseq
        %v2284 = vshrl.u32 %v2283, 7
        %v2285 = vsub.s32 %v2282, %v2284
        %v2286 = vrot.slane %v2272, %v2285
        %v2287 = vcombine.low %v2279, %v2286
        %v2289 = vunpack.c.l.s4 1983009808
        %v2290 = vunpack.c.0.s8 %v2289
        %v2291 = vlaneseq
        %v2292 = vshrl.u32 %v2291, 7
        %v2293 = vsub.s32 %v2290, %v2292
        %v2294 = vrot.slane %v2287, %v2293
        %v2295 = vcombine.high %v2279, 0.0
        %v2297 = vunpack.c.l.s4 1983009808
        %v2298 = vunpack.c.0.s8 %v2297
        %v2299 = vlaneseq
        %v2300 = vshrl.u32 %v2299, 7
        %v2301 = vsub.s32 %v2298, %v2300
        %v2302 = vrot.slane %v2295, %v2301
        %v2303 = vcombine.low %v2294, %v2302
        %v2304 = vcombine.high %v2294, %v2302
        %v2306 = vunpack.c.l.s4 1934713408
        %v2307 = vunpack.c.0.s8 %v2306
        %v2308 = vlaneseq
        %v2309 = vshrl.u32 %v2308, 7
        %v2310 = vsub.s32 %v2307, %v2309
        %v2311 = vrot.slane %v2303, %v2310
        %v2313 = vunpack.c.l.s4 1934713408
        %v2314 = vunpack.c.0.s8 %v2313
        %v2315 = vlaneseq
        %v2316 = vshrl.u32 %v2315, 7
        %v2317 = vsub.s32 %v2314, %v2316
        %v2318 = vrot.slane %v2304, %v2317
        %v2319 = vcombine.high %v2311, 0.0
        %v2320 = vcombine.high %v2318, 0.0
        %2322 = vrot.lane.b32.xlu0 %v2319, 32
        %v2323 = vpop.permute.xlu0 %2322
        %2326 = vrot.lane.b32.xlu0 %v2318, 64
        %v2327 = vpop.permute.xlu0 %2326
        %2330 = vrot.lane.b32.xlu0 %v2320, 96
        %v2331 = vpop.permute.xlu0 %2330
        %v2333 = vsel %vm1828, %v2311, %v2323
        %vm2334 = vcmask 523264
        %v2335 = vsel %vm2334, %v2333, %v2327
        %vm2336 = vcmask 785408
        %v2337 = vsel %vm2336, %v2335, %v2331
        %v2338 = vpack.c.bf16 %v2337, %v2337
        %v2339 = vld [vmem:[%s1022] sm:$0xf]
        %v2340 = vld [vmem:[%s1022 + $0x4] sm:$0xf]
        %v2341 = vld [vmem:[%s1022 + $0x8] sm:$0xf]
        %v2342 = vld [vmem:[%s1022 + $0xc] sm:$0xf]
        %v2343 = vld [vmem:[%s1022 + $0x10] sm:$0xf]
        %v2344 = vld [vmem:[%s1022 + $0x14] sm:$0xf]
        %v2345 = vld [vmem:[%s1022 + $0x18] sm:$0xf]
        %v2346 = vld [vmem:[%s1022 + $0x1c] sm:$0xf]
        %v2347 = vld [vmem:[%s1022 + $0x20] sm:$0xf]
        %v2348 = vld [vmem:[%s1022 + $0x24] sm:$0xf]
        %v2349 = vld [vmem:[%s1022 + $0x28] sm:$0xf]
        %v2350 = vld [vmem:[%s1022 + $0x2c] sm:$0xf]
        %v2351 = vld [vmem:[%s1022 + $0x30] sm:$0xf]
        %v2352 = vld [vmem:[%s1022 + $0x34] sm:$0xf]
        %v2353 = vld [vmem:[%s1022 + $0x38] sm:$0xf]
        %v2354 = vld [vmem:[%s1022 + $0x3c] sm:$0xf]
        %v2355 = vld [vmem:[%s1030] sm:$0x1]
        %v2357 = vlaneseq
        %v2358 = vshrl.u32 %v2357, 7
        %v2359 = vsub.s32 0, %v2358
        %v2360 = vrot.slane %v2355, %v2359
        %v2378 = vunpack.c.l.b16 %v2339
        %v2379 = vunpack.c.l.b16 %v2340
        %v2380 = vunpack.c.l.b16 %v2341
        %v2381 = vunpack.c.l.b16 %v2342
        %v2382 = vunpack.c.l.b16 %v2343
        %v2383 = vunpack.c.l.b16 %v2344
        %v2384 = vunpack.c.l.b16 %v2345
        %v2385 = vunpack.c.l.b16 %v2346
        %v2386 = vunpack.c.l.b16 %v2347
        %v2387 = vunpack.c.l.b16 %v2348
        %v2388 = vunpack.c.l.b16 %v2349
        %v2389 = vunpack.c.l.b16 %v2350
        %v2390 = vunpack.c.l.b16 %v2351
        %v2391 = vunpack.c.l.b16 %v2352
        %v2392 = vunpack.c.l.b16 %v2353
        %v2393 = vunpack.c.l.b16 %v2354
        %v2394 = vpack.c.b16 %v2379, %v2378
        %v2395 = vpack.c.b16 %v2381, %v2380
        %v2396 = vpack.c.b16 %v2383, %v2382
        %v2397 = vpack.c.b16 %v2385, %v2384
        %v2398 = vpack.c.b16 %v2387, %v2386
        %v2399 = vpack.c.b16 %v2389, %v2388
        %v2400 = vpack.c.b16 %v2391, %v2390
        %v2401 = vpack.c.b16 %v2393, %v2392
        %2410 = vmatprep.subr.bf16.mxu0 0
        %2411 = vmatpush1.bf16.msra.mxu0 %v2394
        %2412 = vmatprep.subr.bf16.mxu0 0
        %2413 = vmatpush1.bf16.msra.mxu0 %v2395
        %2414 = vmatprep.subr.bf16.mxu0 0
        %2415 = vmatpush1.bf16.msra.mxu0 %v2396
        %2416 = vmatprep.subr.bf16.mxu0 0
        %2417 = vmatpush1.bf16.msra.mxu0 %v2397
        %2418 = vmatprep.subr.bf16.mxu0 0
        %2419 = vmatpush1.bf16.msra.mxu0 %v2398
        %2420 = vmatprep.subr.bf16.mxu0 0
        %2421 = vmatpush1.bf16.msra.mxu0 %v2399
        %2422 = vmatprep.subr.bf16.mxu0 0
        %2423 = vmatpush1.bf16.msra.mxu0 %v2400
        %2424 = vmatprep.subr.bf16.mxu0 0
        %2425 = vmatpush1.bf16.msra.mxu0 %v2401
        %2426 = vmatprep.subr.bf16.mxu0 0
        %2427 = vmatpush1.bf16.msra.mxu0 0
        %2428 = vmatprep.subr.bf16.mxu0 0
        %2429 = vmatpush1.bf16.msra.mxu0 0
        %2430 = vmatprep.subr.bf16.mxu0 0
        %2431 = vmatpush1.bf16.msra.mxu0 0
        %2432 = vmatprep.subr.bf16.mxu0 0
        %2433 = vmatpush1.bf16.msra.mxu0 0
        %2434 = vmatprep.subr.bf16.mxu0 0
        %2435 = vmatpush1.bf16.msra.mxu0 0
        %2436 = vmatprep.subr.bf16.mxu0 0
        %2437 = vmatpush1.bf16.msra.mxu0 0
        %2438 = vmatprep.subr.bf16.mxu0 0
        %2439 = vmatpush1.bf16.msra.mxu0 0
        %2440 = vmatprep.subr.bf16.mxu0 0
        %2441 = vmatpush1.bf16.msra.mxu0 0
        %2442 = vmatprep.mubr.bf16.mxu0 0
        %2443 = vmatmul.mubr.bf16.gmra.mrb[0].mxu0 %v2338
        %v2444 = vpop.f32.mrb[0].mxu0
        %v2445 = vadd.f32 %v2360, %v2444
        %v2446 = vpop.f32.mrb[0].mxu0
        %v2447 = vpop.f32.mrb[0].mxu0
        %v2448 = vpop.f32.mrb[0].mxu0
        %2449 = vdwg.mxu0
        %v2450 = vadd.f32 %v2445, %v1222
        %v2451 = vld [vmem:[%s1038] sm:$0x1]
        %v2452 = vld [vmem:[%s1046] sm:$0x1]
        %v2453 = vsel %vm1225, %v2450, 0.0
        %2454 = vadd.xlane.f32.xlu0 %v2453
        %v2455 = vpop.xlane.xlu0 %2454
        %v2456 = vmul.f32 %v2455, %v1229
        %v2457 = vsub.f32 %v2450, %v2456
        %v2458 = vmul.f32 %v2457, %v2457
        %v2459 = vsel %vm1225, %v2458, 0.0
        %2460 = vadd.xlane.f32.xlu0 %v2459
        %v2461 = vpop.xlane.xlu0 %2460
        %v2462 = vmul.f32 %v2461, %v1229
        %v2463 = vadd.f32 %v2462, 1e-05
        %v2464 = vrsqrt.pop %v2463
        %v2465 = vmul.f32 %v2457, %v2464
        %v2467 = vlaneseq
        %v2468 = vshrl.u32 %v2467, 7
        %v2469 = vsub.s32 0, %v2468
        %v2470 = vrot.slane %v2451, %v2469
        %v2472 = vmul.f32 %v2465, %v2470
        %v2474 = vlaneseq
        %v2475 = vshrl.u32 %v2474, 7
        %v2476 = vsub.s32 0, %v2475
        %v2477 = vrot.slane %v2452, %v2476
        %v2479 = vadd.f32 %v2472, %v2477
        %v2480 = vpack.c.bf16 %v2479, %v2479
        %v2481 = vld [vmem:[%s1055] sm:$0xff]
        %v2482 = vld [vmem:[%s1055 + $0x8] sm:$0xff]
        %v2483 = vld [vmem:[%s1055 + $0x10] sm:$0xff]
        %v2484 = vld [vmem:[%s1055 + $0x18] sm:$0xff]
        %v2485 = vld [vmem:[%s1055 + $0x20] sm:$0xff]
        %v2486 = vld [vmem:[%s1055 + $0x28] sm:$0xff]
        %v2487 = vld [vmem:[%s1055 + $0x30] sm:$0xff]
        %v2488 = vld [vmem:[%s1055 + $0x38] sm:$0xff]
        %v2489 = vld [vmem:[%s1055 + $0x40] sm:$0xff]
        %v2490 = vld [vmem:[%s1055 + $0x48] sm:$0xff]
        %v2491 = vld [vmem:[%s1055 + $0x50] sm:$0xff]
        %v2492 = vld [vmem:[%s1055 + $0x58] sm:$0xff]
        %v2493 = vld [vmem:[%s1055 + $0x60] sm:$0xff]
        %v2494 = vld [vmem:[%s1055 + $0x68] sm:$0xff]
        %v2495 = vld [vmem:[%s1055 + $0x70] sm:$0xff]
        %v2496 = vld [vmem:[%s1055 + $0x78] sm:$0xff]
        %v2497 = vld [vmem:[%s1055 + $0x80] sm:$0xff]
        %v2498 = vld [vmem:[%s1055 + $0x88] sm:$0xff]
        %v2499 = vld [vmem:[%s1055 + $0x90] sm:$0xff]
        %v2500 = vld [vmem:[%s1055 + $0x98] sm:$0xff]
        %v2501 = vld [vmem:[%s1055 + $0xa0] sm:$0xff]
        %v2502 = vld [vmem:[%s1055 + $0xa8] sm:$0xff]
        %v2503 = vld [vmem:[%s1055 + $0xb0] sm:$0xff]
        %v2504 = vld [vmem:[%s1055 + $0xb8] sm:$0xff]
        %v2505 = vld [vmem:[%s1055 + $0xc0] sm:$0xff]
        %v2506 = vld [vmem:[%s1055 + $0xc8] sm:$0xff]
        %v2507 = vld [vmem:[%s1055 + $0xd0] sm:$0xff]
        %v2508 = vld [vmem:[%s1055 + $0xd8] sm:$0xff]
        %v2509 = vld [vmem:[%s1055 + $0xe0] sm:$0xff]
        %v2510 = vld [vmem:[%s1055 + $0xe8] sm:$0xff]
        %v2511 = vld [vmem:[%s1055 + $0xf0] sm:$0xff]
        %v2512 = vld [vmem:[%s1055 + $0xf8] sm:$0xff]
        %v2513 = vld [vmem:[%s1064] sm:$0xf]
        %v2515 = vlaneseq
        %v2516 = vshrl.u32 %v2515, 7
        %v2517 = vsub.s32 0, %v2516
        %v2518 = vrot.slane %v2513, %v2517
        %v2519 = vlaneseq
        %v2520 = vshrl.u32 %v2519, 7
        %v2521 = vsub.s32 1, %v2520
        %v2522 = vrot.slane %v2513, %v2521
        %v2523 = vlaneseq
        %v2524 = vshrl.u32 %v2523, 7
        %v2525 = vsub.s32 2, %v2524
        %v2526 = vrot.slane %v2513, %v2525
        %v2527 = vlaneseq
        %v2528 = vshrl.u32 %v2527, 7
        %v2529 = vsub.s32 3, %v2528
        %v2530 = vrot.slane %v2513, %v2529
        %v2567 = vunpack.c.l.b16 %v2481
        %v2568 = vunpack.c.h.b16 %v2481
        %v2569 = vunpack.c.l.b16 %v2482
        %v2570 = vunpack.c.h.b16 %v2482
        %v2571 = vunpack.c.l.b16 %v2483
        %v2572 = vunpack.c.h.b16 %v2483
        %v2573 = vunpack.c.l.b16 %v2484
        %v2574 = vunpack.c.h.b16 %v2484
        %v2575 = vunpack.c.l.b16 %v2485
        %v2576 = vunpack.c.h.b16 %v2485
        %v2577 = vunpack.c.l.b16 %v2486
        %v2578 = vunpack.c.h.b16 %v2486
        %v2579 = vunpack.c.l.b16 %v2487
        %v2580 = vunpack.c.h.b16 %v2487
        %v2581 = vunpack.c.l.b16 %v2488
        %v2582 = vunpack.c.h.b16 %v2488
        %v2583 = vunpack.c.l.b16 %v2489
        %v2584 = vunpack.c.h.b16 %v2489
        %v2585 = vunpack.c.l.b16 %v2490
        %v2586 = vunpack.c.h.b16 %v2490
        %v2587 = vunpack.c.l.b16 %v2491
        %v2588 = vunpack.c.h.b16 %v2491
        %v2589 = vunpack.c.l.b16 %v2492
        %v2590 = vunpack.c.h.b16 %v2492
        %v2591 = vunpack.c.l.b16 %v2493
        %v2592 = vunpack.c.h.b16 %v2493
        %v2593 = vunpack.c.l.b16 %v2494
        %v2594 = vunpack.c.h.b16 %v2494
        %v2595 = vunpack.c.l.b16 %v2495
        %v2596 = vunpack.c.h.b16 %v2495
        %v2597 = vunpack.c.l.b16 %v2496
        %v2598 = vunpack.c.h.b16 %v2496
        %v2599 = vunpack.c.l.b16 %v2497
        %v2600 = vunpack.c.h.b16 %v2497
        %v2601 = vunpack.c.l.b16 %v2498
        %v2602 = vunpack.c.h.b16 %v2498
        %v2603 = vunpack.c.l.b16 %v2499
        %v2604 = vunpack.c.h.b16 %v2499
        %v2605 = vunpack.c.l.b16 %v2500
        %v2606 = vunpack.c.h.b16 %v2500
        %v2607 = vunpack.c.l.b16 %v2501
        %v2608 = vunpack.c.h.b16 %v2501
        %v2609 = vunpack.c.l.b16 %v2502
        %v2610 = vunpack.c.h.b16 %v2502
        %v2611 = vunpack.c.l.b16 %v2503
        %v2612 = vunpack.c.h.b16 %v2503
        %v2613 = vunpack.c.l.b16 %v2504
        %v2614 = vunpack.c.h.b16 %v2504
        %v2615 = vunpack.c.l.b16 %v2505
        %v2616 = vunpack.c.h.b16 %v2505
        %v2617 = vunpack.c.l.b16 %v2506
        %v2618 = vunpack.c.h.b16 %v2506
        %v2619 = vunpack.c.l.b16 %v2507
        %v2620 = vunpack.c.h.b16 %v2507
        %v2621 = vunpack.c.l.b16 %v2508
        %v2622 = vunpack.c.h.b16 %v2508
        %v2623 = vunpack.c.l.b16 %v2509
        %v2624 = vunpack.c.h.b16 %v2509
        %v2625 = vunpack.c.l.b16 %v2510
        %v2626 = vunpack.c.h.b16 %v2510
        %v2627 = vunpack.c.l.b16 %v2511
        %v2628 = vunpack.c.h.b16 %v2511
        %v2629 = vunpack.c.l.b16 %v2512
        %v2630 = vunpack.c.h.b16 %v2512
        %v2631 = vpack.c.b16 %v2571, %v2567
        %v2632 = vpack.c.b16 %v2572, %v2568
        %v2633 = vpack.c.b16 %v2573, %v2569
        %v2634 = vpack.c.b16 %v2574, %v2570
        %v2635 = vpack.c.b16 %v2579, %v2575
        %v2636 = vpack.c.b16 %v2580, %v2576
        %v2637 = vpack.c.b16 %v2581, %v2577
        %v2638 = vpack.c.b16 %v2582, %v2578
        %v2639 = vpack.c.b16 %v2587, %v2583
        %v2640 = vpack.c.b16 %v2588, %v2584
        %v2641 = vpack.c.b16 %v2589, %v2585
        %v2642 = vpack.c.b16 %v2590, %v2586
        %v2643 = vpack.c.b16 %v2595, %v2591
        %v2644 = vpack.c.b16 %v2596, %v2592
        %v2645 = vpack.c.b16 %v2597, %v2593
        %v2646 = vpack.c.b16 %v2598, %v2594
        %v2647 = vpack.c.b16 %v2603, %v2599
        %v2648 = vpack.c.b16 %v2604, %v2600
        %v2649 = vpack.c.b16 %v2605, %v2601
        %v2650 = vpack.c.b16 %v2606, %v2602
        %v2651 = vpack.c.b16 %v2611, %v2607
        %v2652 = vpack.c.b16 %v2612, %v2608
        %v2653 = vpack.c.b16 %v2613, %v2609
        %v2654 = vpack.c.b16 %v2614, %v2610
        %v2655 = vpack.c.b16 %v2619, %v2615
        %v2656 = vpack.c.b16 %v2620, %v2616
        %v2657 = vpack.c.b16 %v2621, %v2617
        %v2658 = vpack.c.b16 %v2622, %v2618
        %v2659 = vpack.c.b16 %v2627, %v2623
        %v2660 = vpack.c.b16 %v2628, %v2624
        %v2661 = vpack.c.b16 %v2629, %v2625
        %v2662 = vpack.c.b16 %v2630, %v2626
        %2695 = vmatprep.subr.bf16.mxu0 %v2632
        %2696 = vmatpush1.bf16.msra.mxu0 %v2631
        %2697 = vmatprep.subr.bf16.mxu0 %v2636
        %2698 = vmatpush1.bf16.msra.mxu0 %v2635
        %2699 = vmatprep.subr.bf16.mxu0 %v2640
        %2700 = vmatpush1.bf16.msra.mxu0 %v2639
        %2701 = vmatprep.subr.bf16.mxu0 %v2644
        %2702 = vmatpush1.bf16.msra.mxu0 %v2643
        %2703 = vmatprep.subr.bf16.mxu0 %v2648
        %2704 = vmatpush1.bf16.msra.mxu0 %v2647
        %2705 = vmatprep.subr.bf16.mxu0 %v2652
        %2706 = vmatpush1.bf16.msra.mxu0 %v2651
        %2707 = vmatprep.subr.bf16.mxu0 %v2656
        %2708 = vmatpush1.bf16.msra.mxu0 %v2655
        %2709 = vmatprep.subr.bf16.mxu0 %v2660
        %2710 = vmatpush1.bf16.msra.mxu0 %v2659
        %2711 = vmatprep.subr.bf16.mxu0 0
        %2712 = vmatpush1.bf16.msra.mxu0 0
        %2713 = vmatprep.subr.bf16.mxu0 0
        %2714 = vmatpush1.bf16.msra.mxu0 0
        %2715 = vmatprep.subr.bf16.mxu0 0
        %2716 = vmatpush1.bf16.msra.mxu0 0
        %2717 = vmatprep.subr.bf16.mxu0 0
        %2718 = vmatpush1.bf16.msra.mxu0 0
        %2719 = vmatprep.subr.bf16.mxu0 0
        %2720 = vmatpush1.bf16.msra.mxu0 0
        %2721 = vmatprep.subr.bf16.mxu0 0
        %2722 = vmatpush1.bf16.msra.mxu0 0
        %2723 = vmatprep.subr.bf16.mxu0 0
        %2724 = vmatpush1.bf16.msra.mxu0 0
        %2725 = vmatprep.subr.bf16.mxu0 0
        %2726 = vmatpush1.bf16.msra.mxu0 0
        %2727 = vmatprep.mubr.bf16.mxu0 0
        %2728 = vmatmul.mubr.bf16.gmra.mrb[0].mxu0 %v2480
        %v2729 = vpop.f32.mrb[0].mxu0
        %v2730 = vadd.f32 %v2518, %v2729
        %v2731 = vpop.f32.mrb[0].mxu0
        %v2732 = vadd.f32 %v2522, %v2731
        %v2733 = vpop.f32.mrb[0].mxu0
        %v2734 = vpop.f32.mrb[0].mxu0
        %2735 = vdwg.mxu0
        %2736 = vmatprep.subr.bf16.mxu0 %v2634
        %2737 = vmatpush1.bf16.msra.mxu0 %v2633
        %2738 = vmatprep.subr.bf16.mxu0 %v2638
        %2739 = vmatpush1.bf16.msra.mxu0 %v2637
        %2740 = vmatprep.subr.bf16.mxu0 %v2642
        %2741 = vmatpush1.bf16.msra.mxu0 %v2641
        %2742 = vmatprep.subr.bf16.mxu0 %v2646
        %2743 = vmatpush1.bf16.msra.mxu0 %v2645
        %2744 = vmatprep.subr.bf16.mxu0 %v2650
        %2745 = vmatpush1.bf16.msra.mxu0 %v2649
        %2746 = vmatprep.subr.bf16.mxu0 %v2654
        %2747 = vmatpush1.bf16.msra.mxu0 %v2653
        %2748 = vmatprep.subr.bf16.mxu0 %v2658
        %2749 = vmatpush1.bf16.msra.mxu0 %v2657
        %2750 = vmatprep.subr.bf16.mxu0 %v2662
        %2751 = vmatpush1.bf16.msra.mxu0 %v2661
        %2752 = vmatprep.subr.bf16.mxu0 0
        %2753 = vmatpush1.bf16.msra.mxu0 0
        %2754 = vmatprep.subr.bf16.mxu0 0
        %2755 = vmatpush1.bf16.msra.mxu0 0
        %2756 = vmatprep.subr.bf16.mxu0 0
        %2757 = vmatpush1.bf16.msra.mxu0 0
        %2758 = vmatprep.subr.bf16.mxu0 0
        %2759 = vmatpush1.bf16.msra.mxu0 0
        %2760 = vmatprep.subr.bf16.mxu0 0
        %2761 = vmatpush1.bf16.msra.mxu0 0
        %2762 = vmatprep.subr.bf16.mxu0 0
        %2763 = vmatpush1.bf16.msra.mxu0 0
        %2764 = vmatprep.subr.bf16.mxu0 0
        %2765 = vmatpush1.bf16.msra.mxu0 0
        %2766 = vmatprep.subr.bf16.mxu0 0
        %2767 = vmatpush1.bf16.msra.mxu0 0
        %2768 = vmatprep.mubr.bf16.mxu0 0
        %2769 = vmatmul.mubr.bf16.gmra.mrb[0].mxu0 %v2480
        %v2770 = vpop.f32.mrb[0].mxu0
        %v2771 = vadd.f32 %v2526, %v2770
        %v2772 = vpop.f32.mrb[0].mxu0
        %v2773 = vadd.f32 %v2530, %v2772
        %v2774 = vpop.f32.mrb[0].mxu0
        %v2775 = vpop.f32.mrb[0].mxu0
        %2776 = vdwg.mxu0
        %v2777 = vmul.f32 %v2730, 0.5
        %v2778 = vmul.f32 %v2732, 0.5
        %v2779 = vmul.f32 %v2771, 0.5
        %v2780 = vmul.f32 %v2773, 0.5
        %v2781 = vmul.f32 %v2730, 0.044715
        %v2782 = vmul.f32 %v2732, 0.044715
        %v2783 = vmul.f32 %v2771, 0.044715
        %v2784 = vmul.f32 %v2773, 0.044715
        %v2785 = vmul.f32 %v2781, %v2730
        %v2786 = vmul.f32 %v2782, %v2732
        %v2787 = vmul.f32 %v2783, %v2771
        %v2788 = vmul.f32 %v2784, %v2773
        %v2789 = vmul.f32 %v2785, %v2730
        %v2790 = vmul.f32 %v2786, %v2732
        %v2791 = vmul.f32 %v2787, %v2771
        %v2792 = vmul.f32 %v2788, %v2773
        %v2793 = vadd.f32 %v2730, %v2789
        %v2794 = vadd.f32 %v2732, %v2790
        %v2795 = vadd.f32 %v2771, %v2791
        %v2796 = vadd.f32 %v2773, %v2792
        %v2797 = vmul.f32 %v2793, 0.7978846
        %v2798 = vmul.f32 %v2794, 0.7978846
        %v2799 = vmul.f32 %v2795, 0.7978846
        %v2800 = vmul.f32 %v2796, 0.7978846
        %v2801 = vtanh.pop %v2797
        %v2802 = vtanh.pop %v2798
        %v2803 = vtanh.pop %v2799
        %v2804 = vtanh.pop %v2800
        %v2805 = vadd.f32 %v2801, 1.0
        %v2806 = vadd.f32 %v2802, 1.0
        %v2807 = vadd.f32 %v2803, 1.0
        %v2808 = vadd.f32 %v2804, 1.0
        %v2809 = vmul.f32 %v2777, %v2805
        %v2810 = vmul.f32 %v2778, %v2806
        %v2811 = vmul.f32 %v2779, %v2807
        %v2812 = vmul.f32 %v2780, %v2808
        %v2813 = vpack.c.bf16 %v2809, %v2809
        %v2814 = vpack.c.bf16 %v2810, %v2810
        %v2815 = vpack.c.bf16 %v2811, %v2811
        %v2816 = vpack.c.bf16 %v2812, %v2812
        %v2817 = vld [vmem:[%s1073] sm:$0xf]
        %v2818 = vld [vmem:[%s1073 + $0x4] sm:$0xf]
        %v2819 = vld [vmem:[%s1073 + $0x8] sm:$0xf]
        %v2820 = vld [vmem:[%s1073 + $0xc] sm:$0xf]
        %v2821 = vld [vmem:[%s1073 + $0x10] sm:$0xf]
        %v2822 = vld [vmem:[%s1073 + $0x14] sm:$0xf]
        %v2823 = vld [vmem:[%s1073 + $0x18] sm:$0xf]
        %v2824 = vld [vmem:[%s1073 + $0x1c] sm:$0xf]
        %v2825 = vld [vmem:[%s1073 + $0x20] sm:$0xf]
        %v2826 = vld [vmem:[%s1073 + $0x24] sm:$0xf]
        %v2827 = vld [vmem:[%s1073 + $0x28] sm:$0xf]
        %v2828 = vld [vmem:[%s1073 + $0x2c] sm:$0xf]
        %v2829 = vld [vmem:[%s1073 + $0x30] sm:$0xf]
        %v2830 = vld [vmem:[%s1073 + $0x34] sm:$0xf]
        %v2831 = vld [vmem:[%s1073 + $0x38] sm:$0xf]
        %v2832 = vld [vmem:[%s1073 + $0x3c] sm:$0xf]
        %v2833 = vld [vmem:[%s1073 + $0x40] sm:$0xf]
        %v2834 = vld [vmem:[%s1073 + $0x44] sm:$0xf]
        %v2835 = vld [vmem:[%s1073 + $0x48] sm:$0xf]
        %v2836 = vld [vmem:[%s1073 + $0x4c] sm:$0xf]
        %v2837 = vld [vmem:[%s1073 + $0x50] sm:$0xf]
        %v2838 = vld [vmem:[%s1073 + $0x54] sm:$0xf]
        %v2839 = vld [vmem:[%s1073 + $0x58] sm:$0xf]
        %v2840 = vld [vmem:[%s1073 + $0x5c] sm:$0xf]
        %v2841 = vld [vmem:[%s1073 + $0x60] sm:$0xf]
        %v2842 = vld [vmem:[%s1073 + $0x64] sm:$0xf]
        %v2843 = vld [vmem:[%s1073 + $0x68] sm:$0xf]
        %v2844 = vld [vmem:[%s1073 + $0x6c] sm:$0xf]
        %v2845 = vld [vmem:[%s1073 + $0x70] sm:$0xf]
        %v2846 = vld [vmem:[%s1073 + $0x74] sm:$0xf]
        %v2847 = vld [vmem:[%s1073 + $0x78] sm:$0xf]
        %v2848 = vld [vmem:[%s1073 + $0x7c] sm:$0xf]
        %v2849 = vld [vmem:[%s1073 + $0x80] sm:$0xf]
        %v2850 = vld [vmem:[%s1073 + $0x84] sm:$0xf]
        %v2851 = vld [vmem:[%s1073 + $0x88] sm:$0xf]
        %v2852 = vld [vmem:[%s1073 + $0x8c] sm:$0xf]
        %v2853 = vld [vmem:[%s1073 + $0x90] sm:$0xf]
        %v2854 = vld [vmem:[%s1073 + $0x94] sm:$0xf]
        %v2855 = vld [vmem:[%s1073 + $0x98] sm:$0xf]
        %v2856 = vld [vmem:[%s1073 + $0x9c] sm:$0xf]
        %v2857 = vld [vmem:[%s1073 + $0xa0] sm:$0xf]
        %v2858 = vld [vmem:[%s1073 + $0xa4] sm:$0xf]
        %v2859 = vld [vmem:[%s1073 + $0xa8] sm:$0xf]
        %v2860 = vld [vmem:[%s1073 + $0xac] sm:$0xf]
        %v2861 = vld [vmem:[%s1073 + $0xb0] sm:$0xf]
        %v2862 = vld [vmem:[%s1073 + $0xb4] sm:$0xf]
        %v2863 = vld [vmem:[%s1073 + $0xb8] sm:$0xf]
        %v2864 = vld [vmem:[%s1073 + $0xbc] sm:$0xf]
        %v2865 = vld [vmem:[%s1073 + $0xc0] sm:$0xf]
        %v2866 = vld [vmem:[%s1073 + $0xc4] sm:$0xf]
        %v2867 = vld [vmem:[%s1073 + $0xc8] sm:$0xf]
        %v2868 = vld [vmem:[%s1073 + $0xcc] sm:$0xf]
        %v2869 = vld [vmem:[%s1073 + $0xd0] sm:$0xf]
        %v2870 = vld [vmem:[%s1073 + $0xd4] sm:$0xf]
        %v2871 = vld [vmem:[%s1073 + $0xd8] sm:$0xf]
        %v2872 = vld [vmem:[%s1073 + $0xdc] sm:$0xf]
        %v2873 = vld [vmem:[%s1073 + $0xe0] sm:$0xf]
        %v2874 = vld [vmem:[%s1073 + $0xe4] sm:$0xf]
        %v2875 = vld [vmem:[%s1073 + $0xe8] sm:$0xf]
        %v2876 = vld [vmem:[%s1073 + $0xec] sm:$0xf]
        %v2877 = vld [vmem:[%s1073 + $0xf0] sm:$0xf]
        %v2878 = vld [vmem:[%s1073 + $0xf4] sm:$0xf]
        %v2879 = vld [vmem:[%s1073 + $0xf8] sm:$0xf]
        %v2880 = vld [vmem:[%s1073 + $0xfc] sm:$0xf]
        %v2881 = vld [vmem:[%s1081] sm:$0x1]
        %v2883 = vlaneseq
        %v2884 = vshrl.u32 %v2883, 7
        %v2885 = vsub.s32 0, %v2884
        %v2886 = vrot.slane %v2881, %v2885
        %v2952 = vunpack.c.l.b16 %v2817
        %v2953 = vunpack.c.l.b16 %v2818
        %v2954 = vunpack.c.l.b16 %v2819
        %v2955 = vunpack.c.l.b16 %v2820
        %v2956 = vunpack.c.l.b16 %v2821
        %v2957 = vunpack.c.l.b16 %v2822
        %v2958 = vunpack.c.l.b16 %v2823
        %v2959 = vunpack.c.l.b16 %v2824
        %v2960 = vunpack.c.l.b16 %v2825
        %v2961 = vunpack.c.l.b16 %v2826
        %v2962 = vunpack.c.l.b16 %v2827
        %v2963 = vunpack.c.l.b16 %v2828
        %v2964 = vunpack.c.l.b16 %v2829
        %v2965 = vunpack.c.l.b16 %v2830
        %v2966 = vunpack.c.l.b16 %v2831
        %v2967 = vunpack.c.l.b16 %v2832
        %v2968 = vunpack.c.l.b16 %v2833
        %v2969 = vunpack.c.l.b16 %v2834
        %v2970 = vunpack.c.l.b16 %v2835
        %v2971 = vunpack.c.l.b16 %v2836
        %v2972 = vunpack.c.l.b16 %v2837
        %v2973 = vunpack.c.l.b16 %v2838
        %v2974 = vunpack.c.l.b16 %v2839
        %v2975 = vunpack.c.l.b16 %v2840
        %v2976 = vunpack.c.l.b16 %v2841
        %v2977 = vunpack.c.l.b16 %v2842
        %v2978 = vunpack.c.l.b16 %v2843
        %v2979 = vunpack.c.l.b16 %v2844
        %v2980 = vunpack.c.l.b16 %v2845
        %v2981 = vunpack.c.l.b16 %v2846
        %v2982 = vunpack.c.l.b16 %v2847
        %v2983 = vunpack.c.l.b16 %v2848
        %v2984 = vunpack.c.l.b16 %v2849
        %v2985 = vunpack.c.l.b16 %v2850
        %v2986 = vunpack.c.l.b16 %v2851
        %v2987 = vunpack.c.l.b16 %v2852
        %v2988 = vunpack.c.l.b16 %v2853
        %v2989 = vunpack.c.l.b16 %v2854
        %v2990 = vunpack.c.l.b16 %v2855
        %v2991 = vunpack.c.l.b16 %v2856
        %v2992 = vunpack.c.l.b16 %v2857
        %v2993 = vunpack.c.l.b16 %v2858
        %v2994 = vunpack.c.l.b16 %v2859
        %v2995 = vunpack.c.l.b16 %v2860
        %v2996 = vunpack.c.l.b16 %v2861
        %v2997 = vunpack.c.l.b16 %v2862
        %v2998 = vunpack.c.l.b16 %v2863
        %v2999 = vunpack.c.l.b16 %v2864
        %v3000 = vunpack.c.l.b16 %v2865
        %v3001 = vunpack.c.l.b16 %v2866
        %v3002 = vunpack.c.l.b16 %v2867
        %v3003 = vunpack.c.l.b16 %v2868
        %v3004 = vunpack.c.l.b16 %v2869
        %v3005 = vunpack.c.l.b16 %v2870
        %v3006 = vunpack.c.l.b16 %v2871
        %v3007 = vunpack.c.l.b16 %v2872
        %v3008 = vunpack.c.l.b16 %v2873
        %v3009 = vunpack.c.l.b16 %v2874
        %v3010 = vunpack.c.l.b16 %v2875
        %v3011 = vunpack.c.l.b16 %v2876
        %v3012 = vunpack.c.l.b16 %v2877
        %v3013 = vunpack.c.l.b16 %v2878
        %v3014 = vunpack.c.l.b16 %v2879
        %v3015 = vunpack.c.l.b16 %v2880
        %v3016 = vpack.c.b16 %v2953, %v2952
        %v3017 = vpack.c.b16 %v2955, %v2954
        %v3018 = vpack.c.b16 %v2957, %v2956
        %v3019 = vpack.c.b16 %v2959, %v2958
        %v3020 = vpack.c.b16 %v2961, %v2960
        %v3021 = vpack.c.b16 %v2963, %v2962
        %v3022 = vpack.c.b16 %v2965, %v2964
        %v3023 = vpack.c.b16 %v2967, %v2966
        %v3024 = vpack.c.b16 %v2969, %v2968
        %v3025 = vpack.c.b16 %v2971, %v2970
        %v3026 = vpack.c.b16 %v2973, %v2972
        %v3027 = vpack.c.b16 %v2975, %v2974
        %v3028 = vpack.c.b16 %v2977, %v2976
        %v3029 = vpack.c.b16 %v2979, %v2978
        %v3030 = vpack.c.b16 %v2981, %v2980
        %v3031 = vpack.c.b16 %v2983, %v2982
        %v3032 = vpack.c.b16 %v2985, %v2984
        %v3033 = vpack.c.b16 %v2987, %v2986
        %v3034 = vpack.c.b16 %v2989, %v2988
        %v3035 = vpack.c.b16 %v2991, %v2990
        %v3036 = vpack.c.b16 %v2993, %v2992
        %v3037 = vpack.c.b16 %v2995, %v2994
        %v3038 = vpack.c.b16 %v2997, %v2996
        %v3039 = vpack.c.b16 %v2999, %v2998
        %v3040 = vpack.c.b16 %v3001, %v3000
        %v3041 = vpack.c.b16 %v3003, %v3002
        %v3042 = vpack.c.b16 %v3005, %v3004
        %v3043 = vpack.c.b16 %v3007, %v3006
        %v3044 = vpack.c.b16 %v3009, %v3008
        %v3045 = vpack.c.b16 %v3011, %v3010
        %v3046 = vpack.c.b16 %v3013, %v3012
        %v3047 = vpack.c.b16 %v3015, %v3014
        %3080 = vmatprep.subr.bf16.mxu0 0
        %3081 = vmatpush1.bf16.msra.mxu0 %v3016
        %3082 = vmatprep.subr.bf16.mxu0 0
        %3083 = vmatpush1.bf16.msra.mxu0 %v3017
        %3084 = vmatprep.subr.bf16.mxu0 0
        %3085 = vmatpush1.bf16.msra.mxu0 %v3018
        %3086 = vmatprep.subr.bf16.mxu0 0
        %3087 = vmatpush1.bf16.msra.mxu0 %v3019
        %3088 = vmatprep.subr.bf16.mxu0 0
        %3089 = vmatpush1.bf16.msra.mxu0 %v3020
        %3090 = vmatprep.subr.bf16.mxu0 0
        %3091 = vmatpush1.bf16.msra.mxu0 %v3021
        %3092 = vmatprep.subr.bf16.mxu0 0
        %3093 = vmatpush1.bf16.msra.mxu0 %v3022
        %3094 = vmatprep.subr.bf16.mxu0 0
        %3095 = vmatpush1.bf16.msra.mxu0 %v3023
        %3096 = vmatprep.subr.bf16.mxu0 0
        %3097 = vmatpush1.bf16.msra.mxu0 %v3024
        %3098 = vmatprep.subr.bf16.mxu0 0
        %3099 = vmatpush1.bf16.msra.mxu0 %v3025
        %3100 = vmatprep.subr.bf16.mxu0 0
        %3101 = vmatpush1.bf16.msra.mxu0 %v3026
        %3102 = vmatprep.subr.bf16.mxu0 0
        %3103 = vmatpush1.bf16.msra.mxu0 %v3027
        %3104 = vmatprep.subr.bf16.mxu0 0
        %3105 = vmatpush1.bf16.msra.mxu0 %v3028
        %3106 = vmatprep.subr.bf16.mxu0 0
        %3107 = vmatpush1.bf16.msra.mxu0 %v3029
        %3108 = vmatprep.subr.bf16.mxu0 0
        %3109 = vmatpush1.bf16.msra.mxu0 %v3030
        %3110 = vmatprep.subr.bf16.mxu0 0
        %3111 = vmatpush1.bf16.msra.mxu0 %v3031
        %3112 = vmatprep.mubr.bf16.mxu0 %v2814
        %3113 = vmatmul.mubr.bf16.gmra.mrb[0].mxu0 %v2813
        %v3114 = vpop.f32.mrb[0].mxu0
        %v3115 = vadd.f32 %v2886, %v3114
        %v3116 = vpop.f32.mrb[0].mxu0
        %v3117 = vpop.f32.mrb[0].mxu0
        %v3118 = vpop.f32.mrb[0].mxu0
        %3119 = vdwg.mxu0
        %3120 = vmatprep.subr.bf16.mxu0 0
        %3121 = vmatpush1.bf16.msra.mxu0 %v3032
        %3122 = vmatprep.subr.bf16.mxu0 0
        %3123 = vmatpush1.bf16.msra.mxu0 %v3033
        %3124 = vmatprep.subr.bf16.mxu0 0
        %3125 = vmatpush1.bf16.msra.mxu0 %v3034
        %3126 = vmatprep.subr.bf16.mxu0 0
        %3127 = vmatpush1.bf16.msra.mxu0 %v3035
        %3128 = vmatprep.subr.bf16.mxu0 0
        %3129 = vmatpush1.bf16.msra.mxu0 %v3036
        %3130 = vmatprep.subr.bf16.mxu0 0
        %3131 = vmatpush1.bf16.msra.mxu0 %v3037
        %3132 = vmatprep.subr.bf16.mxu0 0
        %3133 = vmatpush1.bf16.msra.mxu0 %v3038
        %3134 = vmatprep.subr.bf16.mxu0 0
        %3135 = vmatpush1.bf16.msra.mxu0 %v3039
        %3136 = vmatprep.subr.bf16.mxu0 0
        %3137 = vmatpush1.bf16.msra.mxu0 %v3040
        %3138 = vmatprep.subr.bf16.mxu0 0
        %3139 = vmatpush1.bf16.msra.mxu0 %v3041
        %3140 = vmatprep.subr.bf16.mxu0 0
        %3141 = vmatpush1.bf16.msra.mxu0 %v3042
        %3142 = vmatprep.subr.bf16.mxu0 0
        %3143 = vmatpush1.bf16.msra.mxu0 %v3043
        %3144 = vmatprep.subr.bf16.mxu0 0
        %3145 = vmatpush1.bf16.msra.mxu0 %v3044
        %3146 = vmatprep.subr.bf16.mxu0 0
        %3147 = vmatpush1.bf16.msra.mxu0 %v3045
        %3148 = vmatprep.subr.bf16.mxu0 0
        %3149 = vmatpush1.bf16.msra.mxu0 %v3046
        %3150 = vmatprep.subr.bf16.mxu0 0
        %3151 = vmatpush1.bf16.msra.mxu0 %v3047
        %3152 = vmatprep.mubr.bf16.mxu0 %v2816
        %3153 = vmatmul.mubr.bf16.gmra.mrb[0].mxu0 %v2815
        %v3154 = vpop.f32.mrb[0].mxu0
        %v3155 = vadd.f32 %v3115, %v3154
        %v3156 = vpop.f32.mrb[0].mxu0
        %v3157 = vpop.f32.mrb[0].mxu0
        %v3158 = vpop.f32.mrb[0].mxu0
        %3159 = vdwg.mxu0
        %v3160 = vadd.f32 %v3155, %v2450
        %p3161 = scmp.lt.s32.totalorder %s66, 1
        // Predicated region
        $region177: #{factorized_encoder_forward.6} parent=95 // pred_check
          %p3162 = pneg %p3161
        $region178: #{factorized_encoder_forward.6} parent=95 // pred_check_branch
          %3164 = sbr.rel (%p3162) target = $region180
        $region179: #{factorized_encoder_forward.6} parent=95 // pred_region
          %3165 = vst [vmem:[%s1214] sm:$0x7] %v3160
        $region180: #{factorized_encoder_forward.6} parent=95 // pred_fallthru
          _
        %p3166 = scmp.eq.s32.totalorder %s66, 1
        // Predicated region
        $region181: #{factorized_encoder_forward.6} parent=95 // pred_check
          %p3167 = pneg %p3166
        $region182: #{factorized_encoder_forward.6} parent=95 // pred_check_branch
          %3169 = sbr.rel (%p3167) target = $region184
        $region183: #{factorized_encoder_forward.6} parent=95 // pred_region
          %v3170 = vld [vmem:[#allocation29] sm:$0x1]
          %v3171 = vld [vmem:[#allocation31] sm:$0x1]
          %v3172 = vsel %vm1225, %v3160, 0.0
          %3173 = vadd.xlane.f32.xlu0 %v3172
          %v3174 = vpop.xlane.xlu0 %3173
          %v3175 = vmul.f32 %v3174, %v1229
          %v3176 = vsub.f32 %v3160, %v3175
          %v3177 = vmul.f32 %v3176, %v3176
          %v3178 = vsel %vm1225, %v3177, 0.0
          %3179 = vadd.xlane.f32.xlu0 %v3178
          %v3180 = vpop.xlane.xlu0 %3179
          %v3181 = vmul.f32 %v3180, %v1229
          %v3182 = vadd.f32 %v3181, 1e-05
          %v3183 = vrsqrt.pop %v3182
          %v3184 = vmul.f32 %v3176, %v3183
          %v3186 = vlaneseq
          %v3187 = vshrl.u32 %v3186, 7
          %v3188 = vsub.s32 0, %v3187
          %v3189 = vrot.slane %v3170, %v3188
          %v3191 = vmul.f32 %v3184, %v3189
          %v3193 = vlaneseq
          %v3194 = vshrl.u32 %v3193, 7
          %v3195 = vsub.s32 0, %v3194
          %v3196 = vrot.slane %v3171, %v3195
          %v3198 = vadd.f32 %v3191, %v3196
          %3199 = vst [vmem:[%s1214] sm:$0x7] %v3198
        $region184: #{factorized_encoder_forward.6} parent=95 // pred_fallthru
          _
        %s3200 = sand.u32 %s565, 1
        %s3201 = scalar_lea.sflag [#allocation4], %s3200
        %s3202 = sand.u32 %s565, 1
        %s3203 = smul.addr %s3202, 4
        %s3204 = scalar_lea.vmem [#allocation32], %s3203
        // Predicated region
        $region185: #{factorized_encoder_forward.6} parent=95 // pred_check
          %p3205 = pneg %p575
        $region186: #{factorized_encoder_forward.6} parent=95 // pred_check_branch
          %3207 = sbr.rel (%p3205) target = $region188
        $region187: #{factorized_encoder_forward.6} parent=95 // pred_region
          %s3209 = ssub.s32 64, 64
          %3210 = vsyncadd %s3201, %s3209
          %s3211 = smul.addr %s65, 64
          %s3212 = scalar_lea.hbm %s19, %s3211
          %s3214 = sshll.u32 %s3204, 4
          %s3215 = int_to_ptr.vmem [resolvable:$true] %s3214
          %3217 = dma.vmem_to_hbm [thread:$0]  %s3215, 64, %s3212, %s3201
        $region188: #{factorized_encoder_forward.6} parent=95 // pred_fallthru
          _
      $region96: #{factorized_encoder_forward.6} parent=5 // pred_fallthru
        _
      %p3218 = scmp.le.s32.totalorder 2, %s56
      // Predicated region
      $region189: #{factorized_encoder_forward.6} parent=5 // pred_check
        %p3219 = pneg %p3218
      $region190: #{factorized_encoder_forward.6} parent=5 // pred_check_branch
        %3221 = sbr.rel (%p3219) target = $region192
      $region191: #{factorized_encoder_forward.6} parent=5 // pred_region
        %s3222 = ssub.s32 %s56, 2
        // Predicated region
        $region193: #{factorized_encoder_forward.6} parent=191 // pred_check
          %p3223 = pneg %p581
        $region194: #{factorized_encoder_forward.6} parent=191 // pred_check_branch
          %3225 = sbr.rel (%p3223) target = $region196
        $region195: #{factorized_encoder_forward.6} parent=191 // pred_region
          %s3226 = sand.u32 %s566, 1
          %s3227 = scalar_lea.sflag [#allocation4], %s3226
          %s3228 = sand.u32 %s566, 1
          %s3229 = smul.addr %s3228, 4
          %s3230 = scalar_lea.vmem [#allocation32], %s3229
          %3231 = dma.done %s3227, 64
        $region196: #{factorized_encoder_forward.6} parent=191 // pred_fallthru
          _
      $region192: #{factorized_encoder_forward.6} parent=5 // pred_fallthru
        _
    $region6: #{factorized_encoder_forward.6} parent=1 // loop_footer
      %s60 = sadd.s32 1, %s56
    $region7: #{factorized_encoder_forward.6} parent=1 // loop_footer_branch
      %55 = sbr.rel target = $region3
    $region8: #{factorized_encoder_forward.6} parent=1 // loop_exit
      _
    %3232 = vsyncpa [#allocation3], 1
    %s3233 = scalar_lea.sflag [#allocation3], 1
    %3234 = vsyncpa %s3233, 1
    %3235 = vsyncpa [#allocation6], 1
    %s3236 = scalar_lea.sflag [#allocation6], 1
    %3237 = vsyncpa %s3236, 1
    %3238 = vsyncpa [#allocation9], 1
    %s3239 = scalar_lea.sflag [#allocation9], 1
    %3240 = vsyncpa %s3239, 1
    %3241 = vsyncpa [#allocation12], 1
    %s3242 = scalar_lea.sflag [#allocation12], 1
    %3243 = vsyncpa %s3242, 1
    %3244 = vsyncpa [#allocation15], 1
    %s3245 = scalar_lea.sflag [#allocation15], 1
    %3246 = vsyncpa %s3245, 1
    %3247 = vsyncpa [#allocation18], 1
    %s3248 = scalar_lea.sflag [#allocation18], 1
    %3249 = vsyncpa %s3248, 1
    %3250 = vsyncpa [#allocation21], 1
    %s3251 = scalar_lea.sflag [#allocation21], 1
    %3252 = vsyncpa %s3251, 1
    %3253 = vsyncpa [#allocation24], 1
    %s3254 = scalar_lea.sflag [#allocation24], 1
    %3255 = vsyncpa %s3254, 1
    %3256 = vsyncpa [#allocation27], 1
    %s3257 = scalar_lea.sflag [#allocation27], 1
    %3258 = vsyncpa %s3257, 1
    %3259 = vsyncpa [#allocation30], 1
    %3260 = vsyncpa [#allocation4], 1
    %s3261 = scalar_lea.sflag [#allocation4], 1
    %3262 = vsyncpa %s3261, 1

</llo_original>
